<compile_context>
chip_gen: v7x
topology: tpu7x:2x2x1
jax: 0.10.0
libtpu: 0.0.40
codegen_flags: <defaults>
</compile_context>

<pallas_src>
import functools

import jax
import jax.numpy as jnp
from jax import lax
from jax.experimental import pallas as pl
from jax.experimental.pallas import tpu as pltpu

# Safe across generations: v5e/v6e have 128 MiB physical VMEM, v7x has 64 MiB.
_VMEM_LIMIT_BYTES = 48 * 1024 * 1024


def _round_up(x, m):
    return (x + m - 1) // m * m


# ----------------------------------------------------------------------------
# In-kernel helpers (traced inside kernel bodies)
# ----------------------------------------------------------------------------
def _conv3(xpad_ref, cw_ref, cb, tile):
    """Conv1d k=3 p=1 over the frame axis from an (tile+2, Cin) f32 scratch."""
    xp = xpad_ref[...]
    y = jnp.dot(xp[0:tile, :].astype(jnp.bfloat16), cw_ref[0],
                preferred_element_type=jnp.float32)
    y = y + jnp.dot(xp[1:tile + 1, :].astype(jnp.bfloat16), cw_ref[1],
                    preferred_element_type=jnp.float32)
    y = y + jnp.dot(xp[2:tile + 2, :].astype(jnp.bfloat16), cw_ref[2],
                    preferred_element_type=jnp.float32)
    return y + cb                                                 # (tile, Cout)


def _store_bn_stats(y, stats_ref):
    """Merged per-(batch,tile) BN partial stats: row0=mean, row1=sum-sq-dev."""
    m = jnp.mean(y, axis=0, keepdims=True)                        # (1, C)
    d = y - m
    stats_ref[0:1, :] = m
    stats_ref[1:2, :] = jnp.sum(d * d, axis=0, keepdims=True)


def _bn_scale_shift(mean_ref, ss_ref, g_ref, b_ref, rows):
    """Chan combination of per-(batch,tile) stats -> BN affine scale/shift.

    Training-mode (biased) batch statistics, matching torch BatchNorm1d.train().
    """
    mloc = mean_ref[...]                                           # (NB, C) f32
    ssloc = ss_ref[...]                                            # (NB, C) f32
    nb = mloc.shape[0]
    gm = jnp.mean(mloc, axis=0, keepdims=True)                     # (1, C)
    dm = mloc - gm
    ss_tot = (jnp.sum(ssloc, axis=0, keepdims=True)
              + rows * jnp.sum(dm * dm, axis=0, keepdims=True))
    var = ss_tot / (nb * rows)
    scale = g_ref[...] * lax.rsqrt(var + 1e-5)
    shift = b_ref[...] - gm * scale
    return scale, shift                                            # (1, C) each


def _fill_xpad_bn_relu(xpad_ref, x_ref, xl_ref, xr_ref, scale, shift, tile):
    """BN+ReLU prologue into the f32 conv scratch, with k=3 halo rows."""
    t = pl.program_id(1)
    nt = pl.num_programs(1)

    def bn_relu(v):
        return jnp.maximum(v * scale + shift, 0.0)

    left = bn_relu(xl_ref[...].astype(jnp.float32)[7:8, :])        # frame t*tile-1
    right = bn_relu(xr_ref[...].astype(jnp.float32)[0:1, :])       # frame (t+1)*tile
    zero = jnp.zeros_like(left)
    xpad_ref[0:1, :] = jnp.where(t == 0, zero, left)               # conv zero pad
    xpad_ref[tile + 1:tile + 2, :] = jnp.where(t == nt - 1, zero, right)
    xpad_ref[1:tile + 1, :] = bn_relu(x_ref[...].astype(jnp.float32))


# ----------------------------------------------------------------------------
# Kernel A: log-mel spectrogram (single DFT matmul) + Conv1 + BN1 partial stats
# ----------------------------------------------------------------------------
def melconv1_kernel(chunks_ref, wdft_ref, fb_ref, cw_ref, cb_ref,
                    y_ref, stats_ref, frames_ref, xpad_ref):
    t = pl.program_id(1)
    nt = pl.num_programs(1)
    tile = y_ref.shape[0]
    hop = chunks_ref.shape[1]
    r = chunks_ref.shape[0] - tile - 1            # chunk rows = tile + R + 1
    kpad = wdft_ref.shape[1] // 2

    # im2col: R hop-chunks -> full n_fft frames (tile + 2 halo frames), bf16.
    ch = chunks_ref[...].astype(jnp.float32)      # (tile+R+1, hop)
    for j in range(r):                            # static, R is small
        frames_ref[:, j * hop:(j + 1) * hop] = (
            ch[j:j + tile + 2, :].astype(jnp.bfloat16))

    # Single windowed-DFT matmul: [re | im] over a zero-padded freq axis.
    spec = jnp.dot(frames_ref[...], wdft_ref[...],
                   preferred_element_type=jnp.float32)            # (tile+2, 2*kpad)
    re = spec[:, :kpad]
    im = spec[:, kpad:]
    power = re * re + im * im                                     # (tile+2, kpad)

    mel = jnp.dot(power.astype(jnp.bfloat16), fb_ref[...],
                  preferred_element_type=jnp.float32)             # (tile+2, n_mels)
    logmel = jnp.log(mel + 1e-5)

    # Zero the halo rows at the sequence boundaries (conv1d zero padding).
    row = lax.broadcasted_iota(jnp.int32, (tile + 2, 1), 0)
    lo = jnp.where(t == 0, 1, 0)
    hi = jnp.where(t == nt - 1, tile, tile + 1)
    logmel = jnp.where((row >= lo) & (row <= hi), logmel, 0.0)
    xpad_ref[...] = logmel

    y = _conv3(xpad_ref, cw_ref, cb_ref[...], tile)               # (tile, C1) f32
    y_ref[...] = y.astype(y_ref.dtype)                            # bf16 store
    _store_bn_stats(y, stats_ref)


def mel_conv1(chunks_t, wdft, fb, cw, cb, tile):
    B, NT, CR, hop = chunks_t.shape
    n_fft = wdft.shape[0]
    c1 = cw.shape[2]
    n_mels = cw.shape[1]
    L = NT * tile
    return pl.pallas_call(
        melconv1_kernel,
        out_shape=(jax.ShapeDtypeStruct((B, L, c1), jnp.bfloat16),
                   jax.ShapeDtypeStruct((B, NT, 2, c1), jnp.float32)),
        grid=(B, NT),
        in_specs=[
            pl.BlockSpec((None, None, CR, hop), lambda b, t: (b, t, 0, 0)),
            pl.BlockSpec(wdft.shape, lambda b, t: (0, 0)),
            pl.BlockSpec(fb.shape, lambda b, t: (0, 0)),
            pl.BlockSpec(cw.shape, lambda b, t: (0, 0, 0)),
            pl.BlockSpec(cb.shape, lambda b, t: (0, 0)),
        ],
        out_specs=(
            pl.BlockSpec((None, tile, c1), lambda b, t: (b, t, 0)),
            pl.BlockSpec((None, None, 2, c1), lambda b, t: (b, t, 0, 0)),
        ),
        scratch_shapes=[pltpu.VMEM((tile + 2, n_fft), jnp.bfloat16),
                        pltpu.VMEM((tile + 2, n_mels), jnp.float32)],
        compiler_params=pltpu.CompilerParams(
            dimension_semantics=("parallel", "parallel"),
            vmem_limit_bytes=_VMEM_LIMIT_BYTES),
    )(chunks_t, wdft, fb, cw, cb)


# ----------------------------------------------------------------------------
# Kernel B: BN combine + affine + ReLU prologue -> Conv (k=3,p=1) -> BN stats
# ----------------------------------------------------------------------------
def bn_conv_kernel(rows, x_ref, xl_ref, xr_ref, mean_ref, ss_ref, g_ref, b_ref,
                   cw_ref, cb_ref, y_ref, stats_ref, xpad_ref):
    tile = y_ref.shape[0]
    scale, shift = _bn_scale_shift(mean_ref, ss_ref, g_ref, b_ref, rows)
    _fill_xpad_bn_relu(xpad_ref, x_ref, xl_ref, xr_ref, scale, shift, tile)
    y = _conv3(xpad_ref, cw_ref, cb_ref[...], tile)
    y_ref[...] = y.astype(y_ref.dtype)
    _store_bn_stats(y, stats_ref)


def bn_conv(x, mean_in, ss_in, gamma, beta, cw, cb, tile):
    B, L, cin = x.shape
    NT = L // tile
    cout = cw.shape[2]
    t8 = tile // 8
    nblk8 = L // 8
    kern = functools.partial(bn_conv_kernel, tile)
    return pl.pallas_call(
        kern,
        out_shape=(jax.ShapeDtypeStruct((B, L, cout), jnp.bfloat16),
                   jax.ShapeDtypeStruct((B, NT, 2, cout), jnp.float32)),
        grid=(B, NT),
        in_specs=[
            pl.BlockSpec((None, tile, cin), lambda b, t: (b, t, 0)),
            # 8-row halo blocks: last row = frame t*tile-1, first row = (t+1)*tile
            pl.BlockSpec((None, 8, cin),
                         lambda b, t: (b, jnp.maximum(t * t8 - 1, 0), 0)),
            pl.BlockSpec((None, 8, cin),
                         lambda b, t: (b, jnp.minimum((t + 1) * t8, nblk8 - 1), 0)),
            pl.BlockSpec(mean_in.shape, lambda b, t: (0, 0)),
            pl.BlockSpec(ss_in.shape, lambda b, t: (0, 0)),
            pl.BlockSpec(gamma.shape, lambda b, t: (0, 0)),
            pl.BlockSpec(beta.shape, lambda b, t: (0, 0)),
            pl.BlockSpec(cw.shape, lambda b, t: (0, 0, 0)),
            pl.BlockSpec(cb.shape, lambda b, t: (0, 0)),
        ],
        out_specs=(
            pl.BlockSpec((None, tile, cout), lambda b, t: (b, t, 0)),
            pl.BlockSpec((None, None, 2, cout), lambda b, t: (b, t, 0, 0)),
        ),
        scratch_shapes=[pltpu.VMEM((tile + 2, cin), jnp.float32)],
        compiler_params=pltpu.CompilerParams(
            dimension_semantics=("parallel", "parallel"),
            vmem_limit_bytes=_VMEM_LIMIT_BYTES),
    )(x, x, x, mean_in, ss_in, gamma, beta, cw, cb)


# ----------------------------------------------------------------------------
# Kernel C: BN prologue -> Conv3 -> tokenizer MLP -> argmax -> embedding
# ----------------------------------------------------------------------------
def bn_conv_tok_kernel(rows, x_ref, xl_ref, xr_ref, mean_ref, ss_ref,
                       g_ref, b_ref, cw_ref, cb_ref,
                       tw1_ref, tb1_ref, tw2_ref, tb2_ref, emb_ref,
                       out_ref, xpad_ref):
    tile = out_ref.shape[0]
    scale, shift = _bn_scale_shift(mean_ref, ss_ref, g_ref, b_ref, rows)
    _fill_xpad_bn_relu(xpad_ref, x_ref, xl_ref, xr_ref, scale, shift, tile)
    feat = _conv3(xpad_ref, cw_ref, cb_ref[...], tile)             # (tile, D) f32

    hid = jnp.maximum(
        jnp.dot(feat.astype(jnp.bfloat16), tw1_ref[...],
                preferred_element_type=jnp.float32) + tb1_ref[...], 0.0)
    logits = jnp.dot(hid.astype(jnp.bfloat16), tw2_ref[...],
                     preferred_element_type=jnp.float32) + tb2_ref[...]

    ntok = logits.shape[1]
    col = lax.broadcasted_iota(jnp.int32, logits.shape, 1)
    maxv = jnp.max(logits, axis=-1, keepdims=True)
    # first index achieving the max == torch.argmax tie-breaking
    tok = jnp.min(jnp.where(logits == maxv, col, ntok), axis=-1, keepdims=True)
    onehot = (col == tok).astype(jnp.bfloat16)                     # exact 0/1
    out_ref[...] = jnp.dot(onehot, emb_ref[...],
                           preferred_element_type=jnp.float32)     # (tile, D)


def bn_conv_tokenize(x, mean_in, ss_in, gamma, beta, cw, cb,
                     tw1, tb1, tw2, tb2, emb, tile):
    B, L, cin = x.shape
    NT = L // tile
    d = cw.shape[2]
    t8 = tile // 8
    nblk8 = L // 8
    kern = functools.partial(bn_conv_tok_kernel, tile)
    return pl.pallas_call(
        kern,
        out_shape=jax.ShapeDtypeStruct((B, L, d), jnp.float32),
        grid=(B, NT),
        in_specs=[
            pl.BlockSpec((None, tile, cin), lambda b, t: (b, t, 0)),
            pl.BlockSpec((None, 8, cin),
                         lambda b, t: (b, jnp.maximum(t * t8 - 1, 0), 0)),
            pl.BlockSpec((None, 8, cin),
                         lambda b, t: (b, jnp.minimum((t + 1) * t8, nblk8 - 1), 0)),
            pl.BlockSpec(mean_in.shape, lambda b, t: (0, 0)),
            pl.BlockSpec(ss_in.shape, lambda b, t: (0, 0)),
            pl.BlockSpec(gamma.shape, lambda b, t: (0, 0)),
            pl.BlockSpec(beta.shape, lambda b, t: (0, 0)),
            pl.BlockSpec(cw.shape, lambda b, t: (0, 0, 0)),
            pl.BlockSpec(cb.shape, lambda b, t: (0, 0)),
            pl.BlockSpec(tw1.shape, lambda b, t: (0, 0)),
            pl.BlockSpec(tb1.shape, lambda b, t: (0, 0)),
            pl.BlockSpec(tw2.shape, lambda b, t: (0, 0)),
            pl.BlockSpec(tb2.shape, lambda b, t: (0, 0)),
            pl.BlockSpec(emb.shape, lambda b, t: (0, 0)),
        ],
        out_specs=pl.BlockSpec((None, tile, d), lambda b, t: (b, t, 0)),
        scratch_shapes=[pltpu.VMEM((tile + 2, cin), jnp.float32)],
        compiler_params=pltpu.CompilerParams(
            dimension_semantics=("parallel", "parallel"),
            vmem_limit_bytes=_VMEM_LIMIT_BYTES),
    )(x, x, x, mean_in, ss_in, gamma, beta, cw, cb, tw1, tb1, tw2, tb2, emb)


# ----------------------------------------------------------------------------
# Host-side glue: framing (reshape + tiny halo gather), constants, tiling
# ----------------------------------------------------------------------------
def make_chunks(audio, n_fft, hop):
    """Reflect-pad (torch.stft center=True) and reshape to hop-sized chunks."""
    assert n_fft % hop == 0, "framing path assumes hop divides n_fft"
    B, T = audio.shape
    pad = n_fft // 2
    ap = jnp.pad(audio, ((0, 0), (pad, pad)), mode="reflect")
    L = T // hop + 1                      # torch.stft(center=True) frame count
    R = n_fft // hop
    need = (L - 1 + R) * hop
    if ap.shape[1] < need:
        ap = jnp.pad(ap, ((0, 0), (0, need - ap.shape[1])))
    ap = ap[:, :need]
    return ap.reshape(B, L - 1 + R, hop), L


def tile_chunks(chunks, L, tile, R):
    """(B, L-1+R, hop) -> (B, NT, tile+R+1, hop) bf16 with 1-frame halos."""
    B, NC, hop = chunks.shape
    NT = L // tile
    idx = (jnp.arange(NT)[:, None] * tile - 1
           + jnp.arange(tile + R + 1)[None, :])
    idx = jnp.clip(idx, 0, NC - 1)        # clamped rows feed halo frames only
    return chunks[:, idx, :].astype(jnp.bfloat16)


def choose_tile_l(L, target):
    """Largest multiple-of-8 divisor of L that is <= target."""
    best = None
    d = 8
    while d <= min(L, target):
        if L % d == 0:
            best = d
        d += 8
    return best if best is not None else L


def melscale_fbanks(n_freqs, n_mels, sample_rate, f_min=0.0, f_max=None):
    # torchaudio melscale_fbanks, mel_scale='htk', norm=None
    if f_max is None:
        f_max = sample_rate / 2.0
    hz_to_mel = lambda f: 2595.0 * jnp.log10(1.0 + f / 700.0)
    mel_to_hz = lambda m: 700.0 * (jnp.power(10.0, m / 2595.0) - 1.0)
    all_freqs = jnp.linspace(0.0, sample_rate / 2.0, n_freqs)
    m_pts = jnp.linspace(hz_to_mel(jnp.float32(f_min)),
                         hz_to_mel(jnp.float32(f_max)), n_mels + 2)
    f_pts = mel_to_hz(m_pts)
    f_diff = f_pts[1:] - f_pts[:-1]
    slopes = f_pts[None, :] - all_freqs[:, None]
    down = -slopes[:, :-2] / f_diff[:-1]
    up = slopes[:, 2:] / f_diff[1:]
    return jnp.maximum(0.0, jnp.minimum(down, up)).astype(jnp.float32)


def build_dft_and_mel(n_fft, hop, n_mels, sample_rate):
    """[wr | wi] combined (n_fft, 2*kpad) bf16; freq axis padded to 128-mult."""
    del hop
    n_freq = n_fft // 2 + 1
    kpad = _round_up(n_freq, 128)
    n = jnp.arange(n_fft, dtype=jnp.float32)
    win = 0.5 - 0.5 * jnp.cos(2.0 * jnp.pi * n / n_fft)           # periodic hann
    k = jnp.arange(n_freq, dtype=jnp.float32)
    ang = 2.0 * jnp.pi * n[:, None] * k[None, :] / n_fft
    wr = jnp.cos(ang) * win[:, None]
    wi = -jnp.sin(ang) * win[:, None]
    W = jnp.zeros((n_fft, 2 * kpad), jnp.float32)
    W = W.at[:, :n_freq].set(wr).at[:, kpad:kpad + n_freq].set(wi)
    fb = melscale_fbanks(n_freq, n_mels, sample_rate)             # (n_freq, n_mels)
    fbp = jnp.zeros((kpad, n_mels), jnp.float32).at[:n_freq].set(fb)
    return W.astype(jnp.bfloat16), fbp.astype(jnp.bfloat16)


def init_params(key, cfg):
    n_fft, hop, n_mels = cfg["n_fft"], cfg["hop_length"], cfg["n_mels"]
    c1, c2, d, nt = cfg["c1"], cfg["c2"], cfg["feature_dim"], cfg["num_tokens"]
    ks = jax.random.split(key, 12)
    bf = lambda k, shape, s=0.05: (s * jax.random.normal(k, shape)).astype(jnp.bfloat16)
    f32 = lambda k, shape, s=0.05: (s * jax.random.normal(k, shape)).astype(jnp.float32)
    wdft, fb = build_dft_and_mel(n_fft, hop, n_mels, cfg["sample_rate"])
    return dict(
        wdft=wdft, fb=fb,
        # conv weights stored (3, Cin, Cout) bf16; w[k, ci, co] == torch W[co, ci, k]
        conv1_w=bf(ks[0], (3, n_mels, c1)), conv1_b=f32(ks[1], (1, c1)),
        bn1_g=jnp.ones((1, c1), jnp.float32), bn1_b=jnp.zeros((1, c1), jnp.float32),
        conv2_w=bf(ks[2], (3, c1, c2)), conv2_b=f32(ks[3], (1, c2)),
        bn2_g=jnp.ones((1, c2), jnp.float32), bn2_b=jnp.zeros((1, c2), jnp.float32),
        conv3_w=bf(ks[4], (3, c2, d)), conv3_b=f32(ks[5], (1, d)),
        tok_w1=bf(ks[6], (d, d)), tok_b1=f32(ks[7], (1, d)),
        tok_w2=bf(ks[8], (d, nt)), tok_b2=f32(ks[9], (1, nt)),
        emb=bf(ks[10], (nt, d)),
    )


def audio_processing_tokenizer_forward(audio, params, cfg):
    """audio: (B, T, 1) f32 -> embeddings (B, frames, feature_dim) f32."""
    a = audio[..., 0]
    n_fft, hop = cfg["n_fft"], cfg["hop_length"]
    B = a.shape[0]

    chunks, L = make_chunks(a, n_fft, hop)
    tile = choose_tile_l(L, cfg.get("tile_l", 256))
    # TODO(synk): pad/mask ragged frame counts; demo picks T so L % 8 == 0.
    assert L % 8 == 0 and tile % 8 == 0 and L % tile == 0, (L, tile)
    NT = L // tile
    R = n_fft // hop
    chunks_t = tile_chunks(chunks, L, tile, R)       # (B, NT, tile+R+1, hop) bf16

    # Kernel A: log-mel + conv1 + merged BN1 partial stats
    y1, st1 = mel_conv1(chunks_t, params["wdft"], params["fb"],
                        params["conv1_w"], params["conv1_b"], tile)
    m1 = st1[:, :, 0, :].reshape(B * NT, -1)
    s1 = st1[:, :, 1, :].reshape(B * NT, -1)

    # Kernel B: BN1 combine+affine+ReLU -> conv2 + merged BN2 partial stats
    y2, st2 = bn_conv(y1, m1, s1, params["bn1_g"], params["bn1_b"],
                      params["conv2_w"], params["conv2_b"], tile)
    m2 = st2[:, :, 0, :].reshape(B * NT, -1)
    s2 = st2[:, :, 1, :].reshape(B * NT, -1)

    # Kernel C: BN2 combine+affine+ReLU -> conv3 -> MLP -> argmax -> embedding
    emb = bn_conv_tokenize(y2, m2, s2, params["bn2_g"], params["bn2_b"],
                           params["conv3_w"], params["conv3_b"],
                           params["tok_w1"], params["tok_b1"],
                           params["tok_w2"], params["tok_b2"],
                           params["emb"], tile)
    return emb


if __name__ == "__main__":
    # Small, lane-dense shapes consistent with the module structure
    # (n_fft/hop ratio 4 like 1024/256; channels/feature_dim/tokens scaled
    #  down 256/512/512/1024 -> 128/128/128/256; hop lane-dense).
    cfg = dict(n_fft=512, hop_length=128, win_length=512, n_mels=128,
               sample_rate=16000, c1=128, c2=128, feature_dim=128,
               num_tokens=256, tile_l=64)
    assert cfg["win_length"] == cfg["n_fft"]

    key = jax.random.PRNGKey(0)
    kp, ka = jax.random.split(key)
    params = init_params(kp, cfg)

    B = 2
    T = 255 * cfg["hop_length"]              # frames = T // hop + 1 = 256
    audio = jax.random.normal(ka, (B, T, 1), dtype=jnp.float32)

    fwd = jax.jit(functools.partial(audio_processing_tokenizer_forward, cfg=cfg))
    emb = fwd(audio, params)
    jax.block_until_ready(emb)

    expected_frames = T // cfg["hop_length"] + 1
    assert emb.shape == (B, expected_frames, cfg["feature_dim"]), emb.shape
    assert emb.dtype == jnp.float32
    assert bool(jnp.all(jnp.isfinite(emb)))
    print("KERNEL_OK")
</pallas_src>

<mosaic_0001>
module attributes {stable_mosaic.version = 11 : i64} {
  func.func @melconv1_kernel(%arg0: i32, %arg1: i32, %arg2: memref<1x1x69x128xbf16, #tpu.memory_space<vmem>>, %arg3: memref<512x768xbf16, #tpu.memory_space<vmem>>, %arg4: memref<384x128xbf16, #tpu.memory_space<vmem>>, %arg5: memref<3x128x128xbf16, #tpu.memory_space<vmem>>, %arg6: memref<1x128xf32, #tpu.memory_space<vmem>>, %arg7: memref<1x64x128xbf16, #tpu.memory_space<vmem>>, %arg8: memref<1x1x2x128xf32, #tpu.memory_space<vmem>>, %arg9: memref<66x512xbf16, #tpu.memory_space<vmem>>, %arg10: memref<66x128xf32, #tpu.memory_space<vmem>>) attributes {dimension_semantics = [#tpu.dimension_semantics<parallel>, #tpu.dimension_semantics<parallel>], iteration_bounds = array<i64: 2, 4>, scalar_prefetch = 0 : i64, scratch_operands = 2 : i64, tpu.core_type = #tpu.core_type<tc>, window_params = [{transform_indices = @transform_0, window_bounds = array<i64: 1, 1, 69, 128>}, {pipeline_mode = #tpu.pipeline_mode<synchronous>, transform_indices = @transform_1, window_bounds = array<i64: 512, 768>}, {pipeline_mode = #tpu.pipeline_mode<synchronous>, transform_indices = @transform_2, window_bounds = array<i64: 384, 128>}, {pipeline_mode = #tpu.pipeline_mode<synchronous>, transform_indices = @transform_3, window_bounds = array<i64: 3, 128, 128>}, {pipeline_mode = #tpu.pipeline_mode<synchronous>, transform_indices = @transform_4, window_bounds = array<i64: 1, 128>}, {transform_indices = @transform_5, window_bounds = array<i64: 1, 64, 128>}, {transform_indices = @transform_6, window_bounds = array<i64: 1, 1, 2, 128>}]} {
    %c0 = arith.constant 0 : index
    %c0_0 = arith.constant 0 : index
    %c0_1 = arith.constant 0 : index
    %c0_2 = arith.constant 0 : index
    %0 = vector.load %arg2[%c0, %c0_0, %c0_1, %c0_2] : memref<1x1x69x128xbf16, #tpu.memory_space<vmem>>, vector<1x1x69x128xbf16>
    %1 = vector.shape_cast %0 : vector<1x1x69x128xbf16> to vector<69x128xbf16>
    %2 = arith.extf %1 : vector<69x128xbf16> to vector<69x128xf32>
    %3 = vector.extract_strided_slice %2 {offsets = [0, 0], sizes = [66, 128], strides = [1, 1]} : vector<69x128xf32> to vector<66x128xf32>
    %4 = arith.truncf %3 : vector<66x128xf32> to vector<66x128xbf16>
    %c0_3 = arith.constant 0 : index
    %c0_4 = arith.constant 0 : index
    %5 = vector.load %arg9[%c0_3, %c0_4] : memref<66x512xbf16, #tpu.memory_space<vmem>>, vector<66x128xbf16>
    tpu.vector_store %arg9[%c0_3, %c0_4], %4 {strides = array<i32>} : memref<66x512xbf16, #tpu.memory_space<vmem>>, vector<66x128xbf16>,
    %6 = vector.extract_strided_slice %2 {offsets = [1, 0], sizes = [66, 128], strides = [1, 1]} : vector<69x128xf32> to vector<66x128xf32>
    %7 = arith.truncf %6 : vector<66x128xf32> to vector<66x128xbf16>
    %c0_5 = arith.constant 0 : index
    %c128 = arith.constant 128 : index
    %8 = vector.load %arg9[%c0_5, %c128] : memref<66x512xbf16, #tpu.memory_space<vmem>>, vector<66x128xbf16>
    tpu.vector_store %arg9[%c0_5, %c128], %7 {strides = array<i32>} : memref<66x512xbf16, #tpu.memory_space<vmem>>, vector<66x128xbf16>,
    %9 = vector.extract_strided_slice %2 {offsets = [2, 0], sizes = [66, 128], strides = [1, 1]} : vector<69x128xf32> to vector<66x128xf32>
    %10 = arith.truncf %9 : vector<66x128xf32> to vector<66x128xbf16>
    %c0_6 = arith.constant 0 : index
    %c256 = arith.constant 256 : index
    %11 = vector.load %arg9[%c0_6, %c256] : memref<66x512xbf16, #tpu.memory_space<vmem>>, vector<66x128xbf16>
    tpu.vector_store %arg9[%c0_6, %c256], %10 {strides = array<i32>} : memref<66x512xbf16, #tpu.memory_space<vmem>>, vector<66x128xbf16>,
    %12 = vector.extract_strided_slice %2 {offsets = [3, 0], sizes = [66, 128], strides = [1, 1]} : vector<69x128xf32> to vector<66x128xf32>
    %13 = arith.truncf %12 : vector<66x128xf32> to vector<66x128xbf16>
    %c0_7 = arith.constant 0 : index
    %c384 = arith.constant 384 : index
    %14 = vector.load %arg9[%c0_7, %c384] : memref<66x512xbf16, #tpu.memory_space<vmem>>, vector<66x128xbf16>
    tpu.vector_store %arg9[%c0_7, %c384], %13 {strides = array<i32>} : memref<66x512xbf16, #tpu.memory_space<vmem>>, vector<66x128xbf16>,
    %c0_8 = arith.constant 0 : index
    %c0_9 = arith.constant 0 : index
    %15 = vector.load %arg9[%c0_8, %c0_9] : memref<66x512xbf16, #tpu.memory_space<vmem>>, vector<66x512xbf16>
    %c0_10 = arith.constant 0 : index
    %c0_11 = arith.constant 0 : index
    %16 = vector.load %arg3[%c0_10, %c0_11] : memref<512x768xbf16, #tpu.memory_space<vmem>>, vector<512x768xbf16>
    %cst = arith.constant dense<0.000000e+00> : vector<66x768xf32>
    %17 = tpu.matmul %15, %16, %cst {dimension_numbers = #tpu.dot_dimension_numbers<[1], [0], [0], [1], [0, 0, 1, 1], [], []>} : vector<66x512xbf16>, vector<512x768xbf16>, vector<66x768xf32> -> vector<66x768xf32>
    %18 = vector.extract_strided_slice %17 {offsets = [0, 0], sizes = [66, 384], strides = [1, 1]} : vector<66x768xf32> to vector<66x384xf32>
    %19 = vector.extract_strided_slice %17 {offsets = [0, 384], sizes = [66, 384], strides = [1, 1]} : vector<66x768xf32> to vector<66x384xf32>
    %20 = arith.mulf %18, %18 : vector<66x384xf32>
    %21 = arith.mulf %19, %19 : vector<66x384xf32>
    %22 = arith.addf %20, %21 : vector<66x384xf32>
    %23 = arith.truncf %22 : vector<66x384xf32> to vector<66x384xbf16>
    %c0_12 = arith.constant 0 : index
    %c0_13 = arith.constant 0 : index
    %24 = vector.load %arg4[%c0_12, %c0_13] : memref<384x128xbf16, #tpu.memory_space<vmem>>, vector<384x128xbf16>
    %cst_14 = arith.constant dense<0.000000e+00> : vector<66x128xf32>
    %25 = tpu.matmul %23, %24, %cst_14 {dimension_numbers = #tpu.dot_dimension_numbers<[1], [0], [0], [1], [0, 0, 1, 1], [], []>} : vector<66x384xbf16>, vector<384x128xbf16>, vector<66x128xf32> -> vector<66x128xf32>
    %cst_15 = arith.constant 9.99999974E-6 : f32
    %26 = vector.broadcast %cst_15 : f32 to vector<66x128xf32>
    %27 = arith.addf %25, %26 : vector<66x128xf32>
    %28 = math.log %27 : vector<66x128xf32>
    %29 = tpu.iota {dimensions = array<i32: 0>} : vector<66x1xi32>
    %c0_i32 = arith.constant 0 : i32
    %30 = arith.cmpi eq, %arg1, %c0_i32 : i32
    %c1_i32 = arith.constant 1 : i32
    %c0_i32_16 = arith.constant 0 : i32
    %31 = arith.select %30, %c1_i32, %c0_i32_16 : i32
    %c3_i32 = arith.constant 3 : i32
    %32 = arith.cmpi eq, %arg1, %c3_i32 : i32
    %c64_i32 = arith.constant 64 : i32
    %c65_i32 = arith.constant 65 : i32
    %33 = arith.select %32, %c64_i32, %c65_i32 : i32
    %34 = vector.broadcast %31 : i32 to vector<66x1xi32>
    %35 = arith.cmpi sge, %29, %34 : vector<66x1xi32>
    %36 = vector.broadcast %33 : i32 to vector<66x1xi32>
    %37 = arith.cmpi sle, %29, %36 : vector<66x1xi32>
    %38 = arith.andi %35, %37 : vector<66x1xi1>
    %cst_17 = arith.constant 0.000000e+00 : f32
    %39 = vector.shape_cast %38 : vector<66x1xi1> to vector<66x1xi1>
    %40 = vector.broadcast %39 : vector<66x1xi1> to vector<66x128xi1>
    %41 = vector.broadcast %cst_17 : f32 to vector<66x128xf32>
    %42 = arith.select %40, %28, %41 : vector<66x128xi1>, vector<66x128xf32>
    %c0_18 = arith.constant 0 : index
    %c0_19 = arith.constant 0 : index
    %43 = vector.load %arg10[%c0_18, %c0_19] : memref<66x128xf32, #tpu.memory_space<vmem>>, vector<66x128xf32>
    tpu.vector_store %arg10[%c0_18, %c0_19], %42 {strides = array<i32>} : memref<66x128xf32, #tpu.memory_space<vmem>>, vector<66x128xf32>,
    %c0_20 = arith.constant 0 : index
    %c0_21 = arith.constant 0 : index
    %44 = vector.load %arg6[%c0_20, %c0_21] : memref<1x128xf32, #tpu.memory_space<vmem>>, vector<1x128xf32>
    %c0_22 = arith.constant 0 : index
    %c0_23 = arith.constant 0 : index
    %45 = vector.load %arg10[%c0_22, %c0_23] : memref<66x128xf32, #tpu.memory_space<vmem>>, vector<66x128xf32>
    %46 = vector.extract_strided_slice %45 {offsets = [0, 0], sizes = [64, 128], strides = [1, 1]} : vector<66x128xf32> to vector<64x128xf32>
    %47 = arith.truncf %46 : vector<64x128xf32> to vector<64x128xbf16>
    %c0_24 = arith.constant 0 : index
    %c0_25 = arith.constant 0 : index
    %c0_26 = arith.constant 0 : index
    %48 = vector.load %arg5[%c0_24, %c0_25, %c0_26] : memref<3x128x128xbf16, #tpu.memory_space<vmem>>, vector<1x128x128xbf16>
    %49 = vector.shape_cast %48 : vector<1x128x128xbf16> to vector<128x128xbf16>
    %cst_27 = arith.constant dense<0.000000e+00> : vector<64x128xf32>
    %50 = tpu.matmul %47, %49, %cst_27 {dimension_numbers = #tpu.dot_dimension_numbers<[1], [0], [0], [1], [0, 0, 1, 1], [], []>} : vector<64x128xbf16>, vector<128x128xbf16>, vector<64x128xf32> -> vector<64x128xf32>
    %51 = vector.extract_strided_slice %45 {offsets = [1, 0], sizes = [64, 128], strides = [1, 1]} : vector<66x128xf32> to vector<64x128xf32>
    %52 = arith.truncf %51 : vector<64x128xf32> to vector<64x128xbf16>
    %c1 = arith.constant 1 : index
    %c0_28 = arith.constant 0 : index
    %c0_29 = arith.constant 0 : index
    %53 = vector.load %arg5[%c1, %c0_28, %c0_29] : memref<3x128x128xbf16, #tpu.memory_space<vmem>>, vector<1x128x128xbf16>
    %54 = vector.shape_cast %53 : vector<1x128x128xbf16> to vector<128x128xbf16>
    %cst_30 = arith.constant dense<0.000000e+00> : vector<64x128xf32>
    %55 = tpu.matmul %52, %54, %cst_30 {dimension_numbers = #tpu.dot_dimension_numbers<[1], [0], [0], [1], [0, 0, 1, 1], [], []>} : vector<64x128xbf16>, vector<128x128xbf16>, vector<64x128xf32> -> vector<64x128xf32>
    %56 = arith.addf %50, %55 : vector<64x128xf32>
    %57 = vector.extract_strided_slice %45 {offsets = [2, 0], sizes = [64, 128], strides = [1, 1]} : vector<66x128xf32> to vector<64x128xf32>
    %58 = arith.truncf %57 : vector<64x128xf32> to vector<64x128xbf16>
    %c2 = arith.constant 2 : index
    %c0_31 = arith.constant 0 : index
    %c0_32 = arith.constant 0 : index
    %59 = vector.load %arg5[%c2, %c0_31, %c0_32] : memref<3x128x128xbf16, #tpu.memory_space<vmem>>, vector<1x128x128xbf16>
    %60 = vector.shape_cast %59 : vector<1x128x128xbf16> to vector<128x128xbf16>
    %cst_33 = arith.constant dense<0.000000e+00> : vector<64x128xf32>
    %61 = tpu.matmul %58, %60, %cst_33 {dimension_numbers = #tpu.dot_dimension_numbers<[1], [0], [0], [1], [0, 0, 1, 1], [], []>} : vector<64x128xbf16>, vector<128x128xbf16>, vector<64x128xf32> -> vector<64x128xf32>
    %62 = arith.addf %56, %61 : vector<64x128xf32>
    %63 = vector.broadcast %44 : vector<1x128xf32> to vector<64x128xf32>
    %64 = arith.addf %62, %63 : vector<64x128xf32>
    %65 = arith.truncf %64 : vector<64x128xf32> to vector<64x128xbf16>
    %c0_34 = arith.constant 0 : index
    %c0_35 = arith.constant 0 : index
    %c0_36 = arith.constant 0 : index
    %66 = vector.load %arg7[%c0_34, %c0_35, %c0_36] : memref<1x64x128xbf16, #tpu.memory_space<vmem>>, vector<1x64x128xbf16>
    %67 = vector.shape_cast %66 : vector<1x64x128xbf16> to vector<64x128xbf16>
    %68 = vector.shape_cast %65 : vector<64x128xbf16> to vector<1x64x128xbf16>
    tpu.vector_store %arg7[%c0_34, %c0_35, %c0_36], %68 {strides = array<i32>} : memref<1x64x128xbf16, #tpu.memory_space<vmem>>, vector<1x64x128xbf16>,
    %cst_37 = arith.constant dense<0.000000e+00> : vector<128xf32>
    %69 = vector.multi_reduction <add>, %64, %cst_37 [0] : vector<64x128xf32> to vector<128xf32>
    %70 = vector.shape_cast %69 : vector<128xf32> to vector<1x128xf32>
    %cst_38 = arith.constant 6.400000e+01 : f32
    %71 = vector.broadcast %cst_38 : f32 to vector<1x128xf32>
    %72 = arith.divf %70, %71 : vector<1x128xf32>
    %73 = vector.broadcast %72 : vector<1x128xf32> to vector<64x128xf32>
    %74 = arith.subf %64, %73 : vector<64x128xf32>
    %c0_39 = arith.constant 0 : index
    %c0_40 = arith.constant 0 : index
    %c0_41 = arith.constant 0 : index
    %c0_42 = arith.constant 0 : index
    %75 = vector.load %arg8[%c0_39, %c0_40, %c0_41, %c0_42] : memref<1x1x2x128xf32, #tpu.memory_space<vmem>>, vector<1x1x1x128xf32>
    %76 = vector.shape_cast %75 : vector<1x1x1x128xf32> to vector<1x128xf32>
    %77 = vector.shape_cast %72 : vector<1x128xf32> to vector<1x1x1x128xf32>
    tpu.vector_store %arg8[%c0_39, %c0_40, %c0_41, %c0_42], %77 {strides = array<i32>} : memref<1x1x2x128xf32, #tpu.memory_space<vmem>>, vector<1x1x1x128xf32>,
    %78 = arith.mulf %74, %74 : vector<64x128xf32>
    %cst_43 = arith.constant dense<0.000000e+00> : vector<128xf32>
    %79 = vector.multi_reduction <add>, %78, %cst_43 [0] : vector<64x128xf32> to vector<128xf32>
    %80 = vector.shape_cast %79 : vector<128xf32> to vector<1x128xf32>
    %c0_44 = arith.constant 0 : index
    %c0_45 = arith.constant 0 : index
    %c1_46 = arith.constant 1 : index
    %c0_47 = arith.constant 0 : index
    %81 = vector.load %arg8[%c0_44, %c0_45, %c1_46, %c0_47] : memref<1x1x2x128xf32, #tpu.memory_space<vmem>>, vector<1x1x1x128xf32>
    %82 = vector.shape_cast %81 : vector<1x1x1x128xf32> to vector<1x128xf32>
    %83 = vector.shape_cast %80 : vector<1x128xf32> to vector<1x1x1x128xf32>
    tpu.vector_store %arg8[%c0_44, %c0_45, %c1_46, %c0_47], %83 {strides = array<i32>} : memref<1x1x2x128xf32, #tpu.memory_space<vmem>>, vector<1x1x1x128xf32>,
    return
  }
  func.func @transform_0(%arg0: i32, %arg1: i32) -> (i32, i32, i32, i32) {
    %c0_i32 = arith.constant 0 : i32
    %c0_i32_0 = arith.constant 0 : i32
    %c0_i32_1 = arith.constant 0 : i32
    return %arg0, %arg1, %c0_i32, %c0_i32_0 : i32, i32, i32, i32
  }
  func.func @transform_1(%arg0: i32, %arg1: i32) -> (i32, i32) {
    %c0_i32 = arith.constant 0 : i32
    %c0_i32_0 = arith.constant 0 : i32
    %c0_i32_1 = arith.constant 0 : i32
    return %c0_i32, %c0_i32_0 : i32, i32
  }
  func.func @transform_2(%arg0: i32, %arg1: i32) -> (i32, i32) {
    %c0_i32 = arith.constant 0 : i32
    %c0_i32_0 = arith.constant 0 : i32
    %c0_i32_1 = arith.constant 0 : i32
    return %c0_i32, %c0_i32_0 : i32, i32
  }
  func.func @transform_3(%arg0: i32, %arg1: i32) -> (i32, i32, i32) {
    %c0_i32 = arith.constant 0 : i32
    %c0_i32_0 = arith.constant 0 : i32
    %c0_i32_1 = arith.constant 0 : i32
    %c0_i32_2 = arith.constant 0 : i32
    return %c0_i32, %c0_i32_0, %c0_i32_1 : i32, i32, i32
  }
  func.func @transform_4(%arg0: i32, %arg1: i32) -> (i32, i32) {
    %c0_i32 = arith.constant 0 : i32
    %c0_i32_0 = arith.constant 0 : i32
    %c0_i32_1 = arith.constant 0 : i32
    return %c0_i32, %c0_i32_0 : i32, i32
  }
  func.func @transform_5(%arg0: i32, %arg1: i32) -> (i32, i32, i32) {
    %c0_i32 = arith.constant 0 : i32
    %c0_i32_0 = arith.constant 0 : i32
    return %arg0, %arg1, %c0_i32 : i32, i32, i32
  }
  func.func @transform_6(%arg0: i32, %arg1: i32) -> (i32, i32, i32, i32) {
    %c0_i32 = arith.constant 0 : i32
    %c0_i32_0 = arith.constant 0 : i32
    %c0_i32_1 = arith.constant 0 : i32
    return %arg0, %arg1, %c0_i32, %c0_i32_0 : i32, i32, i32, i32
  }
}

module attributes {stable_mosaic.version = 11 : i64} {
  func.func @bn_conv_kernel(%arg0: i32, %arg1: i32, %arg2: memref<1x64x128xbf16, #tpu.memory_space<vmem>>, %arg3: memref<1x8x128xbf16, #tpu.memory_space<vmem>>, %arg4: memref<1x8x128xbf16, #tpu.memory_space<vmem>>, %arg5: memref<8x128xf32, #tpu.memory_space<vmem>>, %arg6: memref<8x128xf32, #tpu.memory_space<vmem>>, %arg7: memref<1x128xf32, #tpu.memory_space<vmem>>, %arg8: memref<1x128xf32, #tpu.memory_space<vmem>>, %arg9: memref<3x128x128xbf16, #tpu.memory_space<vmem>>, %arg10: memref<1x128xf32, #tpu.memory_space<vmem>>, %arg11: memref<1x64x128xbf16, #tpu.memory_space<vmem>>, %arg12: memref<1x1x2x128xf32, #tpu.memory_space<vmem>>, %arg13: memref<66x128xf32, #tpu.memory_space<vmem>>) attributes {dimension_semantics = [#tpu.dimension_semantics<parallel>, #tpu.dimension_semantics<parallel>], iteration_bounds = array<i64: 2, 4>, scalar_prefetch = 0 : i64, scratch_operands = 1 : i64, tpu.core_type = #tpu.core_type<tc>, window_params = [{transform_indices = @transform_0, window_bounds = array<i64: 1, 64, 128>}, {transform_indices = @transform_1, window_bounds = array<i64: 1, 8, 128>}, {transform_indices = @transform_2, window_bounds = array<i64: 1, 8, 128>}, {pipeline_mode = #tpu.pipeline_mode<synchronous>, transform_indices = @transform_3, window_bounds = array<i64: 8, 128>}, {pipeline_mode = #tpu.pipeline_mode<synchronous>, transform_indices = @transform_4, window_bounds = array<i64: 8, 128>}, {pipeline_mode = #tpu.pipeline_mode<synchronous>, transform_indices = @transform_5, window_bounds = array<i64: 1, 128>}, {pipeline_mode = #tpu.pipeline_mode<synchronous>, transform_indices = @transform_6, window_bounds = array<i64: 1, 128>}, {pipeline_mode = #tpu.pipeline_mode<synchronous>, transform_indices = @transform_7, window_bounds = array<i64: 3, 128, 128>}, {pipeline_mode = #tpu.pipeline_mode<synchronous>, transform_indices = @transform_8, window_bounds = array<i64: 1, 128>}, {transform_indices = @transform_9, window_bounds = array<i64: 1, 64, 128>}, {transform_indices = @transform_10, window_bounds = array<i64: 1, 1, 2, 128>}]} {
    %c0 = arith.constant 0 : index
    %c0_0 = arith.constant 0 : index
    %0 = vector.load %arg5[%c0, %c0_0] : memref<8x128xf32, #tpu.memory_space<vmem>>, vector<8x128xf32>
    %c0_1 = arith.constant 0 : index
    %c0_2 = arith.constant 0 : index
    %1 = vector.load %arg6[%c0_1, %c0_2] : memref<8x128xf32, #tpu.memory_space<vmem>>, vector<8x128xf32>
    %cst = arith.constant dense<0.000000e+00> : vector<128xf32>
    %2 = vector.multi_reduction <add>, %0, %cst [0] : vector<8x128xf32> to vector<128xf32>
    %3 = vector.shape_cast %2 : vector<128xf32> to vector<1x128xf32>
    %cst_3 = arith.constant 8.000000e+00 : f32
    %4 = vector.broadcast %cst_3 : f32 to vector<1x128xf32>
    %5 = arith.divf %3, %4 : vector<1x128xf32>
    %6 = vector.broadcast %5 : vector<1x128xf32> to vector<8x128xf32>
    %7 = arith.subf %0, %6 : vector<8x128xf32>
    %cst_4 = arith.constant dense<0.000000e+00> : vector<128xf32>
    %8 = vector.multi_reduction <add>, %1, %cst_4 [0] : vector<8x128xf32> to vector<128xf32>
    %9 = vector.shape_cast %8 : vector<128xf32> to vector<1x128xf32>
    %10 = arith.mulf %7, %7 : vector<8x128xf32>
    %cst_5 = arith.constant dense<0.000000e+00> : vector<128xf32>
    %11 = vector.multi_reduction <add>, %10, %cst_5 [0] : vector<8x128xf32> to vector<128xf32>
    %12 = vector.shape_cast %11 : vector<128xf32> to vector<1x128xf32>
    %cst_6 = arith.constant 6.400000e+01 : f32
    %13 = vector.broadcast %cst_6 : f32 to vector<1x128xf32>
    %14 = arith.mulf %13, %12 : vector<1x128xf32>
    %15 = arith.addf %9, %14 : vector<1x128xf32>
    %cst_7 = arith.constant 5.120000e+02 : f32
    %16 = vector.broadcast %cst_7 : f32 to vector<1x128xf32>
    %17 = arith.divf %15, %16 : vector<1x128xf32>
    %c0_8 = arith.constant 0 : index
    %c0_9 = arith.constant 0 : index
    %18 = vector.load %arg7[%c0_8, %c0_9] : memref<1x128xf32, #tpu.memory_space<vmem>>, vector<1x128xf32>
    %cst_10 = arith.constant 9.99999974E-6 : f32
    %19 = vector.broadcast %cst_10 : f32 to vector<1x128xf32>
    %20 = arith.addf %17, %19 : vector<1x128xf32>
    %21 = math.rsqrt %20 : vector<1x128xf32>
    %22 = arith.mulf %18, %21 : vector<1x128xf32>
    %c0_11 = arith.constant 0 : index
    %c0_12 = arith.constant 0 : index
    %23 = vector.load %arg8[%c0_11, %c0_12] : memref<1x128xf32, #tpu.memory_space<vmem>>, vector<1x128xf32>
    %24 = arith.mulf %5, %22 : vector<1x128xf32>
    %25 = arith.subf %23, %24 : vector<1x128xf32>
    %c0_13 = arith.constant 0 : index
    %c0_14 = arith.constant 0 : index
    %c0_15 = arith.constant 0 : index
    %26 = vector.load %arg3[%c0_13, %c0_14, %c0_15] : memref<1x8x128xbf16, #tpu.memory_space<vmem>>, vector<1x8x128xbf16>
    %27 = vector.shape_cast %26 : vector<1x8x128xbf16> to vector<8x128xbf16>
    %28 = arith.extf %27 : vector<8x128xbf16> to vector<8x128xf32>
    %29 = vector.extract_strided_slice %28 {offsets = [7, 0], sizes = [1, 128], strides = [1, 1]} : vector<8x128xf32> to vector<1x128xf32>
    %30 = arith.mulf %29, %22 : vector<1x128xf32>
    %31 = arith.addf %30, %25 : vector<1x128xf32>
    %cst_16 = arith.constant 0.000000e+00 : f32
    %32 = vector.broadcast %cst_16 : f32 to vector<1x128xf32>
    %33 = arith.maximumf %31, %32 : vector<1x128xf32>
    %c0_17 = arith.constant 0 : index
    %c0_18 = arith.constant 0 : index
    %c0_19 = arith.constant 0 : index
    %34 = vector.load %arg4[%c0_17, %c0_18, %c0_19] : memref<1x8x128xbf16, #tpu.memory_space<vmem>>, vector<1x8x128xbf16>
    %35 = vector.shape_cast %34 : vector<1x8x128xbf16> to vector<8x128xbf16>
    %36 = arith.extf %35 : vector<8x128xbf16> to vector<8x128xf32>
    %37 = vector.extract_strided_slice %36 {offsets = [0, 0], sizes = [1, 128], strides = [1, 1]} : vector<8x128xf32> to vector<1x128xf32>
    %38 = arith.mulf %37, %22 : vector<1x128xf32>
    %39 = arith.addf %38, %25 : vector<1x128xf32>
    %cst_20 = arith.constant 0.000000e+00 : f32
    %40 = vector.broadcast %cst_20 : f32 to vector<1x128xf32>
    %41 = arith.maximumf %39, %40 : vector<1x128xf32>
    %cst_21 = arith.constant 0.000000e+00 : f32
    %42 = vector.broadcast %cst_21 : f32 to vector<1x128xf32>
    %c0_i32 = arith.constant 0 : i32
    %43 = arith.cmpi eq, %arg1, %c0_i32 : i32
    %44 = arith.select %43, %42, %33 : vector<1x128xf32>
    %c0_22 = arith.constant 0 : index
    %c0_23 = arith.constant 0 : index
    %45 = vector.load %arg13[%c0_22, %c0_23] : memref<66x128xf32, #tpu.memory_space<vmem>>, vector<1x128xf32>
    tpu.vector_store %arg13[%c0_22, %c0_23], %44 {strides = array<i32>} : memref<66x128xf32, #tpu.memory_space<vmem>>, vector<1x128xf32>,
    %c3_i32 = arith.constant 3 : i32
    %46 = arith.cmpi eq, %arg1, %c3_i32 : i32
    %47 = arith.select %46, %42, %41 : vector<1x128xf32>
    %c65 = arith.constant 65 : index
    %c0_24 = arith.constant 0 : index
    %48 = vector.load %arg13[%c65, %c0_24] : memref<66x128xf32, #tpu.memory_space<vmem>>, vector<1x128xf32>
    tpu.vector_store %arg13[%c65, %c0_24], %47 {strides = array<i32>} : memref<66x128xf32, #tpu.memory_space<vmem>>, vector<1x128xf32>,
    %c0_25 = arith.constant 0 : index
    %c0_26 = arith.constant 0 : index
    %c0_27 = arith.constant 0 : index
    %49 = vector.load %arg2[%c0_25, %c0_26, %c0_27] : memref<1x64x128xbf16, #tpu.memory_space<vmem>>, vector<1x64x128xbf16>
    %50 = vector.shape_cast %49 : vector<1x64x128xbf16> to vector<64x128xbf16>
    %51 = arith.extf %50 : vector<64x128xbf16> to vector<64x128xf32>
    %52 = vector.broadcast %22 : vector<1x128xf32> to vector<64x128xf32>
    %53 = arith.mulf %51, %52 : vector<64x128xf32>
    %54 = vector.broadcast %25 : vector<1x128xf32> to vector<64x128xf32>
    %55 = arith.addf %53, %54 : vector<64x128xf32>
    %cst_28 = arith.constant 0.000000e+00 : f32
    %56 = vector.broadcast %cst_28 : f32 to vector<64x128xf32>
    %57 = arith.maximumf %55, %56 : vector<64x128xf32>
    %c1 = arith.constant 1 : index
    %c0_29 = arith.constant 0 : index
    %58 = vector.load %arg13[%c1, %c0_29] : memref<66x128xf32, #tpu.memory_space<vmem>>, vector<64x128xf32>
    tpu.vector_store %arg13[%c1, %c0_29], %57 {strides = array<i32>} : memref<66x128xf32, #tpu.memory_space<vmem>>, vector<64x128xf32>,
    %c0_30 = arith.constant 0 : index
    %c0_31 = arith.constant 0 : index
    %59 = vector.load %arg10[%c0_30, %c0_31] : memref<1x128xf32, #tpu.memory_space<vmem>>, vector<1x128xf32>
    %c0_32 = arith.constant 0 : index
    %c0_33 = arith.constant 0 : index
    %60 = vector.load %arg13[%c0_32, %c0_33] : memref<66x128xf32, #tpu.memory_space<vmem>>, vector<66x128xf32>
    %61 = vector.extract_strided_slice %60 {offsets = [0, 0], sizes = [64, 128], strides = [1, 1]} : vector<66x128xf32> to vector<64x128xf32>
    %62 = arith.truncf %61 : vector<64x128xf32> to vector<64x128xbf16>
    %c0_34 = arith.constant 0 : index
    %c0_35 = arith.constant 0 : index
    %c0_36 = arith.constant 0 : index
    %63 = vector.load %arg9[%c0_34, %c0_35, %c0_36] : memref<3x128x128xbf16, #tpu.memory_space<vmem>>, vector<1x128x128xbf16>
    %64 = vector.shape_cast %63 : vector<1x128x128xbf16> to vector<128x128xbf16>
    %cst_37 = arith.constant dense<0.000000e+00> : vector<64x128xf32>
    %65 = tpu.matmul %62, %64, %cst_37 {dimension_numbers = #tpu.dot_dimension_numbers<[1], [0], [0], [1], [0, 0, 1, 1], [], []>} : vector<64x128xbf16>, vector<128x128xbf16>, vector<64x128xf32> -> vector<64x128xf32>
    %66 = vector.extract_strided_slice %60 {offsets = [1, 0], sizes = [64, 128], strides = [1, 1]} : vector<66x128xf32> to vector<64x128xf32>
    %67 = arith.truncf %66 : vector<64x128xf32> to vector<64x128xbf16>
    %c1_38 = arith.constant 1 : index
    %c0_39 = arith.constant 0 : index
    %c0_40 = arith.constant 0 : index
    %68 = vector.load %arg9[%c1_38, %c0_39, %c0_40] : memref<3x128x128xbf16, #tpu.memory_space<vmem>>, vector<1x128x128xbf16>
    %69 = vector.shape_cast %68 : vector<1x128x128xbf16> to vector<128x128xbf16>
    %cst_41 = arith.constant dense<0.000000e+00> : vector<64x128xf32>
    %70 = tpu.matmul %67, %69, %cst_41 {dimension_numbers = #tpu.dot_dimension_numbers<[1], [0], [0], [1], [0, 0, 1, 1], [], []>} : vector<64x128xbf16>, vector<128x128xbf16>, vector<64x128xf32> -> vector<64x128xf32>
    %71 = arith.addf %65, %70 : vector<64x128xf32>
    %72 = vector.extract_strided_slice %60 {offsets = [2, 0], sizes = [64, 128], strides = [1, 1]} : vector<66x128xf32> to vector<64x128xf32>
    %73 = arith.truncf %72 : vector<64x128xf32> to vector<64x128xbf16>
    %c2 = arith.constant 2 : index
    %c0_42 = arith.constant 0 : index
    %c0_43 = arith.constant 0 : index
    %74 = vector.load %arg9[%c2, %c0_42, %c0_43] : memref<3x128x128xbf16, #tpu.memory_space<vmem>>, vector<1x128x128xbf16>
    %75 = vector.shape_cast %74 : vector<1x128x128xbf16> to vector<128x128xbf16>
    %cst_44 = arith.constant dense<0.000000e+00> : vector<64x128xf32>
    %76 = tpu.matmul %73, %75, %cst_44 {dimension_numbers = #tpu.dot_dimension_numbers<[1], [0], [0], [1], [0, 0, 1, 1], [], []>} : vector<64x128xbf16>, vector<128x128xbf16>, vector<64x128xf32> -> vector<64x128xf32>
    %77 = arith.addf %71, %76 : vector<64x128xf32>
    %78 = vector.broadcast %59 : vector<1x128xf32> to vector<64x128xf32>
    %79 = arith.addf %77, %78 : vector<64x128xf32>
    %80 = arith.truncf %79 : vector<64x128xf32> to vector<64x128xbf16>
    %c0_45 = arith.constant 0 : index
    %c0_46 = arith.constant 0 : index
    %c0_47 = arith.constant 0 : index
    %81 = vector.load %arg11[%c0_45, %c0_46, %c0_47] : memref<1x64x128xbf16, #tpu.memory_space<vmem>>, vector<1x64x128xbf16>
    %82 = vector.shape_cast %81 : vector<1x64x128xbf16> to vector<64x128xbf16>
    %83 = vector.shape_cast %80 : vector<64x128xbf16> to vector<1x64x128xbf16>
    tpu.vector_store %arg11[%c0_45, %c0_46, %c0_47], %83 {strides = array<i32>} : memref<1x64x128xbf16, #tpu.memory_space<vmem>>, vector<1x64x128xbf16>,
    %cst_48 = arith.constant dense<0.000000e+00> : vector<128xf32>
    %84 = vector.multi_reduction <add>, %79, %cst_48 [0] : vector<64x128xf32> to vector<128xf32>
    %85 = vector.shape_cast %84 : vector<128xf32> to vector<1x128xf32>
    %cst_49 = arith.constant 6.400000e+01 : f32
    %86 = vector.broadcast %cst_49 : f32 to vector<1x128xf32>
    %87 = arith.divf %85, %86 : vector<1x128xf32>
    %88 = vector.broadcast %87 : vector<1x128xf32> to vector<64x128xf32>
    %89 = arith.subf %79, %88 : vector<64x128xf32>
    %c0_50 = arith.constant 0 : index
    %c0_51 = arith.constant 0 : index
    %c0_52 = arith.constant 0 : index
    %c0_53 = arith.constant 0 : index
    %90 = vector.load %arg12[%c0_50, %c0_51, %c0_52, %c0_53] : memref<1x1x2x128xf32, #tpu.memory_space<vmem>>, vector<1x1x1x128xf32>
    %91 = vector.shape_cast %90 : vector<1x1x1x128xf32> to vector<1x128xf32>
    %92 = vector.shape_cast %87 : vector<1x128xf32> to vector<1x1x1x128xf32>
    tpu.vector_store %arg12[%c0_50, %c0_51, %c0_52, %c0_53], %92 {strides = array<i32>} : memref<1x1x2x128xf32, #tpu.memory_space<vmem>>, vector<1x1x1x128xf32>,
    %93 = arith.mulf %89, %89 : vector<64x128xf32>
    %cst_54 = arith.constant dense<0.000000e+00> : vector<128xf32>
    %94 = vector.multi_reduction <add>, %93, %cst_54 [0] : vector<64x128xf32> to vector<128xf32>
    %95 = vector.shape_cast %94 : vector<128xf32> to vector<1x128xf32>
    %c0_55 = arith.constant 0 : index
    %c0_56 = arith.constant 0 : index
    %c1_57 = arith.constant 1 : index
    %c0_58 = arith.constant 0 : index
    %96 = vector.load %arg12[%c0_55, %c0_56, %c1_57, %c0_58] : memref<1x1x2x128xf32, #tpu.memory_space<vmem>>, vector<1x1x1x128xf32>
    %97 = vector.shape_cast %96 : vector<1x1x1x128xf32> to vector<1x128xf32>
    %98 = vector.shape_cast %95 : vector<1x128xf32> to vector<1x1x1x128xf32>
    tpu.vector_store %arg12[%c0_55, %c0_56, %c1_57, %c0_58], %98 {strides = array<i32>} : memref<1x1x2x128xf32, #tpu.memory_space<vmem>>, vector<1x1x1x128xf32>,
    return
  }
  func.func @transform_0(%arg0: i32, %arg1: i32) -> (i32, i32, i32) {
    %c0_i32 = arith.constant 0 : i32
    %c0_i32_0 = arith.constant 0 : i32
    return %arg0, %arg1, %c0_i32 : i32, i32, i32
  }
  func.func @transform_1(%arg0: i32, %arg1: i32) -> (i32, i32, i32) {
    %c8_i32 = arith.constant 8 : i32
    %0 = arith.muli %arg1, %c8_i32 : i32
    %c1_i32 = arith.constant 1 : i32
    %1 = arith.subi %0, %c1_i32 : i32
    %c0_i32 = arith.constant 0 : i32
    %2 = arith.maxsi %1, %c0_i32 : i32
    %c0_i32_0 = arith.constant 0 : i32
    %c0_i32_1 = arith.constant 0 : i32
    return %arg0, %2, %c0_i32_0 : i32, i32, i32
  }
  func.func @transform_2(%arg0: i32, %arg1: i32) -> (i32, i32, i32) {
    %c1_i32 = arith.constant 1 : i32
    %0 = arith.addi %arg1, %c1_i32 : i32
    %c8_i32 = arith.constant 8 : i32
    %1 = arith.muli %0, %c8_i32 : i32
    %c31_i32 = arith.constant 31 : i32
    %2 = arith.minsi %1, %c31_i32 : i32
    %c0_i32 = arith.constant 0 : i32
    %c0_i32_0 = arith.constant 0 : i32
    return %arg0, %2, %c0_i32 : i32, i32, i32
  }
  func.func @transform_3(%arg0: i32, %arg1: i32) -> (i32, i32) {
    %c0_i32 = arith.constant 0 : i32
    %c0_i32_0 = arith.constant 0 : i32
    %c0_i32_1 = arith.constant 0 : i32
    return %c0_i32, %c0_i32_0 : i32, i32
  }
  func.func @transform_4(%arg0: i32, %arg1: i32) -> (i32, i32) {
    %c0_i32 = arith.constant 0 : i32
    %c0_i32_0 = arith.constant 0 : i32
    %c0_i32_1 = arith.constant 0 : i32
    return %c0_i32, %c0_i32_0 : i32, i32
  }
  func.func @transform_5(%arg0: i32, %arg1: i32) -> (i32, i32) {
    %c0_i32 = arith.constant 0 : i32
    %c0_i32_0 = arith.constant 0 : i32
    %c0_i32_1 = arith.constant 0 : i32
    return %c0_i32, %c0_i32_0 : i32, i32
  }
  func.func @transform_6(%arg0: i32, %arg1: i32) -> (i32, i32) {
    %c0_i32 = arith.constant 0 : i32
    %c0_i32_0 = arith.constant 0 : i32
    %c0_i32_1 = arith.constant 0 : i32
    return %c0_i32, %c0_i32_0 : i32, i32
  }
  func.func @transform_7(%arg0: i32, %arg1: i32) -> (i32, i32, i32) {
    %c0_i32 = arith.constant 0 : i32
    %c0_i32_0 = arith.constant 0 : i32
    %c0_i32_1 = arith.constant 0 : i32
    %c0_i32_2 = arith.constant 0 : i32
    return %c0_i32, %c0_i32_0, %c0_i32_1 : i32, i32, i32
  }
  func.func @transform_8(%arg0: i32, %arg1: i32) -> (i32, i32) {
    %c0_i32 = arith.constant 0 : i32
    %c0_i32_0 = arith.constant 0 : i32
    %c0_i32_1 = arith.constant 0 : i32
    return %c0_i32, %c0_i32_0 : i32, i32
  }
  func.func @transform_9(%arg0: i32, %arg1: i32) -> (i32, i32, i32) {
    %c0_i32 = arith.constant 0 : i32
    %c0_i32_0 = arith.constant 0 : i32
    return %arg0, %arg1, %c0_i32 : i32, i32, i32
  }
  func.func @transform_10(%arg0: i32, %arg1: i32) -> (i32, i32, i32, i32) {
    %c0_i32 = arith.constant 0 : i32
    %c0_i32_0 = arith.constant 0 : i32
    %c0_i32_1 = arith.constant 0 : i32
    return %arg0, %arg1, %c0_i32, %c0_i32_0 : i32, i32, i32, i32
  }
}

module attributes {stable_mosaic.version = 11 : i64} {
  func.func @bn_conv_tok_kernel(%arg0: i32, %arg1: i32, %arg2: memref<1x64x128xbf16, #tpu.memory_space<vmem>>, %arg3: memref<1x8x128xbf16, #tpu.memory_space<vmem>>, %arg4: memref<1x8x128xbf16, #tpu.memory_space<vmem>>, %arg5: memref<8x128xf32, #tpu.memory_space<vmem>>, %arg6: memref<8x128xf32, #tpu.memory_space<vmem>>, %arg7: memref<1x128xf32, #tpu.memory_space<vmem>>, %arg8: memref<1x128xf32, #tpu.memory_space<vmem>>, %arg9: memref<3x128x128xbf16, #tpu.memory_space<vmem>>, %arg10: memref<1x128xf32, #tpu.memory_space<vmem>>, %arg11: memref<128x128xbf16, #tpu.memory_space<vmem>>, %arg12: memref<1x128xf32, #tpu.memory_space<vmem>>, %arg13: memref<128x256xbf16, #tpu.memory_space<vmem>>, %arg14: memref<1x256xf32, #tpu.memory_space<vmem>>, %arg15: memref<256x128xbf16, #tpu.memory_space<vmem>>, %arg16: memref<1x64x128xf32, #tpu.memory_space<vmem>>, %arg17: memref<66x128xf32, #tpu.memory_space<vmem>>) attributes {dimension_semantics = [#tpu.dimension_semantics<parallel>, #tpu.dimension_semantics<parallel>], iteration_bounds = array<i64: 2, 4>, scalar_prefetch = 0 : i64, scratch_operands = 1 : i64, tpu.core_type = #tpu.core_type<tc>, window_params = [{transform_indices = @transform_0, window_bounds = array<i64: 1, 64, 128>}, {transform_indices = @transform_1, window_bounds = array<i64: 1, 8, 128>}, {transform_indices = @transform_2, window_bounds = array<i64: 1, 8, 128>}, {pipeline_mode = #tpu.pipeline_mode<synchronous>, transform_indices = @transform_3, window_bounds = array<i64: 8, 128>}, {pipeline_mode = #tpu.pipeline_mode<synchronous>, transform_indices = @transform_4, window_bounds = array<i64: 8, 128>}, {pipeline_mode = #tpu.pipeline_mode<synchronous>, transform_indices = @transform_5, window_bounds = array<i64: 1, 128>}, {pipeline_mode = #tpu.pipeline_mode<synchronous>, transform_indices = @transform_6, window_bounds = array<i64: 1, 128>}, {pipeline_mode = #tpu.pipeline_mode<synchronous>, transform_indices = @transform_7, window_bounds = array<i64: 3, 128, 128>}, {pipeline_mode = #tpu.pipeline_mode<synchronous>, transform_indices = @transform_8, window_bounds = array<i64: 1, 128>}, {pipeline_mode = #tpu.pipeline_mode<synchronous>, transform_indices = @transform_9, window_bounds = array<i64: 128, 128>}, {pipeline_mode = #tpu.pipeline_mode<synchronous>, transform_indices = @transform_10, window_bounds = array<i64: 1, 128>}, {pipeline_mode = #tpu.pipeline_mode<synchronous>, transform_indices = @transform_11, window_bounds = array<i64: 128, 256>}, {pipeline_mode = #tpu.pipeline_mode<synchronous>, transform_indices = @transform_12, window_bounds = array<i64: 1, 256>}, {pipeline_mode = #tpu.pipeline_mode<synchronous>, transform_indices = @transform_13, window_bounds = array<i64: 256, 128>}, {transform_indices = @transform_14, window_bounds = array<i64: 1, 64, 128>}]} {
    %c0 = arith.constant 0 : index
    %c0_0 = arith.constant 0 : index
    %0 = vector.load %arg5[%c0, %c0_0] : memref<8x128xf32, #tpu.memory_space<vmem>>, vector<8x128xf32>
    %c0_1 = arith.constant 0 : index
    %c0_2 = arith.constant 0 : index
    %1 = vector.load %arg6[%c0_1, %c0_2] : memref<8x128xf32, #tpu.memory_space<vmem>>, vector<8x128xf32>
    %cst = arith.constant dense<0.000000e+00> : vector<128xf32>
    %2 = vector.multi_reduction <add>, %0, %cst [0] : vector<8x128xf32> to vector<128xf32>
    %3 = vector.shape_cast %2 : vector<128xf32> to vector<1x128xf32>
    %cst_3 = arith.constant 8.000000e+00 : f32
    %4 = vector.broadcast %cst_3 : f32 to vector<1x128xf32>
    %5 = arith.divf %3, %4 : vector<1x128xf32>
    %6 = vector.broadcast %5 : vector<1x128xf32> to vector<8x128xf32>
    %7 = arith.subf %0, %6 : vector<8x128xf32>
    %cst_4 = arith.constant dense<0.000000e+00> : vector<128xf32>
    %8 = vector.multi_reduction <add>, %1, %cst_4 [0] : vector<8x128xf32> to vector<128xf32>
    %9 = vector.shape_cast %8 : vector<128xf32> to vector<1x128xf32>
    %10 = arith.mulf %7, %7 : vector<8x128xf32>
    %cst_5 = arith.constant dense<0.000000e+00> : vector<128xf32>
    %11 = vector.multi_reduction <add>, %10, %cst_5 [0] : vector<8x128xf32> to vector<128xf32>
    %12 = vector.shape_cast %11 : vector<128xf32> to vector<1x128xf32>
    %cst_6 = arith.constant 6.400000e+01 : f32
    %13 = vector.broadcast %cst_6 : f32 to vector<1x128xf32>
    %14 = arith.mulf %13, %12 : vector<1x128xf32>
    %15 = arith.addf %9, %14 : vector<1x128xf32>
    %cst_7 = arith.constant 5.120000e+02 : f32
    %16 = vector.broadcast %cst_7 : f32 to vector<1x128xf32>
    %17 = arith.divf %15, %16 : vector<1x128xf32>
    %c0_8 = arith.constant 0 : index
    %c0_9 = arith.constant 0 : index
    %18 = vector.load %arg7[%c0_8, %c0_9] : memref<1x128xf32, #tpu.memory_space<vmem>>, vector<1x128xf32>
    %cst_10 = arith.constant 9.99999974E-6 : f32
    %19 = vector.broadcast %cst_10 : f32 to vector<1x128xf32>
    %20 = arith.addf %17, %19 : vector<1x128xf32>
    %21 = math.rsqrt %20 : vector<1x128xf32>
    %22 = arith.mulf %18, %21 : vector<1x128xf32>
    %c0_11 = arith.constant 0 : index
    %c0_12 = arith.constant 0 : index
    %23 = vector.load %arg8[%c0_11, %c0_12] : memref<1x128xf32, #tpu.memory_space<vmem>>, vector<1x128xf32>
    %24 = arith.mulf %5, %22 : vector<1x128xf32>
    %25 = arith.subf %23, %24 : vector<1x128xf32>
    %c0_13 = arith.constant 0 : index
    %c0_14 = arith.constant 0 : index
    %c0_15 = arith.constant 0 : index
    %26 = vector.load %arg3[%c0_13, %c0_14, %c0_15] : memref<1x8x128xbf16, #tpu.memory_space<vmem>>, vector<1x8x128xbf16>
    %27 = vector.shape_cast %26 : vector<1x8x128xbf16> to vector<8x128xbf16>
    %28 = arith.extf %27 : vector<8x128xbf16> to vector<8x128xf32>
    %29 = vector.extract_strided_slice %28 {offsets = [7, 0], sizes = [1, 128], strides = [1, 1]} : vector<8x128xf32> to vector<1x128xf32>
    %30 = arith.mulf %29, %22 : vector<1x128xf32>
    %31 = arith.addf %30, %25 : vector<1x128xf32>
    %cst_16 = arith.constant 0.000000e+00 : f32
    %32 = vector.broadcast %cst_16 : f32 to vector<1x128xf32>
    %33 = arith.maximumf %31, %32 : vector<1x128xf32>
    %c0_17 = arith.constant 0 : index
    %c0_18 = arith.constant 0 : index
    %c0_19 = arith.constant 0 : index
    %34 = vector.load %arg4[%c0_17, %c0_18, %c0_19] : memref<1x8x128xbf16, #tpu.memory_space<vmem>>, vector<1x8x128xbf16>
    %35 = vector.shape_cast %34 : vector<1x8x128xbf16> to vector<8x128xbf16>
    %36 = arith.extf %35 : vector<8x128xbf16> to vector<8x128xf32>
    %37 = vector.extract_strided_slice %36 {offsets = [0, 0], sizes = [1, 128], strides = [1, 1]} : vector<8x128xf32> to vector<1x128xf32>
    %38 = arith.mulf %37, %22 : vector<1x128xf32>
    %39 = arith.addf %38, %25 : vector<1x128xf32>
    %cst_20 = arith.constant 0.000000e+00 : f32
    %40 = vector.broadcast %cst_20 : f32 to vector<1x128xf32>
    %41 = arith.maximumf %39, %40 : vector<1x128xf32>
    %cst_21 = arith.constant 0.000000e+00 : f32
    %42 = vector.broadcast %cst_21 : f32 to vector<1x128xf32>
    %c0_i32 = arith.constant 0 : i32
    %43 = arith.cmpi eq, %arg1, %c0_i32 : i32
    %44 = arith.select %43, %42, %33 : vector<1x128xf32>
    %c0_22 = arith.constant 0 : index
    %c0_23 = arith.constant 0 : index
    %45 = vector.load %arg17[%c0_22, %c0_23] : memref<66x128xf32, #tpu.memory_space<vmem>>, vector<1x128xf32>
    tpu.vector_store %arg17[%c0_22, %c0_23], %44 {strides = array<i32>} : memref<66x128xf32, #tpu.memory_space<vmem>>, vector<1x128xf32>,
    %c3_i32 = arith.constant 3 : i32
    %46 = arith.cmpi eq, %arg1, %c3_i32 : i32
    %47 = arith.select %46, %42, %41 : vector<1x128xf32>
    %c65 = arith.constant 65 : index
    %c0_24 = arith.constant 0 : index
    %48 = vector.load %arg17[%c65, %c0_24] : memref<66x128xf32, #tpu.memory_space<vmem>>, vector<1x128xf32>
    tpu.vector_store %arg17[%c65, %c0_24], %47 {strides = array<i32>} : memref<66x128xf32, #tpu.memory_space<vmem>>, vector<1x128xf32>,
    %c0_25 = arith.constant 0 : index
    %c0_26 = arith.constant 0 : index
    %c0_27 = arith.constant 0 : index
    %49 = vector.load %arg2[%c0_25, %c0_26, %c0_27] : memref<1x64x128xbf16, #tpu.memory_space<vmem>>, vector<1x64x128xbf16>
    %50 = vector.shape_cast %49 : vector<1x64x128xbf16> to vector<64x128xbf16>
    %51 = arith.extf %50 : vector<64x128xbf16> to vector<64x128xf32>
    %52 = vector.broadcast %22 : vector<1x128xf32> to vector<64x128xf32>
    %53 = arith.mulf %51, %52 : vector<64x128xf32>
    %54 = vector.broadcast %25 : vector<1x128xf32> to vector<64x128xf32>
    %55 = arith.addf %53, %54 : vector<64x128xf32>
    %cst_28 = arith.constant 0.000000e+00 : f32
    %56 = vector.broadcast %cst_28 : f32 to vector<64x128xf32>
    %57 = arith.maximumf %55, %56 : vector<64x128xf32>
    %c1 = arith.constant 1 : index
    %c0_29 = arith.constant 0 : index
    %58 = vector.load %arg17[%c1, %c0_29] : memref<66x128xf32, #tpu.memory_space<vmem>>, vector<64x128xf32>
    tpu.vector_store %arg17[%c1, %c0_29], %57 {strides = array<i32>} : memref<66x128xf32, #tpu.memory_space<vmem>>, vector<64x128xf32>,
    %c0_30 = arith.constant 0 : index
    %c0_31 = arith.constant 0 : index
    %59 = vector.load %arg10[%c0_30, %c0_31] : memref<1x128xf32, #tpu.memory_space<vmem>>, vector<1x128xf32>
    %c0_32 = arith.constant 0 : index
    %c0_33 = arith.constant 0 : index
    %60 = vector.load %arg17[%c0_32, %c0_33] : memref<66x128xf32, #tpu.memory_space<vmem>>, vector<66x128xf32>
    %61 = vector.extract_strided_slice %60 {offsets = [0, 0], sizes = [64, 128], strides = [1, 1]} : vector<66x128xf32> to vector<64x128xf32>
    %62 = arith.truncf %61 : vector<64x128xf32> to vector<64x128xbf16>
    %c0_34 = arith.constant 0 : index
    %c0_35 = arith.constant 0 : index
    %c0_36 = arith.constant 0 : index
    %63 = vector.load %arg9[%c0_34, %c0_35, %c0_36] : memref<3x128x128xbf16, #tpu.memory_space<vmem>>, vector<1x128x128xbf16>
    %64 = vector.shape_cast %63 : vector<1x128x128xbf16> to vector<128x128xbf16>
    %cst_37 = arith.constant dense<0.000000e+00> : vector<64x128xf32>
    %65 = tpu.matmul %62, %64, %cst_37 {dimension_numbers = #tpu.dot_dimension_numbers<[1], [0], [0], [1], [0, 0, 1, 1], [], []>} : vector<64x128xbf16>, vector<128x128xbf16>, vector<64x128xf32> -> vector<64x128xf32>
    %66 = vector.extract_strided_slice %60 {offsets = [1, 0], sizes = [64, 128], strides = [1, 1]} : vector<66x128xf32> to vector<64x128xf32>
    %67 = arith.truncf %66 : vector<64x128xf32> to vector<64x128xbf16>
    %c1_38 = arith.constant 1 : index
    %c0_39 = arith.constant 0 : index
    %c0_40 = arith.constant 0 : index
    %68 = vector.load %arg9[%c1_38, %c0_39, %c0_40] : memref<3x128x128xbf16, #tpu.memory_space<vmem>>, vector<1x128x128xbf16>
    %69 = vector.shape_cast %68 : vector<1x128x128xbf16> to vector<128x128xbf16>
    %cst_41 = arith.constant dense<0.000000e+00> : vector<64x128xf32>
    %70 = tpu.matmul %67, %69, %cst_41 {dimension_numbers = #tpu.dot_dimension_numbers<[1], [0], [0], [1], [0, 0, 1, 1], [], []>} : vector<64x128xbf16>, vector<128x128xbf16>, vector<64x128xf32> -> vector<64x128xf32>
    %71 = arith.addf %65, %70 : vector<64x128xf32>
    %72 = vector.extract_strided_slice %60 {offsets = [2, 0], sizes = [64, 128], strides = [1, 1]} : vector<66x128xf32> to vector<64x128xf32>
    %73 = arith.truncf %72 : vector<64x128xf32> to vector<64x128xbf16>
    %c2 = arith.constant 2 : index
    %c0_42 = arith.constant 0 : index
    %c0_43 = arith.constant 0 : index
    %74 = vector.load %arg9[%c2, %c0_42, %c0_43] : memref<3x128x128xbf16, #tpu.memory_space<vmem>>, vector<1x128x128xbf16>
    %75 = vector.shape_cast %74 : vector<1x128x128xbf16> to vector<128x128xbf16>
    %cst_44 = arith.constant dense<0.000000e+00> : vector<64x128xf32>
    %76 = tpu.matmul %73, %75, %cst_44 {dimension_numbers = #tpu.dot_dimension_numbers<[1], [0], [0], [1], [0, 0, 1, 1], [], []>} : vector<64x128xbf16>, vector<128x128xbf16>, vector<64x128xf32> -> vector<64x128xf32>
    %77 = arith.addf %71, %76 : vector<64x128xf32>
    %78 = vector.broadcast %59 : vector<1x128xf32> to vector<64x128xf32>
    %79 = arith.addf %77, %78 : vector<64x128xf32>
    %80 = arith.truncf %79 : vector<64x128xf32> to vector<64x128xbf16>
    %c0_45 = arith.constant 0 : index
    %c0_46 = arith.constant 0 : index
    %81 = vector.load %arg11[%c0_45, %c0_46] : memref<128x128xbf16, #tpu.memory_space<vmem>>, vector<128x128xbf16>
    %cst_47 = arith.constant dense<0.000000e+00> : vector<64x128xf32>
    %82 = tpu.matmul %80, %81, %cst_47 {dimension_numbers = #tpu.dot_dimension_numbers<[1], [0], [0], [1], [0, 0, 1, 1], [], []>} : vector<64x128xbf16>, vector<128x128xbf16>, vector<64x128xf32> -> vector<64x128xf32>
    %c0_48 = arith.constant 0 : index
    %c0_49 = arith.constant 0 : index
    %83 = vector.load %arg12[%c0_48, %c0_49] : memref<1x128xf32, #tpu.memory_space<vmem>>, vector<1x128xf32>
    %84 = vector.broadcast %83 : vector<1x128xf32> to vector<64x128xf32>
    %85 = arith.addf %82, %84 : vector<64x128xf32>
    %cst_50 = arith.constant 0.000000e+00 : f32
    %86 = vector.broadcast %cst_50 : f32 to vector<64x128xf32>
    %87 = arith.maximumf %85, %86 : vector<64x128xf32>
    %88 = arith.truncf %87 : vector<64x128xf32> to vector<64x128xbf16>
    %c0_51 = arith.constant 0 : index
    %c0_52 = arith.constant 0 : index
    %89 = vector.load %arg13[%c0_51, %c0_52] : memref<128x256xbf16, #tpu.memory_space<vmem>>, vector<128x256xbf16>
    %cst_53 = arith.constant dense<0.000000e+00> : vector<64x256xf32>
    %90 = tpu.matmul %88, %89, %cst_53 {dimension_numbers = #tpu.dot_dimension_numbers<[1], [0], [0], [1], [0, 0, 1, 1], [], []>} : vector<64x128xbf16>, vector<128x256xbf16>, vector<64x256xf32> -> vector<64x256xf32>
    %c0_54 = arith.constant 0 : index
    %c0_55 = arith.constant 0 : index
    %91 = vector.load %arg14[%c0_54, %c0_55] : memref<1x256xf32, #tpu.memory_space<vmem>>, vector<1x256xf32>
    %92 = vector.broadcast %91 : vector<1x256xf32> to vector<64x256xf32>
    %93 = arith.addf %90, %92 : vector<64x256xf32>
    %94 = tpu.iota {dimensions = array<i32: 1>} : vector<64x256xi32>
    %cst_56 = arith.constant dense<0xFF800000> : vector<64xf32>
    %95 = vector.multi_reduction <maximumf>, %93, %cst_56 [1] : vector<64x256xf32> to vector<64xf32>
    %96 = vector.shape_cast %95 : vector<64xf32> to vector<64x1xf32>
    %97 = vector.broadcast %96 : vector<64x1xf32> to vector<64x256xf32>
    %98 = arith.cmpf oeq, %93, %97 : vector<64x256xf32>
    %c256_i32 = arith.constant 256 : i32
    %99 = vector.broadcast %c256_i32 : i32 to vector<64x256xi32>
    %100 = arith.select %98, %94, %99 : vector<64x256xi1>, vector<64x256xi32>
    %cst_57 = arith.constant dense<2147483647> : vector<64xi32>
    %101 = vector.multi_reduction <minsi>, %100, %cst_57 [1] : vector<64x256xi32> to vector<64xi32>
    %102 = vector.shape_cast %101 : vector<64xi32> to vector<64x1xi32>
    %103 = vector.broadcast %102 : vector<64x1xi32> to vector<64x256xi32>
    %104 = arith.cmpi eq, %94, %103 : vector<64x256xi32>
    %105 = arith.extui %104 : vector<64x256xi1> to vector<64x256xi32>
    %106 = arith.sitofp %105 : vector<64x256xi32> to vector<64x256xf32>
    %107 = arith.truncf %106 : vector<64x256xf32> to vector<64x256xbf16>
    %c0_58 = arith.constant 0 : index
    %c0_59 = arith.constant 0 : index
    %108 = vector.load %arg15[%c0_58, %c0_59] : memref<256x128xbf16, #tpu.memory_space<vmem>>, vector<256x128xbf16>
    %cst_60 = arith.constant dense<0.000000e+00> : vector<64x128xf32>
    %109 = tpu.matmul %107, %108, %cst_60 {dimension_numbers = #tpu.dot_dimension_numbers<[1], [0], [0], [1], [0, 0, 1, 1], [], []>} : vector<64x256xbf16>, vector<256x128xbf16>, vector<64x128xf32> -> vector<64x128xf32>
    %c0_61 = arith.constant 0 : index
    %c0_62 = arith.constant 0 : index
    %c0_63 = arith.constant 0 : index
    %110 = vector.load %arg16[%c0_61, %c0_62, %c0_63] : memref<1x64x128xf32, #tpu.memory_space<vmem>>, vector<1x64x128xf32>
    %111 = vector.shape_cast %110 : vector<1x64x128xf32> to vector<64x128xf32>
    %112 = vector.shape_cast %109 : vector<64x128xf32> to vector<1x64x128xf32>
    tpu.vector_store %arg16[%c0_61, %c0_62, %c0_63], %112 {strides = array<i32>} : memref<1x64x128xf32, #tpu.memory_space<vmem>>, vector<1x64x128xf32>,
    return
  }
  func.func @transform_0(%arg0: i32, %arg1: i32) -> (i32, i32, i32) {
    %c0_i32 = arith.constant 0 : i32
    %c0_i32_0 = arith.constant 0 : i32
    return %arg0, %arg1, %c0_i32 : i32, i32, i32
  }
  func.func @transform_1(%arg0: i32, %arg1: i32) -> (i32, i32, i32) {
    %c8_i32 = arith.constant 8 : i32
    %0 = arith.muli %arg1, %c8_i32 : i32
    %c1_i32 = arith.constant 1 : i32
    %1 = arith.subi %0, %c1_i32 : i32
    %c0_i32 = arith.constant 0 : i32
    %2 = arith.maxsi %1, %c0_i32 : i32
    %c0_i32_0 = arith.constant 0 : i32
    %c0_i32_1 = arith.constant 0 : i32
    return %arg0, %2, %c0_i32_0 : i32, i32, i32
  }
  func.func @transform_2(%arg0: i32, %arg1: i32) -> (i32, i32, i32) {
    %c1_i32 = arith.constant 1 : i32
    %0 = arith.addi %arg1, %c1_i32 : i32
    %c8_i32 = arith.constant 8 : i32
    %1 = arith.muli %0, %c8_i32 : i32
    %c31_i32 = arith.constant 31 : i32
    %2 = arith.minsi %1, %c31_i32 : i32
    %c0_i32 = arith.constant 0 : i32
    %c0_i32_0 = arith.constant 0 : i32
    return %arg0, %2, %c0_i32 : i32, i32, i32
  }
  func.func @transform_3(%arg0: i32, %arg1: i32) -> (i32, i32) {
    %c0_i32 = arith.constant 0 : i32
    %c0_i32_0 = arith.constant 0 : i32
    %c0_i32_1 = arith.constant 0 : i32
    return %c0_i32, %c0_i32_0 : i32, i32
  }
  func.func @transform_4(%arg0: i32, %arg1: i32) -> (i32, i32) {
    %c0_i32 = arith.constant 0 : i32
    %c0_i32_0 = arith.constant 0 : i32
    %c0_i32_1 = arith.constant 0 : i32
    return %c0_i32, %c0_i32_0 : i32, i32
  }
  func.func @transform_5(%arg0: i32, %arg1: i32) -> (i32, i32) {
    %c0_i32 = arith.constant 0 : i32
    %c0_i32_0 = arith.constant 0 : i32
    %c0_i32_1 = arith.constant 0 : i32
    return %c0_i32, %c0_i32_0 : i32, i32
  }
  func.func @transform_6(%arg0: i32, %arg1: i32) -> (i32, i32) {
    %c0_i32 = arith.constant 0 : i32
    %c0_i32_0 = arith.constant 0 : i32
    %c0_i32_1 = arith.constant 0 : i32
    return %c0_i32, %c0_i32_0 : i32, i32
  }
  func.func @transform_7(%arg0: i32, %arg1: i32) -> (i32, i32, i32) {
    %c0_i32 = arith.constant 0 : i32
    %c0_i32_0 = arith.constant 0 : i32
    %c0_i32_1 = arith.constant 0 : i32
    %c0_i32_2 = arith.constant 0 : i32
    return %c0_i32, %c0_i32_0, %c0_i32_1 : i32, i32, i32
  }
  func.func @transform_8(%arg0: i32, %arg1: i32) -> (i32, i32) {
    %c0_i32 = arith.constant 0 : i32
    %c0_i32_0 = arith.constant 0 : i32
    %c0_i32_1 = arith.constant 0 : i32
    return %c0_i32, %c0_i32_0 : i32, i32
  }
  func.func @transform_9(%arg0: i32, %arg1: i32) -> (i32, i32) {
    %c0_i32 = arith.constant 0 : i32
    %c0_i32_0 = arith.constant 0 : i32
    %c0_i32_1 = arith.constant 0 : i32
    return %c0_i32, %c0_i32_0 : i32, i32
  }
  func.func @transform_10(%arg0: i32, %arg1: i32) -> (i32, i32) {
    %c0_i32 = arith.constant 0 : i32
    %c0_i32_0 = arith.constant 0 : i32
    %c0_i32_1 = arith.constant 0 : i32
    return %c0_i32, %c0_i32_0 : i32, i32
  }
  func.func @transform_11(%arg0: i32, %arg1: i32) -> (i32, i32) {
    %c0_i32 = arith.constant 0 : i32
    %c0_i32_0 = arith.constant 0 : i32
    %c0_i32_1 = arith.constant 0 : i32
    return %c0_i32, %c0_i32_0 : i32, i32
  }
  func.func @transform_12(%arg0: i32, %arg1: i32) -> (i32, i32) {
    %c0_i32 = arith.constant 0 : i32
    %c0_i32_0 = arith.constant 0 : i32
    %c0_i32_1 = arith.constant 0 : i32
    return %c0_i32, %c0_i32_0 : i32, i32
  }
  func.func @transform_13(%arg0: i32, %arg1: i32) -> (i32, i32) {
    %c0_i32 = arith.constant 0 : i32
    %c0_i32_0 = arith.constant 0 : i32
    %c0_i32_1 = arith.constant 0 : i32
    return %c0_i32, %c0_i32_0 : i32, i32
  }
  func.func @transform_14(%arg0: i32, %arg1: i32) -> (i32, i32, i32) {
    %c0_i32 = arith.constant 0 : i32
    %c0_i32_0 = arith.constant 0 : i32
    return %arg0, %arg1, %c0_i32 : i32, i32, i32
  }
}

</mosaic_0001>

<llo_original>
// kernel: audio_processing_tokenizer_forward.4
$region0: #{audio_processing_tokenizer_forward.4}
  #allocation0 [shape = 'u32[]', space=smem, size = 0x4, offset = 0x4, fixed_abs, tag = 'smem constant byte address 0x4 - core index']
  #allocation1 [shape = 'u32[144,128]{1,0:T(1,128)}', space=vmem, size = 0x12000, scoped, tag = 'internal scratch']
  #allocation2 [shape = 'f32[66,128]{1,0:T(8,128)}', space=vmem, size = 0x9000, scoped, tag = 'scratch operand']
  %s0 = inlined_call_operand.vmem [shape: bf16[2,256,128], index: 0, kind: input, shape index: {}, may-alias: {0,1,2}]
  %s1 = inlined_call_operand.vmem [shape: bf16[2,256,128], index: 1, kind: input, shape index: {}, may-alias: {0,1,2}]
  %s2 = inlined_call_operand.vmem [shape: bf16[2,256,128], index: 2, kind: input, shape index: {}, may-alias: {0,1,2}]
  %s3 = inlined_call_operand.vmem [shape: f32[8,128], index: 3, kind: input, shape index: {}]
  %s4 = inlined_call_operand.vmem [shape: f32[8,128], index: 4, kind: input, shape index: {}]
  %s5 = inlined_call_operand.vmem [shape: f32[1,128], index: 5, kind: input, shape index: {}]
  %s6 = inlined_call_operand.vmem [shape: f32[1,128], index: 6, kind: input, shape index: {}]
  %s7 = inlined_call_operand.vmem [shape: bf16[3,128,128], index: 7, kind: input, shape index: {}]
  %s8 = inlined_call_operand.vmem [shape: f32[1,128], index: 8, kind: input, shape index: {}]
  %s9 = inlined_call_operand.vmem [shape: bf16[2,256,128], index: 9, kind: output, shape index: {0}]
  %s10 = inlined_call_operand.vmem [shape: f32[2,4,2,128], index: 10, kind: output, shape index: {1}]
  %11 = xla_tuple %s9, %s10
  %s12 = sld [smem:[#allocation0]]
  $region77: #{audio_processing_tokenizer_forward.4} parent=0
    _
  %s14 = ssub.s32 1, %s12
  %s15 = scalar_select 0, %s14, %s12
  loop: start=0, step=1, limit=10
  $region2: #{audio_processing_tokenizer_forward.4} parent=0 // loop_pre_header
    _
  $region3: #{audio_processing_tokenizer_forward.4} parent=0 // loop_header
    %s17 = sphi 0, %s21
    %p18 = scmp.ge.s32.totalorder %s17, 10
    %s24 = sphi 0, %s36
    %s25 = sphi 0, %s32
    %s26 = sphi 0, %s24
    %s27 = sphi 0, %s25
    %s28 = sphi 0, %s26
    %s29 = sphi 0, %s27
    %s41 = sphi 0, %s43
    %s44 = sphi 0, %s41
    %s45 = sphi 0, %s44
    %s61 = sphi 0, %s45
    %s77 = sphi 0, %s79
    %s80 = sphi 0, %s77
    %s81 = sphi 0, %s80
    %s97 = sphi 0, %s81
    %s113 = sphi 0, %s115
    %s116 = sphi 0, %s113
    %s117 = sphi 0, %s116
    %s133 = sphi 0, %s117
    %s137 = sphi 0, %s137
    %s139 = sphi 0, %s137
    %s140 = sphi 0, %s139
    %s154 = sphi 0, %s140
    %s158 = sphi 0, %s158
    %s160 = sphi 0, %s158
    %s161 = sphi 0, %s160
    %s175 = sphi 0, %s161
    %s179 = sphi 0, %s179
    %s181 = sphi 0, %s179
    %s182 = sphi 0, %s181
    %s196 = sphi 0, %s182
    %s200 = sphi 0, %s200
    %s202 = sphi 0, %s200
    %s203 = sphi 0, %s202
    %s217 = sphi 0, %s203
    %s221 = sphi 0, %s221
    %s223 = sphi 0, %s221
    %s224 = sphi 0, %s223
    %s238 = sphi 0, %s224
    %s242 = sphi 0, %s242
    %s244 = sphi 0, %s242
    %s245 = sphi 0, %s244
    %s259 = sphi 0, %s245
    %s267 = sphi 0, %s269
    %s270 = sphi 0, %s267
    %s271 = sphi 0, %s270
    %s287 = sphi 0, %s271
    %s295 = sphi 0, %s297
    %s298 = sphi 0, %s295
    %s299 = sphi 0, %s298
    %s315 = sphi 0, %s299
  $region4: #{audio_processing_tokenizer_forward.4} parent=0 // loop_header_branch
    %20 = sbr.rel (%p18) target = $region8
  $region5: #{audio_processing_tokenizer_forward.4} parent=0 // loop_body
    %s22 = ssub.s32 %s17, 1
    %s23 = ssub.s32 %s17, 2
    %s30 = sadd.s32 1, %s25
    %p31 = scmp.ge.s32.totalorder %s30, 4
    %s32 = scalar_select %p31, 0, %s30
    %s33 = sadd.s32 1, %s24
    %s34 = scalar_select %p31, %s33, %s24
    %p35 = scmp.ge.s32.totalorder %s34, 2
    %s36 = scalar_select %p35, 0, %s34
    %s37 = ssub.s32 %s24, %s36
    %s38 = ssub.s32 %s25, %s32
    %s39 = sor.u32 %s37, %s38
    %p40 = scmp.eq.s32.totalorder %s39, 0
    %s42 = sadd.s32 %s41, 1
    %s43 = scalar_select %p40, %s41, %s42
    %p46 = pneg %p40
    %p47 = scmp.eq.s32.totalorder %s17, 7
    %p48 = por %p46, %p47
    %p49 = scmp.ne.s32.totalorder %s41, %s44
    %p50 = scmp.eq.s32.totalorder %s17, 0
    %p51 = por %p49, %p50
    %p52 = scmp.ne.s32.totalorder %s41, %s44
    %p53 = scmp.eq.s32.totalorder %s22, 7
    %p54 = por %p52, %p53
    %p55 = scmp.ne.s32.totalorder %s44, %s45
    %p56 = scmp.eq.s32.totalorder %s22, 0
    %p57 = por %p55, %p56
    %p58 = scmp.ne.s32.totalorder %s44, %s45
    %p59 = scmp.eq.s32.totalorder %s23, 7
    %p60 = por %p58, %p59
    %p62 = scmp.ne.s32.totalorder %s45, %s61
    %p63 = scmp.eq.s32.totalorder %s23, 0
    %p64 = por %p62, %p63
    %s65 = smul.u32 %s25, 8
    %s66 = ssub.s32 %s65, 1
    %p67 = scmp.gt.s32.totalorder %s66, 0
    %s68 = scalar_select %p67, %s66, 0
    %s69 = smul.u32 %s32, 8
    %s70 = ssub.s32 %s69, 1
    %p71 = scmp.gt.s32.totalorder %s70, 0
    %s72 = scalar_select %p71, %s70, 0
    %s73 = ssub.s32 %s24, %s36
    %s74 = ssub.s32 %s68, %s72
    %s75 = sor.u32 %s73, %s74
    %p76 = scmp.eq.s32.totalorder %s75, 0
    %s78 = sadd.s32 %s77, 1
    %s79 = scalar_select %p76, %s77, %s78
    %p82 = pneg %p76
    %p83 = scmp.eq.s32.totalorder %s17, 7
    %p84 = por %p82, %p83
    %p85 = scmp.ne.s32.totalorder %s77, %s80
    %p86 = scmp.eq.s32.totalorder %s17, 0
    %p87 = por %p85, %p86
    %p88 = scmp.ne.s32.totalorder %s77, %s80
    %p89 = scmp.eq.s32.totalorder %s22, 7
    %p90 = por %p88, %p89
    %p91 = scmp.ne.s32.totalorder %s80, %s81
    %p92 = scmp.eq.s32.totalorder %s22, 0
    %p93 = por %p91, %p92
    %p94 = scmp.ne.s32.totalorder %s80, %s81
    %p95 = scmp.eq.s32.totalorder %s23, 7
    %p96 = por %p94, %p95
    %p98 = scmp.ne.s32.totalorder %s81, %s97
    %p99 = scmp.eq.s32.totalorder %s23, 0
    %p100 = por %p98, %p99
    %s101 = sadd.s32 %s25, 1
    %s102 = smul.u32 %s101, 8
    %p103 = scmp.lt.s32.totalorder %s102, 31
    %s104 = scalar_select %p103, %s102, 31
    %s105 = sadd.s32 %s32, 1
    %s106 = smul.u32 %s105, 8
    %p107 = scmp.lt.s32.totalorder %s106, 31
    %s108 = scalar_select %p107, %s106, 31
    %s109 = ssub.s32 %s24, %s36
    %s110 = ssub.s32 %s104, %s108
    %s111 = sor.u32 %s109, %s110
    %p112 = scmp.eq.s32.totalorder %s111, 0
    %s114 = sadd.s32 %s113, 1
    %s115 = scalar_select %p112, %s113, %s114
    %p118 = pneg %p112
    %p119 = scmp.eq.s32.totalorder %s17, 7
    %p120 = por %p118, %p119
    %p121 = scmp.ne.s32.totalorder %s113, %s116
    %p122 = scmp.eq.s32.totalorder %s17, 0
    %p123 = por %p121, %p122
    %p124 = scmp.ne.s32.totalorder %s113, %s116
    %p125 = scmp.eq.s32.totalorder %s22, 7
    %p126 = por %p124, %p125
    %p127 = scmp.ne.s32.totalorder %s116, %s117
    %p128 = scmp.eq.s32.totalorder %s22, 0
    %p129 = por %p127, %p128
    %p130 = scmp.ne.s32.totalorder %s116, %s117
    %p131 = scmp.eq.s32.totalorder %s23, 7
    %p132 = por %p130, %p131
    %p134 = scmp.ne.s32.totalorder %s117, %s133
    %p135 = scmp.eq.s32.totalorder %s23, 0
    %p136 = por %p134, %p135
    %s138 = sadd.s32 %s137, 1
    %p141 = scmp.eq.s32.totalorder %s17, 7
    %p142 = scmp.ne.s32.totalorder %s137, %s139
    %p143 = scmp.eq.s32.totalorder %s17, 0
    %p144 = por %p142, %p143
    %p145 = scmp.ne.s32.totalorder %s137, %s139
    %p146 = scmp.eq.s32.totalorder %s22, 7
    %p147 = por %p145, %p146
    %p148 = scmp.ne.s32.totalorder %s139, %s140
    %p149 = scmp.eq.s32.totalorder %s22, 0
    %p150 = por %p148, %p149
    %p151 = scmp.ne.s32.totalorder %s139, %s140
    %p152 = scmp.eq.s32.totalorder %s23, 7
    %p153 = por %p151, %p152
    %p155 = scmp.ne.s32.totalorder %s140, %s154
    %p156 = scmp.eq.s32.totalorder %s23, 0
    %p157 = por %p155, %p156
    %s159 = sadd.s32 %s158, 1
    %p162 = scmp.eq.s32.totalorder %s17, 7
    %p163 = scmp.ne.s32.totalorder %s158, %s160
    %p164 = scmp.eq.s32.totalorder %s17, 0
    %p165 = por %p163, %p164
    %p166 = scmp.ne.s32.totalorder %s158, %s160
    %p167 = scmp.eq.s32.totalorder %s22, 7
    %p168 = por %p166, %p167
    %p169 = scmp.ne.s32.totalorder %s160, %s161
    %p170 = scmp.eq.s32.totalorder %s22, 0
    %p171 = por %p169, %p170
    %p172 = scmp.ne.s32.totalorder %s160, %s161
    %p173 = scmp.eq.s32.totalorder %s23, 7
    %p174 = por %p172, %p173
    %p176 = scmp.ne.s32.totalorder %s161, %s175
    %p177 = scmp.eq.s32.totalorder %s23, 0
    %p178 = por %p176, %p177
    %s180 = sadd.s32 %s179, 1
    %p183 = scmp.eq.s32.totalorder %s17, 7
    %p184 = scmp.ne.s32.totalorder %s179, %s181
    %p185 = scmp.eq.s32.totalorder %s17, 0
    %p186 = por %p184, %p185
    %p187 = scmp.ne.s32.totalorder %s179, %s181
    %p188 = scmp.eq.s32.totalorder %s22, 7
    %p189 = por %p187, %p188
    %p190 = scmp.ne.s32.totalorder %s181, %s182
    %p191 = scmp.eq.s32.totalorder %s22, 0
    %p192 = por %p190, %p191
    %p193 = scmp.ne.s32.totalorder %s181, %s182
    %p194 = scmp.eq.s32.totalorder %s23, 7
    %p195 = por %p193, %p194
    %p197 = scmp.ne.s32.totalorder %s182, %s196
    %p198 = scmp.eq.s32.totalorder %s23, 0
    %p199 = por %p197, %p198
    %s201 = sadd.s32 %s200, 1
    %p204 = scmp.eq.s32.totalorder %s17, 7
    %p205 = scmp.ne.s32.totalorder %s200, %s202
    %p206 = scmp.eq.s32.totalorder %s17, 0
    %p207 = por %p205, %p206
    %p208 = scmp.ne.s32.totalorder %s200, %s202
    %p209 = scmp.eq.s32.totalorder %s22, 7
    %p210 = por %p208, %p209
    %p211 = scmp.ne.s32.totalorder %s202, %s203
    %p212 = scmp.eq.s32.totalorder %s22, 0
    %p213 = por %p211, %p212
    %p214 = scmp.ne.s32.totalorder %s202, %s203
    %p215 = scmp.eq.s32.totalorder %s23, 7
    %p216 = por %p214, %p215
    %p218 = scmp.ne.s32.totalorder %s203, %s217
    %p219 = scmp.eq.s32.totalorder %s23, 0
    %p220 = por %p218, %p219
    %s222 = sadd.s32 %s221, 1
    %p225 = scmp.eq.s32.totalorder %s17, 7
    %p226 = scmp.ne.s32.totalorder %s221, %s223
    %p227 = scmp.eq.s32.totalorder %s17, 0
    %p228 = por %p226, %p227
    %p229 = scmp.ne.s32.totalorder %s221, %s223
    %p230 = scmp.eq.s32.totalorder %s22, 7
    %p231 = por %p229, %p230
    %p232 = scmp.ne.s32.totalorder %s223, %s224
    %p233 = scmp.eq.s32.totalorder %s22, 0
    %p234 = por %p232, %p233
    %p235 = scmp.ne.s32.totalorder %s223, %s224
    %p236 = scmp.eq.s32.totalorder %s23, 7
    %p237 = por %p235, %p236
    %p239 = scmp.ne.s32.totalorder %s224, %s238
    %p240 = scmp.eq.s32.totalorder %s23, 0
    %p241 = por %p239, %p240
    %s243 = sadd.s32 %s242, 1
    %p246 = scmp.eq.s32.totalorder %s17, 7
    %p247 = scmp.ne.s32.totalorder %s242, %s244
    %p248 = scmp.eq.s32.totalorder %s17, 0
    %p249 = por %p247, %p248
    %p250 = scmp.ne.s32.totalorder %s242, %s244
    %p251 = scmp.eq.s32.totalorder %s22, 7
    %p252 = por %p250, %p251
    %p253 = scmp.ne.s32.totalorder %s244, %s245
    %p254 = scmp.eq.s32.totalorder %s22, 0
    %p255 = por %p253, %p254
    %p256 = scmp.ne.s32.totalorder %s244, %s245
    %p257 = scmp.eq.s32.totalorder %s23, 7
    %p258 = por %p256, %p257
    %p260 = scmp.ne.s32.totalorder %s245, %s259
    %p261 = scmp.eq.s32.totalorder %s23, 0
    %p262 = por %p260, %p261
    %s263 = ssub.s32 %s24, %s36
    %s264 = ssub.s32 %s25, %s32
    %s265 = sor.u32 %s263, %s264
    %p266 = scmp.eq.s32.totalorder %s265, 0
    %s268 = sadd.s32 %s267, 1
    %s269 = scalar_select %p266, %s267, %s268
    %p272 = pneg %p266
    %p273 = scmp.eq.s32.totalorder %s17, 7
    %p274 = por %p272, %p273
    %p275 = scmp.ne.s32.totalorder %s267, %s270
    %p276 = scmp.eq.s32.totalorder %s17, 0
    %p277 = por %p275, %p276
    %p278 = scmp.ne.s32.totalorder %s267, %s270
    %p279 = scmp.eq.s32.totalorder %s22, 7
    %p280 = por %p278, %p279
    %p281 = scmp.ne.s32.totalorder %s270, %s271
    %p282 = scmp.eq.s32.totalorder %s22, 0
    %p283 = por %p281, %p282
    %p284 = scmp.ne.s32.totalorder %s270, %s271
    %p285 = scmp.eq.s32.totalorder %s23, 7
    %p286 = por %p284, %p285
    %p288 = scmp.ne.s32.totalorder %s271, %s287
    %p289 = scmp.eq.s32.totalorder %s23, 0
    %p290 = por %p288, %p289
    %s291 = ssub.s32 %s24, %s36
    %s292 = ssub.s32 %s25, %s32
    %s293 = sor.u32 %s291, %s292
    %p294 = scmp.eq.s32.totalorder %s293, 0
    %s296 = sadd.s32 %s295, 1
    %s297 = scalar_select %p294, %s295, %s296
    %p300 = pneg %p294
    %p301 = scmp.eq.s32.totalorder %s17, 7
    %p302 = por %p300, %p301
    %p303 = scmp.ne.s32.totalorder %s295, %s298
    %p304 = scmp.eq.s32.totalorder %s17, 0
    %p305 = por %p303, %p304
    %p306 = scmp.ne.s32.totalorder %s295, %s298
    %p307 = scmp.eq.s32.totalorder %s22, 7
    %p308 = por %p306, %p307
    %p309 = scmp.ne.s32.totalorder %s298, %s299
    %p310 = scmp.eq.s32.totalorder %s22, 0
    %p311 = por %p309, %p310
    %p312 = scmp.ne.s32.totalorder %s298, %s299
    %p313 = scmp.eq.s32.totalorder %s23, 7
    %p314 = por %p312, %p313
    %p316 = scmp.ne.s32.totalorder %s299, %s315
    %p317 = scmp.eq.s32.totalorder %s23, 0
    %p318 = por %p316, %p317
    %p319 = scmp.le.s32.totalorder 1, %s17
    %p320 = scmp.lt.s32.totalorder %s17, 9
    %p321 = pnand %p319, %p320
    %p322 = pneg %p321
    // Predicated region
    $region9: #{audio_processing_tokenizer_forward.4} parent=5 // pred_check
      _
    $region10: #{audio_processing_tokenizer_forward.4} parent=5 // pred_check_branch
      %324 = sbr.rel (%p321) target = $region12
    $region11: #{audio_processing_tokenizer_forward.4} parent=5 // pred_region
      %s325 = ssub.s32 %s17, 1
      // Predicated region
      $region13: #{audio_processing_tokenizer_forward.4} parent=11 // pred_check
        %p326 = pneg %p150
      $region14: #{audio_processing_tokenizer_forward.4} parent=11 // pred_check_branch
        %328 = sbr.rel (%p326) target = $region16
      $region15: #{audio_processing_tokenizer_forward.4} parent=11 // pred_region
        _
      $region16: #{audio_processing_tokenizer_forward.4} parent=11 // pred_fallthru
        _
      // Predicated region
      $region17: #{audio_processing_tokenizer_forward.4} parent=11 // pred_check
        %p329 = pneg %p171
      $region18: #{audio_processing_tokenizer_forward.4} parent=11 // pred_check_branch
        %331 = sbr.rel (%p329) target = $region20
      $region19: #{audio_processing_tokenizer_forward.4} parent=11 // pred_region
        _
      $region20: #{audio_processing_tokenizer_forward.4} parent=11 // pred_fallthru
        _
      // Predicated region
      $region21: #{audio_processing_tokenizer_forward.4} parent=11 // pred_check
        %p332 = pneg %p192
      $region22: #{audio_processing_tokenizer_forward.4} parent=11 // pred_check_branch
        %334 = sbr.rel (%p332) target = $region24
      $region23: #{audio_processing_tokenizer_forward.4} parent=11 // pred_region
        _
      $region24: #{audio_processing_tokenizer_forward.4} parent=11 // pred_fallthru
        _
      // Predicated region
      $region25: #{audio_processing_tokenizer_forward.4} parent=11 // pred_check
        %p335 = pneg %p213
      $region26: #{audio_processing_tokenizer_forward.4} parent=11 // pred_check_branch
        %337 = sbr.rel (%p335) target = $region28
      $region27: #{audio_processing_tokenizer_forward.4} parent=11 // pred_region
        _
      $region28: #{audio_processing_tokenizer_forward.4} parent=11 // pred_fallthru
        _
      // Predicated region
      $region29: #{audio_processing_tokenizer_forward.4} parent=11 // pred_check
        %p338 = pneg %p234
      $region30: #{audio_processing_tokenizer_forward.4} parent=11 // pred_check_branch
        %340 = sbr.rel (%p338) target = $region32
      $region31: #{audio_processing_tokenizer_forward.4} parent=11 // pred_region
        _
      $region32: #{audio_processing_tokenizer_forward.4} parent=11 // pred_fallthru
        _
      // Predicated region
      $region33: #{audio_processing_tokenizer_forward.4} parent=11 // pred_check
        %p341 = pneg %p255
      $region34: #{audio_processing_tokenizer_forward.4} parent=11 // pred_check_branch
        %343 = sbr.rel (%p341) target = $region36
      $region35: #{audio_processing_tokenizer_forward.4} parent=11 // pred_region
        _
      $region36: #{audio_processing_tokenizer_forward.4} parent=11 // pred_fallthru
        _
    $region12: #{audio_processing_tokenizer_forward.4} parent=5 // pred_fallthru
      _
    %p344 = scmp.lt.s32.totalorder %s17, 8
    // Predicated region
    $region37: #{audio_processing_tokenizer_forward.4} parent=5 // pred_check
      %p345 = pneg %p344
    $region38: #{audio_processing_tokenizer_forward.4} parent=5 // pred_check_branch
      %347 = sbr.rel (%p345) target = $region40
    $region39: #{audio_processing_tokenizer_forward.4} parent=5 // pred_region
      // Predicated region
      $region41: #{audio_processing_tokenizer_forward.4} parent=39 // pred_check
        %p348 = pneg %p51
      $region42: #{audio_processing_tokenizer_forward.4} parent=39 // pred_check_branch
        %350 = sbr.rel (%p348) target = $region44
      $region43: #{audio_processing_tokenizer_forward.4} parent=39 // pred_region
        %s351 = smul.u32 8, %s25
        %p352 = scmp.lt.s32.totalorder %s24, 1
        %s353 = scalar_select %p352, %s24, 1
        %p354 = scmp.lt.s32.totalorder %s351, 31
        %s355 = scalar_select %p354, %s351, 31
        %s356 = smul.addr %s353, 32
        %s357 = sadd.s32 %s355, %s356
        %s358 = smul.addr %s357, 4
        %s359 = scalar_lea.vmem %s0, %s358
        %s360 = smul.u32 8, %s25
      $region44: #{audio_processing_tokenizer_forward.4} parent=39 // pred_fallthru
        _
      // Predicated region
      $region45: #{audio_processing_tokenizer_forward.4} parent=39 // pred_check
        %p361 = pneg %p87
      $region46: #{audio_processing_tokenizer_forward.4} parent=39 // pred_check_branch
        %363 = sbr.rel (%p361) target = $region48
      $region47: #{audio_processing_tokenizer_forward.4} parent=39 // pred_region
        %s364 = smul.u32 %s25, 8
        %s365 = ssub.s32 %s364, 1
        %p366 = scmp.gt.s32.totalorder %s365, 0
        %s367 = scalar_select %p366, %s365, 0
        %p368 = scmp.lt.s32.totalorder %s24, 1
        %s369 = scalar_select %p368, %s24, 1
        %p370 = scmp.lt.s32.totalorder %s367, 31
        %s371 = scalar_select %p370, %s367, 31
        %s372 = smul.addr %s369, 32
        %s373 = sadd.s32 %s371, %s372
        %s374 = smul.addr %s373, 4
        %s375 = scalar_lea.vmem %s1, %s374
        %s376 = smul.u32 %s25, 8
        %s377 = ssub.s32 %s376, 1
        %p378 = scmp.gt.s32.totalorder %s377, 0
        %s379 = scalar_select %p378, %s377, 0
      $region48: #{audio_processing_tokenizer_forward.4} parent=39 // pred_fallthru
        _
      // Predicated region
      $region49: #{audio_processing_tokenizer_forward.4} parent=39 // pred_check
        %p380 = pneg %p123
      $region50: #{audio_processing_tokenizer_forward.4} parent=39 // pred_check_branch
        %382 = sbr.rel (%p380) target = $region52
      $region51: #{audio_processing_tokenizer_forward.4} parent=39 // pred_region
        %s383 = sadd.s32 %s25, 1
        %s384 = smul.u32 %s383, 8
        %p385 = scmp.lt.s32.totalorder %s384, 31
        %s386 = scalar_select %p385, %s384, 31
        %p387 = scmp.lt.s32.totalorder %s24, 1
        %s388 = scalar_select %p387, %s24, 1
        %p389 = scmp.lt.s32.totalorder %s386, 31
        %s390 = scalar_select %p389, %s386, 31
        %s391 = smul.addr %s388, 32
        %s392 = sadd.s32 %s390, %s391
        %s393 = smul.addr %s392, 4
        %s394 = scalar_lea.vmem %s2, %s393
        %s395 = sadd.s32 %s25, 1
        %s396 = smul.u32 %s395, 8
        %p397 = scmp.lt.s32.totalorder %s396, 31
        %s398 = scalar_select %p397, %s396, 31
      $region52: #{audio_processing_tokenizer_forward.4} parent=39 // pred_fallthru
        _
    $region40: #{audio_processing_tokenizer_forward.4} parent=5 // pred_fallthru
      _
    %p399 = scmp.le.s32.totalorder 1, %s17
    %p400 = scmp.lt.s32.totalorder %s17, 9
    %p401 = pnand %p399, %p400
    %p402 = pneg %p401
    // Predicated region
    $region53: #{audio_processing_tokenizer_forward.4} parent=5 // pred_check
      _
    $region54: #{audio_processing_tokenizer_forward.4} parent=5 // pred_check_branch
      %404 = sbr.rel (%p401) target = $region56
    $region55: #{audio_processing_tokenizer_forward.4} parent=5 // pred_region
      %s405 = ssub.s32 %s17, 1
      %s406 = smul.u32 8, %s27
      %p407 = scmp.lt.s32.totalorder %s26, 1
      %s408 = scalar_select %p407, %s26, 1
      %p409 = scmp.lt.s32.totalorder %s406, 31
      %s410 = scalar_select %p409, %s406, 31
      %s411 = smul.addr %s408, 32
      %s412 = sadd.s32 %s410, %s411
      %s413 = smul.addr %s412, 4
      %s414 = scalar_lea.vmem %s0, %s413
      %p415 = pneg %p57
      %p416 = pneg %p54
      %s417 = smul.u32 %s27, 8
      %s418 = ssub.s32 %s417, 1
      %p419 = scmp.gt.s32.totalorder %s418, 0
      %s420 = scalar_select %p419, %s418, 0
      %p421 = scmp.lt.s32.totalorder %s26, 1
      %s422 = scalar_select %p421, %s26, 1
      %p423 = scmp.lt.s32.totalorder %s420, 31
      %s424 = scalar_select %p423, %s420, 31
      %s425 = smul.addr %s422, 32
      %s426 = sadd.s32 %s424, %s425
      %s427 = smul.addr %s426, 4
      %s428 = scalar_lea.vmem %s1, %s427
      %p429 = pneg %p93
      %p430 = pneg %p90
      %s431 = sadd.s32 %s27, 1
      %s432 = smul.u32 %s431, 8
      %p433 = scmp.lt.s32.totalorder %s432, 31
      %s434 = scalar_select %p433, %s432, 31
      %p435 = scmp.lt.s32.totalorder %s26, 1
      %s436 = scalar_select %p435, %s26, 1
      %p437 = scmp.lt.s32.totalorder %s434, 31
      %s438 = scalar_select %p437, %s434, 31
      %s439 = smul.addr %s436, 32
      %s440 = sadd.s32 %s438, %s439
      %s441 = smul.addr %s440, 4
      %s442 = scalar_lea.vmem %s2, %s441
      %p443 = pneg %p129
      %p444 = pneg %p126
      %p445 = pneg %p150
      %p446 = pneg %p147
      %p447 = pneg %p171
      %p448 = pneg %p168
      %p449 = pneg %p192
      %p450 = pneg %p189
      %p451 = pneg %p213
      %p452 = pneg %p210
      %p453 = pneg %p234
      %p454 = pneg %p231
      %p455 = pneg %p255
      %p456 = pneg %p252
      %p457 = pneg %p283
      %p458 = pneg %p280
      %s459 = smul.u32 8, %s27
      %p460 = scmp.lt.s32.totalorder %s26, 1
      %s461 = scalar_select %p460, %s26, 1
      %p462 = scmp.lt.s32.totalorder %s459, 31
      %s463 = scalar_select %p462, %s459, 31
      %s464 = smul.addr %s461, 32
      %s465 = sadd.s32 %s463, %s464
      %s466 = smul.addr %s465, 4
      %s467 = scalar_lea.vmem %s9, %s466
      %p468 = pneg %p311
      %p469 = pneg %p308
      %p470 = scmp.lt.s32.totalorder %s26, 1
      %s471 = scalar_select %p470, %s26, 1
      %p472 = scmp.lt.s32.totalorder %s27, 3
      %s473 = scalar_select %p472, %s27, 3
      %s474 = smul.addr %s471, 4
      %s475 = sadd.s32 %s473, %s474
      %s476 = smul.addr %s475, 2
      %s477 = scalar_lea.vmem %s10, %s476
      %s478 = smul.u32 8, %s27
      %p479 = scmp.lt.s32.totalorder %s26, 1
      %s480 = scalar_select %p479, %s26, 1
      %p481 = scmp.lt.s32.totalorder %s478, 31
      %s482 = scalar_select %p481, %s478, 31
      %s483 = smul.addr %s480, 32
      %s484 = sadd.s32 %s482, %s483
      %s485 = smul.addr %s484, 4
      %s486 = scalar_lea.vmem %s0, %s485
      %s487 = smul.u32 8, %s27
      %s488 = smul.u32 %s27, 8
      %s489 = ssub.s32 %s488, 1
      %p490 = scmp.gt.s32.totalorder %s489, 0
      %s491 = scalar_select %p490, %s489, 0
      %p492 = scmp.lt.s32.totalorder %s26, 1
      %s493 = scalar_select %p492, %s26, 1
      %p494 = scmp.lt.s32.totalorder %s491, 31
      %s495 = scalar_select %p494, %s491, 31
      %s496 = smul.addr %s493, 32
      %s497 = sadd.s32 %s495, %s496
      %s498 = smul.addr %s497, 4
      %s499 = scalar_lea.vmem %s1, %s498
      %s500 = smul.u32 %s27, 8
      %s501 = ssub.s32 %s500, 1
      %p502 = scmp.gt.s32.totalorder %s501, 0
      %s503 = scalar_select %p502, %s501, 0
      %s504 = sadd.s32 %s27, 1
      %s505 = smul.u32 %s504, 8
      %p506 = scmp.lt.s32.totalorder %s505, 31
      %s507 = scalar_select %p506, %s505, 31
      %p508 = scmp.lt.s32.totalorder %s26, 1
      %s509 = scalar_select %p508, %s26, 1
      %p510 = scmp.lt.s32.totalorder %s507, 31
      %s511 = scalar_select %p510, %s507, 31
      %s512 = smul.addr %s509, 32
      %s513 = sadd.s32 %s511, %s512
      %s514 = smul.addr %s513, 4
      %s515 = scalar_lea.vmem %s2, %s514
      %s516 = sadd.s32 %s27, 1
      %s517 = smul.u32 %s516, 8
      %p518 = scmp.lt.s32.totalorder %s517, 31
      %s519 = scalar_select %p518, %s517, 31
      %s520 = smul.u32 8, %s27
      %p521 = scmp.lt.s32.totalorder %s26, 1
      %s522 = scalar_select %p521, %s26, 1
      %p523 = scmp.lt.s32.totalorder %s520, 31
      %s524 = scalar_select %p523, %s520, 31
      %s525 = smul.addr %s522, 32
      %s526 = sadd.s32 %s524, %s525
      %s527 = smul.addr %s526, 4
      %s528 = scalar_lea.vmem %s9, %s527
      %s529 = smul.u32 8, %s27
      %p530 = scmp.lt.s32.totalorder %s26, 1
      %s531 = scalar_select %p530, %s26, 1
      %p532 = scmp.lt.s32.totalorder %s27, 3
      %s533 = scalar_select %p532, %s27, 3
      %s534 = smul.addr %s531, 4
      %s535 = sadd.s32 %s533, %s534
      %s536 = smul.addr %s535, 2
      %s537 = scalar_lea.vmem %s10, %s536
      %v539 = vld [vmem:[%s3] sm:$0xff]
      %v540 = vld [vmem:[%s4] sm:$0xff]
      %v541 = vrot.slane %v539, 4
      %v542 = vadd.f32 %v539, %v541
      %v543 = vrot.slane %v542, 2
      %v544 = vadd.f32 %v542, %v543
      %v545 = vrot.slane %v544, 1
      %v546 = vadd.f32 %v544, %v545
      %v547 = vrcp.pop 8.0
      %v548 = vmul.f32 %v546, %v547
      %v549 = vsub.f32 %v539, %v548
      %v550 = vrot.slane %v540, 4
      %v551 = vadd.f32 %v540, %v550
      %v552 = vrot.slane %v551, 2
      %v553 = vadd.f32 %v551, %v552
      %v554 = vrot.slane %v553, 1
      %v555 = vadd.f32 %v553, %v554
      %v556 = vmul.f32 %v549, %v549
      %v557 = vrot.slane %v556, 4
      %v558 = vadd.f32 %v556, %v557
      %v559 = vrot.slane %v558, 2
      %v560 = vadd.f32 %v558, %v559
      %v561 = vrot.slane %v560, 1
      %v562 = vadd.f32 %v560, %v561
      %v563 = vmul.f32 %v562, 64.0
      %v564 = vadd.f32 %v555, %v563
      %v565 = vrcp.pop 512.0
      %v566 = vmul.f32 %v564, %v565
      %v567 = vld [vmem:[%s5] sm:$0x1]
      %v568 = vadd.f32 %v566, 1e-05
      %v569 = vrsqrt.pop %v568
      %v570 = vmul.f32 %v567, %v569
      %v571 = vld [vmem:[%s6] sm:$0x1]
      %v572 = vmul.f32 %v548, %v570
      %v573 = vsub.f32 %v571, %v572
      %v574 = vld [vmem:[%s499] sm:$0xf]
      %v575 = vunpack.c.l.bf16 %v574
      %v577 = vlaneseq
      %v578 = vshrl.u32 %v577, 7
      %v579 = vsub.s32 0, %v578
      %v580 = vrot.slane %v570, %v579
      %v582 = vmul.f32 %v575, %v580
      %v584 = vlaneseq
      %v585 = vshrl.u32 %v584, 7
      %v586 = vsub.s32 0, %v585
      %v587 = vrot.slane %v573, %v586
      %v589 = vadd.f32 %v582, %v587
      %v590 = vmax.f32 %v589, 0.0
      %v591 = vld [vmem:[%s515] sm:$0xf]
      %v592 = vunpack.c.l.bf16 %v591
      %v593 = vmul.f32 %v592, %v570
      %v594 = vadd.f32 %v593, %v573
      %v595 = vmax.f32 %v594, 0.0
      %p596 = scmp.eq.s32.totalorder %s27, 0
      %s597 = scalar_select %p596, 1, 0
      %v598 = vstv %s597
      %vm599 = vcmp.eq.s32.totalorder %v598, 1
      %v600 = vsel %vm599, 0.0, %v590
      %601 = vst [vmem:[#allocation2 - $0x7] sm:$0x80] %v600
      %p602 = scmp.eq.s32.totalorder %s27, 3
      %s603 = scalar_select %p602, 1, 0
      %v604 = vstv %s603
      %vm605 = vcmp.eq.s32.totalorder %v604, 1
      %v606 = vsel %vm605, 0.0, %v595
      %607 = vst [vmem:[#allocation2 + $0x41] sm:$0x1] %v606
      %v608 = vld [vmem:[%s486] sm:$0xf]
      %v609 = vld [vmem:[%s486 + $0x4] sm:$0xf]
      %v610 = vld [vmem:[%s486 + $0x8] sm:$0xf]
      %v611 = vld [vmem:[%s486 + $0xc] sm:$0xf]
      %v612 = vld [vmem:[%s486 + $0x10] sm:$0xf]
      %v613 = vld [vmem:[%s486 + $0x14] sm:$0xf]
      %v614 = vld [vmem:[%s486 + $0x18] sm:$0xf]
      %v615 = vld [vmem:[%s486 + $0x1c] sm:$0xf]
      %v616 = vunpack.c.l.bf16 %v608
      %v617 = vunpack.c.l.bf16 %v609
      %v618 = vunpack.c.l.bf16 %v610
      %v619 = vunpack.c.l.bf16 %v611
      %v620 = vunpack.c.l.bf16 %v612
      %v621 = vunpack.c.l.bf16 %v613
      %v622 = vunpack.c.l.bf16 %v614
      %v623 = vunpack.c.l.bf16 %v615
      %v624 = vmul.f32 %v616, %v580
      %v625 = vmul.f32 %v617, %v580
      %v626 = vmul.f32 %v618, %v580
      %v627 = vmul.f32 %v619, %v580
      %v628 = vmul.f32 %v620, %v580
      %v629 = vmul.f32 %v621, %v580
      %v630 = vmul.f32 %v622, %v580
      %v631 = vmul.f32 %v623, %v580
      %v632 = vadd.f32 %v624, %v587
      %v633 = vadd.f32 %v625, %v587
      %v634 = vadd.f32 %v626, %v587
      %v635 = vadd.f32 %v627, %v587
      %v636 = vadd.f32 %v628, %v587
      %v637 = vadd.f32 %v629, %v587
      %v638 = vadd.f32 %v630, %v587
      %v639 = vadd.f32 %v631, %v587
      %v640 = vmax.f32 %v632, 0.0
      %v641 = vmax.f32 %v633, 0.0
      %v642 = vmax.f32 %v634, 0.0
      %v643 = vmax.f32 %v635, 0.0
      %v644 = vmax.f32 %v636, 0.0
      %v645 = vmax.f32 %v637, 0.0
      %v646 = vmax.f32 %v638, 0.0
      %v647 = vmax.f32 %v639, 0.0
      %648 = vst [vmem:[#allocation2 + $0x1] sm:$0xff] %v640
      %649 = vst [vmem:[#allocation2 + $0x9] sm:$0xff] %v641
      %650 = vst [vmem:[#allocation2 + $0x11] sm:$0xff] %v642
      %651 = vst [vmem:[#allocation2 + $0x19] sm:$0xff] %v643
      %652 = vst [vmem:[#allocation2 + $0x21] sm:$0xff] %v644
      %653 = vst [vmem:[#allocation2 + $0x29] sm:$0xff] %v645
      %654 = vst [vmem:[#allocation2 + $0x31] sm:$0xff] %v646
      %655 = vst [vmem:[#allocation2 + $0x39] sm:$0xff] %v647
      %v656 = vld [vmem:[%s8] sm:$0x1]
      %v657 = vld [vmem:[#allocation2] sm:$0xff]
      %v658 = vld [vmem:[#allocation2 + $0x8] sm:$0xff]
      %v659 = vld [vmem:[#allocation2 + $0x10] sm:$0xff]
      %v660 = vld [vmem:[#allocation2 + $0x18] sm:$0xff]
      %v661 = vld [vmem:[#allocation2 + $0x20] sm:$0xff]
      %v662 = vld [vmem:[#allocation2 + $0x28] sm:$0xff]
      %v663 = vld [vmem:[#allocation2 + $0x30] sm:$0xff]
      %v664 = vld [vmem:[#allocation2 + $0x38] sm:$0xff]
      %v665 = vld [vmem:[#allocation2 + $0x40] sm:$0x3]
      %v666 = vpack.c.bf16 %v658, %v657
      %v667 = vpack.c.bf16 %v660, %v659
      %v668 = vpack.c.bf16 %v662, %v661
      %v669 = vpack.c.bf16 %v664, %v663
      %v670 = vld [vmem:[%s7] sm:$0xf]
      %v671 = vld [vmem:[%s7 + $0x4] sm:$0xf]
      %v672 = vld [vmem:[%s7 + $0x8] sm:$0xf]
      %v673 = vld [vmem:[%s7 + $0xc] sm:$0xf]
      %v674 = vld [vmem:[%s7 + $0x10] sm:$0xf]
      %v675 = vld [vmem:[%s7 + $0x14] sm:$0xf]
      %v676 = vld [vmem:[%s7 + $0x18] sm:$0xf]
      %v677 = vld [vmem:[%s7 + $0x1c] sm:$0xf]
      %v678 = vld [vmem:[%s7 + $0x20] sm:$0xf]
      %v679 = vld [vmem:[%s7 + $0x24] sm:$0xf]
      %v680 = vld [vmem:[%s7 + $0x28] sm:$0xf]
      %v681 = vld [vmem:[%s7 + $0x2c] sm:$0xf]
      %v682 = vld [vmem:[%s7 + $0x30] sm:$0xf]
      %v683 = vld [vmem:[%s7 + $0x34] sm:$0xf]
      %v684 = vld [vmem:[%s7 + $0x38] sm:$0xf]
      %v685 = vld [vmem:[%s7 + $0x3c] sm:$0xf]
      %v686 = vpack.c.bf16 %v665, %v665
      %s687 = scalar_lea.vmem %s7, 64
      %v688 = vld [vmem:[%s687] sm:$0xf]
      %v689 = vld [vmem:[%s687 + $0x4] sm:$0xf]
      %v690 = vld [vmem:[%s687 + $0x8] sm:$0xf]
      %v691 = vld [vmem:[%s687 + $0xc] sm:$0xf]
      %v692 = vld [vmem:[%s687 + $0x10] sm:$0xf]
      %v693 = vld [vmem:[%s687 + $0x14] sm:$0xf]
      %v694 = vld [vmem:[%s687 + $0x18] sm:$0xf]
      %v695 = vld [vmem:[%s687 + $0x1c] sm:$0xf]
      %v696 = vld [vmem:[%s687 + $0x20] sm:$0xf]
      %v697 = vld [vmem:[%s687 + $0x24] sm:$0xf]
      %v698 = vld [vmem:[%s687 + $0x28] sm:$0xf]
      %v699 = vld [vmem:[%s687 + $0x2c] sm:$0xf]
      %v700 = vld [vmem:[%s687 + $0x30] sm:$0xf]
      %v701 = vld [vmem:[%s687 + $0x34] sm:$0xf]
      %v702 = vld [vmem:[%s687 + $0x38] sm:$0xf]
      %v703 = vld [vmem:[%s687 + $0x3c] sm:$0xf]
      %vm704 = vsmask.f32 7424
      %v706 = vshrl.u32 %v666, 16
      %v708 = vshll.u32 %v666, 16
      %v710 = vrot.slane %v708, 1
      %v711 = vor.u32 %v706, %v710
      %v713 = vshll.u32 %v667, 16
      %v715 = vrot.slane %v713, 1
      %v716 = vsel %vm704, %v711, %v715
      %v717 = vshrl.u32 %v667, 16
      %v719 = vor.u32 %v717, %v715
      %v721 = vshll.u32 %v668, 16
      %v723 = vrot.slane %v721, 1
      %v724 = vsel %vm704, %v719, %v723
      %v725 = vshrl.u32 %v668, 16
      %v727 = vor.u32 %v725, %v723
      %v729 = vshll.u32 %v669, 16
      %v731 = vrot.slane %v729, 1
      %v732 = vsel %vm704, %v727, %v731
      %v733 = vshrl.u32 %v669, 16
      %v735 = vor.u32 %v733, %v731
      %v737 = vshll.u32 %v686, 16
      %v739 = vrot.slane %v737, 1
      %v740 = vsel %vm704, %v735, %v739
      %v761 = vunpack.c.l.b16 %v688
      %v762 = vunpack.c.l.b16 %v689
      %v763 = vunpack.c.l.b16 %v690
      %v764 = vunpack.c.l.b16 %v691
      %v765 = vunpack.c.l.b16 %v692
      %v766 = vunpack.c.l.b16 %v693
      %v767 = vunpack.c.l.b16 %v694
      %v768 = vunpack.c.l.b16 %v695
      %v769 = vunpack.c.l.b16 %v696
      %v770 = vunpack.c.l.b16 %v697
      %v771 = vunpack.c.l.b16 %v698
      %v772 = vunpack.c.l.b16 %v699
      %v773 = vunpack.c.l.b16 %v700
      %v774 = vunpack.c.l.b16 %v701
      %v775 = vunpack.c.l.b16 %v702
      %v776 = vunpack.c.l.b16 %v703
      %v777 = vpack.c.b16 %v762, %v761
      %v778 = vpack.c.b16 %v764, %v763
      %v779 = vpack.c.b16 %v766, %v765
      %v780 = vpack.c.b16 %v768, %v767
      %v781 = vpack.c.b16 %v770, %v769
      %v782 = vpack.c.b16 %v772, %v771
      %v783 = vpack.c.b16 %v774, %v773
      %v784 = vpack.c.b16 %v776, %v775
      %793 = vmatprep.subr.bf16.mxu0 0
      %794 = vmatpush1.bf16.msra.mxu0 %v777
      %795 = vmatprep.subr.bf16.mxu0 0
      %796 = vmatpush1.bf16.msra.mxu0 %v778
      %797 = vmatprep.subr.bf16.mxu0 0
      %798 = vmatpush1.bf16.msra.mxu0 %v779
      %799 = vmatprep.subr.bf16.mxu0 0
      %800 = vmatpush1.bf16.msra.mxu0 %v780
      %801 = vmatprep.subr.bf16.mxu0 0
      %802 = vmatpush1.bf16.msra.mxu0 %v781
      %803 = vmatprep.subr.bf16.mxu0 0
      %804 = vmatpush1.bf16.msra.mxu0 %v782
      %805 = vmatprep.subr.bf16.mxu0 0
      %806 = vmatpush1.bf16.msra.mxu0 %v783
      %807 = vmatprep.subr.bf16.mxu0 0
      %808 = vmatpush1.bf16.msra.mxu0 %v784
      %809 = vmatprep.subr.bf16.mxu0 0
      %810 = vmatpush1.bf16.msra.mxu0 0
      %811 = vmatprep.subr.bf16.mxu0 0
      %812 = vmatpush1.bf16.msra.mxu0 0
      %813 = vmatprep.subr.bf16.mxu0 0
      %814 = vmatpush1.bf16.msra.mxu0 0
      %815 = vmatprep.subr.bf16.mxu0 0
      %816 = vmatpush1.bf16.msra.mxu0 0
      %817 = vmatprep.subr.bf16.mxu0 0
      %818 = vmatpush1.bf16.msra.mxu0 0
      %819 = vmatprep.subr.bf16.mxu0 0
      %820 = vmatpush1.bf16.msra.mxu0 0
      %821 = vmatprep.subr.bf16.mxu0 0
      %822 = vmatpush1.bf16.msra.mxu0 0
      %823 = vmatprep.subr.bf16.mxu0 0
      %824 = vmatpush1.bf16.msra.mxu0 0
      %825 = vmatprep.mubr.bf16.mxu0 0
      %826 = vmatmul.mubr.bf16.gmra.mrb[0].mxu0 %v716
      %v827 = vpop.f32.mrb[0].mxu0
      %v828 = vadd.f32 0.0, %v827
      %v829 = vpop.f32.mrb[0].mxu0
      %v830 = vpop.f32.mrb[0].mxu0
      %v831 = vadd.f32 0.0, %v830
      %v832 = vpop.f32.mrb[0].mxu0
      %833 = vmatprep.mubr.bf16.mxu0 0
      %834 = vmatmul.mubr.bf16.gmra.mrb[0].mxu0 %v724
      %v835 = vpop.f32.mrb[0].mxu0
      %v836 = vadd.f32 0.0, %v835
      %v837 = vpop.f32.mrb[0].mxu0
      %v838 = vpop.f32.mrb[0].mxu0
      %v839 = vadd.f32 0.0, %v838
      %v840 = vpop.f32.mrb[0].mxu0
      %841 = vmatprep.mubr.bf16.mxu0 0
      %842 = vmatmul.mubr.bf16.gmra.mrb[0].mxu0 %v732
      %v843 = vpop.f32.mrb[0].mxu0
      %v844 = vadd.f32 0.0, %v843
      %v845 = vpop.f32.mrb[0].mxu0
      %v846 = vpop.f32.mrb[0].mxu0
      %v847 = vadd.f32 0.0, %v846
      %v848 = vpop.f32.mrb[0].mxu0
      %849 = vmatprep.mubr.bf16.mxu0 0
      %850 = vmatmul.mubr.bf16.gmra.mrb[0].mxu0 %v740
      %v851 = vpop.f32.mrb[0].mxu0
      %v852 = vadd.f32 0.0, %v851
      %v853 = vpop.f32.mrb[0].mxu0
      %v854 = vpop.f32.mrb[0].mxu0
      %v855 = vadd.f32 0.0, %v854
      %v856 = vpop.f32.mrb[0].mxu0
      %857 = vdwg.mxu0
      %v874 = vunpack.c.l.b16 %v670
      %v875 = vunpack.c.l.b16 %v671
      %v876 = vunpack.c.l.b16 %v672
      %v877 = vunpack.c.l.b16 %v673
      %v878 = vunpack.c.l.b16 %v674
      %v879 = vunpack.c.l.b16 %v675
      %v880 = vunpack.c.l.b16 %v676
      %v881 = vunpack.c.l.b16 %v677
      %v882 = vunpack.c.l.b16 %v678
      %v883 = vunpack.c.l.b16 %v679
      %v884 = vunpack.c.l.b16 %v680
      %v885 = vunpack.c.l.b16 %v681
      %v886 = vunpack.c.l.b16 %v682
      %v887 = vunpack.c.l.b16 %v683
      %v888 = vunpack.c.l.b16 %v684
      %v889 = vunpack.c.l.b16 %v685
      %v890 = vpack.c.b16 %v875, %v874
      %v891 = vpack.c.b16 %v877, %v876
      %v892 = vpack.c.b16 %v879, %v878
      %v893 = vpack.c.b16 %v881, %v880
      %v894 = vpack.c.b16 %v883, %v882
      %v895 = vpack.c.b16 %v885, %v884
      %v896 = vpack.c.b16 %v887, %v886
      %v897 = vpack.c.b16 %v889, %v888
      %906 = vmatprep.subr.bf16.mxu0 0
      %907 = vmatpush1.bf16.msra.mxu0 %v890
      %908 = vmatprep.subr.bf16.mxu0 0
      %909 = vmatpush1.bf16.msra.mxu0 %v891
      %910 = vmatprep.subr.bf16.mxu0 0
      %911 = vmatpush1.bf16.msra.mxu0 %v892
      %912 = vmatprep.subr.bf16.mxu0 0
      %913 = vmatpush1.bf16.msra.mxu0 %v893
      %914 = vmatprep.subr.bf16.mxu0 0
      %915 = vmatpush1.bf16.msra.mxu0 %v894
      %916 = vmatprep.subr.bf16.mxu0 0
      %917 = vmatpush1.bf16.msra.mxu0 %v895
      %918 = vmatprep.subr.bf16.mxu0 0
      %919 = vmatpush1.bf16.msra.mxu0 %v896
      %920 = vmatprep.subr.bf16.mxu0 0
      %921 = vmatpush1.bf16.msra.mxu0 %v897
      %922 = vmatprep.subr.bf16.mxu0 0
      %923 = vmatpush1.bf16.msra.mxu0 0
      %924 = vmatprep.subr.bf16.mxu0 0
      %925 = vmatpush1.bf16.msra.mxu0 0
      %926 = vmatprep.subr.bf16.mxu0 0
      %927 = vmatpush1.bf16.msra.mxu0 0
      %928 = vmatprep.subr.bf16.mxu0 0
      %929 = vmatpush1.bf16.msra.mxu0 0
      %930 = vmatprep.subr.bf16.mxu0 0
      %931 = vmatpush1.bf16.msra.mxu0 0
      %932 = vmatprep.subr.bf16.mxu0 0
      %933 = vmatpush1.bf16.msra.mxu0 0
      %934 = vmatprep.subr.bf16.mxu0 0
      %935 = vmatpush1.bf16.msra.mxu0 0
      %936 = vmatprep.subr.bf16.mxu0 0
      %937 = vmatpush1.bf16.msra.mxu0 0
      %938 = vmatprep.mubr.bf16.mxu0 0
      %939 = vmatmul.mubr.bf16.gmra.mrb[0].mxu0 %v666
      %v940 = vpop.f32.mrb[0].mxu0
      %v941 = vadd.f32 %v828, %v940
      %v942 = vpop.f32.mrb[0].mxu0
      %v943 = vpop.f32.mrb[0].mxu0
      %v944 = vadd.f32 %v831, %v943
      %v945 = vpop.f32.mrb[0].mxu0
      %946 = vmatprep.mubr.bf16.mxu0 0
      %947 = vmatmul.mubr.bf16.gmra.mrb[0].mxu0 %v667
      %v948 = vpop.f32.mrb[0].mxu0
      %v949 = vadd.f32 %v836, %v948
      %v950 = vpop.f32.mrb[0].mxu0
      %v951 = vpop.f32.mrb[0].mxu0
      %v952 = vadd.f32 %v839, %v951
      %v953 = vpop.f32.mrb[0].mxu0
      %954 = vmatprep.mubr.bf16.mxu0 0
      %955 = vmatmul.mubr.bf16.gmra.mrb[0].mxu0 %v668
      %v956 = vpop.f32.mrb[0].mxu0
      %v957 = vadd.f32 %v844, %v956
      %v958 = vpop.f32.mrb[0].mxu0
      %v959 = vpop.f32.mrb[0].mxu0
      %v960 = vadd.f32 %v847, %v959
      %v961 = vpop.f32.mrb[0].mxu0
      %962 = vmatprep.mubr.bf16.mxu0 0
      %963 = vmatmul.mubr.bf16.gmra.mrb[0].mxu0 %v669
      %v964 = vpop.f32.mrb[0].mxu0
      %v965 = vadd.f32 %v852, %v964
      %v966 = vpop.f32.mrb[0].mxu0
      %v967 = vpop.f32.mrb[0].mxu0
      %v968 = vadd.f32 %v855, %v967
      %v969 = vpop.f32.mrb[0].mxu0
      %970 = vdwg.mxu0
      %s971 = scalar_lea.vmem %s7, 128
      %v972 = vld [vmem:[%s971] sm:$0xf]
      %v973 = vld [vmem:[%s971 + $0x4] sm:$0xf]
      %v974 = vld [vmem:[%s971 + $0x8] sm:$0xf]
      %v975 = vld [vmem:[%s971 + $0xc] sm:$0xf]
      %v976 = vld [vmem:[%s971 + $0x10] sm:$0xf]
      %v977 = vld [vmem:[%s971 + $0x14] sm:$0xf]
      %v978 = vld [vmem:[%s971 + $0x18] sm:$0xf]
      %v979 = vld [vmem:[%s971 + $0x1c] sm:$0xf]
      %v980 = vld [vmem:[%s971 + $0x20] sm:$0xf]
      %v981 = vld [vmem:[%s971 + $0x24] sm:$0xf]
      %v982 = vld [vmem:[%s971 + $0x28] sm:$0xf]
      %v983 = vld [vmem:[%s971 + $0x2c] sm:$0xf]
      %v984 = vld [vmem:[%s971 + $0x30] sm:$0xf]
      %v985 = vld [vmem:[%s971 + $0x34] sm:$0xf]
      %v986 = vld [vmem:[%s971 + $0x38] sm:$0xf]
      %v987 = vld [vmem:[%s971 + $0x3c] sm:$0xf]
      %vm993 = vcmask 1046528
      %v994 = vrot.slane %v666, 1
      %v995 = vrot.slane %v667, 1
      %v996 = vsel %vm993, %v994, %v995
      %v997 = vrot.slane %v668, 1
      %v998 = vsel %vm993, %v995, %v997
      %v999 = vrot.slane %v669, 1
      %v1000 = vsel %vm993, %v997, %v999
      %v1001 = vrot.slane %v686, 1
      %v1002 = vsel %vm993, %v999, %v1001
      %v1023 = vunpack.c.l.b16 %v972
      %v1024 = vunpack.c.l.b16 %v973
      %v1025 = vunpack.c.l.b16 %v974
      %v1026 = vunpack.c.l.b16 %v975
      %v1027 = vunpack.c.l.b16 %v976
      %v1028 = vunpack.c.l.b16 %v977
      %v1029 = vunpack.c.l.b16 %v978
      %v1030 = vunpack.c.l.b16 %v979
      %v1031 = vunpack.c.l.b16 %v980
      %v1032 = vunpack.c.l.b16 %v981
      %v1033 = vunpack.c.l.b16 %v982
      %v1034 = vunpack.c.l.b16 %v983
      %v1035 = vunpack.c.l.b16 %v984
      %v1036 = vunpack.c.l.b16 %v985
      %v1037 = vunpack.c.l.b16 %v986
      %v1038 = vunpack.c.l.b16 %v987
      %v1039 = vpack.c.b16 %v1024, %v1023
      %v1040 = vpack.c.b16 %v1026, %v1025
      %v1041 = vpack.c.b16 %v1028, %v1027
      %v1042 = vpack.c.b16 %v1030, %v1029
      %v1043 = vpack.c.b16 %v1032, %v1031
      %v1044 = vpack.c.b16 %v1034, %v1033
      %v1045 = vpack.c.b16 %v1036, %v1035
      %v1046 = vpack.c.b16 %v1038, %v1037
      %1055 = vmatprep.subr.bf16.mxu0 0
      %1056 = vmatpush1.bf16.msra.mxu0 %v1039
      %1057 = vmatprep.subr.bf16.mxu0 0
      %1058 = vmatpush1.bf16.msra.mxu0 %v1040
      %1059 = vmatprep.subr.bf16.mxu0 0
      %1060 = vmatpush1.bf16.msra.mxu0 %v1041
      %1061 = vmatprep.subr.bf16.mxu0 0
      %1062 = vmatpush1.bf16.msra.mxu0 %v1042
      %1063 = vmatprep.subr.bf16.mxu0 0
      %1064 = vmatpush1.bf16.msra.mxu0 %v1043
      %1065 = vmatprep.subr.bf16.mxu0 0
      %1066 = vmatpush1.bf16.msra.mxu0 %v1044
      %1067 = vmatprep.subr.bf16.mxu0 0
      %1068 = vmatpush1.bf16.msra.mxu0 %v1045
      %1069 = vmatprep.subr.bf16.mxu0 0
      %1070 = vmatpush1.bf16.msra.mxu0 %v1046
      %1071 = vmatprep.subr.bf16.mxu0 0
      %1072 = vmatpush1.bf16.msra.mxu0 0
      %1073 = vmatprep.subr.bf16.mxu0 0
      %1074 = vmatpush1.bf16.msra.mxu0 0
      %1075 = vmatprep.subr.bf16.mxu0 0
      %1076 = vmatpush1.bf16.msra.mxu0 0
      %1077 = vmatprep.subr.bf16.mxu0 0
      %1078 = vmatpush1.bf16.msra.mxu0 0
      %1079 = vmatprep.subr.bf16.mxu0 0
      %1080 = vmatpush1.bf16.msra.mxu0 0
      %1081 = vmatprep.subr.bf16.mxu0 0
      %1082 = vmatpush1.bf16.msra.mxu0 0
      %1083 = vmatprep.subr.bf16.mxu0 0
      %1084 = vmatpush1.bf16.msra.mxu0 0
      %1085 = vmatprep.subr.bf16.mxu0 0
      %1086 = vmatpush1.bf16.msra.mxu0 0
      %1087 = vmatprep.mubr.bf16.mxu0 0
      %1088 = vmatmul.mubr.bf16.gmra.mrb[0].mxu0 %v996
      %v1089 = vpop.f32.mrb[0].mxu0
      %v1090 = vadd.f32 0.0, %v1089
      %v1091 = vpop.f32.mrb[0].mxu0
      %v1092 = vpop.f32.mrb[0].mxu0
      %v1093 = vadd.f32 0.0, %v1092
      %v1094 = vpop.f32.mrb[0].mxu0
      %1095 = vmatprep.mubr.bf16.mxu0 0
      %1096 = vmatmul.mubr.bf16.gmra.mrb[0].mxu0 %v998
      %v1097 = vpop.f32.mrb[0].mxu0
      %v1098 = vadd.f32 0.0, %v1097
      %v1099 = vpop.f32.mrb[0].mxu0
      %v1100 = vpop.f32.mrb[0].mxu0
      %v1101 = vadd.f32 0.0, %v1100
      %v1102 = vpop.f32.mrb[0].mxu0
      %1103 = vmatprep.mubr.bf16.mxu0 0
      %1104 = vmatmul.mubr.bf16.gmra.mrb[0].mxu0 %v1000
      %v1105 = vpop.f32.mrb[0].mxu0
      %v1106 = vadd.f32 0.0, %v1105
      %v1107 = vpop.f32.mrb[0].mxu0
      %v1108 = vpop.f32.mrb[0].mxu0
      %v1109 = vadd.f32 0.0, %v1108
      %v1110 = vpop.f32.mrb[0].mxu0
      %1111 = vmatprep.mubr.bf16.mxu0 0
      %1112 = vmatmul.mubr.bf16.gmra.mrb[0].mxu0 %v1002
      %v1113 = vpop.f32.mrb[0].mxu0
      %v1114 = vadd.f32 0.0, %v1113
      %v1115 = vpop.f32.mrb[0].mxu0
      %v1116 = vpop.f32.mrb[0].mxu0
      %v1117 = vadd.f32 0.0, %v1116
      %v1118 = vpop.f32.mrb[0].mxu0
      %1119 = vdwg.mxu0
      %v1120 = vadd.f32 %v941, %v1090
      %v1121 = vadd.f32 %v944, %v1093
      %v1122 = vadd.f32 %v949, %v1098
      %v1123 = vadd.f32 %v952, %v1101
      %v1124 = vadd.f32 %v957, %v1106
      %v1125 = vadd.f32 %v960, %v1109
      %v1126 = vadd.f32 %v965, %v1114
      %v1127 = vadd.f32 %v968, %v1117
      %v1129 = vlaneseq
      %v1130 = vshrl.u32 %v1129, 7
      %v1131 = vsub.s32 0, %v1130
      %v1132 = vrot.slane %v656, %v1131
      %v1134 = vadd.f32 %v1120, %v1132
      %v1135 = vadd.f32 %v1121, %v1132
      %v1136 = vadd.f32 %v1122, %v1132
      %v1137 = vadd.f32 %v1123, %v1132
      %v1138 = vadd.f32 %v1124, %v1132
      %v1139 = vadd.f32 %v1125, %v1132
      %v1140 = vadd.f32 %v1126, %v1132
      %v1141 = vadd.f32 %v1127, %v1132
      %v1142 = vpack.c.bf16 %v1135, %v1134
      %v1143 = vpack.c.bf16 %v1137, %v1136
      %v1144 = vpack.c.bf16 %v1139, %v1138
      %v1145 = vpack.c.bf16 %v1141, %v1140
      %v1150 = vunpack.c.l.b16 %v1142
      %v1151 = vunpack.c.h.b16 %v1142
      %v1152 = vunpack.c.l.b16 %v1143
      %v1153 = vunpack.c.h.b16 %v1143
      %v1154 = vunpack.c.l.b16 %v1144
      %v1155 = vunpack.c.h.b16 %v1144
      %v1156 = vunpack.c.l.b16 %v1145
      %v1157 = vunpack.c.h.b16 %v1145
      %v1158 = vpack.c.b16 %v1150, %v1150
      %v1159 = vpack.c.b16 %v1151, %v1151
      %v1160 = vpack.c.b16 %v1152, %v1152
      %v1161 = vpack.c.b16 %v1153, %v1153
      %v1162 = vpack.c.b16 %v1154, %v1154
      %v1163 = vpack.c.b16 %v1155, %v1155
      %v1164 = vpack.c.b16 %v1156, %v1156
      %v1165 = vpack.c.b16 %v1157, %v1157
      %1174 = vst [vmem:[%s528] sm:$0xf] %v1158
      %1175 = vst [vmem:[%s528 + $0x4] sm:$0xf] %v1159
      %1176 = vst [vmem:[%s528 + $0x8] sm:$0xf] %v1160
      %1177 = vst [vmem:[%s528 + $0xc] sm:$0xf] %v1161
      %1178 = vst [vmem:[%s528 + $0x10] sm:$0xf] %v1162
      %1179 = vst [vmem:[%s528 + $0x14] sm:$0xf] %v1163
      %1180 = vst [vmem:[%s528 + $0x18] sm:$0xf] %v1164
      %1181 = vst [vmem:[%s528 + $0x1c] sm:$0xf] %v1165
      %v1182 = vadd.f32 %v1134, %v1135
      %v1183 = vadd.f32 %v1182, %v1136
      %v1184 = vadd.f32 %v1183, %v1137
      %v1185 = vadd.f32 %v1184, %v1138
      %v1186 = vadd.f32 %v1185, %v1139
      %v1187 = vadd.f32 %v1186, %v1140
      %v1188 = vadd.f32 %v1187, %v1141
      %v1189 = vrot.slane %v1188, 4
      %v1190 = vadd.f32 %v1188, %v1189
      %v1191 = vrot.slane %v1190, 2
      %v1192 = vadd.f32 %v1190, %v1191
      %v1193 = vrot.slane %v1192, 1
      %v1194 = vadd.f32 %v1192, %v1193
      %v1195 = vrcp.pop 64.0
      %v1196 = vmul.f32 %v1194, %v1195
      %v1197 = vsub.f32 %v1134, %v1196
      %v1198 = vsub.f32 %v1135, %v1196
      %v1199 = vsub.f32 %v1136, %v1196
      %v1200 = vsub.f32 %v1137, %v1196
      %v1201 = vsub.f32 %v1138, %v1196
      %v1202 = vsub.f32 %v1139, %v1196
      %v1203 = vsub.f32 %v1140, %v1196
      %v1204 = vsub.f32 %v1141, %v1196
      %1205 = vst [vmem:[%s537] sm:$0x1] %v1196
      %v1206 = vmul.f32 %v1197, %v1197
      %v1207 = vmul.f32 %v1198, %v1198
      %v1208 = vmul.f32 %v1199, %v1199
      %v1209 = vmul.f32 %v1200, %v1200
      %v1210 = vmul.f32 %v1201, %v1201
      %v1211 = vmul.f32 %v1202, %v1202
      %v1212 = vmul.f32 %v1203, %v1203
      %v1213 = vmul.f32 %v1204, %v1204
      %v1214 = vadd.f32 %v1206, %v1207
      %v1215 = vadd.f32 %v1214, %v1208
      %v1216 = vadd.f32 %v1215, %v1209
      %v1217 = vadd.f32 %v1216, %v1210
      %v1218 = vadd.f32 %v1217, %v1211
      %v1219 = vadd.f32 %v1218, %v1212
      %v1220 = vadd.f32 %v1219, %v1213
      %v1221 = vrot.slane %v1220, 4
      %v1222 = vadd.f32 %v1220, %v1221
      %v1223 = vrot.slane %v1222, 2
      %v1224 = vadd.f32 %v1222, %v1223
      %v1225 = vrot.slane %v1224, 1
      %v1226 = vadd.f32 %v1224, %v1225
      %1227 = vst [vmem:[%s537 + $0x1] sm:$0x1] %v1226
      %s1228 = smul.u32 8, %s27
      %p1229 = scmp.lt.s32.totalorder %s26, 1
      %s1230 = scalar_select %p1229, %s26, 1
      %p1231 = scmp.lt.s32.totalorder %s1228, 31
      %s1232 = scalar_select %p1231, %s1228, 31
      %s1233 = smul.addr %s1230, 32
      %s1234 = sadd.s32 %s1232, %s1233
      %s1235 = smul.addr %s1234, 4
      %s1236 = scalar_lea.vmem %s9, %s1235
      %p1237 = scmp.lt.s32.totalorder %s26, 1
      %s1238 = scalar_select %p1237, %s26, 1
      %p1239 = scmp.lt.s32.totalorder %s27, 3
      %s1240 = scalar_select %p1239, %s27, 3
      %s1241 = smul.addr %s1238, 4
      %s1242 = sadd.s32 %s1240, %s1241
      %s1243 = smul.addr %s1242, 2
      %s1244 = scalar_lea.vmem %s10, %s1243
      // Predicated region
      $region57: #{audio_processing_tokenizer_forward.4} parent=55 // pred_check
        %p1245 = pneg %p280
      $region58: #{audio_processing_tokenizer_forward.4} parent=55 // pred_check_branch
        %1247 = sbr.rel (%p1245) target = $region60
      $region59: #{audio_processing_tokenizer_forward.4} parent=55 // pred_region
        %s1248 = smul.u32 8, %s27
      $region60: #{audio_processing_tokenizer_forward.4} parent=55 // pred_fallthru
        _
      // Predicated region
      $region61: #{audio_processing_tokenizer_forward.4} parent=55 // pred_check
        %p1249 = pneg %p308
      $region62: #{audio_processing_tokenizer_forward.4} parent=55 // pred_check_branch
        %1251 = sbr.rel (%p1249) target = $region64
      $region63: #{audio_processing_tokenizer_forward.4} parent=55 // pred_region
        _
      $region64: #{audio_processing_tokenizer_forward.4} parent=55 // pred_fallthru
        _
    $region56: #{audio_processing_tokenizer_forward.4} parent=5 // pred_fallthru
      _
    %p1252 = scmp.le.s32.totalorder 2, %s17
    // Predicated region
    $region65: #{audio_processing_tokenizer_forward.4} parent=5 // pred_check
      %p1253 = pneg %p1252
    $region66: #{audio_processing_tokenizer_forward.4} parent=5 // pred_check_branch
      %1255 = sbr.rel (%p1253) target = $region68
    $region67: #{audio_processing_tokenizer_forward.4} parent=5 // pred_region
      %s1256 = ssub.s32 %s17, 2
      // Predicated region
      $region69: #{audio_processing_tokenizer_forward.4} parent=67 // pred_check
        %p1257 = pneg %p286
      $region70: #{audio_processing_tokenizer_forward.4} parent=67 // pred_check_branch
        %1259 = sbr.rel (%p1257) target = $region72
      $region71: #{audio_processing_tokenizer_forward.4} parent=67 // pred_region
        %s1260 = smul.u32 8, %s29
        %p1261 = scmp.lt.s32.totalorder %s28, 1
        %s1262 = scalar_select %p1261, %s28, 1
        %p1263 = scmp.lt.s32.totalorder %s1260, 31
        %s1264 = scalar_select %p1263, %s1260, 31
        %s1265 = smul.addr %s1262, 32
        %s1266 = sadd.s32 %s1264, %s1265
        %s1267 = smul.addr %s1266, 4
        %s1268 = scalar_lea.vmem %s9, %s1267
      $region72: #{audio_processing_tokenizer_forward.4} parent=67 // pred_fallthru
        _
      // Predicated region
      $region73: #{audio_processing_tokenizer_forward.4} parent=67 // pred_check
        %p1269 = pneg %p314
      $region74: #{audio_processing_tokenizer_forward.4} parent=67 // pred_check_branch
        %1271 = sbr.rel (%p1269) target = $region76
      $region75: #{audio_processing_tokenizer_forward.4} parent=67 // pred_region
        %p1272 = scmp.lt.s32.totalorder %s28, 1
        %s1273 = scalar_select %p1272, %s28, 1
        %p1274 = scmp.lt.s32.totalorder %s29, 3
        %s1275 = scalar_select %p1274, %s29, 3
        %s1276 = smul.addr %s1273, 4
        %s1277 = sadd.s32 %s1275, %s1276
        %s1278 = smul.addr %s1277, 2
        %s1279 = scalar_lea.vmem %s10, %s1278
      $region76: #{audio_processing_tokenizer_forward.4} parent=67 // pred_fallthru
        _
    $region68: #{audio_processing_tokenizer_forward.4} parent=5 // pred_fallthru
      _
  $region6: #{audio_processing_tokenizer_forward.4} parent=0 // loop_footer
    %s21 = sadd.s32 1, %s17
  $region7: #{audio_processing_tokenizer_forward.4} parent=0 // loop_footer_branch
    %16 = sbr.rel target = $region3
  $region8: #{audio_processing_tokenizer_forward.4} parent=0 // loop_exit
    _

// kernel: audio_processing_tokenizer_forward.5
$region0: #{audio_processing_tokenizer_forward.5}
  #allocation0 [shape = 'u32[]', space=smem, size = 0x4, offset = 0x4, fixed_abs, tag = 'smem constant byte address 0x4 - core index']
  #allocation1 [shape = 'u32[144,128]{1,0:T(1,128)}', space=vmem, size = 0x12000, scoped, tag = 'internal scratch']
  #allocation2 [shape = 'f32[66,128]{1,0:T(8,128)}', space=vmem, size = 0x9000, scoped, tag = 'scratch operand']
  %s0 = inlined_call_operand.vmem [shape: bf16[2,256,128], index: 0, kind: input, shape index: {}, may-alias: {0,1,2}]
  %s1 = inlined_call_operand.vmem [shape: bf16[2,256,128], index: 1, kind: input, shape index: {}, may-alias: {0,1,2}]
  %s2 = inlined_call_operand.vmem [shape: bf16[2,256,128], index: 2, kind: input, shape index: {}, may-alias: {0,1,2}]
  %s3 = inlined_call_operand.vmem [shape: f32[8,128], index: 3, kind: input, shape index: {}]
  %s4 = inlined_call_operand.vmem [shape: f32[8,128], index: 4, kind: input, shape index: {}]
  %s5 = inlined_call_operand.vmem [shape: f32[1,128], index: 5, kind: input, shape index: {}]
  %s6 = inlined_call_operand.vmem [shape: f32[1,128], index: 6, kind: input, shape index: {}]
  %s7 = inlined_call_operand.vmem [shape: bf16[3,128,128], index: 7, kind: input, shape index: {}]
  %s8 = inlined_call_operand.vmem [shape: f32[1,128], index: 8, kind: input, shape index: {}]
  %s9 = inlined_call_operand.vmem [shape: bf16[128,128], index: 9, kind: input, shape index: {}]
  %s10 = inlined_call_operand.vmem [shape: f32[1,128], index: 10, kind: input, shape index: {}]
  %s11 = inlined_call_operand.vmem [shape: bf16[128,256], index: 11, kind: input, shape index: {}]
  %s12 = inlined_call_operand.vmem [shape: f32[1,256], index: 12, kind: input, shape index: {}]
  %s13 = inlined_call_operand.vmem [shape: bf16[256,128], index: 13, kind: input, shape index: {}]
  %s14 = inlined_call_operand.hbm [shape: f32[2,256,128], index: 14, kind: output, shape index: {}]
  %s15 = sld [smem:[#allocation0]]
  $region89: #{audio_processing_tokenizer_forward.5} parent=0
    _
  %s17 = ssub.s32 1, %s15
  %s18 = scalar_select 0, %s17, %s15
  $region1: #{audio_processing_tokenizer_forward.5} parent=0
    #allocation3 [shape = 'u8[65536]{0}', space=vmem, size = 0x10000, scoped, tag = 'output window, operand 0']
    #allocation4 [shape = 's32[2]{0}', space=sflag, size = 0x8, scoped, tag = 'scoped memory for audio_processing_tokenizer_forward.5']
    %19 = vsyncpa [#allocation4], 0
    %s20 = scalar_lea.sflag [#allocation4], 1
    %21 = vsyncpa %s20, 0
    loop: start=0, step=1, limit=10
    $region2: #{audio_processing_tokenizer_forward.5} parent=1 // loop_pre_header
      _
    $region3: #{audio_processing_tokenizer_forward.5} parent=1 // loop_header
      %s23 = sphi 0, %s27
      %p24 = scmp.ge.s32.totalorder %s23, 10
      %s30 = sphi 0, %s42
      %s31 = sphi 0, %s38
      %s32 = sphi 0, %s30
      %s33 = sphi 0, %s31
      %s34 = sphi 0, %s32
      %s35 = sphi 0, %s33
      %s47 = sphi 0, %s49
      %s50 = sphi 0, %s47
      %s51 = sphi 0, %s50
      %s67 = sphi 0, %s51
      %s83 = sphi 0, %s85
      %s86 = sphi 0, %s83
      %s87 = sphi 0, %s86
      %s103 = sphi 0, %s87
      %s119 = sphi 0, %s121
      %s122 = sphi 0, %s119
      %s123 = sphi 0, %s122
      %s139 = sphi 0, %s123
      %s143 = sphi 0, %s143
      %s145 = sphi 0, %s143
      %s146 = sphi 0, %s145
      %s160 = sphi 0, %s146
      %s164 = sphi 0, %s164
      %s166 = sphi 0, %s164
      %s167 = sphi 0, %s166
      %s181 = sphi 0, %s167
      %s185 = sphi 0, %s185
      %s187 = sphi 0, %s185
      %s188 = sphi 0, %s187
      %s202 = sphi 0, %s188
      %s206 = sphi 0, %s206
      %s208 = sphi 0, %s206
      %s209 = sphi 0, %s208
      %s223 = sphi 0, %s209
      %s227 = sphi 0, %s227
      %s229 = sphi 0, %s227
      %s230 = sphi 0, %s229
      %s244 = sphi 0, %s230
      %s248 = sphi 0, %s248
      %s250 = sphi 0, %s248
      %s251 = sphi 0, %s250
      %s265 = sphi 0, %s251
      %s269 = sphi 0, %s269
      %s271 = sphi 0, %s269
      %s272 = sphi 0, %s271
      %s286 = sphi 0, %s272
      %s290 = sphi 0, %s290
      %s292 = sphi 0, %s290
      %s293 = sphi 0, %s292
      %s307 = sphi 0, %s293
      %s311 = sphi 0, %s311
      %s313 = sphi 0, %s311
      %s314 = sphi 0, %s313
      %s328 = sphi 0, %s314
      %s332 = sphi 0, %s332
      %s334 = sphi 0, %s332
      %s335 = sphi 0, %s334
      %s349 = sphi 0, %s335
      %s353 = sphi 0, %s353
      %s355 = sphi 0, %s353
      %s356 = sphi 0, %s355
      %s370 = sphi 0, %s356
      %s378 = sphi 0, %s380
      %s381 = sphi 0, %s378
      %s382 = sphi 0, %s381
      %s398 = sphi 0, %s382
    $region4: #{audio_processing_tokenizer_forward.5} parent=1 // loop_header_branch
      %26 = sbr.rel (%p24) target = $region8
    $region5: #{audio_processing_tokenizer_forward.5} parent=1 // loop_body
      %s28 = ssub.s32 %s23, 1
      %s29 = ssub.s32 %s23, 2
      %s36 = sadd.s32 1, %s31
      %p37 = scmp.ge.s32.totalorder %s36, 4
      %s38 = scalar_select %p37, 0, %s36
      %s39 = sadd.s32 1, %s30
      %s40 = scalar_select %p37, %s39, %s30
      %p41 = scmp.ge.s32.totalorder %s40, 2
      %s42 = scalar_select %p41, 0, %s40
      %s43 = ssub.s32 %s30, %s42
      %s44 = ssub.s32 %s31, %s38
      %s45 = sor.u32 %s43, %s44
      %p46 = scmp.eq.s32.totalorder %s45, 0
      %s48 = sadd.s32 %s47, 1
      %s49 = scalar_select %p46, %s47, %s48
      %p52 = pneg %p46
      %p53 = scmp.eq.s32.totalorder %s23, 7
      %p54 = por %p52, %p53
      %p55 = scmp.ne.s32.totalorder %s47, %s50
      %p56 = scmp.eq.s32.totalorder %s23, 0
      %p57 = por %p55, %p56
      %p58 = scmp.ne.s32.totalorder %s47, %s50
      %p59 = scmp.eq.s32.totalorder %s28, 7
      %p60 = por %p58, %p59
      %p61 = scmp.ne.s32.totalorder %s50, %s51
      %p62 = scmp.eq.s32.totalorder %s28, 0
      %p63 = por %p61, %p62
      %p64 = scmp.ne.s32.totalorder %s50, %s51
      %p65 = scmp.eq.s32.totalorder %s29, 7
      %p66 = por %p64, %p65
      %p68 = scmp.ne.s32.totalorder %s51, %s67
      %p69 = scmp.eq.s32.totalorder %s29, 0
      %p70 = por %p68, %p69
      %s71 = smul.u32 %s31, 8
      %s72 = ssub.s32 %s71, 1
      %p73 = scmp.gt.s32.totalorder %s72, 0
      %s74 = scalar_select %p73, %s72, 0
      %s75 = smul.u32 %s38, 8
      %s76 = ssub.s32 %s75, 1
      %p77 = scmp.gt.s32.totalorder %s76, 0
      %s78 = scalar_select %p77, %s76, 0
      %s79 = ssub.s32 %s30, %s42
      %s80 = ssub.s32 %s74, %s78
      %s81 = sor.u32 %s79, %s80
      %p82 = scmp.eq.s32.totalorder %s81, 0
      %s84 = sadd.s32 %s83, 1
      %s85 = scalar_select %p82, %s83, %s84
      %p88 = pneg %p82
      %p89 = scmp.eq.s32.totalorder %s23, 7
      %p90 = por %p88, %p89
      %p91 = scmp.ne.s32.totalorder %s83, %s86
      %p92 = scmp.eq.s32.totalorder %s23, 0
      %p93 = por %p91, %p92
      %p94 = scmp.ne.s32.totalorder %s83, %s86
      %p95 = scmp.eq.s32.totalorder %s28, 7
      %p96 = por %p94, %p95
      %p97 = scmp.ne.s32.totalorder %s86, %s87
      %p98 = scmp.eq.s32.totalorder %s28, 0
      %p99 = por %p97, %p98
      %p100 = scmp.ne.s32.totalorder %s86, %s87
      %p101 = scmp.eq.s32.totalorder %s29, 7
      %p102 = por %p100, %p101
      %p104 = scmp.ne.s32.totalorder %s87, %s103
      %p105 = scmp.eq.s32.totalorder %s29, 0
      %p106 = por %p104, %p105
      %s107 = sadd.s32 %s31, 1
      %s108 = smul.u32 %s107, 8
      %p109 = scmp.lt.s32.totalorder %s108, 31
      %s110 = scalar_select %p109, %s108, 31
      %s111 = sadd.s32 %s38, 1
      %s112 = smul.u32 %s111, 8
      %p113 = scmp.lt.s32.totalorder %s112, 31
      %s114 = scalar_select %p113, %s112, 31
      %s115 = ssub.s32 %s30, %s42
      %s116 = ssub.s32 %s110, %s114
      %s117 = sor.u32 %s115, %s116
      %p118 = scmp.eq.s32.totalorder %s117, 0
      %s120 = sadd.s32 %s119, 1
      %s121 = scalar_select %p118, %s119, %s120
      %p124 = pneg %p118
      %p125 = scmp.eq.s32.totalorder %s23, 7
      %p126 = por %p124, %p125
      %p127 = scmp.ne.s32.totalorder %s119, %s122
      %p128 = scmp.eq.s32.totalorder %s23, 0
      %p129 = por %p127, %p128
      %p130 = scmp.ne.s32.totalorder %s119, %s122
      %p131 = scmp.eq.s32.totalorder %s28, 7
      %p132 = por %p130, %p131
      %p133 = scmp.ne.s32.totalorder %s122, %s123
      %p134 = scmp.eq.s32.totalorder %s28, 0
      %p135 = por %p133, %p134
      %p136 = scmp.ne.s32.totalorder %s122, %s123
      %p137 = scmp.eq.s32.totalorder %s29, 7
      %p138 = por %p136, %p137
      %p140 = scmp.ne.s32.totalorder %s123, %s139
      %p141 = scmp.eq.s32.totalorder %s29, 0
      %p142 = por %p140, %p141
      %s144 = sadd.s32 %s143, 1
      %p147 = scmp.eq.s32.totalorder %s23, 7
      %p148 = scmp.ne.s32.totalorder %s143, %s145
      %p149 = scmp.eq.s32.totalorder %s23, 0
      %p150 = por %p148, %p149
      %p151 = scmp.ne.s32.totalorder %s143, %s145
      %p152 = scmp.eq.s32.totalorder %s28, 7
      %p153 = por %p151, %p152
      %p154 = scmp.ne.s32.totalorder %s145, %s146
      %p155 = scmp.eq.s32.totalorder %s28, 0
      %p156 = por %p154, %p155
      %p157 = scmp.ne.s32.totalorder %s145, %s146
      %p158 = scmp.eq.s32.totalorder %s29, 7
      %p159 = por %p157, %p158
      %p161 = scmp.ne.s32.totalorder %s146, %s160
      %p162 = scmp.eq.s32.totalorder %s29, 0
      %p163 = por %p161, %p162
      %s165 = sadd.s32 %s164, 1
      %p168 = scmp.eq.s32.totalorder %s23, 7
      %p169 = scmp.ne.s32.totalorder %s164, %s166
      %p170 = scmp.eq.s32.totalorder %s23, 0
      %p171 = por %p169, %p170
      %p172 = scmp.ne.s32.totalorder %s164, %s166
      %p173 = scmp.eq.s32.totalorder %s28, 7
      %p174 = por %p172, %p173
      %p175 = scmp.ne.s32.totalorder %s166, %s167
      %p176 = scmp.eq.s32.totalorder %s28, 0
      %p177 = por %p175, %p176
      %p178 = scmp.ne.s32.totalorder %s166, %s167
      %p179 = scmp.eq.s32.totalorder %s29, 7
      %p180 = por %p178, %p179
      %p182 = scmp.ne.s32.totalorder %s167, %s181
      %p183 = scmp.eq.s32.totalorder %s29, 0
      %p184 = por %p182, %p183
      %s186 = sadd.s32 %s185, 1
      %p189 = scmp.eq.s32.totalorder %s23, 7
      %p190 = scmp.ne.s32.totalorder %s185, %s187
      %p191 = scmp.eq.s32.totalorder %s23, 0
      %p192 = por %p190, %p191
      %p193 = scmp.ne.s32.totalorder %s185, %s187
      %p194 = scmp.eq.s32.totalorder %s28, 7
      %p195 = por %p193, %p194
      %p196 = scmp.ne.s32.totalorder %s187, %s188
      %p197 = scmp.eq.s32.totalorder %s28, 0
      %p198 = por %p196, %p197
      %p199 = scmp.ne.s32.totalorder %s187, %s188
      %p200 = scmp.eq.s32.totalorder %s29, 7
      %p201 = por %p199, %p200
      %p203 = scmp.ne.s32.totalorder %s188, %s202
      %p204 = scmp.eq.s32.totalorder %s29, 0
      %p205 = por %p203, %p204
      %s207 = sadd.s32 %s206, 1
      %p210 = scmp.eq.s32.totalorder %s23, 7
      %p211 = scmp.ne.s32.totalorder %s206, %s208
      %p212 = scmp.eq.s32.totalorder %s23, 0
      %p213 = por %p211, %p212
      %p214 = scmp.ne.s32.totalorder %s206, %s208
      %p215 = scmp.eq.s32.totalorder %s28, 7
      %p216 = por %p214, %p215
      %p217 = scmp.ne.s32.totalorder %s208, %s209
      %p218 = scmp.eq.s32.totalorder %s28, 0
      %p219 = por %p217, %p218
      %p220 = scmp.ne.s32.totalorder %s208, %s209
      %p221 = scmp.eq.s32.totalorder %s29, 7
      %p222 = por %p220, %p221
      %p224 = scmp.ne.s32.totalorder %s209, %s223
      %p225 = scmp.eq.s32.totalorder %s29, 0
      %p226 = por %p224, %p225
      %s228 = sadd.s32 %s227, 1
      %p231 = scmp.eq.s32.totalorder %s23, 7
      %p232 = scmp.ne.s32.totalorder %s227, %s229
      %p233 = scmp.eq.s32.totalorder %s23, 0
      %p234 = por %p232, %p233
      %p235 = scmp.ne.s32.totalorder %s227, %s229
      %p236 = scmp.eq.s32.totalorder %s28, 7
      %p237 = por %p235, %p236
      %p238 = scmp.ne.s32.totalorder %s229, %s230
      %p239 = scmp.eq.s32.totalorder %s28, 0
      %p240 = por %p238, %p239
      %p241 = scmp.ne.s32.totalorder %s229, %s230
      %p242 = scmp.eq.s32.totalorder %s29, 7
      %p243 = por %p241, %p242
      %p245 = scmp.ne.s32.totalorder %s230, %s244
      %p246 = scmp.eq.s32.totalorder %s29, 0
      %p247 = por %p245, %p246
      %s249 = sadd.s32 %s248, 1
      %p252 = scmp.eq.s32.totalorder %s23, 7
      %p253 = scmp.ne.s32.totalorder %s248, %s250
      %p254 = scmp.eq.s32.totalorder %s23, 0
      %p255 = por %p253, %p254
      %p256 = scmp.ne.s32.totalorder %s248, %s250
      %p257 = scmp.eq.s32.totalorder %s28, 7
      %p258 = por %p256, %p257
      %p259 = scmp.ne.s32.totalorder %s250, %s251
      %p260 = scmp.eq.s32.totalorder %s28, 0
      %p261 = por %p259, %p260
      %p262 = scmp.ne.s32.totalorder %s250, %s251
      %p263 = scmp.eq.s32.totalorder %s29, 7
      %p264 = por %p262, %p263
      %p266 = scmp.ne.s32.totalorder %s251, %s265
      %p267 = scmp.eq.s32.totalorder %s29, 0
      %p268 = por %p266, %p267
      %s270 = sadd.s32 %s269, 1
      %p273 = scmp.eq.s32.totalorder %s23, 7
      %p274 = scmp.ne.s32.totalorder %s269, %s271
      %p275 = scmp.eq.s32.totalorder %s23, 0
      %p276 = por %p274, %p275
      %p277 = scmp.ne.s32.totalorder %s269, %s271
      %p278 = scmp.eq.s32.totalorder %s28, 7
      %p279 = por %p277, %p278
      %p280 = scmp.ne.s32.totalorder %s271, %s272
      %p281 = scmp.eq.s32.totalorder %s28, 0
      %p282 = por %p280, %p281
      %p283 = scmp.ne.s32.totalorder %s271, %s272
      %p284 = scmp.eq.s32.totalorder %s29, 7
      %p285 = por %p283, %p284
      %p287 = scmp.ne.s32.totalorder %s272, %s286
      %p288 = scmp.eq.s32.totalorder %s29, 0
      %p289 = por %p287, %p288
      %s291 = sadd.s32 %s290, 1
      %p294 = scmp.eq.s32.totalorder %s23, 7
      %p295 = scmp.ne.s32.totalorder %s290, %s292
      %p296 = scmp.eq.s32.totalorder %s23, 0
      %p297 = por %p295, %p296
      %p298 = scmp.ne.s32.totalorder %s290, %s292
      %p299 = scmp.eq.s32.totalorder %s28, 7
      %p300 = por %p298, %p299
      %p301 = scmp.ne.s32.totalorder %s292, %s293
      %p302 = scmp.eq.s32.totalorder %s28, 0
      %p303 = por %p301, %p302
      %p304 = scmp.ne.s32.totalorder %s292, %s293
      %p305 = scmp.eq.s32.totalorder %s29, 7
      %p306 = por %p304, %p305
      %p308 = scmp.ne.s32.totalorder %s293, %s307
      %p309 = scmp.eq.s32.totalorder %s29, 0
      %p310 = por %p308, %p309
      %s312 = sadd.s32 %s311, 1
      %p315 = scmp.eq.s32.totalorder %s23, 7
      %p316 = scmp.ne.s32.totalorder %s311, %s313
      %p317 = scmp.eq.s32.totalorder %s23, 0
      %p318 = por %p316, %p317
      %p319 = scmp.ne.s32.totalorder %s311, %s313
      %p320 = scmp.eq.s32.totalorder %s28, 7
      %p321 = por %p319, %p320
      %p322 = scmp.ne.s32.totalorder %s313, %s314
      %p323 = scmp.eq.s32.totalorder %s28, 0
      %p324 = por %p322, %p323
      %p325 = scmp.ne.s32.totalorder %s313, %s314
      %p326 = scmp.eq.s32.totalorder %s29, 7
      %p327 = por %p325, %p326
      %p329 = scmp.ne.s32.totalorder %s314, %s328
      %p330 = scmp.eq.s32.totalorder %s29, 0
      %p331 = por %p329, %p330
      %s333 = sadd.s32 %s332, 1
      %p336 = scmp.eq.s32.totalorder %s23, 7
      %p337 = scmp.ne.s32.totalorder %s332, %s334
      %p338 = scmp.eq.s32.totalorder %s23, 0
      %p339 = por %p337, %p338
      %p340 = scmp.ne.s32.totalorder %s332, %s334
      %p341 = scmp.eq.s32.totalorder %s28, 7
      %p342 = por %p340, %p341
      %p343 = scmp.ne.s32.totalorder %s334, %s335
      %p344 = scmp.eq.s32.totalorder %s28, 0
      %p345 = por %p343, %p344
      %p346 = scmp.ne.s32.totalorder %s334, %s335
      %p347 = scmp.eq.s32.totalorder %s29, 7
      %p348 = por %p346, %p347
      %p350 = scmp.ne.s32.totalorder %s335, %s349
      %p351 = scmp.eq.s32.totalorder %s29, 0
      %p352 = por %p350, %p351
      %s354 = sadd.s32 %s353, 1
      %p357 = scmp.eq.s32.totalorder %s23, 7
      %p358 = scmp.ne.s32.totalorder %s353, %s355
      %p359 = scmp.eq.s32.totalorder %s23, 0
      %p360 = por %p358, %p359
      %p361 = scmp.ne.s32.totalorder %s353, %s355
      %p362 = scmp.eq.s32.totalorder %s28, 7
      %p363 = por %p361, %p362
      %p364 = scmp.ne.s32.totalorder %s355, %s356
      %p365 = scmp.eq.s32.totalorder %s28, 0
      %p366 = por %p364, %p365
      %p367 = scmp.ne.s32.totalorder %s355, %s356
      %p368 = scmp.eq.s32.totalorder %s29, 7
      %p369 = por %p367, %p368
      %p371 = scmp.ne.s32.totalorder %s356, %s370
      %p372 = scmp.eq.s32.totalorder %s29, 0
      %p373 = por %p371, %p372
      %s374 = ssub.s32 %s30, %s42
      %s375 = ssub.s32 %s31, %s38
      %s376 = sor.u32 %s374, %s375
      %p377 = scmp.eq.s32.totalorder %s376, 0
      %s379 = sadd.s32 %s378, 1
      %s380 = scalar_select %p377, %s378, %s379
      %p383 = pneg %p377
      %p384 = scmp.eq.s32.totalorder %s23, 7
      %p385 = por %p383, %p384
      %p386 = scmp.ne.s32.totalorder %s378, %s381
      %p387 = scmp.eq.s32.totalorder %s23, 0
      %p388 = por %p386, %p387
      %p389 = scmp.ne.s32.totalorder %s378, %s381
      %p390 = scmp.eq.s32.totalorder %s28, 7
      %p391 = por %p389, %p390
      %p392 = scmp.ne.s32.totalorder %s381, %s382
      %p393 = scmp.eq.s32.totalorder %s28, 0
      %p394 = por %p392, %p393
      %p395 = scmp.ne.s32.totalorder %s381, %s382
      %p396 = scmp.eq.s32.totalorder %s29, 7
      %p397 = por %p395, %p396
      %p399 = scmp.ne.s32.totalorder %s382, %s398
      %p400 = scmp.eq.s32.totalorder %s29, 0
      %p401 = por %p399, %p400
      %p402 = scmp.le.s32.totalorder 1, %s23
      %p403 = scmp.lt.s32.totalorder %s23, 9
      %p404 = pnand %p402, %p403
      %p405 = pneg %p404
      // Predicated region
      $region9: #{audio_processing_tokenizer_forward.5} parent=5 // pred_check
        _
      $region10: #{audio_processing_tokenizer_forward.5} parent=5 // pred_check_branch
        %407 = sbr.rel (%p404) target = $region12
      $region11: #{audio_processing_tokenizer_forward.5} parent=5 // pred_region
        %s408 = ssub.s32 %s23, 1
        // Predicated region
        $region13: #{audio_processing_tokenizer_forward.5} parent=11 // pred_check
          %p409 = pneg %p156
        $region14: #{audio_processing_tokenizer_forward.5} parent=11 // pred_check_branch
          %411 = sbr.rel (%p409) target = $region16
        $region15: #{audio_processing_tokenizer_forward.5} parent=11 // pred_region
          _
        $region16: #{audio_processing_tokenizer_forward.5} parent=11 // pred_fallthru
          _
        // Predicated region
        $region17: #{audio_processing_tokenizer_forward.5} parent=11 // pred_check
          %p412 = pneg %p177
        $region18: #{audio_processing_tokenizer_forward.5} parent=11 // pred_check_branch
          %414 = sbr.rel (%p412) target = $region20
        $region19: #{audio_processing_tokenizer_forward.5} parent=11 // pred_region
          _
        $region20: #{audio_processing_tokenizer_forward.5} parent=11 // pred_fallthru
          _
        // Predicated region
        $region21: #{audio_processing_tokenizer_forward.5} parent=11 // pred_check
          %p415 = pneg %p198
        $region22: #{audio_processing_tokenizer_forward.5} parent=11 // pred_check_branch
          %417 = sbr.rel (%p415) target = $region24
        $region23: #{audio_processing_tokenizer_forward.5} parent=11 // pred_region
          _
        $region24: #{audio_processing_tokenizer_forward.5} parent=11 // pred_fallthru
          _
        // Predicated region
        $region25: #{audio_processing_tokenizer_forward.5} parent=11 // pred_check
          %p418 = pneg %p219
        $region26: #{audio_processing_tokenizer_forward.5} parent=11 // pred_check_branch
          %420 = sbr.rel (%p418) target = $region28
        $region27: #{audio_processing_tokenizer_forward.5} parent=11 // pred_region
          _
        $region28: #{audio_processing_tokenizer_forward.5} parent=11 // pred_fallthru
          _
        // Predicated region
        $region29: #{audio_processing_tokenizer_forward.5} parent=11 // pred_check
          %p421 = pneg %p240
        $region30: #{audio_processing_tokenizer_forward.5} parent=11 // pred_check_branch
          %423 = sbr.rel (%p421) target = $region32
        $region31: #{audio_processing_tokenizer_forward.5} parent=11 // pred_region
          _
        $region32: #{audio_processing_tokenizer_forward.5} parent=11 // pred_fallthru
          _
        // Predicated region
        $region33: #{audio_processing_tokenizer_forward.5} parent=11 // pred_check
          %p424 = pneg %p261
        $region34: #{audio_processing_tokenizer_forward.5} parent=11 // pred_check_branch
          %426 = sbr.rel (%p424) target = $region36
        $region35: #{audio_processing_tokenizer_forward.5} parent=11 // pred_region
          _
        $region36: #{audio_processing_tokenizer_forward.5} parent=11 // pred_fallthru
          _
        // Predicated region
        $region37: #{audio_processing_tokenizer_forward.5} parent=11 // pred_check
          %p427 = pneg %p282
        $region38: #{audio_processing_tokenizer_forward.5} parent=11 // pred_check_branch
          %429 = sbr.rel (%p427) target = $region40
        $region39: #{audio_processing_tokenizer_forward.5} parent=11 // pred_region
          _
        $region40: #{audio_processing_tokenizer_forward.5} parent=11 // pred_fallthru
          _
        // Predicated region
        $region41: #{audio_processing_tokenizer_forward.5} parent=11 // pred_check
          %p430 = pneg %p303
        $region42: #{audio_processing_tokenizer_forward.5} parent=11 // pred_check_branch
          %432 = sbr.rel (%p430) target = $region44
        $region43: #{audio_processing_tokenizer_forward.5} parent=11 // pred_region
          _
        $region44: #{audio_processing_tokenizer_forward.5} parent=11 // pred_fallthru
          _
        // Predicated region
        $region45: #{audio_processing_tokenizer_forward.5} parent=11 // pred_check
          %p433 = pneg %p324
        $region46: #{audio_processing_tokenizer_forward.5} parent=11 // pred_check_branch
          %435 = sbr.rel (%p433) target = $region48
        $region47: #{audio_processing_tokenizer_forward.5} parent=11 // pred_region
          _
        $region48: #{audio_processing_tokenizer_forward.5} parent=11 // pred_fallthru
          _
        // Predicated region
        $region49: #{audio_processing_tokenizer_forward.5} parent=11 // pred_check
          %p436 = pneg %p345
        $region50: #{audio_processing_tokenizer_forward.5} parent=11 // pred_check_branch
          %438 = sbr.rel (%p436) target = $region52
        $region51: #{audio_processing_tokenizer_forward.5} parent=11 // pred_region
          _
        $region52: #{audio_processing_tokenizer_forward.5} parent=11 // pred_fallthru
          _
        // Predicated region
        $region53: #{audio_processing_tokenizer_forward.5} parent=11 // pred_check
          %p439 = pneg %p366
        $region54: #{audio_processing_tokenizer_forward.5} parent=11 // pred_check_branch
          %441 = sbr.rel (%p439) target = $region56
        $region55: #{audio_processing_tokenizer_forward.5} parent=11 // pred_region
          _
        $region56: #{audio_processing_tokenizer_forward.5} parent=11 // pred_fallthru
          _
      $region12: #{audio_processing_tokenizer_forward.5} parent=5 // pred_fallthru
        _
      %p442 = scmp.lt.s32.totalorder %s23, 8
      // Predicated region
      $region57: #{audio_processing_tokenizer_forward.5} parent=5 // pred_check
        %p443 = pneg %p442
      $region58: #{audio_processing_tokenizer_forward.5} parent=5 // pred_check_branch
        %445 = sbr.rel (%p443) target = $region60
      $region59: #{audio_processing_tokenizer_forward.5} parent=5 // pred_region
        // Predicated region
        $region61: #{audio_processing_tokenizer_forward.5} parent=59 // pred_check
          %p446 = pneg %p57
        $region62: #{audio_processing_tokenizer_forward.5} parent=59 // pred_check_branch
          %448 = sbr.rel (%p446) target = $region64
        $region63: #{audio_processing_tokenizer_forward.5} parent=59 // pred_region
          %s449 = smul.u32 8, %s31
          %p450 = scmp.lt.s32.totalorder %s30, 1
          %s451 = scalar_select %p450, %s30, 1
          %p452 = scmp.lt.s32.totalorder %s449, 31
          %s453 = scalar_select %p452, %s449, 31
          %s454 = smul.addr %s451, 32
          %s455 = sadd.s32 %s453, %s454
          %s456 = smul.addr %s455, 4
          %s457 = scalar_lea.vmem %s0, %s456
          %s458 = smul.u32 8, %s31
        $region64: #{audio_processing_tokenizer_forward.5} parent=59 // pred_fallthru
          _
        // Predicated region
        $region65: #{audio_processing_tokenizer_forward.5} parent=59 // pred_check
          %p459 = pneg %p93
        $region66: #{audio_processing_tokenizer_forward.5} parent=59 // pred_check_branch
          %461 = sbr.rel (%p459) target = $region68
        $region67: #{audio_processing_tokenizer_forward.5} parent=59 // pred_region
          %s462 = smul.u32 %s31, 8
          %s463 = ssub.s32 %s462, 1
          %p464 = scmp.gt.s32.totalorder %s463, 0
          %s465 = scalar_select %p464, %s463, 0
          %p466 = scmp.lt.s32.totalorder %s30, 1
          %s467 = scalar_select %p466, %s30, 1
          %p468 = scmp.lt.s32.totalorder %s465, 31
          %s469 = scalar_select %p468, %s465, 31
          %s470 = smul.addr %s467, 32
          %s471 = sadd.s32 %s469, %s470
          %s472 = smul.addr %s471, 4
          %s473 = scalar_lea.vmem %s1, %s472
          %s474 = smul.u32 %s31, 8
          %s475 = ssub.s32 %s474, 1
          %p476 = scmp.gt.s32.totalorder %s475, 0
          %s477 = scalar_select %p476, %s475, 0
        $region68: #{audio_processing_tokenizer_forward.5} parent=59 // pred_fallthru
          _
        // Predicated region
        $region69: #{audio_processing_tokenizer_forward.5} parent=59 // pred_check
          %p478 = pneg %p129
        $region70: #{audio_processing_tokenizer_forward.5} parent=59 // pred_check_branch
          %480 = sbr.rel (%p478) target = $region72
        $region71: #{audio_processing_tokenizer_forward.5} parent=59 // pred_region
          %s481 = sadd.s32 %s31, 1
          %s482 = smul.u32 %s481, 8
          %p483 = scmp.lt.s32.totalorder %s482, 31
          %s484 = scalar_select %p483, %s482, 31
          %p485 = scmp.lt.s32.totalorder %s30, 1
          %s486 = scalar_select %p485, %s30, 1
          %p487 = scmp.lt.s32.totalorder %s484, 31
          %s488 = scalar_select %p487, %s484, 31
          %s489 = smul.addr %s486, 32
          %s490 = sadd.s32 %s488, %s489
          %s491 = smul.addr %s490, 4
          %s492 = scalar_lea.vmem %s2, %s491
          %s493 = sadd.s32 %s31, 1
          %s494 = smul.u32 %s493, 8
          %p495 = scmp.lt.s32.totalorder %s494, 31
          %s496 = scalar_select %p495, %s494, 31
        $region72: #{audio_processing_tokenizer_forward.5} parent=59 // pred_fallthru
          _
      $region60: #{audio_processing_tokenizer_forward.5} parent=5 // pred_fallthru
        _
      %p497 = scmp.le.s32.totalorder 1, %s23
      %p498 = scmp.lt.s32.totalorder %s23, 9
      %p499 = pnand %p497, %p498
      %p500 = pneg %p499
      // Predicated region
      $region73: #{audio_processing_tokenizer_forward.5} parent=5 // pred_check
        _
      $region74: #{audio_processing_tokenizer_forward.5} parent=5 // pred_check_branch
        %502 = sbr.rel (%p499) target = $region76
      $region75: #{audio_processing_tokenizer_forward.5} parent=5 // pred_region
        %s503 = ssub.s32 %s23, 1
        %s504 = smul.u32 8, %s33
        %p505 = scmp.lt.s32.totalorder %s32, 1
        %s506 = scalar_select %p505, %s32, 1
        %p507 = scmp.lt.s32.totalorder %s504, 31
        %s508 = scalar_select %p507, %s504, 31
        %s509 = smul.addr %s506, 32
        %s510 = sadd.s32 %s508, %s509
        %s511 = smul.addr %s510, 4
        %s512 = scalar_lea.vmem %s0, %s511
        %p513 = pneg %p63
        %p514 = pneg %p60
        %s515 = smul.u32 %s33, 8
        %s516 = ssub.s32 %s515, 1
        %p517 = scmp.gt.s32.totalorder %s516, 0
        %s518 = scalar_select %p517, %s516, 0
        %p519 = scmp.lt.s32.totalorder %s32, 1
        %s520 = scalar_select %p519, %s32, 1
        %p521 = scmp.lt.s32.totalorder %s518, 31
        %s522 = scalar_select %p521, %s518, 31
        %s523 = smul.addr %s520, 32
        %s524 = sadd.s32 %s522, %s523
        %s525 = smul.addr %s524, 4
        %s526 = scalar_lea.vmem %s1, %s525
        %p527 = pneg %p99
        %p528 = pneg %p96
        %s529 = sadd.s32 %s33, 1
        %s530 = smul.u32 %s529, 8
        %p531 = scmp.lt.s32.totalorder %s530, 31
        %s532 = scalar_select %p531, %s530, 31
        %p533 = scmp.lt.s32.totalorder %s32, 1
        %s534 = scalar_select %p533, %s32, 1
        %p535 = scmp.lt.s32.totalorder %s532, 31
        %s536 = scalar_select %p535, %s532, 31
        %s537 = smul.addr %s534, 32
        %s538 = sadd.s32 %s536, %s537
        %s539 = smul.addr %s538, 4
        %s540 = scalar_lea.vmem %s2, %s539
        %p541 = pneg %p135
        %p542 = pneg %p132
        %p543 = pneg %p156
        %p544 = pneg %p153
        %p545 = pneg %p177
        %p546 = pneg %p174
        %p547 = pneg %p198
        %p548 = pneg %p195
        %p549 = pneg %p219
        %p550 = pneg %p216
        %p551 = pneg %p240
        %p552 = pneg %p237
        %p553 = pneg %p261
        %p554 = pneg %p258
        %p555 = pneg %p282
        %p556 = pneg %p279
        %p557 = pneg %p303
        %p558 = pneg %p300
        %p559 = pneg %p324
        %p560 = pneg %p321
        %p561 = pneg %p345
        %p562 = pneg %p342
        %p563 = pneg %p366
        %p564 = pneg %p363
        %p565 = pneg %p394
        %p566 = pneg %p391
        %s567 = sand.u32 %s381, 1
        %s568 = scalar_lea.sflag [#allocation4], %s567
        %s569 = sand.u32 %s381, 1
        %s570 = smul.addr %s569, 64
        %s571 = scalar_lea.vmem [#allocation3], %s570
        %s572 = smul.u32 8, %s33
        %p573 = scmp.lt.s32.totalorder %s32, 1
        %s574 = scalar_select %p573, %s32, 1
        %p575 = scmp.lt.s32.totalorder %s572, 31
        %s576 = scalar_select %p575, %s572, 31
        %s577 = smul.addr %s574, 32
        %s578 = sadd.s32 %s576, %s577
        %s579 = smul.addr %s578, 4
        %s580 = scalar_lea.vmem %s0, %s579
        %s581 = smul.u32 8, %s33
        %s582 = smul.u32 %s33, 8
        %s583 = ssub.s32 %s582, 1
        %p584 = scmp.gt.s32.totalorder %s583, 0
        %s585 = scalar_select %p584, %s583, 0
        %p586 = scmp.lt.s32.totalorder %s32, 1
        %s587 = scalar_select %p586, %s32, 1
        %p588 = scmp.lt.s32.totalorder %s585, 31
        %s589 = scalar_select %p588, %s585, 31
        %s590 = smul.addr %s587, 32
        %s591 = sadd.s32 %s589, %s590
        %s592 = smul.addr %s591, 4
        %s593 = scalar_lea.vmem %s1, %s592
        %s594 = smul.u32 %s33, 8
        %s595 = ssub.s32 %s594, 1
        %p596 = scmp.gt.s32.totalorder %s595, 0
        %s597 = scalar_select %p596, %s595, 0
        %s598 = sadd.s32 %s33, 1
        %s599 = smul.u32 %s598, 8
        %p600 = scmp.lt.s32.totalorder %s599, 31
        %s601 = scalar_select %p600, %s599, 31
        %p602 = scmp.lt.s32.totalorder %s32, 1
        %s603 = scalar_select %p602, %s32, 1
        %p604 = scmp.lt.s32.totalorder %s601, 31
        %s605 = scalar_select %p604, %s601, 31
        %s606 = smul.addr %s603, 32
        %s607 = sadd.s32 %s605, %s606
        %s608 = smul.addr %s607, 4
        %s609 = scalar_lea.vmem %s2, %s608
        %s610 = sadd.s32 %s33, 1
        %s611 = smul.u32 %s610, 8
        %p612 = scmp.lt.s32.totalorder %s611, 31
        %s613 = scalar_select %p612, %s611, 31
        %s614 = smul.u32 8, %s33
        %v616 = vld [vmem:[%s3] sm:$0xff]
        %v617 = vld [vmem:[%s4] sm:$0xff]
        %v618 = vrot.slane %v616, 4
        %v619 = vadd.f32 %v616, %v618
        %v620 = vrot.slane %v619, 2
        %v621 = vadd.f32 %v619, %v620
        %v622 = vrot.slane %v621, 1
        %v623 = vadd.f32 %v621, %v622
        %v624 = vrcp.pop 8.0
        %v625 = vmul.f32 %v623, %v624
        %v626 = vsub.f32 %v616, %v625
        %v627 = vrot.slane %v617, 4
        %v628 = vadd.f32 %v617, %v627
        %v629 = vrot.slane %v628, 2
        %v630 = vadd.f32 %v628, %v629
        %v631 = vrot.slane %v630, 1
        %v632 = vadd.f32 %v630, %v631
        %v633 = vmul.f32 %v626, %v626
        %v634 = vrot.slane %v633, 4
        %v635 = vadd.f32 %v633, %v634
        %v636 = vrot.slane %v635, 2
        %v637 = vadd.f32 %v635, %v636
        %v638 = vrot.slane %v637, 1
        %v639 = vadd.f32 %v637, %v638
        %v640 = vmul.f32 %v639, 64.0
        %v641 = vadd.f32 %v632, %v640
        %v642 = vrcp.pop 512.0
        %v643 = vmul.f32 %v641, %v642
        %v644 = vld [vmem:[%s5] sm:$0x1]
        %v645 = vadd.f32 %v643, 1e-05
        %v646 = vrsqrt.pop %v645
        %v647 = vmul.f32 %v644, %v646
        %v648 = vld [vmem:[%s6] sm:$0x1]
        %v649 = vmul.f32 %v625, %v647
        %v650 = vsub.f32 %v648, %v649
        %v651 = vld [vmem:[%s593] sm:$0xf]
        %v652 = vunpack.c.l.bf16 %v651
        %v654 = vlaneseq
        %v655 = vshrl.u32 %v654, 7
        %v656 = vsub.s32 0, %v655
        %v657 = vrot.slane %v647, %v656
        %v659 = vmul.f32 %v652, %v657
        %v661 = vlaneseq
        %v662 = vshrl.u32 %v661, 7
        %v663 = vsub.s32 0, %v662
        %v664 = vrot.slane %v650, %v663
        %v666 = vadd.f32 %v659, %v664
        %v667 = vmax.f32 %v666, 0.0
        %v668 = vld [vmem:[%s609] sm:$0xf]
        %v669 = vunpack.c.l.bf16 %v668
        %v670 = vmul.f32 %v669, %v647
        %v671 = vadd.f32 %v670, %v650
        %v672 = vmax.f32 %v671, 0.0
        %p673 = scmp.eq.s32.totalorder %s33, 0
        %s674 = scalar_select %p673, 1, 0
        %v675 = vstv %s674
        %vm676 = vcmp.eq.s32.totalorder %v675, 1
        %v677 = vsel %vm676, 0.0, %v667
        %678 = vst [vmem:[#allocation2 - $0x7] sm:$0x80] %v677
        %p679 = scmp.eq.s32.totalorder %s33, 3
        %s680 = scalar_select %p679, 1, 0
        %v681 = vstv %s680
        %vm682 = vcmp.eq.s32.totalorder %v681, 1
        %v683 = vsel %vm682, 0.0, %v672
        %684 = vst [vmem:[#allocation2 + $0x41] sm:$0x1] %v683
        %v685 = vld [vmem:[%s580] sm:$0xf]
        %v686 = vld [vmem:[%s580 + $0x4] sm:$0xf]
        %v687 = vld [vmem:[%s580 + $0x8] sm:$0xf]
        %v688 = vld [vmem:[%s580 + $0xc] sm:$0xf]
        %v689 = vld [vmem:[%s580 + $0x10] sm:$0xf]
        %v690 = vld [vmem:[%s580 + $0x14] sm:$0xf]
        %v691 = vld [vmem:[%s580 + $0x18] sm:$0xf]
        %v692 = vld [vmem:[%s580 + $0x1c] sm:$0xf]
        %v693 = vunpack.c.l.bf16 %v685
        %v694 = vunpack.c.l.bf16 %v686
        %v695 = vunpack.c.l.bf16 %v687
        %v696 = vunpack.c.l.bf16 %v688
        %v697 = vunpack.c.l.bf16 %v689
        %v698 = vunpack.c.l.bf16 %v690
        %v699 = vunpack.c.l.bf16 %v691
        %v700 = vunpack.c.l.bf16 %v692
        %v701 = vmul.f32 %v693, %v657
        %v702 = vmul.f32 %v694, %v657
        %v703 = vmul.f32 %v695, %v657
        %v704 = vmul.f32 %v696, %v657
        %v705 = vmul.f32 %v697, %v657
        %v706 = vmul.f32 %v698, %v657
        %v707 = vmul.f32 %v699, %v657
        %v708 = vmul.f32 %v700, %v657
        %v709 = vadd.f32 %v701, %v664
        %v710 = vadd.f32 %v702, %v664
        %v711 = vadd.f32 %v703, %v664
        %v712 = vadd.f32 %v704, %v664
        %v713 = vadd.f32 %v705, %v664
        %v714 = vadd.f32 %v706, %v664
        %v715 = vadd.f32 %v707, %v664
        %v716 = vadd.f32 %v708, %v664
        %v717 = vmax.f32 %v709, 0.0
        %v718 = vmax.f32 %v710, 0.0
        %v719 = vmax.f32 %v711, 0.0
        %v720 = vmax.f32 %v712, 0.0
        %v721 = vmax.f32 %v713, 0.0
        %v722 = vmax.f32 %v714, 0.0
        %v723 = vmax.f32 %v715, 0.0
        %v724 = vmax.f32 %v716, 0.0
        %725 = vst [vmem:[#allocation2 + $0x1] sm:$0xff] %v717
        %726 = vst [vmem:[#allocation2 + $0x9] sm:$0xff] %v718
        %727 = vst [vmem:[#allocation2 + $0x11] sm:$0xff] %v719
        %728 = vst [vmem:[#allocation2 + $0x19] sm:$0xff] %v720
        %729 = vst [vmem:[#allocation2 + $0x21] sm:$0xff] %v721
        %730 = vst [vmem:[#allocation2 + $0x29] sm:$0xff] %v722
        %731 = vst [vmem:[#allocation2 + $0x31] sm:$0xff] %v723
        %732 = vst [vmem:[#allocation2 + $0x39] sm:$0xff] %v724
        %v733 = vld [vmem:[%s8] sm:$0x1]
        %v734 = vld [vmem:[#allocation2] sm:$0xff]
        %v735 = vld [vmem:[#allocation2 + $0x8] sm:$0xff]
        %v736 = vld [vmem:[#allocation2 + $0x10] sm:$0xff]
        %v737 = vld [vmem:[#allocation2 + $0x18] sm:$0xff]
        %v738 = vld [vmem:[#allocation2 + $0x20] sm:$0xff]
        %v739 = vld [vmem:[#allocation2 + $0x28] sm:$0xff]
        %v740 = vld [vmem:[#allocation2 + $0x30] sm:$0xff]
        %v741 = vld [vmem:[#allocation2 + $0x38] sm:$0xff]
        %v742 = vld [vmem:[#allocation2 + $0x40] sm:$0x3]
        %v743 = vpack.c.bf16 %v735, %v734
        %v744 = vpack.c.bf16 %v737, %v736
        %v745 = vpack.c.bf16 %v739, %v738
        %v746 = vpack.c.bf16 %v741, %v740
        %v747 = vld [vmem:[%s7] sm:$0xf]
        %v748 = vld [vmem:[%s7 + $0x4] sm:$0xf]
        %v749 = vld [vmem:[%s7 + $0x8] sm:$0xf]
        %v750 = vld [vmem:[%s7 + $0xc] sm:$0xf]
        %v751 = vld [vmem:[%s7 + $0x10] sm:$0xf]
        %v752 = vld [vmem:[%s7 + $0x14] sm:$0xf]
        %v753 = vld [vmem:[%s7 + $0x18] sm:$0xf]
        %v754 = vld [vmem:[%s7 + $0x1c] sm:$0xf]
        %v755 = vld [vmem:[%s7 + $0x20] sm:$0xf]
        %v756 = vld [vmem:[%s7 + $0x24] sm:$0xf]
        %v757 = vld [vmem:[%s7 + $0x28] sm:$0xf]
        %v758 = vld [vmem:[%s7 + $0x2c] sm:$0xf]
        %v759 = vld [vmem:[%s7 + $0x30] sm:$0xf]
        %v760 = vld [vmem:[%s7 + $0x34] sm:$0xf]
        %v761 = vld [vmem:[%s7 + $0x38] sm:$0xf]
        %v762 = vld [vmem:[%s7 + $0x3c] sm:$0xf]
        %v763 = vpack.c.bf16 %v742, %v742
        %s764 = scalar_lea.vmem %s7, 64
        %v765 = vld [vmem:[%s764] sm:$0xf]
        %v766 = vld [vmem:[%s764 + $0x4] sm:$0xf]
        %v767 = vld [vmem:[%s764 + $0x8] sm:$0xf]
        %v768 = vld [vmem:[%s764 + $0xc] sm:$0xf]
        %v769 = vld [vmem:[%s764 + $0x10] sm:$0xf]
        %v770 = vld [vmem:[%s764 + $0x14] sm:$0xf]
        %v771 = vld [vmem:[%s764 + $0x18] sm:$0xf]
        %v772 = vld [vmem:[%s764 + $0x1c] sm:$0xf]
        %v773 = vld [vmem:[%s764 + $0x20] sm:$0xf]
        %v774 = vld [vmem:[%s764 + $0x24] sm:$0xf]
        %v775 = vld [vmem:[%s764 + $0x28] sm:$0xf]
        %v776 = vld [vmem:[%s764 + $0x2c] sm:$0xf]
        %v777 = vld [vmem:[%s764 + $0x30] sm:$0xf]
        %v778 = vld [vmem:[%s764 + $0x34] sm:$0xf]
        %v779 = vld [vmem:[%s764 + $0x38] sm:$0xf]
        %v780 = vld [vmem:[%s764 + $0x3c] sm:$0xf]
        %vm781 = vsmask.f32 7424
        %v783 = vshrl.u32 %v743, 16
        %v785 = vshll.u32 %v743, 16
        %v787 = vrot.slane %v785, 1
        %v788 = vor.u32 %v783, %v787
        %v790 = vshll.u32 %v744, 16
        %v792 = vrot.slane %v790, 1
        %v793 = vsel %vm781, %v788, %v792
        %v794 = vshrl.u32 %v744, 16
        %v796 = vor.u32 %v794, %v792
        %v798 = vshll.u32 %v745, 16
        %v800 = vrot.slane %v798, 1
        %v801 = vsel %vm781, %v796, %v800
        %v802 = vshrl.u32 %v745, 16
        %v804 = vor.u32 %v802, %v800
        %v806 = vshll.u32 %v746, 16
        %v808 = vrot.slane %v806, 1
        %v809 = vsel %vm781, %v804, %v808
        %v810 = vshrl.u32 %v746, 16
        %v812 = vor.u32 %v810, %v808
        %v814 = vshll.u32 %v763, 16
        %v816 = vrot.slane %v814, 1
        %v817 = vsel %vm781, %v812, %v816
        %v838 = vunpack.c.l.b16 %v765
        %v839 = vunpack.c.l.b16 %v766
        %v840 = vunpack.c.l.b16 %v767
        %v841 = vunpack.c.l.b16 %v768
        %v842 = vunpack.c.l.b16 %v769
        %v843 = vunpack.c.l.b16 %v770
        %v844 = vunpack.c.l.b16 %v771
        %v845 = vunpack.c.l.b16 %v772
        %v846 = vunpack.c.l.b16 %v773
        %v847 = vunpack.c.l.b16 %v774
        %v848 = vunpack.c.l.b16 %v775
        %v849 = vunpack.c.l.b16 %v776
        %v850 = vunpack.c.l.b16 %v777
        %v851 = vunpack.c.l.b16 %v778
        %v852 = vunpack.c.l.b16 %v779
        %v853 = vunpack.c.l.b16 %v780
        %v854 = vpack.c.b16 %v839, %v838
        %v855 = vpack.c.b16 %v841, %v840
        %v856 = vpack.c.b16 %v843, %v842
        %v857 = vpack.c.b16 %v845, %v844
        %v858 = vpack.c.b16 %v847, %v846
        %v859 = vpack.c.b16 %v849, %v848
        %v860 = vpack.c.b16 %v851, %v850
        %v861 = vpack.c.b16 %v853, %v852
        %870 = vmatprep.subr.bf16.mxu0 0
        %871 = vmatpush1.bf16.msra.mxu0 %v854
        %872 = vmatprep.subr.bf16.mxu0 0
        %873 = vmatpush1.bf16.msra.mxu0 %v855
        %874 = vmatprep.subr.bf16.mxu0 0
        %875 = vmatpush1.bf16.msra.mxu0 %v856
        %876 = vmatprep.subr.bf16.mxu0 0
        %877 = vmatpush1.bf16.msra.mxu0 %v857
        %878 = vmatprep.subr.bf16.mxu0 0
        %879 = vmatpush1.bf16.msra.mxu0 %v858
        %880 = vmatprep.subr.bf16.mxu0 0
        %881 = vmatpush1.bf16.msra.mxu0 %v859
        %882 = vmatprep.subr.bf16.mxu0 0
        %883 = vmatpush1.bf16.msra.mxu0 %v860
        %884 = vmatprep.subr.bf16.mxu0 0
        %885 = vmatpush1.bf16.msra.mxu0 %v861
        %886 = vmatprep.subr.bf16.mxu0 0
        %887 = vmatpush1.bf16.msra.mxu0 0
        %888 = vmatprep.subr.bf16.mxu0 0
        %889 = vmatpush1.bf16.msra.mxu0 0
        %890 = vmatprep.subr.bf16.mxu0 0
        %891 = vmatpush1.bf16.msra.mxu0 0
        %892 = vmatprep.subr.bf16.mxu0 0
        %893 = vmatpush1.bf16.msra.mxu0 0
        %894 = vmatprep.subr.bf16.mxu0 0
        %895 = vmatpush1.bf16.msra.mxu0 0
        %896 = vmatprep.subr.bf16.mxu0 0
        %897 = vmatpush1.bf16.msra.mxu0 0
        %898 = vmatprep.subr.bf16.mxu0 0
        %899 = vmatpush1.bf16.msra.mxu0 0
        %900 = vmatprep.subr.bf16.mxu0 0
        %901 = vmatpush1.bf16.msra.mxu0 0
        %902 = vmatprep.mubr.bf16.mxu0 0
        %903 = vmatmul.mubr.bf16.gmra.mrb[0].mxu0 %v793
        %v904 = vpop.f32.mrb[0].mxu0
        %v905 = vadd.f32 0.0, %v904
        %v906 = vpop.f32.mrb[0].mxu0
        %v907 = vpop.f32.mrb[0].mxu0
        %v908 = vadd.f32 0.0, %v907
        %v909 = vpop.f32.mrb[0].mxu0
        %910 = vmatprep.mubr.bf16.mxu0 0
        %911 = vmatmul.mubr.bf16.gmra.mrb[0].mxu0 %v801
        %v912 = vpop.f32.mrb[0].mxu0
        %v913 = vadd.f32 0.0, %v912
        %v914 = vpop.f32.mrb[0].mxu0
        %v915 = vpop.f32.mrb[0].mxu0
        %v916 = vadd.f32 0.0, %v915
        %v917 = vpop.f32.mrb[0].mxu0
        %918 = vmatprep.mubr.bf16.mxu0 0
        %919 = vmatmul.mubr.bf16.gmra.mrb[0].mxu0 %v809
        %v920 = vpop.f32.mrb[0].mxu0
        %v921 = vadd.f32 0.0, %v920
        %v922 = vpop.f32.mrb[0].mxu0
        %v923 = vpop.f32.mrb[0].mxu0
        %v924 = vadd.f32 0.0, %v923
        %v925 = vpop.f32.mrb[0].mxu0
        %926 = vmatprep.mubr.bf16.mxu0 0
        %927 = vmatmul.mubr.bf16.gmra.mrb[0].mxu0 %v817
        %v928 = vpop.f32.mrb[0].mxu0
        %v929 = vadd.f32 0.0, %v928
        %v930 = vpop.f32.mrb[0].mxu0
        %v931 = vpop.f32.mrb[0].mxu0
        %v932 = vadd.f32 0.0, %v931
        %v933 = vpop.f32.mrb[0].mxu0
        %934 = vdwg.mxu0
        %v951 = vunpack.c.l.b16 %v747
        %v952 = vunpack.c.l.b16 %v748
        %v953 = vunpack.c.l.b16 %v749
        %v954 = vunpack.c.l.b16 %v750
        %v955 = vunpack.c.l.b16 %v751
        %v956 = vunpack.c.l.b16 %v752
        %v957 = vunpack.c.l.b16 %v753
        %v958 = vunpack.c.l.b16 %v754
        %v959 = vunpack.c.l.b16 %v755
        %v960 = vunpack.c.l.b16 %v756
        %v961 = vunpack.c.l.b16 %v757
        %v962 = vunpack.c.l.b16 %v758
        %v963 = vunpack.c.l.b16 %v759
        %v964 = vunpack.c.l.b16 %v760
        %v965 = vunpack.c.l.b16 %v761
        %v966 = vunpack.c.l.b16 %v762
        %v967 = vpack.c.b16 %v952, %v951
        %v968 = vpack.c.b16 %v954, %v953
        %v969 = vpack.c.b16 %v956, %v955
        %v970 = vpack.c.b16 %v958, %v957
        %v971 = vpack.c.b16 %v960, %v959
        %v972 = vpack.c.b16 %v962, %v961
        %v973 = vpack.c.b16 %v964, %v963
        %v974 = vpack.c.b16 %v966, %v965
        %983 = vmatprep.subr.bf16.mxu0 0
        %984 = vmatpush1.bf16.msra.mxu0 %v967
        %985 = vmatprep.subr.bf16.mxu0 0
        %986 = vmatpush1.bf16.msra.mxu0 %v968
        %987 = vmatprep.subr.bf16.mxu0 0
        %988 = vmatpush1.bf16.msra.mxu0 %v969
        %989 = vmatprep.subr.bf16.mxu0 0
        %990 = vmatpush1.bf16.msra.mxu0 %v970
        %991 = vmatprep.subr.bf16.mxu0 0
        %992 = vmatpush1.bf16.msra.mxu0 %v971
        %993 = vmatprep.subr.bf16.mxu0 0
        %994 = vmatpush1.bf16.msra.mxu0 %v972
        %995 = vmatprep.subr.bf16.mxu0 0
        %996 = vmatpush1.bf16.msra.mxu0 %v973
        %997 = vmatprep.subr.bf16.mxu0 0
        %998 = vmatpush1.bf16.msra.mxu0 %v974
        %999 = vmatprep.subr.bf16.mxu0 0
        %1000 = vmatpush1.bf16.msra.mxu0 0
        %1001 = vmatprep.subr.bf16.mxu0 0
        %1002 = vmatpush1.bf16.msra.mxu0 0
        %1003 = vmatprep.subr.bf16.mxu0 0
        %1004 = vmatpush1.bf16.msra.mxu0 0
        %1005 = vmatprep.subr.bf16.mxu0 0
        %1006 = vmatpush1.bf16.msra.mxu0 0
        %1007 = vmatprep.subr.bf16.mxu0 0
        %1008 = vmatpush1.bf16.msra.mxu0 0
        %1009 = vmatprep.subr.bf16.mxu0 0
        %1010 = vmatpush1.bf16.msra.mxu0 0
        %1011 = vmatprep.subr.bf16.mxu0 0
        %1012 = vmatpush1.bf16.msra.mxu0 0
        %1013 = vmatprep.subr.bf16.mxu0 0
        %1014 = vmatpush1.bf16.msra.mxu0 0
        %1015 = vmatprep.mubr.bf16.mxu0 0
        %1016 = vmatmul.mubr.bf16.gmra.mrb[0].mxu0 %v743
        %v1017 = vpop.f32.mrb[0].mxu0
        %v1018 = vadd.f32 %v905, %v1017
        %v1019 = vpop.f32.mrb[0].mxu0
        %v1020 = vpop.f32.mrb[0].mxu0
        %v1021 = vadd.f32 %v908, %v1020
        %v1022 = vpop.f32.mrb[0].mxu0
        %1023 = vmatprep.mubr.bf16.mxu0 0
        %1024 = vmatmul.mubr.bf16.gmra.mrb[0].mxu0 %v744
        %v1025 = vpop.f32.mrb[0].mxu0
        %v1026 = vadd.f32 %v913, %v1025
        %v1027 = vpop.f32.mrb[0].mxu0
        %v1028 = vpop.f32.mrb[0].mxu0
        %v1029 = vadd.f32 %v916, %v1028
        %v1030 = vpop.f32.mrb[0].mxu0
        %1031 = vmatprep.mubr.bf16.mxu0 0
        %1032 = vmatmul.mubr.bf16.gmra.mrb[0].mxu0 %v745
        %v1033 = vpop.f32.mrb[0].mxu0
        %v1034 = vadd.f32 %v921, %v1033
        %v1035 = vpop.f32.mrb[0].mxu0
        %v1036 = vpop.f32.mrb[0].mxu0
        %v1037 = vadd.f32 %v924, %v1036
        %v1038 = vpop.f32.mrb[0].mxu0
        %1039 = vmatprep.mubr.bf16.mxu0 0
        %1040 = vmatmul.mubr.bf16.gmra.mrb[0].mxu0 %v746
        %v1041 = vpop.f32.mrb[0].mxu0
        %v1042 = vadd.f32 %v929, %v1041
        %v1043 = vpop.f32.mrb[0].mxu0
        %v1044 = vpop.f32.mrb[0].mxu0
        %v1045 = vadd.f32 %v932, %v1044
        %v1046 = vpop.f32.mrb[0].mxu0
        %1047 = vdwg.mxu0
        %s1048 = scalar_lea.vmem %s7, 128
        %v1049 = vld [vmem:[%s1048] sm:$0xf]
        %v1050 = vld [vmem:[%s1048 + $0x4] sm:$0xf]
        %v1051 = vld [vmem:[%s1048 + $0x8] sm:$0xf]
        %v1052 = vld [vmem:[%s1048 + $0xc] sm:$0xf]
        %v1053 = vld [vmem:[%s1048 + $0x10] sm:$0xf]
        %v1054 = vld [vmem:[%s1048 + $0x14] sm:$0xf]
        %v1055 = vld [vmem:[%s1048 + $0x18] sm:$0xf]
        %v1056 = vld [vmem:[%s1048 + $0x1c] sm:$0xf]
        %v1057 = vld [vmem:[%s1048 + $0x20] sm:$0xf]
        %v1058 = vld [vmem:[%s1048 + $0x24] sm:$0xf]
        %v1059 = vld [vmem:[%s1048 + $0x28] sm:$0xf]
        %v1060 = vld [vmem:[%s1048 + $0x2c] sm:$0xf]
        %v1061 = vld [vmem:[%s1048 + $0x30] sm:$0xf]
        %v1062 = vld [vmem:[%s1048 + $0x34] sm:$0xf]
        %v1063 = vld [vmem:[%s1048 + $0x38] sm:$0xf]
        %v1064 = vld [vmem:[%s1048 + $0x3c] sm:$0xf]
        %vm1070 = vcmask 1046528
        %v1071 = vrot.slane %v743, 1
        %v1072 = vrot.slane %v744, 1
        %v1073 = vsel %vm1070, %v1071, %v1072
        %v1074 = vrot.slane %v745, 1
        %v1075 = vsel %vm1070, %v1072, %v1074
        %v1076 = vrot.slane %v746, 1
        %v1077 = vsel %vm1070, %v1074, %v1076
        %v1078 = vrot.slane %v763, 1
        %v1079 = vsel %vm1070, %v1076, %v1078
        %v1100 = vunpack.c.l.b16 %v1049
        %v1101 = vunpack.c.l.b16 %v1050
        %v1102 = vunpack.c.l.b16 %v1051
        %v1103 = vunpack.c.l.b16 %v1052
        %v1104 = vunpack.c.l.b16 %v1053
        %v1105 = vunpack.c.l.b16 %v1054
        %v1106 = vunpack.c.l.b16 %v1055
        %v1107 = vunpack.c.l.b16 %v1056
        %v1108 = vunpack.c.l.b16 %v1057
        %v1109 = vunpack.c.l.b16 %v1058
        %v1110 = vunpack.c.l.b16 %v1059
        %v1111 = vunpack.c.l.b16 %v1060
        %v1112 = vunpack.c.l.b16 %v1061
        %v1113 = vunpack.c.l.b16 %v1062
        %v1114 = vunpack.c.l.b16 %v1063
        %v1115 = vunpack.c.l.b16 %v1064
        %v1116 = vpack.c.b16 %v1101, %v1100
        %v1117 = vpack.c.b16 %v1103, %v1102
        %v1118 = vpack.c.b16 %v1105, %v1104
        %v1119 = vpack.c.b16 %v1107, %v1106
        %v1120 = vpack.c.b16 %v1109, %v1108
        %v1121 = vpack.c.b16 %v1111, %v1110
        %v1122 = vpack.c.b16 %v1113, %v1112
        %v1123 = vpack.c.b16 %v1115, %v1114
        %1132 = vmatprep.subr.bf16.mxu0 0
        %1133 = vmatpush1.bf16.msra.mxu0 %v1116
        %1134 = vmatprep.subr.bf16.mxu0 0
        %1135 = vmatpush1.bf16.msra.mxu0 %v1117
        %1136 = vmatprep.subr.bf16.mxu0 0
        %1137 = vmatpush1.bf16.msra.mxu0 %v1118
        %1138 = vmatprep.subr.bf16.mxu0 0
        %1139 = vmatpush1.bf16.msra.mxu0 %v1119
        %1140 = vmatprep.subr.bf16.mxu0 0
        %1141 = vmatpush1.bf16.msra.mxu0 %v1120
        %1142 = vmatprep.subr.bf16.mxu0 0
        %1143 = vmatpush1.bf16.msra.mxu0 %v1121
        %1144 = vmatprep.subr.bf16.mxu0 0
        %1145 = vmatpush1.bf16.msra.mxu0 %v1122
        %1146 = vmatprep.subr.bf16.mxu0 0
        %1147 = vmatpush1.bf16.msra.mxu0 %v1123
        %1148 = vmatprep.subr.bf16.mxu0 0
        %1149 = vmatpush1.bf16.msra.mxu0 0
        %1150 = vmatprep.subr.bf16.mxu0 0
        %1151 = vmatpush1.bf16.msra.mxu0 0
        %1152 = vmatprep.subr.bf16.mxu0 0
        %1153 = vmatpush1.bf16.msra.mxu0 0
        %1154 = vmatprep.subr.bf16.mxu0 0
        %1155 = vmatpush1.bf16.msra.mxu0 0
        %1156 = vmatprep.subr.bf16.mxu0 0
        %1157 = vmatpush1.bf16.msra.mxu0 0
        %1158 = vmatprep.subr.bf16.mxu0 0
        %1159 = vmatpush1.bf16.msra.mxu0 0
        %1160 = vmatprep.subr.bf16.mxu0 0
        %1161 = vmatpush1.bf16.msra.mxu0 0
        %1162 = vmatprep.subr.bf16.mxu0 0
        %1163 = vmatpush1.bf16.msra.mxu0 0
        %1164 = vmatprep.mubr.bf16.mxu0 0
        %1165 = vmatmul.mubr.bf16.gmra.mrb[0].mxu0 %v1073
        %v1166 = vpop.f32.mrb[0].mxu0
        %v1167 = vadd.f32 0.0, %v1166
        %v1168 = vpop.f32.mrb[0].mxu0
        %v1169 = vpop.f32.mrb[0].mxu0
        %v1170 = vadd.f32 0.0, %v1169
        %v1171 = vpop.f32.mrb[0].mxu0
        %1172 = vmatprep.mubr.bf16.mxu0 0
        %1173 = vmatmul.mubr.bf16.gmra.mrb[0].mxu0 %v1075
        %v1174 = vpop.f32.mrb[0].mxu0
        %v1175 = vadd.f32 0.0, %v1174
        %v1176 = vpop.f32.mrb[0].mxu0
        %v1177 = vpop.f32.mrb[0].mxu0
        %v1178 = vadd.f32 0.0, %v1177
        %v1179 = vpop.f32.mrb[0].mxu0
        %1180 = vmatprep.mubr.bf16.mxu0 0
        %1181 = vmatmul.mubr.bf16.gmra.mrb[0].mxu0 %v1077
        %v1182 = vpop.f32.mrb[0].mxu0
        %v1183 = vadd.f32 0.0, %v1182
        %v1184 = vpop.f32.mrb[0].mxu0
        %v1185 = vpop.f32.mrb[0].mxu0
        %v1186 = vadd.f32 0.0, %v1185
        %v1187 = vpop.f32.mrb[0].mxu0
        %1188 = vmatprep.mubr.bf16.mxu0 0
        %1189 = vmatmul.mubr.bf16.gmra.mrb[0].mxu0 %v1079
        %v1190 = vpop.f32.mrb[0].mxu0
        %v1191 = vadd.f32 0.0, %v1190
        %v1192 = vpop.f32.mrb[0].mxu0
        %v1193 = vpop.f32.mrb[0].mxu0
        %v1194 = vadd.f32 0.0, %v1193
        %v1195 = vpop.f32.mrb[0].mxu0
        %1196 = vdwg.mxu0
        %v1197 = vadd.f32 %v1018, %v1167
        %v1198 = vadd.f32 %v1021, %v1170
        %v1199 = vadd.f32 %v1026, %v1175
        %v1200 = vadd.f32 %v1029, %v1178
        %v1201 = vadd.f32 %v1034, %v1183
        %v1202 = vadd.f32 %v1037, %v1186
        %v1203 = vadd.f32 %v1042, %v1191
        %v1204 = vadd.f32 %v1045, %v1194
        %v1206 = vlaneseq
        %v1207 = vshrl.u32 %v1206, 7
        %v1208 = vsub.s32 0, %v1207
        %v1209 = vrot.slane %v733, %v1208
        %v1211 = vadd.f32 %v1197, %v1209
        %v1212 = vadd.f32 %v1198, %v1209
        %v1213 = vadd.f32 %v1199, %v1209
        %v1214 = vadd.f32 %v1200, %v1209
        %v1215 = vadd.f32 %v1201, %v1209
        %v1216 = vadd.f32 %v1202, %v1209
        %v1217 = vadd.f32 %v1203, %v1209
        %v1218 = vadd.f32 %v1204, %v1209
        %v1219 = vpack.c.bf16 %v1212, %v1211
        %v1220 = vpack.c.bf16 %v1214, %v1213
        %v1221 = vpack.c.bf16 %v1216, %v1215
        %v1222 = vpack.c.bf16 %v1218, %v1217
        %v1223 = vld [vmem:[%s9] sm:$0xf]
        %v1224 = vld [vmem:[%s9 + $0x4] sm:$0xf]
        %v1225 = vld [vmem:[%s9 + $0x8] sm:$0xf]
        %v1226 = vld [vmem:[%s9 + $0xc] sm:$0xf]
        %v1227 = vld [vmem:[%s9 + $0x10] sm:$0xf]
        %v1228 = vld [vmem:[%s9 + $0x14] sm:$0xf]
        %v1229 = vld [vmem:[%s9 + $0x18] sm:$0xf]
        %v1230 = vld [vmem:[%s9 + $0x1c] sm:$0xf]
        %v1231 = vld [vmem:[%s9 + $0x20] sm:$0xf]
        %v1232 = vld [vmem:[%s9 + $0x24] sm:$0xf]
        %v1233 = vld [vmem:[%s9 + $0x28] sm:$0xf]
        %v1234 = vld [vmem:[%s9 + $0x2c] sm:$0xf]
        %v1235 = vld [vmem:[%s9 + $0x30] sm:$0xf]
        %v1236 = vld [vmem:[%s9 + $0x34] sm:$0xf]
        %v1237 = vld [vmem:[%s9 + $0x38] sm:$0xf]
        %v1238 = vld [vmem:[%s9 + $0x3c] sm:$0xf]
        %v1239 = vld [vmem:[%s10] sm:$0x1]
        %v1241 = vlaneseq
        %v1242 = vshrl.u32 %v1241, 7
        %v1243 = vsub.s32 0, %v1242
        %v1244 = vrot.slane %v1239, %v1243
        %v1262 = vunpack.c.l.b16 %v1223
        %v1263 = vunpack.c.l.b16 %v1224
        %v1264 = vunpack.c.l.b16 %v1225
        %v1265 = vunpack.c.l.b16 %v1226
        %v1266 = vunpack.c.l.b16 %v1227
        %v1267 = vunpack.c.l.b16 %v1228
        %v1268 = vunpack.c.l.b16 %v1229
        %v1269 = vunpack.c.l.b16 %v1230
        %v1270 = vunpack.c.l.b16 %v1231
        %v1271 = vunpack.c.l.b16 %v1232
        %v1272 = vunpack.c.l.b16 %v1233
        %v1273 = vunpack.c.l.b16 %v1234
        %v1274 = vunpack.c.l.b16 %v1235
        %v1275 = vunpack.c.l.b16 %v1236
        %v1276 = vunpack.c.l.b16 %v1237
        %v1277 = vunpack.c.l.b16 %v1238
        %v1278 = vpack.c.b16 %v1263, %v1262
        %v1279 = vpack.c.b16 %v1265, %v1264
        %v1280 = vpack.c.b16 %v1267, %v1266
        %v1281 = vpack.c.b16 %v1269, %v1268
        %v1282 = vpack.c.b16 %v1271, %v1270
        %v1283 = vpack.c.b16 %v1273, %v1272
        %v1284 = vpack.c.b16 %v1275, %v1274
        %v1285 = vpack.c.b16 %v1277, %v1276
        %1294 = vmatprep.subr.bf16.mxu0 0
        %1295 = vmatpush1.bf16.msra.mxu0 %v1278
        %1296 = vmatprep.subr.bf16.mxu0 0
        %1297 = vmatpush1.bf16.msra.mxu0 %v1279
        %1298 = vmatprep.subr.bf16.mxu0 0
        %1299 = vmatpush1.bf16.msra.mxu0 %v1280
        %1300 = vmatprep.subr.bf16.mxu0 0
        %1301 = vmatpush1.bf16.msra.mxu0 %v1281
        %1302 = vmatprep.subr.bf16.mxu0 0
        %1303 = vmatpush1.bf16.msra.mxu0 %v1282
        %1304 = vmatprep.subr.bf16.mxu0 0
        %1305 = vmatpush1.bf16.msra.mxu0 %v1283
        %1306 = vmatprep.subr.bf16.mxu0 0
        %1307 = vmatpush1.bf16.msra.mxu0 %v1284
        %1308 = vmatprep.subr.bf16.mxu0 0
        %1309 = vmatpush1.bf16.msra.mxu0 %v1285
        %1310 = vmatprep.subr.bf16.mxu0 0
        %1311 = vmatpush1.bf16.msra.mxu0 0
        %1312 = vmatprep.subr.bf16.mxu0 0
        %1313 = vmatpush1.bf16.msra.mxu0 0
        %1314 = vmatprep.subr.bf16.mxu0 0
        %1315 = vmatpush1.bf16.msra.mxu0 0
        %1316 = vmatprep.subr.bf16.mxu0 0
        %1317 = vmatpush1.bf16.msra.mxu0 0
        %1318 = vmatprep.subr.bf16.mxu0 0
        %1319 = vmatpush1.bf16.msra.mxu0 0
        %1320 = vmatprep.subr.bf16.mxu0 0
        %1321 = vmatpush1.bf16.msra.mxu0 0
        %1322 = vmatprep.subr.bf16.mxu0 0
        %1323 = vmatpush1.bf16.msra.mxu0 0
        %1324 = vmatprep.subr.bf16.mxu0 0
        %1325 = vmatpush1.bf16.msra.mxu0 0
        %1326 = vmatprep.mubr.bf16.mxu0 0
        %1327 = vmatmul.mubr.bf16.gmra.mrb[0].mxu0 %v1219
        %v1328 = vpop.f32.mrb[0].mxu0
        %v1329 = vadd.f32 %v1244, %v1328
        %v1330 = vpop.f32.mrb[0].mxu0
        %v1331 = vpop.f32.mrb[0].mxu0
        %v1332 = vadd.f32 %v1244, %v1331
        %v1333 = vpop.f32.mrb[0].mxu0
        %1334 = vmatprep.mubr.bf16.mxu0 0
        %1335 = vmatmul.mubr.bf16.gmra.mrb[0].mxu0 %v1220
        %v1336 = vpop.f32.mrb[0].mxu0
        %v1337 = vadd.f32 %v1244, %v1336
        %v1338 = vpop.f32.mrb[0].mxu0
        %v1339 = vpop.f32.mrb[0].mxu0
        %v1340 = vadd.f32 %v1244, %v1339
        %v1341 = vpop.f32.mrb[0].mxu0
        %1342 = vmatprep.mubr.bf16.mxu0 0
        %1343 = vmatmul.mubr.bf16.gmra.mrb[0].mxu0 %v1221
        %v1344 = vpop.f32.mrb[0].mxu0
        %v1345 = vadd.f32 %v1244, %v1344
        %v1346 = vpop.f32.mrb[0].mxu0
        %v1347 = vpop.f32.mrb[0].mxu0
        %v1348 = vadd.f32 %v1244, %v1347
        %v1349 = vpop.f32.mrb[0].mxu0
        %1350 = vmatprep.mubr.bf16.mxu0 0
        %1351 = vmatmul.mubr.bf16.gmra.mrb[0].mxu0 %v1222
        %v1352 = vpop.f32.mrb[0].mxu0
        %v1353 = vadd.f32 %v1244, %v1352
        %v1354 = vpop.f32.mrb[0].mxu0
        %v1355 = vpop.f32.mrb[0].mxu0
        %v1356 = vadd.f32 %v1244, %v1355
        %v1357 = vpop.f32.mrb[0].mxu0
        %1358 = vdwg.mxu0
        %v1359 = vmax.f32 %v1329, 0.0
        %v1360 = vmax.f32 %v1332, 0.0
        %v1361 = vmax.f32 %v1337, 0.0
        %v1362 = vmax.f32 %v1340, 0.0
        %v1363 = vmax.f32 %v1345, 0.0
        %v1364 = vmax.f32 %v1348, 0.0
        %v1365 = vmax.f32 %v1353, 0.0
        %v1366 = vmax.f32 %v1356, 0.0
        %v1367 = vpack.c.bf16 %v1360, %v1359
        %v1368 = vpack.c.bf16 %v1362, %v1361
        %v1369 = vpack.c.bf16 %v1364, %v1363
        %v1370 = vpack.c.bf16 %v1366, %v1365
        %v1371 = vld [vmem:[%s11] sm:$0xff]
        %v1372 = vld [vmem:[%s11 + $0x8] sm:$0xff]
        %v1373 = vld [vmem:[%s11 + $0x10] sm:$0xff]
        %v1374 = vld [vmem:[%s11 + $0x18] sm:$0xff]
        %v1375 = vld [vmem:[%s11 + $0x20] sm:$0xff]
        %v1376 = vld [vmem:[%s11 + $0x28] sm:$0xff]
        %v1377 = vld [vmem:[%s11 + $0x30] sm:$0xff]
        %v1378 = vld [vmem:[%s11 + $0x38] sm:$0xff]
        %v1379 = vld [vmem:[%s11 + $0x40] sm:$0xff]
        %v1380 = vld [vmem:[%s11 + $0x48] sm:$0xff]
        %v1381 = vld [vmem:[%s11 + $0x50] sm:$0xff]
        %v1382 = vld [vmem:[%s11 + $0x58] sm:$0xff]
        %v1383 = vld [vmem:[%s11 + $0x60] sm:$0xff]
        %v1384 = vld [vmem:[%s11 + $0x68] sm:$0xff]
        %v1385 = vld [vmem:[%s11 + $0x70] sm:$0xff]
        %v1386 = vld [vmem:[%s11 + $0x78] sm:$0xff]
        %v1387 = vld [vmem:[%s12] sm:$0x3]
        %v1389 = vlaneseq
        %v1390 = vshrl.u32 %v1389, 7
        %v1391 = vsub.s32 0, %v1390
        %v1392 = vrot.slane %v1387, %v1391
        %v1393 = vlaneseq
        %v1394 = vshrl.u32 %v1393, 7
        %v1395 = vsub.s32 1, %v1394
        %v1396 = vrot.slane %v1387, %v1395
        %v1415 = vunpack.c.l.b16 %v1371
        %v1416 = vunpack.c.h.b16 %v1371
        %v1417 = vunpack.c.l.b16 %v1372
        %v1418 = vunpack.c.h.b16 %v1372
        %v1419 = vunpack.c.l.b16 %v1373
        %v1420 = vunpack.c.h.b16 %v1373
        %v1421 = vunpack.c.l.b16 %v1374
        %v1422 = vunpack.c.h.b16 %v1374
        %v1423 = vunpack.c.l.b16 %v1375
        %v1424 = vunpack.c.h.b16 %v1375
        %v1425 = vunpack.c.l.b16 %v1376
        %v1426 = vunpack.c.h.b16 %v1376
        %v1427 = vunpack.c.l.b16 %v1377
        %v1428 = vunpack.c.h.b16 %v1377
        %v1429 = vunpack.c.l.b16 %v1378
        %v1430 = vunpack.c.h.b16 %v1378
        %v1431 = vunpack.c.l.b16 %v1379
        %v1432 = vunpack.c.h.b16 %v1379
        %v1433 = vunpack.c.l.b16 %v1380
        %v1434 = vunpack.c.h.b16 %v1380
        %v1435 = vunpack.c.l.b16 %v1381
        %v1436 = vunpack.c.h.b16 %v1381
        %v1437 = vunpack.c.l.b16 %v1382
        %v1438 = vunpack.c.h.b16 %v1382
        %v1439 = vunpack.c.l.b16 %v1383
        %v1440 = vunpack.c.h.b16 %v1383
        %v1441 = vunpack.c.l.b16 %v1384
        %v1442 = vunpack.c.h.b16 %v1384
        %v1443 = vunpack.c.l.b16 %v1385
        %v1444 = vunpack.c.h.b16 %v1385
        %v1445 = vunpack.c.l.b16 %v1386
        %v1446 = vunpack.c.h.b16 %v1386
        %v1447 = vpack.c.b16 %v1417, %v1415
        %v1448 = vpack.c.b16 %v1418, %v1416
        %v1449 = vpack.c.b16 %v1421, %v1419
        %v1450 = vpack.c.b16 %v1422, %v1420
        %v1451 = vpack.c.b16 %v1425, %v1423
        %v1452 = vpack.c.b16 %v1426, %v1424
        %v1453 = vpack.c.b16 %v1429, %v1427
        %v1454 = vpack.c.b16 %v1430, %v1428
        %v1455 = vpack.c.b16 %v1433, %v1431
        %v1456 = vpack.c.b16 %v1434, %v1432
        %v1457 = vpack.c.b16 %v1437, %v1435
        %v1458 = vpack.c.b16 %v1438, %v1436
        %v1459 = vpack.c.b16 %v1441, %v1439
        %v1460 = vpack.c.b16 %v1442, %v1440
        %v1461 = vpack.c.b16 %v1445, %v1443
        %v1462 = vpack.c.b16 %v1446, %v1444
        %1479 = vmatprep.subr.bf16.mxu0 %v1448
        %1480 = vmatpush1.bf16.msra.mxu0 %v1447
        %1481 = vmatprep.subr.bf16.mxu0 %v1450
        %1482 = vmatpush1.bf16.msra.mxu0 %v1449
        %1483 = vmatprep.subr.bf16.mxu0 %v1452
        %1484 = vmatpush1.bf16.msra.mxu0 %v1451
        %1485 = vmatprep.subr.bf16.mxu0 %v1454
        %1486 = vmatpush1.bf16.msra.mxu0 %v1453
        %1487 = vmatprep.subr.bf16.mxu0 %v1456
        %1488 = vmatpush1.bf16.msra.mxu0 %v1455
        %1489 = vmatprep.subr.bf16.mxu0 %v1458
        %1490 = vmatpush1.bf16.msra.mxu0 %v1457
        %1491 = vmatprep.subr.bf16.mxu0 %v1460
        %1492 = vmatpush1.bf16.msra.mxu0 %v1459
        %1493 = vmatprep.subr.bf16.mxu0 %v1462
        %1494 = vmatpush1.bf16.msra.mxu0 %v1461
        %1495 = vmatprep.subr.bf16.mxu0 0
        %1496 = vmatpush1.bf16.msra.mxu0 0
        %1497 = vmatprep.subr.bf16.mxu0 0
        %1498 = vmatpush1.bf16.msra.mxu0 0
        %1499 = vmatprep.subr.bf16.mxu0 0
        %1500 = vmatpush1.bf16.msra.mxu0 0
        %1501 = vmatprep.subr.bf16.mxu0 0
        %1502 = vmatpush1.bf16.msra.mxu0 0
        %1503 = vmatprep.subr.bf16.mxu0 0
        %1504 = vmatpush1.bf16.msra.mxu0 0
        %1505 = vmatprep.subr.bf16.mxu0 0
        %1506 = vmatpush1.bf16.msra.mxu0 0
        %1507 = vmatprep.subr.bf16.mxu0 0
        %1508 = vmatpush1.bf16.msra.mxu0 0
        %1509 = vmatprep.subr.bf16.mxu0 0
        %1510 = vmatpush1.bf16.msra.mxu0 0
        %1511 = vmatprep.mubr.bf16.mxu0 0
        %1512 = vmatmul.mubr.bf16.gmra.mrb[0].mxu0 %v1367
        %v1513 = vpop.f32.mrb[0].mxu0
        %v1514 = vadd.f32 %v1392, %v1513
        %v1515 = vpop.f32.mrb[0].mxu0
        %v1516 = vadd.f32 %v1396, %v1515
        %v1517 = vpop.f32.mrb[0].mxu0
        %v1518 = vadd.f32 %v1392, %v1517
        %v1519 = vpop.f32.mrb[0].mxu0
        %v1520 = vadd.f32 %v1396, %v1519
        %1521 = vmatprep.mubr.bf16.mxu0 0
        %1522 = vmatmul.mubr.bf16.gmra.mrb[0].mxu0 %v1368
        %v1523 = vpop.f32.mrb[0].mxu0
        %v1524 = vadd.f32 %v1392, %v1523
        %v1525 = vpop.f32.mrb[0].mxu0
        %v1526 = vadd.f32 %v1396, %v1525
        %v1527 = vpop.f32.mrb[0].mxu0
        %v1528 = vadd.f32 %v1392, %v1527
        %v1529 = vpop.f32.mrb[0].mxu0
        %v1530 = vadd.f32 %v1396, %v1529
        %1531 = vmatprep.mubr.bf16.mxu0 0
        %1532 = vmatmul.mubr.bf16.gmra.mrb[0].mxu0 %v1369
        %v1533 = vpop.f32.mrb[0].mxu0
        %v1534 = vadd.f32 %v1392, %v1533
        %v1535 = vpop.f32.mrb[0].mxu0
        %v1536 = vadd.f32 %v1396, %v1535
        %v1537 = vpop.f32.mrb[0].mxu0
        %v1538 = vadd.f32 %v1392, %v1537
        %v1539 = vpop.f32.mrb[0].mxu0
        %v1540 = vadd.f32 %v1396, %v1539
        %1541 = vmatprep.mubr.bf16.mxu0 0
        %1542 = vmatmul.mubr.bf16.gmra.mrb[0].mxu0 %v1370
        %v1543 = vpop.f32.mrb[0].mxu0
        %v1544 = vadd.f32 %v1392, %v1543
        %v1545 = vpop.f32.mrb[0].mxu0
        %v1546 = vadd.f32 %v1396, %v1545
        %v1547 = vpop.f32.mrb[0].mxu0
        %v1548 = vadd.f32 %v1392, %v1547
        %v1549 = vpop.f32.mrb[0].mxu0
        %v1550 = vadd.f32 %v1396, %v1549
        %1551 = vdwg.mxu0
        %v1552 = vlaneseq
        %v1553 = vand.u32 %v1552, 127
        %v1554 = vadd.s32 %v1553, 128
        %v1555 = vmax.f32 %v1514, %v1516
        %1556 = vmax.xlane.f32.xlu0 %v1555
        %v1557 = vpop.xlane.xlu0 %1556
        %v1558 = vmax.f32 %v1518, %v1520
        %1559 = vmax.xlane.f32.xlu0 %v1558
        %v1560 = vpop.xlane.xlu0 %1559
        %v1561 = vmax.f32 %v1524, %v1526
        %1562 = vmax.xlane.f32.xlu0 %v1561
        %v1563 = vpop.xlane.xlu0 %1562
        %v1564 = vmax.f32 %v1528, %v1530
        %1565 = vmax.xlane.f32.xlu0 %v1564
        %v1566 = vpop.xlane.xlu0 %1565
        %v1567 = vmax.f32 %v1534, %v1536
        %1568 = vmax.xlane.f32.xlu0 %v1567
        %v1569 = vpop.xlane.xlu0 %1568
        %v1570 = vmax.f32 %v1538, %v1540
        %1571 = vmax.xlane.f32.xlu0 %v1570
        %v1572 = vpop.xlane.xlu0 %1571
        %v1573 = vmax.f32 %v1544, %v1546
        %1574 = vmax.xlane.f32.xlu0 %v1573
        %v1575 = vpop.xlane.xlu0 %1574
        %v1576 = vmax.f32 %v1548, %v1550
        %1577 = vmax.xlane.f32.xlu0 %v1576
        %v1578 = vpop.xlane.xlu0 %1577
        %vm1579 = vcmp.eq.f32.partialorder %v1514, %v1557
        %vm1580 = vcmp.eq.f32.partialorder %v1516, %v1557
        %vm1581 = vcmp.eq.f32.partialorder %v1518, %v1560
        %vm1582 = vcmp.eq.f32.partialorder %v1520, %v1560
        %vm1583 = vcmp.eq.f32.partialorder %v1524, %v1563
        %vm1584 = vcmp.eq.f32.partialorder %v1526, %v1563
        %vm1585 = vcmp.eq.f32.partialorder %v1528, %v1566
        %vm1586 = vcmp.eq.f32.partialorder %v1530, %v1566
        %vm1587 = vcmp.eq.f32.partialorder %v1534, %v1569
        %vm1588 = vcmp.eq.f32.partialorder %v1536, %v1569
        %vm1589 = vcmp.eq.f32.partialorder %v1538, %v1572
        %vm1590 = vcmp.eq.f32.partialorder %v1540, %v1572
        %vm1591 = vcmp.eq.f32.partialorder %v1544, %v1575
        %vm1592 = vcmp.eq.f32.partialorder %v1546, %v1575
        %vm1593 = vcmp.eq.f32.partialorder %v1548, %v1578
        %vm1594 = vcmp.eq.f32.partialorder %v1550, %v1578
        %v1595 = vsel %vm1579, %v1553, 256
        %v1596 = vsel %vm1580, %v1554, 256
        %v1597 = vsel %vm1581, %v1553, 256
        %v1598 = vsel %vm1582, %v1554, 256
        %v1599 = vsel %vm1583, %v1553, 256
        %v1600 = vsel %vm1584, %v1554, 256
        %v1601 = vsel %vm1585, %v1553, 256
        %v1602 = vsel %vm1586, %v1554, 256
        %v1603 = vsel %vm1587, %v1553, 256
        %v1604 = vsel %vm1588, %v1554, 256
        %v1605 = vsel %vm1589, %v1553, 256
        %v1606 = vsel %vm1590, %v1554, 256
        %v1607 = vsel %vm1591, %v1553, 256
        %v1608 = vsel %vm1592, %v1554, 256
        %v1609 = vsel %vm1593, %v1553, 256
        %v1610 = vsel %vm1594, %v1554, 256
        %vm1611 = vcmp.lt.s32.totalorder %v1595, %v1596
        %v1612 = vsel %vm1611, %v1595, %v1596
        %v1613 = vand.u32 %v1612, 65535
        %v1614 = vshra.s32 %v1612, 16
        %v1615 = vcvt.s32.f32 %v1613
        %v1616 = vcvt.s32.f32 %v1614
        %1617 = vmin.xlane.f32.xlu0 %v1616
        %v1618 = vpop.xlane.xlu0 %1617
        %vm1619 = vcmp.eq.f32.partialorder %v1616, %v1618
        %v1620 = vsel %vm1619, %v1615, inf
        %1621 = vmin.xlane.f32.xlu0 %v1620
        %v1622 = vpop.xlane.xlu0 %1621
        %v1623 = vcvt.f32.s32 %v1622
        %v1624 = vcvt.f32.s32 %v1618
        %v1625 = vshll.u32 %v1624, 16
        %v1626 = vadd.s32 %v1625, %v1623
        %vm1627 = vcmp.lt.s32.totalorder %v1597, %v1598
        %v1628 = vsel %vm1627, %v1597, %v1598
        %v1629 = vand.u32 %v1628, 65535
        %v1630 = vshra.s32 %v1628, 16
        %v1631 = vcvt.s32.f32 %v1629
        %v1632 = vcvt.s32.f32 %v1630
        %1633 = vmin.xlane.f32.xlu0 %v1632
        %v1634 = vpop.xlane.xlu0 %1633
        %vm1635 = vcmp.eq.f32.partialorder %v1632, %v1634
        %v1636 = vsel %vm1635, %v1631, inf
        %1637 = vmin.xlane.f32.xlu0 %v1636
        %v1638 = vpop.xlane.xlu0 %1637
        %v1639 = vcvt.f32.s32 %v1638
        %v1640 = vcvt.f32.s32 %v1634
        %v1641 = vshll.u32 %v1640, 16
        %v1642 = vadd.s32 %v1641, %v1639
        %vm1643 = vcmp.lt.s32.totalorder %v1599, %v1600
        %v1644 = vsel %vm1643, %v1599, %v1600
        %v1645 = vand.u32 %v1644, 65535
        %v1646 = vshra.s32 %v1644, 16
        %v1647 = vcvt.s32.f32 %v1645
        %v1648 = vcvt.s32.f32 %v1646
        %1649 = vmin.xlane.f32.xlu0 %v1648
        %v1650 = vpop.xlane.xlu0 %1649
        %vm1651 = vcmp.eq.f32.partialorder %v1648, %v1650
        %v1652 = vsel %vm1651, %v1647, inf
        %1653 = vmin.xlane.f32.xlu0 %v1652
        %v1654 = vpop.xlane.xlu0 %1653
        %v1655 = vcvt.f32.s32 %v1654
        %v1656 = vcvt.f32.s32 %v1650
        %v1657 = vshll.u32 %v1656, 16
        %v1658 = vadd.s32 %v1657, %v1655
        %vm1659 = vcmp.lt.s32.totalorder %v1601, %v1602
        %v1660 = vsel %vm1659, %v1601, %v1602
        %v1661 = vand.u32 %v1660, 65535
        %v1662 = vshra.s32 %v1660, 16
        %v1663 = vcvt.s32.f32 %v1661
        %v1664 = vcvt.s32.f32 %v1662
        %1665 = vmin.xlane.f32.xlu0 %v1664
        %v1666 = vpop.xlane.xlu0 %1665
        %vm1667 = vcmp.eq.f32.partialorder %v1664, %v1666
        %v1668 = vsel %vm1667, %v1663, inf
        %1669 = vmin.xlane.f32.xlu0 %v1668
        %v1670 = vpop.xlane.xlu0 %1669
        %v1671 = vcvt.f32.s32 %v1670
        %v1672 = vcvt.f32.s32 %v1666
        %v1673 = vshll.u32 %v1672, 16
        %v1674 = vadd.s32 %v1673, %v1671
        %vm1675 = vcmp.lt.s32.totalorder %v1603, %v1604
        %v1676 = vsel %vm1675, %v1603, %v1604
        %v1677 = vand.u32 %v1676, 65535
        %v1678 = vshra.s32 %v1676, 16
        %v1679 = vcvt.s32.f32 %v1677
        %v1680 = vcvt.s32.f32 %v1678
        %1681 = vmin.xlane.f32.xlu0 %v1680
        %v1682 = vpop.xlane.xlu0 %1681
        %vm1683 = vcmp.eq.f32.partialorder %v1680, %v1682
        %v1684 = vsel %vm1683, %v1679, inf
        %1685 = vmin.xlane.f32.xlu0 %v1684
        %v1686 = vpop.xlane.xlu0 %1685
        %v1687 = vcvt.f32.s32 %v1686
        %v1688 = vcvt.f32.s32 %v1682
        %v1689 = vshll.u32 %v1688, 16
        %v1690 = vadd.s32 %v1689, %v1687
        %vm1691 = vcmp.lt.s32.totalorder %v1605, %v1606
        %v1692 = vsel %vm1691, %v1605, %v1606
        %v1693 = vand.u32 %v1692, 65535
        %v1694 = vshra.s32 %v1692, 16
        %v1695 = vcvt.s32.f32 %v1693
        %v1696 = vcvt.s32.f32 %v1694
        %1697 = vmin.xlane.f32.xlu0 %v1696
        %v1698 = vpop.xlane.xlu0 %1697
        %vm1699 = vcmp.eq.f32.partialorder %v1696, %v1698
        %v1700 = vsel %vm1699, %v1695, inf
        %1701 = vmin.xlane.f32.xlu0 %v1700
        %v1702 = vpop.xlane.xlu0 %1701
        %v1703 = vcvt.f32.s32 %v1702
        %v1704 = vcvt.f32.s32 %v1698
        %v1705 = vshll.u32 %v1704, 16
        %v1706 = vadd.s32 %v1705, %v1703
        %vm1707 = vcmp.lt.s32.totalorder %v1607, %v1608
        %v1708 = vsel %vm1707, %v1607, %v1608
        %v1709 = vand.u32 %v1708, 65535
        %v1710 = vshra.s32 %v1708, 16
        %v1711 = vcvt.s32.f32 %v1709
        %v1712 = vcvt.s32.f32 %v1710
        %1713 = vmin.xlane.f32.xlu0 %v1712
        %v1714 = vpop.xlane.xlu0 %1713
        %vm1715 = vcmp.eq.f32.partialorder %v1712, %v1714
        %v1716 = vsel %vm1715, %v1711, inf
        %1717 = vmin.xlane.f32.xlu0 %v1716
        %v1718 = vpop.xlane.xlu0 %1717
        %v1719 = vcvt.f32.s32 %v1718
        %v1720 = vcvt.f32.s32 %v1714
        %v1721 = vshll.u32 %v1720, 16
        %v1722 = vadd.s32 %v1721, %v1719
        %vm1723 = vcmp.lt.s32.totalorder %v1609, %v1610
        %v1724 = vsel %vm1723, %v1609, %v1610
        %v1725 = vand.u32 %v1724, 65535
        %v1726 = vshra.s32 %v1724, 16
        %v1727 = vcvt.s32.f32 %v1725
        %v1728 = vcvt.s32.f32 %v1726
        %1729 = vmin.xlane.f32.xlu0 %v1728
        %v1730 = vpop.xlane.xlu0 %1729
        %vm1731 = vcmp.eq.f32.partialorder %v1728, %v1730
        %v1732 = vsel %vm1731, %v1727, inf
        %1733 = vmin.xlane.f32.xlu0 %v1732
        %v1734 = vpop.xlane.xlu0 %1733
        %v1735 = vcvt.f32.s32 %v1734
        %v1736 = vcvt.f32.s32 %v1730
        %v1737 = vshll.u32 %v1736, 16
        %v1738 = vadd.s32 %v1737, %v1735
        %vm1739 = vcmp.eq.s32.totalorder %v1553, %v1626
        %vm1740 = vcmp.eq.s32.totalorder %v1554, %v1626
        %vm1741 = vcmp.eq.s32.totalorder %v1553, %v1642
        %vm1742 = vcmp.eq.s32.totalorder %v1554, %v1642
        %vm1743 = vcmp.eq.s32.totalorder %v1553, %v1658
        %vm1744 = vcmp.eq.s32.totalorder %v1554, %v1658
        %vm1745 = vcmp.eq.s32.totalorder %v1553, %v1674
        %vm1746 = vcmp.eq.s32.totalorder %v1554, %v1674
        %vm1747 = vcmp.eq.s32.totalorder %v1553, %v1690
        %vm1748 = vcmp.eq.s32.totalorder %v1554, %v1690
        %vm1749 = vcmp.eq.s32.totalorder %v1553, %v1706
        %vm1750 = vcmp.eq.s32.totalorder %v1554, %v1706
        %vm1751 = vcmp.eq.s32.totalorder %v1553, %v1722
        %vm1752 = vcmp.eq.s32.totalorder %v1554, %v1722
        %vm1753 = vcmp.eq.s32.totalorder %v1553, %v1738
        %vm1754 = vcmp.eq.s32.totalorder %v1554, %v1738
        %v1755 = vsel %vm1739, 1, 0
        %v1756 = vsel %vm1740, 1, 0
        %v1757 = vsel %vm1741, 1, 0
        %v1758 = vsel %vm1742, 1, 0
        %v1759 = vsel %vm1743, 1, 0
        %v1760 = vsel %vm1744, 1, 0
        %v1761 = vsel %vm1745, 1, 0
        %v1762 = vsel %vm1746, 1, 0
        %v1763 = vsel %vm1747, 1, 0
        %v1764 = vsel %vm1748, 1, 0
        %v1765 = vsel %vm1749, 1, 0
        %v1766 = vsel %vm1750, 1, 0
        %v1767 = vsel %vm1751, 1, 0
        %v1768 = vsel %vm1752, 1, 0
        %v1769 = vsel %vm1753, 1, 0
        %v1770 = vsel %vm1754, 1, 0
        %v1771 = vcvt.s32.f32 %v1755
        %v1772 = vcvt.s32.f32 %v1756
        %v1773 = vcvt.s32.f32 %v1757
        %v1774 = vcvt.s32.f32 %v1758
        %v1775 = vcvt.s32.f32 %v1759
        %v1776 = vcvt.s32.f32 %v1760
        %v1777 = vcvt.s32.f32 %v1761
        %v1778 = vcvt.s32.f32 %v1762
        %v1779 = vcvt.s32.f32 %v1763
        %v1780 = vcvt.s32.f32 %v1764
        %v1781 = vcvt.s32.f32 %v1765
        %v1782 = vcvt.s32.f32 %v1766
        %v1783 = vcvt.s32.f32 %v1767
        %v1784 = vcvt.s32.f32 %v1768
        %v1785 = vcvt.s32.f32 %v1769
        %v1786 = vcvt.s32.f32 %v1770
        %v1787 = vpack.c.bf16 %v1773, %v1771
        %v1788 = vpack.c.bf16 %v1774, %v1772
        %v1789 = vpack.c.bf16 %v1777, %v1775
        %v1790 = vpack.c.bf16 %v1778, %v1776
        %v1791 = vpack.c.bf16 %v1781, %v1779
        %v1792 = vpack.c.bf16 %v1782, %v1780
        %v1793 = vpack.c.bf16 %v1785, %v1783
        %v1794 = vpack.c.bf16 %v1786, %v1784
        %v1795 = vld [vmem:[%s13] sm:$0xf]
        %v1796 = vld [vmem:[%s13 + $0x4] sm:$0xf]
        %v1797 = vld [vmem:[%s13 + $0x8] sm:$0xf]
        %v1798 = vld [vmem:[%s13 + $0xc] sm:$0xf]
        %v1799 = vld [vmem:[%s13 + $0x10] sm:$0xf]
        %v1800 = vld [vmem:[%s13 + $0x14] sm:$0xf]
        %v1801 = vld [vmem:[%s13 + $0x18] sm:$0xf]
        %v1802 = vld [vmem:[%s13 + $0x1c] sm:$0xf]
        %v1803 = vld [vmem:[%s13 + $0x20] sm:$0xf]
        %v1804 = vld [vmem:[%s13 + $0x24] sm:$0xf]
        %v1805 = vld [vmem:[%s13 + $0x28] sm:$0xf]
        %v1806 = vld [vmem:[%s13 + $0x2c] sm:$0xf]
        %v1807 = vld [vmem:[%s13 + $0x30] sm:$0xf]
        %v1808 = vld [vmem:[%s13 + $0x34] sm:$0xf]
        %v1809 = vld [vmem:[%s13 + $0x38] sm:$0xf]
        %v1810 = vld [vmem:[%s13 + $0x3c] sm:$0xf]
        %v1811 = vld [vmem:[%s13 + $0x40] sm:$0xf]
        %v1812 = vld [vmem:[%s13 + $0x44] sm:$0xf]
        %v1813 = vld [vmem:[%s13 + $0x48] sm:$0xf]
        %v1814 = vld [vmem:[%s13 + $0x4c] sm:$0xf]
        %v1815 = vld [vmem:[%s13 + $0x50] sm:$0xf]
        %v1816 = vld [vmem:[%s13 + $0x54] sm:$0xf]
        %v1817 = vld [vmem:[%s13 + $0x58] sm:$0xf]
        %v1818 = vld [vmem:[%s13 + $0x5c] sm:$0xf]
        %v1819 = vld [vmem:[%s13 + $0x60] sm:$0xf]
        %v1820 = vld [vmem:[%s13 + $0x64] sm:$0xf]
        %v1821 = vld [vmem:[%s13 + $0x68] sm:$0xf]
        %v1822 = vld [vmem:[%s13 + $0x6c] sm:$0xf]
        %v1823 = vld [vmem:[%s13 + $0x70] sm:$0xf]
        %v1824 = vld [vmem:[%s13 + $0x74] sm:$0xf]
        %v1825 = vld [vmem:[%s13 + $0x78] sm:$0xf]
        %v1826 = vld [vmem:[%s13 + $0x7c] sm:$0xf]
        %v1859 = vunpack.c.l.b16 %v1795
        %v1860 = vunpack.c.l.b16 %v1796
        %v1861 = vunpack.c.l.b16 %v1797
        %v1862 = vunpack.c.l.b16 %v1798
        %v1863 = vunpack.c.l.b16 %v1799
        %v1864 = vunpack.c.l.b16 %v1800
        %v1865 = vunpack.c.l.b16 %v1801
        %v1866 = vunpack.c.l.b16 %v1802
        %v1867 = vunpack.c.l.b16 %v1803
        %v1868 = vunpack.c.l.b16 %v1804
        %v1869 = vunpack.c.l.b16 %v1805
        %v1870 = vunpack.c.l.b16 %v1806
        %v1871 = vunpack.c.l.b16 %v1807
        %v1872 = vunpack.c.l.b16 %v1808
        %v1873 = vunpack.c.l.b16 %v1809
        %v1874 = vunpack.c.l.b16 %v1810
        %v1875 = vunpack.c.l.b16 %v1811
        %v1876 = vunpack.c.l.b16 %v1812
        %v1877 = vunpack.c.l.b16 %v1813
        %v1878 = vunpack.c.l.b16 %v1814
        %v1879 = vunpack.c.l.b16 %v1815
        %v1880 = vunpack.c.l.b16 %v1816
        %v1881 = vunpack.c.l.b16 %v1817
        %v1882 = vunpack.c.l.b16 %v1818
        %v1883 = vunpack.c.l.b16 %v1819
        %v1884 = vunpack.c.l.b16 %v1820
        %v1885 = vunpack.c.l.b16 %v1821
        %v1886 = vunpack.c.l.b16 %v1822
        %v1887 = vunpack.c.l.b16 %v1823
        %v1888 = vunpack.c.l.b16 %v1824
        %v1889 = vunpack.c.l.b16 %v1825
        %v1890 = vunpack.c.l.b16 %v1826
        %v1891 = vpack.c.b16 %v1860, %v1859
        %v1892 = vpack.c.b16 %v1862, %v1861
        %v1893 = vpack.c.b16 %v1864, %v1863
        %v1894 = vpack.c.b16 %v1866, %v1865
        %v1895 = vpack.c.b16 %v1868, %v1867
        %v1896 = vpack.c.b16 %v1870, %v1869
        %v1897 = vpack.c.b16 %v1872, %v1871
        %v1898 = vpack.c.b16 %v1874, %v1873
        %v1899 = vpack.c.b16 %v1876, %v1875
        %v1900 = vpack.c.b16 %v1878, %v1877
        %v1901 = vpack.c.b16 %v1880, %v1879
        %v1902 = vpack.c.b16 %v1882, %v1881
        %v1903 = vpack.c.b16 %v1884, %v1883
        %v1904 = vpack.c.b16 %v1886, %v1885
        %v1905 = vpack.c.b16 %v1888, %v1887
        %v1906 = vpack.c.b16 %v1890, %v1889
        %1923 = vmatprep.subr.bf16.mxu0 0
        %1924 = vmatpush1.bf16.msra.mxu0 %v1891
        %1925 = vmatprep.subr.bf16.mxu0 0
        %1926 = vmatpush1.bf16.msra.mxu0 %v1892
        %1927 = vmatprep.subr.bf16.mxu0 0
        %1928 = vmatpush1.bf16.msra.mxu0 %v1893
        %1929 = vmatprep.subr.bf16.mxu0 0
        %1930 = vmatpush1.bf16.msra.mxu0 %v1894
        %1931 = vmatprep.subr.bf16.mxu0 0
        %1932 = vmatpush1.bf16.msra.mxu0 %v1895
        %1933 = vmatprep.subr.bf16.mxu0 0
        %1934 = vmatpush1.bf16.msra.mxu0 %v1896
        %1935 = vmatprep.subr.bf16.mxu0 0
        %1936 = vmatpush1.bf16.msra.mxu0 %v1897
        %1937 = vmatprep.subr.bf16.mxu0 0
        %1938 = vmatpush1.bf16.msra.mxu0 %v1898
        %1939 = vmatprep.subr.bf16.mxu0 0
        %1940 = vmatpush1.bf16.msra.mxu0 %v1899
        %1941 = vmatprep.subr.bf16.mxu0 0
        %1942 = vmatpush1.bf16.msra.mxu0 %v1900
        %1943 = vmatprep.subr.bf16.mxu0 0
        %1944 = vmatpush1.bf16.msra.mxu0 %v1901
        %1945 = vmatprep.subr.bf16.mxu0 0
        %1946 = vmatpush1.bf16.msra.mxu0 %v1902
        %1947 = vmatprep.subr.bf16.mxu0 0
        %1948 = vmatpush1.bf16.msra.mxu0 %v1903
        %1949 = vmatprep.subr.bf16.mxu0 0
        %1950 = vmatpush1.bf16.msra.mxu0 %v1904
        %1951 = vmatprep.subr.bf16.mxu0 0
        %1952 = vmatpush1.bf16.msra.mxu0 %v1905
        %1953 = vmatprep.subr.bf16.mxu0 0
        %1954 = vmatpush1.bf16.msra.mxu0 %v1906
        %1955 = vmatprep.mubr.bf16.mxu0 %v1788
        %1956 = vmatmul.mubr.bf16.gmra.mrb[0].mxu0 %v1787
        %v1957 = vpop.f32.mrb[0].mxu0
        %v1958 = vadd.f32 0.0, %v1957
        %v1959 = vpop.f32.mrb[0].mxu0
        %v1960 = vpop.f32.mrb[0].mxu0
        %v1961 = vadd.f32 0.0, %v1960
        %v1962 = vpop.f32.mrb[0].mxu0
        %1963 = vmatprep.mubr.bf16.mxu0 %v1790
        %1964 = vmatmul.mubr.bf16.gmra.mrb[0].mxu0 %v1789
        %v1965 = vpop.f32.mrb[0].mxu0
        %v1966 = vadd.f32 0.0, %v1965
        %v1967 = vpop.f32.mrb[0].mxu0
        %v1968 = vpop.f32.mrb[0].mxu0
        %v1969 = vadd.f32 0.0, %v1968
        %v1970 = vpop.f32.mrb[0].mxu0
        %1971 = vmatprep.mubr.bf16.mxu0 %v1792
        %1972 = vmatmul.mubr.bf16.gmra.mrb[0].mxu0 %v1791
        %v1973 = vpop.f32.mrb[0].mxu0
        %v1974 = vadd.f32 0.0, %v1973
        %v1975 = vpop.f32.mrb[0].mxu0
        %v1976 = vpop.f32.mrb[0].mxu0
        %v1977 = vadd.f32 0.0, %v1976
        %v1978 = vpop.f32.mrb[0].mxu0
        %1979 = vmatprep.mubr.bf16.mxu0 %v1794
        %1980 = vmatmul.mubr.bf16.gmra.mrb[0].mxu0 %v1793
        %v1981 = vpop.f32.mrb[0].mxu0
        %v1982 = vadd.f32 0.0, %v1981
        %v1983 = vpop.f32.mrb[0].mxu0
        %v1984 = vpop.f32.mrb[0].mxu0
        %v1985 = vadd.f32 0.0, %v1984
        %v1986 = vpop.f32.mrb[0].mxu0
        %1987 = vdwg.mxu0
        %1988 = vst [vmem:[%s571] sm:$0xff] %v1958
        %1989 = vst [vmem:[%s571 + $0x8] sm:$0xff] %v1961
        %1990 = vst [vmem:[%s571 + $0x10] sm:$0xff] %v1966
        %1991 = vst [vmem:[%s571 + $0x18] sm:$0xff] %v1969
        %1992 = vst [vmem:[%s571 + $0x20] sm:$0xff] %v1974
        %1993 = vst [vmem:[%s571 + $0x28] sm:$0xff] %v1977
        %1994 = vst [vmem:[%s571 + $0x30] sm:$0xff] %v1982
        %1995 = vst [vmem:[%s571 + $0x38] sm:$0xff] %v1985
        %s1996 = sand.u32 %s381, 1
        %s1997 = scalar_lea.sflag [#allocation4], %s1996
        %s1998 = sand.u32 %s381, 1
        %s1999 = smul.addr %s1998, 64
        %s2000 = scalar_lea.vmem [#allocation3], %s1999
        // Predicated region
        $region77: #{audio_processing_tokenizer_forward.5} parent=75 // pred_check
          %p2001 = pneg %p391
        $region78: #{audio_processing_tokenizer_forward.5} parent=75 // pred_check_branch
          %2003 = sbr.rel (%p2001) target = $region80
        $region79: #{audio_processing_tokenizer_forward.5} parent=75 // pred_region
          %s2004 = smul.u32 8, %s33
          %s2006 = ssub.s32 1024, 1024
          %2007 = vsyncadd %s1997, %s2006
          %s2008 = smul.addr %s32, 32
          %s2009 = sadd.s32 %s2004, %s2008
          %s2010 = smul.addr %s2009, 128
          %s2011 = scalar_lea.hbm %s14, %s2010
          %s2012 = sshll.u32 %s2000, 4
          %s2013 = int_to_ptr.vmem [resolvable:$true] %s2012
          %2018 = dma.vmem_to_hbm [thread:$0]  %s2013, 1024, %s2011, %s1997, 128, 128, 8
        $region80: #{audio_processing_tokenizer_forward.5} parent=75 // pred_fallthru
          _
      $region76: #{audio_processing_tokenizer_forward.5} parent=5 // pred_fallthru
        _
      %p2019 = scmp.le.s32.totalorder 2, %s23
      // Predicated region
      $region81: #{audio_processing_tokenizer_forward.5} parent=5 // pred_check
        %p2020 = pneg %p2019
      $region82: #{audio_processing_tokenizer_forward.5} parent=5 // pred_check_branch
        %2022 = sbr.rel (%p2020) target = $region84
      $region83: #{audio_processing_tokenizer_forward.5} parent=5 // pred_region
        %s2023 = ssub.s32 %s23, 2
        // Predicated region
        $region85: #{audio_processing_tokenizer_forward.5} parent=83 // pred_check
          %p2024 = pneg %p397
        $region86: #{audio_processing_tokenizer_forward.5} parent=83 // pred_check_branch
          %2026 = sbr.rel (%p2024) target = $region88
        $region87: #{audio_processing_tokenizer_forward.5} parent=83 // pred_region
          %s2027 = sand.u32 %s382, 1
          %s2028 = scalar_lea.sflag [#allocation4], %s2027
          %s2029 = sand.u32 %s382, 1
          %s2030 = smul.addr %s2029, 64
          %s2031 = scalar_lea.vmem [#allocation3], %s2030
          %2032 = dma.done %s2028, 1024
        $region88: #{audio_processing_tokenizer_forward.5} parent=83 // pred_fallthru
          _
      $region84: #{audio_processing_tokenizer_forward.5} parent=5 // pred_fallthru
        _
    $region6: #{audio_processing_tokenizer_forward.5} parent=1 // loop_footer
      %s27 = sadd.s32 1, %s23
    $region7: #{audio_processing_tokenizer_forward.5} parent=1 // loop_footer_branch
      %22 = sbr.rel target = $region3
    $region8: #{audio_processing_tokenizer_forward.5} parent=1 // loop_exit
      _
    %2033 = vsyncpa [#allocation4], 1
    %s2034 = scalar_lea.sflag [#allocation4], 1
    %2035 = vsyncpa %s2034, 1

// kernel: audio_processing_tokenizer_forward.3
$region0: #{audio_processing_tokenizer_forward.3}
  #allocation0 [shape = 'u32[]', space=smem, size = 0x4, offset = 0x4, fixed_abs, tag = 'smem constant byte address 0x4 - core index']
  #allocation1 [shape = 'u32[144,128]{1,0:T(1,128)}', space=vmem, size = 0x12000, scoped, tag = 'internal scratch']
  #allocation2 [shape = 'bf16[66,512]{1,0:T(8,128)(2,1)}', space=vmem, size = 0x12000, scoped, tag = 'scratch operand']
  #allocation3 [shape = 'f32[66,128]{1,0:T(8,128)}', space=vmem, size = 0x9000, scoped, tag = 'scratch operand']
  %s0 = inlined_call_operand.vmem [shape: bf16[2,4,69,128], index: 0, kind: input, shape index: {}]
  %s1 = inlined_call_operand.vmem [shape: bf16[512,768], index: 1, kind: input, shape index: {}]
  %s2 = inlined_call_operand.vmem [shape: bf16[384,128], index: 2, kind: input, shape index: {}]
  %s3 = inlined_call_operand.vmem [shape: bf16[3,128,128], index: 3, kind: input, shape index: {}]
  %s4 = inlined_call_operand.vmem [shape: f32[1,128], index: 4, kind: input, shape index: {}]
  %s5 = inlined_call_operand.vmem [shape: bf16[2,256,128], index: 5, kind: output, shape index: {0}]
  %s6 = inlined_call_operand.vmem [shape: f32[2,4,2,128], index: 6, kind: output, shape index: {1}]
  %7 = xla_tuple %s5, %s6
  %s8 = sld [smem:[#allocation0]]
  $region61: #{audio_processing_tokenizer_forward.3} parent=0
    _
  %s10 = ssub.s32 1, %s8
  %s11 = scalar_select 0, %s10, %s8
  loop: start=0, step=1, limit=10
  $region2: #{audio_processing_tokenizer_forward.3} parent=0 // loop_pre_header
    _
  $region3: #{audio_processing_tokenizer_forward.3} parent=0 // loop_header
    %s13 = sphi 0, %s17
    %p14 = scmp.ge.s32.totalorder %s13, 10
    %s20 = sphi 0, %s32
    %s21 = sphi 0, %s28
    %s22 = sphi 0, %s20
    %s23 = sphi 0, %s21
    %s24 = sphi 0, %s22
    %s25 = sphi 0, %s23
    %s37 = sphi 0, %s39
    %s40 = sphi 0, %s37
    %s41 = sphi 0, %s40
    %s57 = sphi 0, %s41
    %s61 = sphi 0, %s61
    %s63 = sphi 0, %s61
    %s64 = sphi 0, %s63
    %s78 = sphi 0, %s64
    %s82 = sphi 0, %s82
    %s84 = sphi 0, %s82
    %s85 = sphi 0, %s84
    %s99 = sphi 0, %s85
    %s103 = sphi 0, %s103
    %s105 = sphi 0, %s103
    %s106 = sphi 0, %s105
    %s120 = sphi 0, %s106
    %s124 = sphi 0, %s124
    %s126 = sphi 0, %s124
    %s127 = sphi 0, %s126
    %s141 = sphi 0, %s127
    %s149 = sphi 0, %s151
    %s152 = sphi 0, %s149
    %s153 = sphi 0, %s152
    %s169 = sphi 0, %s153
    %s177 = sphi 0, %s179
    %s180 = sphi 0, %s177
    %s181 = sphi 0, %s180
    %s197 = sphi 0, %s181
  $region4: #{audio_processing_tokenizer_forward.3} parent=0 // loop_header_branch
    %16 = sbr.rel (%p14) target = $region8
  $region5: #{audio_processing_tokenizer_forward.3} parent=0 // loop_body
    %s18 = ssub.s32 %s13, 1
    %s19 = ssub.s32 %s13, 2
    %s26 = sadd.s32 1, %s21
    %p27 = scmp.ge.s32.totalorder %s26, 4
    %s28 = scalar_select %p27, 0, %s26
    %s29 = sadd.s32 1, %s20
    %s30 = scalar_select %p27, %s29, %s20
    %p31 = scmp.ge.s32.totalorder %s30, 2
    %s32 = scalar_select %p31, 0, %s30
    %s33 = ssub.s32 %s20, %s32
    %s34 = ssub.s32 %s21, %s28
    %s35 = sor.u32 %s33, %s34
    %p36 = scmp.eq.s32.totalorder %s35, 0
    %s38 = sadd.s32 %s37, 1
    %s39 = scalar_select %p36, %s37, %s38
    %p42 = pneg %p36
    %p43 = scmp.eq.s32.totalorder %s13, 7
    %p44 = por %p42, %p43
    %p45 = scmp.ne.s32.totalorder %s37, %s40
    %p46 = scmp.eq.s32.totalorder %s13, 0
    %p47 = por %p45, %p46
    %p48 = scmp.ne.s32.totalorder %s37, %s40
    %p49 = scmp.eq.s32.totalorder %s18, 7
    %p50 = por %p48, %p49
    %p51 = scmp.ne.s32.totalorder %s40, %s41
    %p52 = scmp.eq.s32.totalorder %s18, 0
    %p53 = por %p51, %p52
    %p54 = scmp.ne.s32.totalorder %s40, %s41
    %p55 = scmp.eq.s32.totalorder %s19, 7
    %p56 = por %p54, %p55
    %p58 = scmp.ne.s32.totalorder %s41, %s57
    %p59 = scmp.eq.s32.totalorder %s19, 0
    %p60 = por %p58, %p59
    %s62 = sadd.s32 %s61, 1
    %p65 = scmp.eq.s32.totalorder %s13, 7
    %p66 = scmp.ne.s32.totalorder %s61, %s63
    %p67 = scmp.eq.s32.totalorder %s13, 0
    %p68 = por %p66, %p67
    %p69 = scmp.ne.s32.totalorder %s61, %s63
    %p70 = scmp.eq.s32.totalorder %s18, 7
    %p71 = por %p69, %p70
    %p72 = scmp.ne.s32.totalorder %s63, %s64
    %p73 = scmp.eq.s32.totalorder %s18, 0
    %p74 = por %p72, %p73
    %p75 = scmp.ne.s32.totalorder %s63, %s64
    %p76 = scmp.eq.s32.totalorder %s19, 7
    %p77 = por %p75, %p76
    %p79 = scmp.ne.s32.totalorder %s64, %s78
    %p80 = scmp.eq.s32.totalorder %s19, 0
    %p81 = por %p79, %p80
    %s83 = sadd.s32 %s82, 1
    %p86 = scmp.eq.s32.totalorder %s13, 7
    %p87 = scmp.ne.s32.totalorder %s82, %s84
    %p88 = scmp.eq.s32.totalorder %s13, 0
    %p89 = por %p87, %p88
    %p90 = scmp.ne.s32.totalorder %s82, %s84
    %p91 = scmp.eq.s32.totalorder %s18, 7
    %p92 = por %p90, %p91
    %p93 = scmp.ne.s32.totalorder %s84, %s85
    %p94 = scmp.eq.s32.totalorder %s18, 0
    %p95 = por %p93, %p94
    %p96 = scmp.ne.s32.totalorder %s84, %s85
    %p97 = scmp.eq.s32.totalorder %s19, 7
    %p98 = por %p96, %p97
    %p100 = scmp.ne.s32.totalorder %s85, %s99
    %p101 = scmp.eq.s32.totalorder %s19, 0
    %p102 = por %p100, %p101
    %s104 = sadd.s32 %s103, 1
    %p107 = scmp.eq.s32.totalorder %s13, 7
    %p108 = scmp.ne.s32.totalorder %s103, %s105
    %p109 = scmp.eq.s32.totalorder %s13, 0
    %p110 = por %p108, %p109
    %p111 = scmp.ne.s32.totalorder %s103, %s105
    %p112 = scmp.eq.s32.totalorder %s18, 7
    %p113 = por %p111, %p112
    %p114 = scmp.ne.s32.totalorder %s105, %s106
    %p115 = scmp.eq.s32.totalorder %s18, 0
    %p116 = por %p114, %p115
    %p117 = scmp.ne.s32.totalorder %s105, %s106
    %p118 = scmp.eq.s32.totalorder %s19, 7
    %p119 = por %p117, %p118
    %p121 = scmp.ne.s32.totalorder %s106, %s120
    %p122 = scmp.eq.s32.totalorder %s19, 0
    %p123 = por %p121, %p122
    %s125 = sadd.s32 %s124, 1
    %p128 = scmp.eq.s32.totalorder %s13, 7
    %p129 = scmp.ne.s32.totalorder %s124, %s126
    %p130 = scmp.eq.s32.totalorder %s13, 0
    %p131 = por %p129, %p130
    %p132 = scmp.ne.s32.totalorder %s124, %s126
    %p133 = scmp.eq.s32.totalorder %s18, 7
    %p134 = por %p132, %p133
    %p135 = scmp.ne.s32.totalorder %s126, %s127
    %p136 = scmp.eq.s32.totalorder %s18, 0
    %p137 = por %p135, %p136
    %p138 = scmp.ne.s32.totalorder %s126, %s127
    %p139 = scmp.eq.s32.totalorder %s19, 7
    %p140 = por %p138, %p139
    %p142 = scmp.ne.s32.totalorder %s127, %s141
    %p143 = scmp.eq.s32.totalorder %s19, 0
    %p144 = por %p142, %p143
    %s145 = ssub.s32 %s20, %s32
    %s146 = ssub.s32 %s21, %s28
    %s147 = sor.u32 %s145, %s146
    %p148 = scmp.eq.s32.totalorder %s147, 0
    %s150 = sadd.s32 %s149, 1
    %s151 = scalar_select %p148, %s149, %s150
    %p154 = pneg %p148
    %p155 = scmp.eq.s32.totalorder %s13, 7
    %p156 = por %p154, %p155
    %p157 = scmp.ne.s32.totalorder %s149, %s152
    %p158 = scmp.eq.s32.totalorder %s13, 0
    %p159 = por %p157, %p158
    %p160 = scmp.ne.s32.totalorder %s149, %s152
    %p161 = scmp.eq.s32.totalorder %s18, 7
    %p162 = por %p160, %p161
    %p163 = scmp.ne.s32.totalorder %s152, %s153
    %p164 = scmp.eq.s32.totalorder %s18, 0
    %p165 = por %p163, %p164
    %p166 = scmp.ne.s32.totalorder %s152, %s153
    %p167 = scmp.eq.s32.totalorder %s19, 7
    %p168 = por %p166, %p167
    %p170 = scmp.ne.s32.totalorder %s153, %s169
    %p171 = scmp.eq.s32.totalorder %s19, 0
    %p172 = por %p170, %p171
    %s173 = ssub.s32 %s20, %s32
    %s174 = ssub.s32 %s21, %s28
    %s175 = sor.u32 %s173, %s174
    %p176 = scmp.eq.s32.totalorder %s175, 0
    %s178 = sadd.s32 %s177, 1
    %s179 = scalar_select %p176, %s177, %s178
    %p182 = pneg %p176
    %p183 = scmp.eq.s32.totalorder %s13, 7
    %p184 = por %p182, %p183
    %p185 = scmp.ne.s32.totalorder %s177, %s180
    %p186 = scmp.eq.s32.totalorder %s13, 0
    %p187 = por %p185, %p186
    %p188 = scmp.ne.s32.totalorder %s177, %s180
    %p189 = scmp.eq.s32.totalorder %s18, 7
    %p190 = por %p188, %p189
    %p191 = scmp.ne.s32.totalorder %s180, %s181
    %p192 = scmp.eq.s32.totalorder %s18, 0
    %p193 = por %p191, %p192
    %p194 = scmp.ne.s32.totalorder %s180, %s181
    %p195 = scmp.eq.s32.totalorder %s19, 7
    %p196 = por %p194, %p195
    %p198 = scmp.ne.s32.totalorder %s181, %s197
    %p199 = scmp.eq.s32.totalorder %s19, 0
    %p200 = por %p198, %p199
    %p201 = scmp.le.s32.totalorder 1, %s13
    %p202 = scmp.lt.s32.totalorder %s13, 9
    %p203 = pnand %p201, %p202
    %p204 = pneg %p203
    // Predicated region
    $region9: #{audio_processing_tokenizer_forward.3} parent=5 // pred_check
      _
    $region10: #{audio_processing_tokenizer_forward.3} parent=5 // pred_check_branch
      %206 = sbr.rel (%p203) target = $region12
    $region11: #{audio_processing_tokenizer_forward.3} parent=5 // pred_region
      %s207 = ssub.s32 %s13, 1
      // Predicated region
      $region13: #{audio_processing_tokenizer_forward.3} parent=11 // pred_check
        %p208 = pneg %p74
      $region14: #{audio_processing_tokenizer_forward.3} parent=11 // pred_check_branch
        %210 = sbr.rel (%p208) target = $region16
      $region15: #{audio_processing_tokenizer_forward.3} parent=11 // pred_region
        _
      $region16: #{audio_processing_tokenizer_forward.3} parent=11 // pred_fallthru
        _
      // Predicated region
      $region17: #{audio_processing_tokenizer_forward.3} parent=11 // pred_check
        %p211 = pneg %p95
      $region18: #{audio_processing_tokenizer_forward.3} parent=11 // pred_check_branch
        %213 = sbr.rel (%p211) target = $region20
      $region19: #{audio_processing_tokenizer_forward.3} parent=11 // pred_region
        _
      $region20: #{audio_processing_tokenizer_forward.3} parent=11 // pred_fallthru
        _
      // Predicated region
      $region21: #{audio_processing_tokenizer_forward.3} parent=11 // pred_check
        %p214 = pneg %p116
      $region22: #{audio_processing_tokenizer_forward.3} parent=11 // pred_check_branch
        %216 = sbr.rel (%p214) target = $region24
      $region23: #{audio_processing_tokenizer_forward.3} parent=11 // pred_region
        _
      $region24: #{audio_processing_tokenizer_forward.3} parent=11 // pred_fallthru
        _
      // Predicated region
      $region25: #{audio_processing_tokenizer_forward.3} parent=11 // pred_check
        %p217 = pneg %p137
      $region26: #{audio_processing_tokenizer_forward.3} parent=11 // pred_check_branch
        %219 = sbr.rel (%p217) target = $region28
      $region27: #{audio_processing_tokenizer_forward.3} parent=11 // pred_region
        _
      $region28: #{audio_processing_tokenizer_forward.3} parent=11 // pred_fallthru
        _
    $region12: #{audio_processing_tokenizer_forward.3} parent=5 // pred_fallthru
      _
    %p220 = scmp.lt.s32.totalorder %s13, 8
    // Predicated region
    $region29: #{audio_processing_tokenizer_forward.3} parent=5 // pred_check
      %p221 = pneg %p220
    $region30: #{audio_processing_tokenizer_forward.3} parent=5 // pred_check_branch
      %223 = sbr.rel (%p221) target = $region32
    $region31: #{audio_processing_tokenizer_forward.3} parent=5 // pred_region
      // Predicated region
      $region33: #{audio_processing_tokenizer_forward.3} parent=31 // pred_check
        %p224 = pneg %p47
      $region34: #{audio_processing_tokenizer_forward.3} parent=31 // pred_check_branch
        %226 = sbr.rel (%p224) target = $region36
      $region35: #{audio_processing_tokenizer_forward.3} parent=31 // pred_region
        %p227 = scmp.lt.s32.totalorder %s20, 1
        %s228 = scalar_select %p227, %s20, 1
        %p229 = scmp.lt.s32.totalorder %s21, 3
        %s230 = scalar_select %p229, %s21, 3
        %s231 = smul.addr %s230, 9
        %s232 = smul.addr %s228, 36
        %s233 = sadd.s32 %s231, %s232
        %s234 = smul.addr %s233, 4
        %s235 = scalar_lea.vmem %s0, %s234
      $region36: #{audio_processing_tokenizer_forward.3} parent=31 // pred_fallthru
        _
    $region32: #{audio_processing_tokenizer_forward.3} parent=5 // pred_fallthru
      _
    %p236 = scmp.le.s32.totalorder 1, %s13
    %p237 = scmp.lt.s32.totalorder %s13, 9
    %p238 = pnand %p236, %p237
    %p239 = pneg %p238
    // Predicated region
    $region37: #{audio_processing_tokenizer_forward.3} parent=5 // pred_check
      _
    $region38: #{audio_processing_tokenizer_forward.3} parent=5 // pred_check_branch
      %241 = sbr.rel (%p238) target = $region40
    $region39: #{audio_processing_tokenizer_forward.3} parent=5 // pred_region
      %s242 = ssub.s32 %s13, 1
      %p243 = scmp.lt.s32.totalorder %s22, 1
      %s244 = scalar_select %p243, %s22, 1
      %p245 = scmp.lt.s32.totalorder %s23, 3
      %s246 = scalar_select %p245, %s23, 3
      %s247 = smul.addr %s246, 9
      %s248 = smul.addr %s244, 36
      %s249 = sadd.s32 %s247, %s248
      %s250 = smul.addr %s249, 4
      %s251 = scalar_lea.vmem %s0, %s250
      %p252 = pneg %p53
      %p253 = pneg %p50
      %p254 = pneg %p74
      %p255 = pneg %p71
      %p256 = pneg %p95
      %p257 = pneg %p92
      %p258 = pneg %p116
      %p259 = pneg %p113
      %p260 = pneg %p137
      %p261 = pneg %p134
      %p262 = pneg %p165
      %p263 = pneg %p162
      %s264 = smul.u32 8, %s23
      %p265 = scmp.lt.s32.totalorder %s22, 1
      %s266 = scalar_select %p265, %s22, 1
      %p267 = scmp.lt.s32.totalorder %s264, 31
      %s268 = scalar_select %p267, %s264, 31
      %s269 = smul.addr %s266, 32
      %s270 = sadd.s32 %s268, %s269
      %s271 = smul.addr %s270, 4
      %s272 = scalar_lea.vmem %s5, %s271
      %p273 = pneg %p193
      %p274 = pneg %p190
      %p275 = scmp.lt.s32.totalorder %s22, 1
      %s276 = scalar_select %p275, %s22, 1
      %p277 = scmp.lt.s32.totalorder %s23, 3
      %s278 = scalar_select %p277, %s23, 3
      %s279 = smul.addr %s276, 4
      %s280 = sadd.s32 %s278, %s279
      %s281 = smul.addr %s280, 2
      %s282 = scalar_lea.vmem %s6, %s281
      %p283 = scmp.lt.s32.totalorder %s22, 1
      %s284 = scalar_select %p283, %s22, 1
      %p285 = scmp.lt.s32.totalorder %s23, 3
      %s286 = scalar_select %p285, %s23, 3
      %s287 = smul.addr %s286, 9
      %s288 = smul.addr %s284, 36
      %s289 = sadd.s32 %s287, %s288
      %s290 = smul.addr %s289, 4
      %s291 = scalar_lea.vmem %s0, %s290
      %s292 = smul.u32 8, %s23
      %p293 = scmp.lt.s32.totalorder %s22, 1
      %s294 = scalar_select %p293, %s22, 1
      %p295 = scmp.lt.s32.totalorder %s292, 31
      %s296 = scalar_select %p295, %s292, 31
      %s297 = smul.addr %s294, 32
      %s298 = sadd.s32 %s296, %s297
      %s299 = smul.addr %s298, 4
      %s300 = scalar_lea.vmem %s5, %s299
      %s301 = smul.u32 8, %s23
      %p302 = scmp.lt.s32.totalorder %s22, 1
      %s303 = scalar_select %p302, %s22, 1
      %p304 = scmp.lt.s32.totalorder %s23, 3
      %s305 = scalar_select %p304, %s23, 3
      %s306 = smul.addr %s303, 4
      %s307 = sadd.s32 %s305, %s306
      %s308 = smul.addr %s307, 2
      %s309 = scalar_lea.vmem %s6, %s308
      %v311 = vld [vmem:[%s291] sm:$0xf]
      %v312 = vld [vmem:[%s291 + $0x4] sm:$0xf]
      %v313 = vld [vmem:[%s291 + $0x8] sm:$0xf]
      %v314 = vld [vmem:[%s291 + $0xc] sm:$0xf]
      %v315 = vld [vmem:[%s291 + $0x10] sm:$0xf]
      %v316 = vld [vmem:[%s291 + $0x14] sm:$0xf]
      %v317 = vld [vmem:[%s291 + $0x18] sm:$0xf]
      %v318 = vld [vmem:[%s291 + $0x1c] sm:$0xf]
      %v319 = vld [vmem:[%s291 + $0x20] sm:$0x7]
      %v320 = vunpack.c.l.bf16 %v311
      %v321 = vunpack.c.l.bf16 %v312
      %v322 = vunpack.c.l.bf16 %v313
      %v323 = vunpack.c.l.bf16 %v314
      %v324 = vunpack.c.l.bf16 %v315
      %v325 = vunpack.c.l.bf16 %v316
      %v326 = vunpack.c.l.bf16 %v317
      %v327 = vunpack.c.l.bf16 %v318
      %v328 = vunpack.c.l.bf16 %v319
      %v329 = vpack.c.bf16 %v321, %v320
      %v330 = vpack.c.bf16 %v323, %v322
      %v331 = vpack.c.bf16 %v325, %v324
      %v332 = vpack.c.bf16 %v327, %v326
      %v333 = vpack.c.bf16 %v328, %v328
      %v339 = vunpack.c.l.b16 %v329
      %v340 = vunpack.c.h.b16 %v329
      %v341 = vunpack.c.l.b16 %v330
      %v342 = vunpack.c.h.b16 %v330
      %v343 = vunpack.c.l.b16 %v331
      %v344 = vunpack.c.h.b16 %v331
      %v345 = vunpack.c.l.b16 %v332
      %v346 = vunpack.c.h.b16 %v332
      %v347 = vunpack.c.l.b16 %v333
      %v348 = vpack.c.b16 %v339, %v339
      %v349 = vpack.c.b16 %v340, %v340
      %v350 = vpack.c.b16 %v341, %v341
      %v351 = vpack.c.b16 %v342, %v342
      %v352 = vpack.c.b16 %v343, %v343
      %v353 = vpack.c.b16 %v344, %v344
      %v354 = vpack.c.b16 %v345, %v345
      %v355 = vpack.c.b16 %v346, %v346
      %v356 = vpack.c.b16 %v347, %v347
      %366 = vst [vmem:[#allocation2] sm:$0xf] %v348
      %367 = vst [vmem:[#allocation2 + $0x10] sm:$0xf] %v349
      %368 = vst [vmem:[#allocation2 + $0x20] sm:$0xf] %v350
      %369 = vst [vmem:[#allocation2 + $0x30] sm:$0xf] %v351
      %370 = vst [vmem:[#allocation2 + $0x40] sm:$0xf] %v352
      %371 = vst [vmem:[#allocation2 + $0x50] sm:$0xf] %v353
      %372 = vst [vmem:[#allocation2 + $0x60] sm:$0xf] %v354
      %373 = vst [vmem:[#allocation2 + $0x70] sm:$0xf] %v355
      %374 = vst [vmem:[#allocation2 + $0x80] sm:$0x1] %v356
      %vm375 = vsmask.f32 3328
      %vm376 = vsmask.f32 7440
      %vm377 = vmor %vm375, %vm376
      %v379 = vshrl.u32 %v348, 16
      %v381 = vrot.slane %v379, 4
      %v382 = vshll.u32 %v348, 16
      %v384 = vrot.slane %v382, 5
      %v385 = vor.u32 %v381, %v384
      %v386 = vrot.slane %v385, 4
      %v388 = vshll.u32 %v349, 16
      %v390 = vrot.slane %v388, 5
      %v391 = vsel %vm377, %v386, %v390
      %v392 = vshrl.u32 %v349, 16
      %v394 = vrot.slane %v392, 4
      %v395 = vor.u32 %v394, %v390
      %v396 = vrot.slane %v395, 4
      %v398 = vshll.u32 %v350, 16
      %v400 = vrot.slane %v398, 5
      %v401 = vsel %vm377, %v396, %v400
      %v402 = vshrl.u32 %v350, 16
      %v404 = vrot.slane %v402, 4
      %v405 = vor.u32 %v404, %v400
      %v406 = vrot.slane %v405, 4
      %v408 = vshll.u32 %v351, 16
      %v410 = vrot.slane %v408, 5
      %v411 = vsel %vm377, %v406, %v410
      %v412 = vshrl.u32 %v351, 16
      %v414 = vrot.slane %v412, 4
      %v415 = vor.u32 %v414, %v410
      %v416 = vrot.slane %v415, 4
      %v418 = vshll.u32 %v352, 16
      %v420 = vrot.slane %v418, 5
      %v421 = vsel %vm377, %v416, %v420
      %v422 = vshrl.u32 %v352, 16
      %v424 = vrot.slane %v422, 4
      %v425 = vor.u32 %v424, %v420
      %v426 = vrot.slane %v425, 4
      %v428 = vshll.u32 %v353, 16
      %v430 = vrot.slane %v428, 5
      %v431 = vsel %vm377, %v426, %v430
      %v432 = vshrl.u32 %v353, 16
      %v434 = vrot.slane %v432, 4
      %v435 = vor.u32 %v434, %v430
      %v436 = vrot.slane %v435, 4
      %v438 = vshll.u32 %v354, 16
      %v440 = vrot.slane %v438, 5
      %v441 = vsel %vm377, %v436, %v440
      %v442 = vshrl.u32 %v354, 16
      %v444 = vrot.slane %v442, 4
      %v445 = vor.u32 %v444, %v440
      %v446 = vrot.slane %v445, 4
      %v448 = vshll.u32 %v355, 16
      %v450 = vrot.slane %v448, 5
      %v451 = vsel %vm377, %v446, %v450
      %v452 = vshrl.u32 %v355, 16
      %v454 = vrot.slane %v452, 4
      %v455 = vor.u32 %v454, %v450
      %v456 = vrot.slane %v455, 4
      %v458 = vshll.u32 %v356, 16
      %v460 = vrot.slane %v458, 5
      %v461 = vsel %vm377, %v456, %v460
      %v462 = vshrl.u32 %v356, 16
      %v464 = vrot.slane %v462, 4
      %v465 = vor.u32 %v464, %v460
      %v466 = vrot.slane %v465, 4
      %476 = vst [vmem:[#allocation2 + $0x4] sm:$0xf] %v391
      %477 = vst [vmem:[#allocation2 + $0x14] sm:$0xf] %v401
      %478 = vst [vmem:[#allocation2 + $0x24] sm:$0xf] %v411
      %479 = vst [vmem:[#allocation2 + $0x34] sm:$0xf] %v421
      %480 = vst [vmem:[#allocation2 + $0x44] sm:$0xf] %v431
      %481 = vst [vmem:[#allocation2 + $0x54] sm:$0xf] %v441
      %482 = vst [vmem:[#allocation2 + $0x64] sm:$0xf] %v451
      %483 = vst [vmem:[#allocation2 + $0x74] sm:$0xf] %v461
      %484 = vst [vmem:[#allocation2 + $0x84] sm:$0x1] %v466
      %vm485 = vcmask 1042432
      %vm486 = vcmask 1046532
      %vm487 = vmor %vm485, %vm486
      %v488 = vrot.slane %v348, 5
      %v489 = vrot.slane %v488, 4
      %v490 = vrot.slane %v349, 5
      %v491 = vsel %vm487, %v489, %v490
      %v492 = vrot.slane %v490, 4
      %v493 = vrot.slane %v350, 5
      %v494 = vsel %vm487, %v492, %v493
      %v495 = vrot.slane %v493, 4
      %v496 = vrot.slane %v351, 5
      %v497 = vsel %vm487, %v495, %v496
      %v498 = vrot.slane %v496, 4
      %v499 = vrot.slane %v352, 5
      %v500 = vsel %vm487, %v498, %v499
      %v501 = vrot.slane %v499, 4
      %v502 = vrot.slane %v353, 5
      %v503 = vsel %vm487, %v501, %v502
      %v504 = vrot.slane %v502, 4
      %v505 = vrot.slane %v354, 5
      %v506 = vsel %vm487, %v504, %v505
      %v507 = vrot.slane %v505, 4
      %v508 = vrot.slane %v355, 5
      %v509 = vsel %vm487, %v507, %v508
      %v510 = vrot.slane %v508, 4
      %v511 = vrot.slane %v356, 5
      %v512 = vsel %vm487, %v510, %v511
      %v513 = vrot.slane %v511, 4
      %523 = vst [vmem:[#allocation2 + $0x8] sm:$0xf] %v491
      %524 = vst [vmem:[#allocation2 + $0x18] sm:$0xf] %v494
      %525 = vst [vmem:[#allocation2 + $0x28] sm:$0xf] %v497
      %526 = vst [vmem:[#allocation2 + $0x38] sm:$0xf] %v500
      %527 = vst [vmem:[#allocation2 + $0x48] sm:$0xf] %v503
      %528 = vst [vmem:[#allocation2 + $0x58] sm:$0xf] %v506
      %529 = vst [vmem:[#allocation2 + $0x68] sm:$0xf] %v509
      %530 = vst [vmem:[#allocation2 + $0x78] sm:$0xf] %v512
      %531 = vst [vmem:[#allocation2 + $0x88] sm:$0x1] %v513
      %vm532 = vsmask.f32 2304
      %vm533 = vsmask.f32 6416
      %vm534 = vmor %vm532, %vm533
      %v535 = vrot.slane %v379, 5
      %v536 = vrot.slane %v382, 6
      %v537 = vor.u32 %v535, %v536
      %v538 = vrot.slane %v537, 4
      %v539 = vrot.slane %v392, 5
      %v540 = vrot.slane %v388, 6
      %v541 = vor.u32 %v539, %v540
      %v542 = vsel %vm534, %v538, %v541
      %v543 = vrot.slane %v541, 4
      %v544 = vrot.slane %v402, 5
      %v545 = vrot.slane %v398, 6
      %v546 = vor.u32 %v544, %v545
      %v547 = vsel %vm534, %v543, %v546
      %v548 = vrot.slane %v546, 4
      %v549 = vrot.slane %v412, 5
      %v550 = vrot.slane %v408, 6
      %v551 = vor.u32 %v549, %v550
      %v552 = vsel %vm534, %v548, %v551
      %v553 = vrot.slane %v551, 4
      %v554 = vrot.slane %v422, 5
      %v555 = vrot.slane %v418, 6
      %v556 = vor.u32 %v554, %v555
      %v557 = vsel %vm534, %v553, %v556
      %v558 = vrot.slane %v556, 4
      %v559 = vrot.slane %v432, 5
      %v560 = vrot.slane %v428, 6
      %v561 = vor.u32 %v559, %v560
      %v562 = vsel %vm534, %v558, %v561
      %v563 = vrot.slane %v561, 4
      %v564 = vrot.slane %v442, 5
      %v565 = vrot.slane %v438, 6
      %v566 = vor.u32 %v564, %v565
      %v567 = vsel %vm534, %v563, %v566
      %v568 = vrot.slane %v566, 4
      %v569 = vrot.slane %v452, 5
      %v570 = vrot.slane %v448, 6
      %v571 = vor.u32 %v569, %v570
      %v572 = vsel %vm534, %v568, %v571
      %v573 = vrot.slane %v571, 4
      %v574 = vrot.slane %v462, 5
      %v575 = vrot.slane %v458, 6
      %v576 = vor.u32 %v574, %v575
      %v577 = vsel %vm534, %v573, %v576
      %v578 = vrot.slane %v576, 4
      %588 = vst [vmem:[#allocation2 + $0xc] sm:$0xf] %v542
      %589 = vst [vmem:[#allocation2 + $0x1c] sm:$0xf] %v547
      %590 = vst [vmem:[#allocation2 + $0x2c] sm:$0xf] %v552
      %591 = vst [vmem:[#allocation2 + $0x3c] sm:$0xf] %v557
      %592 = vst [vmem:[#allocation2 + $0x4c] sm:$0xf] %v562
      %593 = vst [vmem:[#allocation2 + $0x5c] sm:$0xf] %v567
      %594 = vst [vmem:[#allocation2 + $0x6c] sm:$0xf] %v572
      %595 = vst [vmem:[#allocation2 + $0x7c] sm:$0xf] %v577
      %596 = vst [vmem:[#allocation2 + $0x8c] sm:$0x1] %v578
      %v597 = vld [vmem:[#allocation2] sm:$0xff]
      %v598 = vld [vmem:[#allocation2 + $0x8] sm:$0xff]
      %v599 = vld [vmem:[#allocation2 + $0x10] sm:$0xff]
      %v600 = vld [vmem:[#allocation2 + $0x18] sm:$0xff]
      %v601 = vld [vmem:[#allocation2 + $0x20] sm:$0xff]
      %v602 = vld [vmem:[#allocation2 + $0x28] sm:$0xff]
      %v603 = vld [vmem:[#allocation2 + $0x30] sm:$0xff]
      %v604 = vld [vmem:[#allocation2 + $0x38] sm:$0xff]
      %v605 = vld [vmem:[#allocation2 + $0x40] sm:$0xff]
      %v606 = vld [vmem:[#allocation2 + $0x48] sm:$0xff]
      %v607 = vld [vmem:[#allocation2 + $0x50] sm:$0xff]
      %v608 = vld [vmem:[#allocation2 + $0x58] sm:$0xff]
      %v609 = vld [vmem:[#allocation2 + $0x60] sm:$0xff]
      %v610 = vld [vmem:[#allocation2 + $0x68] sm:$0xff]
      %v611 = vld [vmem:[#allocation2 + $0x70] sm:$0xff]
      %v612 = vld [vmem:[#allocation2 + $0x78] sm:$0xff]
      %v613 = vld [vmem:[#allocation2 + $0x80] sm:$0x11]
      %v614 = vld [vmem:[#allocation2 + $0x88] sm:$0x11]
      %v615 = vld [vmem:[%s1] sm:$0xff]
      %v616 = vld [vmem:[%s1 + $0x8] sm:$0xff]
      %v617 = vld [vmem:[%s1 + $0x10] sm:$0xff]
      %v618 = vld [vmem:[%s1 + $0x18] sm:$0xff]
      %v619 = vld [vmem:[%s1 + $0x20] sm:$0xff]
      %v620 = vld [vmem:[%s1 + $0x28] sm:$0xff]
      %v621 = vld [vmem:[%s1 + $0x30] sm:$0xff]
      %v622 = vld [vmem:[%s1 + $0x38] sm:$0xff]
      %v623 = vld [vmem:[%s1 + $0x40] sm:$0xff]
      %v624 = vld [vmem:[%s1 + $0x48] sm:$0xff]
      %v625 = vld [vmem:[%s1 + $0x50] sm:$0xff]
      %v626 = vld [vmem:[%s1 + $0x58] sm:$0xff]
      %v627 = vld [vmem:[%s1 + $0x60] sm:$0xff]
      %v628 = vld [vmem:[%s1 + $0x68] sm:$0xff]
      %v629 = vld [vmem:[%s1 + $0x70] sm:$0xff]
      %v630 = vld [vmem:[%s1 + $0x78] sm:$0xff]
      %v631 = vld [vmem:[%s1 + $0x80] sm:$0xff]
      %v632 = vld [vmem:[%s1 + $0x88] sm:$0xff]
      %v633 = vld [vmem:[%s1 + $0x90] sm:$0xff]
      %v634 = vld [vmem:[%s1 + $0x98] sm:$0xff]
      %v635 = vld [vmem:[%s1 + $0xa0] sm:$0xff]
      %v636 = vld [vmem:[%s1 + $0xa8] sm:$0xff]
      %v637 = vld [vmem:[%s1 + $0xb0] sm:$0xff]
      %v638 = vld [vmem:[%s1 + $0xb8] sm:$0xff]
      %v639 = vld [vmem:[%s1 + $0xc0] sm:$0xff]
      %v640 = vld [vmem:[%s1 + $0xc8] sm:$0xff]
      %v641 = vld [vmem:[%s1 + $0xd0] sm:$0xff]
      %v642 = vld [vmem:[%s1 + $0xd8] sm:$0xff]
      %v643 = vld [vmem:[%s1 + $0xe0] sm:$0xff]
      %v644 = vld [vmem:[%s1 + $0xe8] sm:$0xff]
      %v645 = vld [vmem:[%s1 + $0xf0] sm:$0xff]
      %v646 = vld [vmem:[%s1 + $0xf8] sm:$0xff]
      %v647 = vld [vmem:[%s1 + $0x100] sm:$0xff]
      %v648 = vld [vmem:[%s1 + $0x108] sm:$0xff]
      %v649 = vld [vmem:[%s1 + $0x110] sm:$0xff]
      %v650 = vld [vmem:[%s1 + $0x118] sm:$0xff]
      %v651 = vld [vmem:[%s1 + $0x120] sm:$0xff]
      %v652 = vld [vmem:[%s1 + $0x128] sm:$0xff]
      %v653 = vld [vmem:[%s1 + $0x130] sm:$0xff]
      %v654 = vld [vmem:[%s1 + $0x138] sm:$0xff]
      %v655 = vld [vmem:[%s1 + $0x140] sm:$0xff]
      %v656 = vld [vmem:[%s1 + $0x148] sm:$0xff]
      %v657 = vld [vmem:[%s1 + $0x150] sm:$0xff]
      %v658 = vld [vmem:[%s1 + $0x158] sm:$0xff]
      %v659 = vld [vmem:[%s1 + $0x160] sm:$0xff]
      %v660 = vld [vmem:[%s1 + $0x168] sm:$0xff]
      %v661 = vld [vmem:[%s1 + $0x170] sm:$0xff]
      %v662 = vld [vmem:[%s1 + $0x178] sm:$0xff]
      %v663 = vld [vmem:[%s1 + $0x180] sm:$0xff]
      %v664 = vld [vmem:[%s1 + $0x188] sm:$0xff]
      %v665 = vld [vmem:[%s1 + $0x190] sm:$0xff]
      %v666 = vld [vmem:[%s1 + $0x198] sm:$0xff]
      %v667 = vld [vmem:[%s1 + $0x1a0] sm:$0xff]
      %v668 = vld [vmem:[%s1 + $0x1a8] sm:$0xff]
      %v669 = vld [vmem:[%s1 + $0x1b0] sm:$0xff]
      %v670 = vld [vmem:[%s1 + $0x1b8] sm:$0xff]
      %v671 = vld [vmem:[%s1 + $0x1c0] sm:$0xff]
      %v672 = vld [vmem:[%s1 + $0x1c8] sm:$0xff]
      %v673 = vld [vmem:[%s1 + $0x1d0] sm:$0xff]
      %v674 = vld [vmem:[%s1 + $0x1d8] sm:$0xff]
      %v675 = vld [vmem:[%s1 + $0x1e0] sm:$0xff]
      %v676 = vld [vmem:[%s1 + $0x1e8] sm:$0xff]
      %v677 = vld [vmem:[%s1 + $0x1f0] sm:$0xff]
      %v678 = vld [vmem:[%s1 + $0x1f8] sm:$0xff]
      %v679 = vld [vmem:[%s1 + $0x200] sm:$0xff]
      %v680 = vld [vmem:[%s1 + $0x208] sm:$0xff]
      %v681 = vld [vmem:[%s1 + $0x210] sm:$0xff]
      %v682 = vld [vmem:[%s1 + $0x218] sm:$0xff]
      %v683 = vld [vmem:[%s1 + $0x220] sm:$0xff]
      %v684 = vld [vmem:[%s1 + $0x228] sm:$0xff]
      %v685 = vld [vmem:[%s1 + $0x230] sm:$0xff]
      %v686 = vld [vmem:[%s1 + $0x238] sm:$0xff]
      %v687 = vld [vmem:[%s1 + $0x240] sm:$0xff]
      %v688 = vld [vmem:[%s1 + $0x248] sm:$0xff]
      %v689 = vld [vmem:[%s1 + $0x250] sm:$0xff]
      %v690 = vld [vmem:[%s1 + $0x258] sm:$0xff]
      %v691 = vld [vmem:[%s1 + $0x260] sm:$0xff]
      %v692 = vld [vmem:[%s1 + $0x268] sm:$0xff]
      %v693 = vld [vmem:[%s1 + $0x270] sm:$0xff]
      %v694 = vld [vmem:[%s1 + $0x278] sm:$0xff]
      %v695 = vld [vmem:[%s1 + $0x280] sm:$0xff]
      %v696 = vld [vmem:[%s1 + $0x288] sm:$0xff]
      %v697 = vld [vmem:[%s1 + $0x290] sm:$0xff]
      %v698 = vld [vmem:[%s1 + $0x298] sm:$0xff]
      %v699 = vld [vmem:[%s1 + $0x2a0] sm:$0xff]
      %v700 = vld [vmem:[%s1 + $0x2a8] sm:$0xff]
      %v701 = vld [vmem:[%s1 + $0x2b0] sm:$0xff]
      %v702 = vld [vmem:[%s1 + $0x2b8] sm:$0xff]
      %v703 = vld [vmem:[%s1 + $0x2c0] sm:$0xff]
      %v704 = vld [vmem:[%s1 + $0x2c8] sm:$0xff]
      %v705 = vld [vmem:[%s1 + $0x2d0] sm:$0xff]
      %v706 = vld [vmem:[%s1 + $0x2d8] sm:$0xff]
      %v707 = vld [vmem:[%s1 + $0x2e0] sm:$0xff]
      %v708 = vld [vmem:[%s1 + $0x2e8] sm:$0xff]
      %v709 = vld [vmem:[%s1 + $0x2f0] sm:$0xff]
      %v710 = vld [vmem:[%s1 + $0x2f8] sm:$0xff]
      %v711 = vld [vmem:[%s1 + $0x300] sm:$0xff]
      %v712 = vld [vmem:[%s1 + $0x308] sm:$0xff]
      %v713 = vld [vmem:[%s1 + $0x310] sm:$0xff]
      %v714 = vld [vmem:[%s1 + $0x318] sm:$0xff]
      %v715 = vld [vmem:[%s1 + $0x320] sm:$0xff]
      %v716 = vld [vmem:[%s1 + $0x328] sm:$0xff]
      %v717 = vld [vmem:[%s1 + $0x330] sm:$0xff]
      %v718 = vld [vmem:[%s1 + $0x338] sm:$0xff]
      %v719 = vld [vmem:[%s1 + $0x340] sm:$0xff]
      %v720 = vld [vmem:[%s1 + $0x348] sm:$0xff]
      %v721 = vld [vmem:[%s1 + $0x350] sm:$0xff]
      %v722 = vld [vmem:[%s1 + $0x358] sm:$0xff]
      %v723 = vld [vmem:[%s1 + $0x360] sm:$0xff]
      %v724 = vld [vmem:[%s1 + $0x368] sm:$0xff]
      %v725 = vld [vmem:[%s1 + $0x370] sm:$0xff]
      %v726 = vld [vmem:[%s1 + $0x378] sm:$0xff]
      %v727 = vld [vmem:[%s1 + $0x380] sm:$0xff]
      %v728 = vld [vmem:[%s1 + $0x388] sm:$0xff]
      %v729 = vld [vmem:[%s1 + $0x390] sm:$0xff]
      %v730 = vld [vmem:[%s1 + $0x398] sm:$0xff]
      %v731 = vld [vmem:[%s1 + $0x3a0] sm:$0xff]
      %v732 = vld [vmem:[%s1 + $0x3a8] sm:$0xff]
      %v733 = vld [vmem:[%s1 + $0x3b0] sm:$0xff]
      %v734 = vld [vmem:[%s1 + $0x3b8] sm:$0xff]
      %v735 = vld [vmem:[%s1 + $0x3c0] sm:$0xff]
      %v736 = vld [vmem:[%s1 + $0x3c8] sm:$0xff]
      %v737 = vld [vmem:[%s1 + $0x3d0] sm:$0xff]
      %v738 = vld [vmem:[%s1 + $0x3d8] sm:$0xff]
      %v739 = vld [vmem:[%s1 + $0x3e0] sm:$0xff]
      %v740 = vld [vmem:[%s1 + $0x3e8] sm:$0xff]
      %v741 = vld [vmem:[%s1 + $0x3f0] sm:$0xff]
      %v742 = vld [vmem:[%s1 + $0x3f8] sm:$0xff]
      %v743 = vld [vmem:[%s1 + $0x400] sm:$0xff]
      %v744 = vld [vmem:[%s1 + $0x408] sm:$0xff]
      %v745 = vld [vmem:[%s1 + $0x410] sm:$0xff]
      %v746 = vld [vmem:[%s1 + $0x418] sm:$0xff]
      %v747 = vld [vmem:[%s1 + $0x420] sm:$0xff]
      %v748 = vld [vmem:[%s1 + $0x428] sm:$0xff]
      %v749 = vld [vmem:[%s1 + $0x430] sm:$0xff]
      %v750 = vld [vmem:[%s1 + $0x438] sm:$0xff]
      %v751 = vld [vmem:[%s1 + $0x440] sm:$0xff]
      %v752 = vld [vmem:[%s1 + $0x448] sm:$0xff]
      %v753 = vld [vmem:[%s1 + $0x450] sm:$0xff]
      %v754 = vld [vmem:[%s1 + $0x458] sm:$0xff]
      %v755 = vld [vmem:[%s1 + $0x460] sm:$0xff]
      %v756 = vld [vmem:[%s1 + $0x468] sm:$0xff]
      %v757 = vld [vmem:[%s1 + $0x470] sm:$0xff]
      %v758 = vld [vmem:[%s1 + $0x478] sm:$0xff]
      %v759 = vld [vmem:[%s1 + $0x480] sm:$0xff]
      %v760 = vld [vmem:[%s1 + $0x488] sm:$0xff]
      %v761 = vld [vmem:[%s1 + $0x490] sm:$0xff]
      %v762 = vld [vmem:[%s1 + $0x498] sm:$0xff]
      %v763 = vld [vmem:[%s1 + $0x4a0] sm:$0xff]
      %v764 = vld [vmem:[%s1 + $0x4a8] sm:$0xff]
      %v765 = vld [vmem:[%s1 + $0x4b0] sm:$0xff]
      %v766 = vld [vmem:[%s1 + $0x4b8] sm:$0xff]
      %v767 = vld [vmem:[%s1 + $0x4c0] sm:$0xff]
      %v768 = vld [vmem:[%s1 + $0x4c8] sm:$0xff]
      %v769 = vld [vmem:[%s1 + $0x4d0] sm:$0xff]
      %v770 = vld [vmem:[%s1 + $0x4d8] sm:$0xff]
      %v771 = vld [vmem:[%s1 + $0x4e0] sm:$0xff]
      %v772 = vld [vmem:[%s1 + $0x4e8] sm:$0xff]
      %v773 = vld [vmem:[%s1 + $0x4f0] sm:$0xff]
      %v774 = vld [vmem:[%s1 + $0x4f8] sm:$0xff]
      %v775 = vld [vmem:[%s1 + $0x500] sm:$0xff]
      %v776 = vld [vmem:[%s1 + $0x508] sm:$0xff]
      %v777 = vld [vmem:[%s1 + $0x510] sm:$0xff]
      %v778 = vld [vmem:[%s1 + $0x518] sm:$0xff]
      %v779 = vld [vmem:[%s1 + $0x520] sm:$0xff]
      %v780 = vld [vmem:[%s1 + $0x528] sm:$0xff]
      %v781 = vld [vmem:[%s1 + $0x530] sm:$0xff]
      %v782 = vld [vmem:[%s1 + $0x538] sm:$0xff]
      %v783 = vld [vmem:[%s1 + $0x540] sm:$0xff]
      %v784 = vld [vmem:[%s1 + $0x548] sm:$0xff]
      %v785 = vld [vmem:[%s1 + $0x550] sm:$0xff]
      %v786 = vld [vmem:[%s1 + $0x558] sm:$0xff]
      %v787 = vld [vmem:[%s1 + $0x560] sm:$0xff]
      %v788 = vld [vmem:[%s1 + $0x568] sm:$0xff]
      %v789 = vld [vmem:[%s1 + $0x570] sm:$0xff]
      %v790 = vld [vmem:[%s1 + $0x578] sm:$0xff]
      %v791 = vld [vmem:[%s1 + $0x580] sm:$0xff]
      %v792 = vld [vmem:[%s1 + $0x588] sm:$0xff]
      %v793 = vld [vmem:[%s1 + $0x590] sm:$0xff]
      %v794 = vld [vmem:[%s1 + $0x598] sm:$0xff]
      %v795 = vld [vmem:[%s1 + $0x5a0] sm:$0xff]
      %v796 = vld [vmem:[%s1 + $0x5a8] sm:$0xff]
      %v797 = vld [vmem:[%s1 + $0x5b0] sm:$0xff]
      %v798 = vld [vmem:[%s1 + $0x5b8] sm:$0xff]
      %v799 = vld [vmem:[%s1 + $0x5c0] sm:$0xff]
      %v800 = vld [vmem:[%s1 + $0x5c8] sm:$0xff]
      %v801 = vld [vmem:[%s1 + $0x5d0] sm:$0xff]
      %v802 = vld [vmem:[%s1 + $0x5d8] sm:$0xff]
      %v803 = vld [vmem:[%s1 + $0x5e0] sm:$0xff]
      %v804 = vld [vmem:[%s1 + $0x5e8] sm:$0xff]
      %v805 = vld [vmem:[%s1 + $0x5f0] sm:$0xff]
      %v806 = vld [vmem:[%s1 + $0x5f8] sm:$0xff]
      %v825 = vunpack.c.l.b16 %v597
      %v826 = vunpack.c.h.b16 %v597
      %v827 = vunpack.c.l.b16 %v598
      %v828 = vunpack.c.h.b16 %v598
      %v829 = vunpack.c.l.b16 %v599
      %v830 = vunpack.c.h.b16 %v599
      %v831 = vunpack.c.l.b16 %v600
      %v832 = vunpack.c.h.b16 %v600
      %v833 = vunpack.c.l.b16 %v601
      %v834 = vunpack.c.h.b16 %v601
      %v835 = vunpack.c.l.b16 %v602
      %v836 = vunpack.c.h.b16 %v602
      %v837 = vunpack.c.l.b16 %v603
      %v838 = vunpack.c.h.b16 %v603
      %v839 = vunpack.c.l.b16 %v604
      %v840 = vunpack.c.h.b16 %v604
      %v841 = vunpack.c.l.b16 %v605
      %v842 = vunpack.c.h.b16 %v605
      %v843 = vunpack.c.l.b16 %v606
      %v844 = vunpack.c.h.b16 %v606
      %v845 = vunpack.c.l.b16 %v607
      %v846 = vunpack.c.h.b16 %v607
      %v847 = vunpack.c.l.b16 %v608
      %v848 = vunpack.c.h.b16 %v608
      %v849 = vunpack.c.l.b16 %v609
      %v850 = vunpack.c.h.b16 %v609
      %v851 = vunpack.c.l.b16 %v610
      %v852 = vunpack.c.h.b16 %v610
      %v853 = vunpack.c.l.b16 %v611
      %v854 = vunpack.c.h.b16 %v611
      %v855 = vunpack.c.l.b16 %v612
      %v856 = vunpack.c.h.b16 %v612
      %v857 = vunpack.c.l.b16 %v613
      %v858 = vunpack.c.h.b16 %v613
      %v859 = vunpack.c.l.b16 %v614
      %v860 = vunpack.c.h.b16 %v614
      %v861 = vpack.c.b16 %v829, %v825
      %v862 = vpack.c.b16 %v830, %v826
      %v863 = vpack.c.b16 %v831, %v827
      %v864 = vpack.c.b16 %v832, %v828
      %v865 = vpack.c.b16 %v837, %v833
      %v866 = vpack.c.b16 %v838, %v834
      %v867 = vpack.c.b16 %v839, %v835
      %v868 = vpack.c.b16 %v840, %v836
      %v869 = vpack.c.b16 %v845, %v841
      %v870 = vpack.c.b16 %v846, %v842
      %v871 = vpack.c.b16 %v847, %v843
      %v872 = vpack.c.b16 %v848, %v844
      %v873 = vpack.c.b16 %v853, %v849
      %v874 = vpack.c.b16 %v854, %v850
      %v875 = vpack.c.b16 %v855, %v851
      %v876 = vpack.c.b16 %v856, %v852
      %v877 = vpack.c.b16 %v857, %v857
      %v878 = vpack.c.b16 %v858, %v858
      %v879 = vpack.c.b16 %v859, %v859
      %v880 = vpack.c.b16 %v860, %v860
      %v1093 = vunpack.c.l.b16 %v615
      %v1094 = vunpack.c.h.b16 %v615
      %v1095 = vunpack.c.l.b16 %v616
      %v1096 = vunpack.c.h.b16 %v616
      %v1097 = vunpack.c.l.b16 %v617
      %v1098 = vunpack.c.h.b16 %v617
      %v1099 = vunpack.c.l.b16 %v618
      %v1100 = vunpack.c.h.b16 %v618
      %v1101 = vunpack.c.l.b16 %v619
      %v1102 = vunpack.c.h.b16 %v619
      %v1103 = vunpack.c.l.b16 %v620
      %v1104 = vunpack.c.h.b16 %v620
      %v1105 = vunpack.c.l.b16 %v621
      %v1106 = vunpack.c.h.b16 %v621
      %v1107 = vunpack.c.l.b16 %v622
      %v1108 = vunpack.c.h.b16 %v622
      %v1109 = vunpack.c.l.b16 %v623
      %v1110 = vunpack.c.h.b16 %v623
      %v1111 = vunpack.c.l.b16 %v624
      %v1112 = vunpack.c.h.b16 %v624
      %v1113 = vunpack.c.l.b16 %v625
      %v1114 = vunpack.c.h.b16 %v625
      %v1115 = vunpack.c.l.b16 %v626
      %v1116 = vunpack.c.h.b16 %v626
      %v1117 = vunpack.c.l.b16 %v627
      %v1118 = vunpack.c.h.b16 %v627
      %v1119 = vunpack.c.l.b16 %v628
      %v1120 = vunpack.c.h.b16 %v628
      %v1121 = vunpack.c.l.b16 %v629
      %v1122 = vunpack.c.h.b16 %v629
      %v1123 = vunpack.c.l.b16 %v630
      %v1124 = vunpack.c.h.b16 %v630
      %v1125 = vunpack.c.l.b16 %v631
      %v1126 = vunpack.c.h.b16 %v631
      %v1127 = vunpack.c.l.b16 %v632
      %v1128 = vunpack.c.h.b16 %v632
      %v1129 = vunpack.c.l.b16 %v633
      %v1130 = vunpack.c.h.b16 %v633
      %v1131 = vunpack.c.l.b16 %v634
      %v1132 = vunpack.c.h.b16 %v634
      %v1133 = vunpack.c.l.b16 %v635
      %v1134 = vunpack.c.h.b16 %v635
      %v1135 = vunpack.c.l.b16 %v636
      %v1136 = vunpack.c.h.b16 %v636
      %v1137 = vunpack.c.l.b16 %v637
      %v1138 = vunpack.c.h.b16 %v637
      %v1139 = vunpack.c.l.b16 %v638
      %v1140 = vunpack.c.h.b16 %v638
      %v1141 = vunpack.c.l.b16 %v639
      %v1142 = vunpack.c.h.b16 %v639
      %v1143 = vunpack.c.l.b16 %v640
      %v1144 = vunpack.c.h.b16 %v640
      %v1145 = vunpack.c.l.b16 %v641
      %v1146 = vunpack.c.h.b16 %v641
      %v1147 = vunpack.c.l.b16 %v642
      %v1148 = vunpack.c.h.b16 %v642
      %v1149 = vunpack.c.l.b16 %v643
      %v1150 = vunpack.c.h.b16 %v643
      %v1151 = vunpack.c.l.b16 %v644
      %v1152 = vunpack.c.h.b16 %v644
      %v1153 = vunpack.c.l.b16 %v645
      %v1154 = vunpack.c.h.b16 %v645
      %v1155 = vunpack.c.l.b16 %v646
      %v1156 = vunpack.c.h.b16 %v646
      %v1157 = vunpack.c.l.b16 %v647
      %v1158 = vunpack.c.h.b16 %v647
      %v1159 = vunpack.c.l.b16 %v648
      %v1160 = vunpack.c.h.b16 %v648
      %v1161 = vunpack.c.l.b16 %v649
      %v1162 = vunpack.c.h.b16 %v649
      %v1163 = vunpack.c.l.b16 %v650
      %v1164 = vunpack.c.h.b16 %v650
      %v1165 = vunpack.c.l.b16 %v651
      %v1166 = vunpack.c.h.b16 %v651
      %v1167 = vunpack.c.l.b16 %v652
      %v1168 = vunpack.c.h.b16 %v652
      %v1169 = vunpack.c.l.b16 %v653
      %v1170 = vunpack.c.h.b16 %v653
      %v1171 = vunpack.c.l.b16 %v654
      %v1172 = vunpack.c.h.b16 %v654
      %v1173 = vunpack.c.l.b16 %v655
      %v1174 = vunpack.c.h.b16 %v655
      %v1175 = vunpack.c.l.b16 %v656
      %v1176 = vunpack.c.h.b16 %v656
      %v1177 = vunpack.c.l.b16 %v657
      %v1178 = vunpack.c.h.b16 %v657
      %v1179 = vunpack.c.l.b16 %v658
      %v1180 = vunpack.c.h.b16 %v658
      %v1181 = vunpack.c.l.b16 %v659
      %v1182 = vunpack.c.h.b16 %v659
      %v1183 = vunpack.c.l.b16 %v660
      %v1184 = vunpack.c.h.b16 %v660
      %v1185 = vunpack.c.l.b16 %v661
      %v1186 = vunpack.c.h.b16 %v661
      %v1187 = vunpack.c.l.b16 %v662
      %v1188 = vunpack.c.h.b16 %v662
      %v1189 = vunpack.c.l.b16 %v663
      %v1190 = vunpack.c.h.b16 %v663
      %v1191 = vunpack.c.l.b16 %v664
      %v1192 = vunpack.c.h.b16 %v664
      %v1193 = vunpack.c.l.b16 %v665
      %v1194 = vunpack.c.h.b16 %v665
      %v1195 = vunpack.c.l.b16 %v666
      %v1196 = vunpack.c.h.b16 %v666
      %v1197 = vunpack.c.l.b16 %v667
      %v1198 = vunpack.c.h.b16 %v667
      %v1199 = vunpack.c.l.b16 %v668
      %v1200 = vunpack.c.h.b16 %v668
      %v1201 = vunpack.c.l.b16 %v669
      %v1202 = vunpack.c.h.b16 %v669
      %v1203 = vunpack.c.l.b16 %v670
      %v1204 = vunpack.c.h.b16 %v670
      %v1205 = vunpack.c.l.b16 %v671
      %v1206 = vunpack.c.h.b16 %v671
      %v1207 = vunpack.c.l.b16 %v672
      %v1208 = vunpack.c.h.b16 %v672
      %v1209 = vunpack.c.l.b16 %v673
      %v1210 = vunpack.c.h.b16 %v673
      %v1211 = vunpack.c.l.b16 %v674
      %v1212 = vunpack.c.h.b16 %v674
      %v1213 = vunpack.c.l.b16 %v675
      %v1214 = vunpack.c.h.b16 %v675
      %v1215 = vunpack.c.l.b16 %v676
      %v1216 = vunpack.c.h.b16 %v676
      %v1217 = vunpack.c.l.b16 %v677
      %v1218 = vunpack.c.h.b16 %v677
      %v1219 = vunpack.c.l.b16 %v678
      %v1220 = vunpack.c.h.b16 %v678
      %v1221 = vunpack.c.l.b16 %v679
      %v1222 = vunpack.c.h.b16 %v679
      %v1223 = vunpack.c.l.b16 %v680
      %v1224 = vunpack.c.h.b16 %v680
      %v1225 = vunpack.c.l.b16 %v681
      %v1226 = vunpack.c.h.b16 %v681
      %v1227 = vunpack.c.l.b16 %v682
      %v1228 = vunpack.c.h.b16 %v682
      %v1229 = vunpack.c.l.b16 %v683
      %v1230 = vunpack.c.h.b16 %v683
      %v1231 = vunpack.c.l.b16 %v684
      %v1232 = vunpack.c.h.b16 %v684
      %v1233 = vunpack.c.l.b16 %v685
      %v1234 = vunpack.c.h.b16 %v685
      %v1235 = vunpack.c.l.b16 %v686
      %v1236 = vunpack.c.h.b16 %v686
      %v1237 = vunpack.c.l.b16 %v687
      %v1238 = vunpack.c.h.b16 %v687
      %v1239 = vunpack.c.l.b16 %v688
      %v1240 = vunpack.c.h.b16 %v688
      %v1241 = vunpack.c.l.b16 %v689
      %v1242 = vunpack.c.h.b16 %v689
      %v1243 = vunpack.c.l.b16 %v690
      %v1244 = vunpack.c.h.b16 %v690
      %v1245 = vunpack.c.l.b16 %v691
      %v1246 = vunpack.c.h.b16 %v691
      %v1247 = vunpack.c.l.b16 %v692
      %v1248 = vunpack.c.h.b16 %v692
      %v1249 = vunpack.c.l.b16 %v693
      %v1250 = vunpack.c.h.b16 %v693
      %v1251 = vunpack.c.l.b16 %v694
      %v1252 = vunpack.c.h.b16 %v694
      %v1253 = vunpack.c.l.b16 %v695
      %v1254 = vunpack.c.h.b16 %v695
      %v1255 = vunpack.c.l.b16 %v696
      %v1256 = vunpack.c.h.b16 %v696
      %v1257 = vunpack.c.l.b16 %v697
      %v1258 = vunpack.c.h.b16 %v697
      %v1259 = vunpack.c.l.b16 %v698
      %v1260 = vunpack.c.h.b16 %v698
      %v1261 = vunpack.c.l.b16 %v699
      %v1262 = vunpack.c.h.b16 %v699
      %v1263 = vunpack.c.l.b16 %v700
      %v1264 = vunpack.c.h.b16 %v700
      %v1265 = vunpack.c.l.b16 %v701
      %v1266 = vunpack.c.h.b16 %v701
      %v1267 = vunpack.c.l.b16 %v702
      %v1268 = vunpack.c.h.b16 %v702
      %v1269 = vunpack.c.l.b16 %v703
      %v1270 = vunpack.c.h.b16 %v703
      %v1271 = vunpack.c.l.b16 %v704
      %v1272 = vunpack.c.h.b16 %v704
      %v1273 = vunpack.c.l.b16 %v705
      %v1274 = vunpack.c.h.b16 %v705
      %v1275 = vunpack.c.l.b16 %v706
      %v1276 = vunpack.c.h.b16 %v706
      %v1277 = vunpack.c.l.b16 %v707
      %v1278 = vunpack.c.h.b16 %v707
      %v1279 = vunpack.c.l.b16 %v708
      %v1280 = vunpack.c.h.b16 %v708
      %v1281 = vunpack.c.l.b16 %v709
      %v1282 = vunpack.c.h.b16 %v709
      %v1283 = vunpack.c.l.b16 %v710
      %v1284 = vunpack.c.h.b16 %v710
      %v1285 = vunpack.c.l.b16 %v711
      %v1286 = vunpack.c.h.b16 %v711
      %v1287 = vunpack.c.l.b16 %v712
      %v1288 = vunpack.c.h.b16 %v712
      %v1289 = vunpack.c.l.b16 %v713
      %v1290 = vunpack.c.h.b16 %v713
      %v1291 = vunpack.c.l.b16 %v714
      %v1292 = vunpack.c.h.b16 %v714
      %v1293 = vunpack.c.l.b16 %v715
      %v1294 = vunpack.c.h.b16 %v715
      %v1295 = vunpack.c.l.b16 %v716
      %v1296 = vunpack.c.h.b16 %v716
      %v1297 = vunpack.c.l.b16 %v717
      %v1298 = vunpack.c.h.b16 %v717
      %v1299 = vunpack.c.l.b16 %v718
      %v1300 = vunpack.c.h.b16 %v718
      %v1301 = vunpack.c.l.b16 %v719
      %v1302 = vunpack.c.h.b16 %v719
      %v1303 = vunpack.c.l.b16 %v720
      %v1304 = vunpack.c.h.b16 %v720
      %v1305 = vunpack.c.l.b16 %v721
      %v1306 = vunpack.c.h.b16 %v721
      %v1307 = vunpack.c.l.b16 %v722
      %v1308 = vunpack.c.h.b16 %v722
      %v1309 = vunpack.c.l.b16 %v723
      %v1310 = vunpack.c.h.b16 %v723
      %v1311 = vunpack.c.l.b16 %v724
      %v1312 = vunpack.c.h.b16 %v724
      %v1313 = vunpack.c.l.b16 %v725
      %v1314 = vunpack.c.h.b16 %v725
      %v1315 = vunpack.c.l.b16 %v726
      %v1316 = vunpack.c.h.b16 %v726
      %v1317 = vunpack.c.l.b16 %v727
      %v1318 = vunpack.c.h.b16 %v727
      %v1319 = vunpack.c.l.b16 %v728
      %v1320 = vunpack.c.h.b16 %v728
      %v1321 = vunpack.c.l.b16 %v729
      %v1322 = vunpack.c.h.b16 %v729
      %v1323 = vunpack.c.l.b16 %v730
      %v1324 = vunpack.c.h.b16 %v730
      %v1325 = vunpack.c.l.b16 %v731
      %v1326 = vunpack.c.h.b16 %v731
      %v1327 = vunpack.c.l.b16 %v732
      %v1328 = vunpack.c.h.b16 %v732
      %v1329 = vunpack.c.l.b16 %v733
      %v1330 = vunpack.c.h.b16 %v733
      %v1331 = vunpack.c.l.b16 %v734
      %v1332 = vunpack.c.h.b16 %v734
      %v1333 = vunpack.c.l.b16 %v735
      %v1334 = vunpack.c.h.b16 %v735
      %v1335 = vunpack.c.l.b16 %v736
      %v1336 = vunpack.c.h.b16 %v736
      %v1337 = vunpack.c.l.b16 %v737
      %v1338 = vunpack.c.h.b16 %v737
      %v1339 = vunpack.c.l.b16 %v738
      %v1340 = vunpack.c.h.b16 %v738
      %v1341 = vunpack.c.l.b16 %v739
      %v1342 = vunpack.c.h.b16 %v739
      %v1343 = vunpack.c.l.b16 %v740
      %v1344 = vunpack.c.h.b16 %v740
      %v1345 = vunpack.c.l.b16 %v741
      %v1346 = vunpack.c.h.b16 %v741
      %v1347 = vunpack.c.l.b16 %v742
      %v1348 = vunpack.c.h.b16 %v742
      %v1349 = vunpack.c.l.b16 %v743
      %v1350 = vunpack.c.h.b16 %v743
      %v1351 = vunpack.c.l.b16 %v744
      %v1352 = vunpack.c.h.b16 %v744
      %v1353 = vunpack.c.l.b16 %v745
      %v1354 = vunpack.c.h.b16 %v745
      %v1355 = vunpack.c.l.b16 %v746
      %v1356 = vunpack.c.h.b16 %v746
      %v1357 = vunpack.c.l.b16 %v747
      %v1358 = vunpack.c.h.b16 %v747
      %v1359 = vunpack.c.l.b16 %v748
      %v1360 = vunpack.c.h.b16 %v748
      %v1361 = vunpack.c.l.b16 %v749
      %v1362 = vunpack.c.h.b16 %v749
      %v1363 = vunpack.c.l.b16 %v750
      %v1364 = vunpack.c.h.b16 %v750
      %v1365 = vunpack.c.l.b16 %v751
      %v1366 = vunpack.c.h.b16 %v751
      %v1367 = vunpack.c.l.b16 %v752
      %v1368 = vunpack.c.h.b16 %v752
      %v1369 = vunpack.c.l.b16 %v753
      %v1370 = vunpack.c.h.b16 %v753
      %v1371 = vunpack.c.l.b16 %v754
      %v1372 = vunpack.c.h.b16 %v754
      %v1373 = vunpack.c.l.b16 %v755
      %v1374 = vunpack.c.h.b16 %v755
      %v1375 = vunpack.c.l.b16 %v756
      %v1376 = vunpack.c.h.b16 %v756
      %v1377 = vunpack.c.l.b16 %v757
      %v1378 = vunpack.c.h.b16 %v757
      %v1379 = vunpack.c.l.b16 %v758
      %v1380 = vunpack.c.h.b16 %v758
      %v1381 = vunpack.c.l.b16 %v759
      %v1382 = vunpack.c.h.b16 %v759
      %v1383 = vunpack.c.l.b16 %v760
      %v1384 = vunpack.c.h.b16 %v760
      %v1385 = vunpack.c.l.b16 %v761
      %v1386 = vunpack.c.h.b16 %v761
      %v1387 = vunpack.c.l.b16 %v762
      %v1388 = vunpack.c.h.b16 %v762
      %v1389 = vunpack.c.l.b16 %v763
      %v1390 = vunpack.c.h.b16 %v763
      %v1391 = vunpack.c.l.b16 %v764
      %v1392 = vunpack.c.h.b16 %v764
      %v1393 = vunpack.c.l.b16 %v765
      %v1394 = vunpack.c.h.b16 %v765
      %v1395 = vunpack.c.l.b16 %v766
      %v1396 = vunpack.c.h.b16 %v766
      %v1397 = vunpack.c.l.b16 %v767
      %v1398 = vunpack.c.h.b16 %v767
      %v1399 = vunpack.c.l.b16 %v768
      %v1400 = vunpack.c.h.b16 %v768
      %v1401 = vunpack.c.l.b16 %v769
      %v1402 = vunpack.c.h.b16 %v769
      %v1403 = vunpack.c.l.b16 %v770
      %v1404 = vunpack.c.h.b16 %v770
      %v1405 = vunpack.c.l.b16 %v771
      %v1406 = vunpack.c.h.b16 %v771
      %v1407 = vunpack.c.l.b16 %v772
      %v1408 = vunpack.c.h.b16 %v772
      %v1409 = vunpack.c.l.b16 %v773
      %v1410 = vunpack.c.h.b16 %v773
      %v1411 = vunpack.c.l.b16 %v774
      %v1412 = vunpack.c.h.b16 %v774
      %v1413 = vunpack.c.l.b16 %v775
      %v1414 = vunpack.c.h.b16 %v775
      %v1415 = vunpack.c.l.b16 %v776
      %v1416 = vunpack.c.h.b16 %v776
      %v1417 = vunpack.c.l.b16 %v777
      %v1418 = vunpack.c.h.b16 %v777
      %v1419 = vunpack.c.l.b16 %v778
      %v1420 = vunpack.c.h.b16 %v778
      %v1421 = vunpack.c.l.b16 %v779
      %v1422 = vunpack.c.h.b16 %v779
      %v1423 = vunpack.c.l.b16 %v780
      %v1424 = vunpack.c.h.b16 %v780
      %v1425 = vunpack.c.l.b16 %v781
      %v1426 = vunpack.c.h.b16 %v781
      %v1427 = vunpack.c.l.b16 %v782
      %v1428 = vunpack.c.h.b16 %v782
      %v1429 = vunpack.c.l.b16 %v783
      %v1430 = vunpack.c.h.b16 %v783
      %v1431 = vunpack.c.l.b16 %v784
      %v1432 = vunpack.c.h.b16 %v784
      %v1433 = vunpack.c.l.b16 %v785
      %v1434 = vunpack.c.h.b16 %v785
      %v1435 = vunpack.c.l.b16 %v786
      %v1436 = vunpack.c.h.b16 %v786
      %v1437 = vunpack.c.l.b16 %v787
      %v1438 = vunpack.c.h.b16 %v787
      %v1439 = vunpack.c.l.b16 %v788
      %v1440 = vunpack.c.h.b16 %v788
      %v1441 = vunpack.c.l.b16 %v789
      %v1442 = vunpack.c.h.b16 %v789
      %v1443 = vunpack.c.l.b16 %v790
      %v1444 = vunpack.c.h.b16 %v790
      %v1445 = vunpack.c.l.b16 %v791
      %v1446 = vunpack.c.h.b16 %v791
      %v1447 = vunpack.c.l.b16 %v792
      %v1448 = vunpack.c.h.b16 %v792
      %v1449 = vunpack.c.l.b16 %v793
      %v1450 = vunpack.c.h.b16 %v793
      %v1451 = vunpack.c.l.b16 %v794
      %v1452 = vunpack.c.h.b16 %v794
      %v1453 = vunpack.c.l.b16 %v795
      %v1454 = vunpack.c.h.b16 %v795
      %v1455 = vunpack.c.l.b16 %v796
      %v1456 = vunpack.c.h.b16 %v796
      %v1457 = vunpack.c.l.b16 %v797
      %v1458 = vunpack.c.h.b16 %v797
      %v1459 = vunpack.c.l.b16 %v798
      %v1460 = vunpack.c.h.b16 %v798
      %v1461 = vunpack.c.l.b16 %v799
      %v1462 = vunpack.c.h.b16 %v799
      %v1463 = vunpack.c.l.b16 %v800
      %v1464 = vunpack.c.h.b16 %v800
      %v1465 = vunpack.c.l.b16 %v801
      %v1466 = vunpack.c.h.b16 %v801
      %v1467 = vunpack.c.l.b16 %v802
      %v1468 = vunpack.c.h.b16 %v802
      %v1469 = vunpack.c.l.b16 %v803
      %v1470 = vunpack.c.h.b16 %v803
      %v1471 = vunpack.c.l.b16 %v804
      %v1472 = vunpack.c.h.b16 %v804
      %v1473 = vunpack.c.l.b16 %v805
      %v1474 = vunpack.c.h.b16 %v805
      %v1475 = vunpack.c.l.b16 %v806
      %v1476 = vunpack.c.h.b16 %v806
      %v1477 = vpack.c.b16 %v1099, %v1093
      %v1478 = vpack.c.b16 %v1100, %v1094
      %v1479 = vpack.c.b16 %v1101, %v1095
      %v1480 = vpack.c.b16 %v1102, %v1096
      %v1481 = vpack.c.b16 %v1103, %v1097
      %v1482 = vpack.c.b16 %v1104, %v1098
      %v1483 = vpack.c.b16 %v1111, %v1105
      %v1484 = vpack.c.b16 %v1112, %v1106
      %v1485 = vpack.c.b16 %v1113, %v1107
      %v1486 = vpack.c.b16 %v1114, %v1108
      %v1487 = vpack.c.b16 %v1115, %v1109
      %v1488 = vpack.c.b16 %v1116, %v1110
      %v1489 = vpack.c.b16 %v1123, %v1117
      %v1490 = vpack.c.b16 %v1124, %v1118
      %v1491 = vpack.c.b16 %v1125, %v1119
      %v1492 = vpack.c.b16 %v1126, %v1120
      %v1493 = vpack.c.b16 %v1127, %v1121
      %v1494 = vpack.c.b16 %v1128, %v1122
      %v1495 = vpack.c.b16 %v1135, %v1129
      %v1496 = vpack.c.b16 %v1136, %v1130
      %v1497 = vpack.c.b16 %v1137, %v1131
      %v1498 = vpack.c.b16 %v1138, %v1132
      %v1499 = vpack.c.b16 %v1139, %v1133
      %v1500 = vpack.c.b16 %v1140, %v1134
      %v1501 = vpack.c.b16 %v1147, %v1141
      %v1502 = vpack.c.b16 %v1148, %v1142
      %v1503 = vpack.c.b16 %v1149, %v1143
      %v1504 = vpack.c.b16 %v1150, %v1144
      %v1505 = vpack.c.b16 %v1151, %v1145
      %v1506 = vpack.c.b16 %v1152, %v1146
      %v1507 = vpack.c.b16 %v1159, %v1153
      %v1508 = vpack.c.b16 %v1160, %v1154
      %v1509 = vpack.c.b16 %v1161, %v1155
      %v1510 = vpack.c.b16 %v1162, %v1156
      %v1511 = vpack.c.b16 %v1163, %v1157
      %v1512 = vpack.c.b16 %v1164, %v1158
      %v1513 = vpack.c.b16 %v1171, %v1165
      %v1514 = vpack.c.b16 %v1172, %v1166
      %v1515 = vpack.c.b16 %v1173, %v1167
      %v1516 = vpack.c.b16 %v1174, %v1168
      %v1517 = vpack.c.b16 %v1175, %v1169
      %v1518 = vpack.c.b16 %v1176, %v1170
      %v1519 = vpack.c.b16 %v1183, %v1177
      %v1520 = vpack.c.b16 %v1184, %v1178
      %v1521 = vpack.c.b16 %v1185, %v1179
      %v1522 = vpack.c.b16 %v1186, %v1180
      %v1523 = vpack.c.b16 %v1187, %v1181
      %v1524 = vpack.c.b16 %v1188, %v1182
      %v1525 = vpack.c.b16 %v1195, %v1189
      %v1526 = vpack.c.b16 %v1196, %v1190
      %v1527 = vpack.c.b16 %v1197, %v1191
      %v1528 = vpack.c.b16 %v1198, %v1192
      %v1529 = vpack.c.b16 %v1199, %v1193
      %v1530 = vpack.c.b16 %v1200, %v1194
      %v1531 = vpack.c.b16 %v1207, %v1201
      %v1532 = vpack.c.b16 %v1208, %v1202
      %v1533 = vpack.c.b16 %v1209, %v1203
      %v1534 = vpack.c.b16 %v1210, %v1204
      %v1535 = vpack.c.b16 %v1211, %v1205
      %v1536 = vpack.c.b16 %v1212, %v1206
      %v1537 = vpack.c.b16 %v1219, %v1213
      %v1538 = vpack.c.b16 %v1220, %v1214
      %v1539 = vpack.c.b16 %v1221, %v1215
      %v1540 = vpack.c.b16 %v1222, %v1216
      %v1541 = vpack.c.b16 %v1223, %v1217
      %v1542 = vpack.c.b16 %v1224, %v1218
      %v1543 = vpack.c.b16 %v1231, %v1225
      %v1544 = vpack.c.b16 %v1232, %v1226
      %v1545 = vpack.c.b16 %v1233, %v1227
      %v1546 = vpack.c.b16 %v1234, %v1228
      %v1547 = vpack.c.b16 %v1235, %v1229
      %v1548 = vpack.c.b16 %v1236, %v1230
      %v1549 = vpack.c.b16 %v1243, %v1237
      %v1550 = vpack.c.b16 %v1244, %v1238
      %v1551 = vpack.c.b16 %v1245, %v1239
      %v1552 = vpack.c.b16 %v1246, %v1240
      %v1553 = vpack.c.b16 %v1247, %v1241
      %v1554 = vpack.c.b16 %v1248, %v1242
      %v1555 = vpack.c.b16 %v1255, %v1249
      %v1556 = vpack.c.b16 %v1256, %v1250
      %v1557 = vpack.c.b16 %v1257, %v1251
      %v1558 = vpack.c.b16 %v1258, %v1252
      %v1559 = vpack.c.b16 %v1259, %v1253
      %v1560 = vpack.c.b16 %v1260, %v1254
      %v1561 = vpack.c.b16 %v1267, %v1261
      %v1562 = vpack.c.b16 %v1268, %v1262
      %v1563 = vpack.c.b16 %v1269, %v1263
      %v1564 = vpack.c.b16 %v1270, %v1264
      %v1565 = vpack.c.b16 %v1271, %v1265
      %v1566 = vpack.c.b16 %v1272, %v1266
      %v1567 = vpack.c.b16 %v1279, %v1273
      %v1568 = vpack.c.b16 %v1280, %v1274
      %v1569 = vpack.c.b16 %v1281, %v1275
      %v1570 = vpack.c.b16 %v1282, %v1276
      %v1571 = vpack.c.b16 %v1283, %v1277
      %v1572 = vpack.c.b16 %v1284, %v1278
      %v1573 = vpack.c.b16 %v1291, %v1285
      %v1574 = vpack.c.b16 %v1292, %v1286
      %v1575 = vpack.c.b16 %v1293, %v1287
      %v1576 = vpack.c.b16 %v1294, %v1288
      %v1577 = vpack.c.b16 %v1295, %v1289
      %v1578 = vpack.c.b16 %v1296, %v1290
      %v1579 = vpack.c.b16 %v1303, %v1297
      %v1580 = vpack.c.b16 %v1304, %v1298
      %v1581 = vpack.c.b16 %v1305, %v1299
      %v1582 = vpack.c.b16 %v1306, %v1300
      %v1583 = vpack.c.b16 %v1307, %v1301
      %v1584 = vpack.c.b16 %v1308, %v1302
      %v1585 = vpack.c.b16 %v1315, %v1309
      %v1586 = vpack.c.b16 %v1316, %v1310
      %v1587 = vpack.c.b16 %v1317, %v1311
      %v1588 = vpack.c.b16 %v1318, %v1312
      %v1589 = vpack.c.b16 %v1319, %v1313
      %v1590 = vpack.c.b16 %v1320, %v1314
      %v1591 = vpack.c.b16 %v1327, %v1321
      %v1592 = vpack.c.b16 %v1328, %v1322
      %v1593 = vpack.c.b16 %v1329, %v1323
      %v1594 = vpack.c.b16 %v1330, %v1324
      %v1595 = vpack.c.b16 %v1331, %v1325
      %v1596 = vpack.c.b16 %v1332, %v1326
      %v1597 = vpack.c.b16 %v1339, %v1333
      %v1598 = vpack.c.b16 %v1340, %v1334
      %v1599 = vpack.c.b16 %v1341, %v1335
      %v1600 = vpack.c.b16 %v1342, %v1336
      %v1601 = vpack.c.b16 %v1343, %v1337
      %v1602 = vpack.c.b16 %v1344, %v1338
      %v1603 = vpack.c.b16 %v1351, %v1345
      %v1604 = vpack.c.b16 %v1352, %v1346
      %v1605 = vpack.c.b16 %v1353, %v1347
      %v1606 = vpack.c.b16 %v1354, %v1348
      %v1607 = vpack.c.b16 %v1355, %v1349
      %v1608 = vpack.c.b16 %v1356, %v1350
      %v1609 = vpack.c.b16 %v1363, %v1357
      %v1610 = vpack.c.b16 %v1364, %v1358
      %v1611 = vpack.c.b16 %v1365, %v1359
      %v1612 = vpack.c.b16 %v1366, %v1360
      %v1613 = vpack.c.b16 %v1367, %v1361
      %v1614 = vpack.c.b16 %v1368, %v1362
      %v1615 = vpack.c.b16 %v1375, %v1369
      %v1616 = vpack.c.b16 %v1376, %v1370
      %v1617 = vpack.c.b16 %v1377, %v1371
      %v1618 = vpack.c.b16 %v1378, %v1372
      %v1619 = vpack.c.b16 %v1379, %v1373
      %v1620 = vpack.c.b16 %v1380, %v1374
      %v1621 = vpack.c.b16 %v1387, %v1381
      %v1622 = vpack.c.b16 %v1388, %v1382
      %v1623 = vpack.c.b16 %v1389, %v1383
      %v1624 = vpack.c.b16 %v1390, %v1384
      %v1625 = vpack.c.b16 %v1391, %v1385
      %v1626 = vpack.c.b16 %v1392, %v1386
      %v1627 = vpack.c.b16 %v1399, %v1393
      %v1628 = vpack.c.b16 %v1400, %v1394
      %v1629 = vpack.c.b16 %v1401, %v1395
      %v1630 = vpack.c.b16 %v1402, %v1396
      %v1631 = vpack.c.b16 %v1403, %v1397
      %v1632 = vpack.c.b16 %v1404, %v1398
      %v1633 = vpack.c.b16 %v1411, %v1405
      %v1634 = vpack.c.b16 %v1412, %v1406
      %v1635 = vpack.c.b16 %v1413, %v1407
      %v1636 = vpack.c.b16 %v1414, %v1408
      %v1637 = vpack.c.b16 %v1415, %v1409
      %v1638 = vpack.c.b16 %v1416, %v1410
      %v1639 = vpack.c.b16 %v1423, %v1417
      %v1640 = vpack.c.b16 %v1424, %v1418
      %v1641 = vpack.c.b16 %v1425, %v1419
      %v1642 = vpack.c.b16 %v1426, %v1420
      %v1643 = vpack.c.b16 %v1427, %v1421
      %v1644 = vpack.c.b16 %v1428, %v1422
      %v1645 = vpack.c.b16 %v1435, %v1429
      %v1646 = vpack.c.b16 %v1436, %v1430
      %v1647 = vpack.c.b16 %v1437, %v1431
      %v1648 = vpack.c.b16 %v1438, %v1432
      %v1649 = vpack.c.b16 %v1439, %v1433
      %v1650 = vpack.c.b16 %v1440, %v1434
      %v1651 = vpack.c.b16 %v1447, %v1441
      %v1652 = vpack.c.b16 %v1448, %v1442
      %v1653 = vpack.c.b16 %v1449, %v1443
      %v1654 = vpack.c.b16 %v1450, %v1444
      %v1655 = vpack.c.b16 %v1451, %v1445
      %v1656 = vpack.c.b16 %v1452, %v1446
      %v1657 = vpack.c.b16 %v1459, %v1453
      %v1658 = vpack.c.b16 %v1460, %v1454
      %v1659 = vpack.c.b16 %v1461, %v1455
      %v1660 = vpack.c.b16 %v1462, %v1456
      %v1661 = vpack.c.b16 %v1463, %v1457
      %v1662 = vpack.c.b16 %v1464, %v1458
      %v1663 = vpack.c.b16 %v1471, %v1465
      %v1664 = vpack.c.b16 %v1472, %v1466
      %v1665 = vpack.c.b16 %v1473, %v1467
      %v1666 = vpack.c.b16 %v1474, %v1468
      %v1667 = vpack.c.b16 %v1475, %v1469
      %v1668 = vpack.c.b16 %v1476, %v1470
      %1861 = vmatprep.subr.bf16.mxu0 %v1478
      %1862 = vmatpush1.bf16.msra.mxu0 %v1477
      %1863 = vmatprep.subr.bf16.mxu0 %v1484
      %1864 = vmatpush1.bf16.msra.mxu0 %v1483
      %1865 = vmatprep.subr.bf16.mxu0 %v1490
      %1866 = vmatpush1.bf16.msra.mxu0 %v1489
      %1867 = vmatprep.subr.bf16.mxu0 %v1496
      %1868 = vmatpush1.bf16.msra.mxu0 %v1495
      %1869 = vmatprep.subr.bf16.mxu0 %v1502
      %1870 = vmatpush1.bf16.msra.mxu0 %v1501
      %1871 = vmatprep.subr.bf16.mxu0 %v1508
      %1872 = vmatpush1.bf16.msra.mxu0 %v1507
      %1873 = vmatprep.subr.bf16.mxu0 %v1514
      %1874 = vmatpush1.bf16.msra.mxu0 %v1513
      %1875 = vmatprep.subr.bf16.mxu0 %v1520
      %1876 = vmatpush1.bf16.msra.mxu0 %v1519
      %1877 = vmatprep.subr.bf16.mxu0 %v1526
      %1878 = vmatpush1.bf16.msra.mxu0 %v1525
      %1879 = vmatprep.subr.bf16.mxu0 %v1532
      %1880 = vmatpush1.bf16.msra.mxu0 %v1531
      %1881 = vmatprep.subr.bf16.mxu0 %v1538
      %1882 = vmatpush1.bf16.msra.mxu0 %v1537
      %1883 = vmatprep.subr.bf16.mxu0 %v1544
      %1884 = vmatpush1.bf16.msra.mxu0 %v1543
      %1885 = vmatprep.subr.bf16.mxu0 %v1550
      %1886 = vmatpush1.bf16.msra.mxu0 %v1549
      %1887 = vmatprep.subr.bf16.mxu0 %v1556
      %1888 = vmatpush1.bf16.msra.mxu0 %v1555
      %1889 = vmatprep.subr.bf16.mxu0 %v1562
      %1890 = vmatpush1.bf16.msra.mxu0 %v1561
      %1891 = vmatprep.subr.bf16.mxu0 %v1568
      %1892 = vmatpush1.bf16.msra.mxu0 %v1567
      %1893 = vmatprep.mubr.bf16.mxu0 %v862
      %1894 = vmatmul.mubr.bf16.gmra.mrb[0].mxu0 %v861
      %v1895 = vpop.f32.mrb[0].mxu0
      %v1896 = vadd.f32 0.0, %v1895
      %v1897 = vpop.f32.mrb[0].mxu0
      %v1898 = vadd.f32 0.0, %v1897
      %v1899 = vpop.f32.mrb[0].mxu0
      %v1900 = vadd.f32 0.0, %v1899
      %v1901 = vpop.f32.mrb[0].mxu0
      %v1902 = vadd.f32 0.0, %v1901
      %1903 = vmatprep.mubr.bf16.mxu0 %v866
      %1904 = vmatmul.mubr.bf16.gmra.mrb[0].mxu0 %v865
      %v1905 = vpop.f32.mrb[0].mxu0
      %v1906 = vadd.f32 0.0, %v1905
      %v1907 = vpop.f32.mrb[0].mxu0
      %v1908 = vadd.f32 0.0, %v1907
      %v1909 = vpop.f32.mrb[0].mxu0
      %v1910 = vadd.f32 0.0, %v1909
      %v1911 = vpop.f32.mrb[0].mxu0
      %v1912 = vadd.f32 0.0, %v1911
      %1913 = vmatprep.mubr.bf16.mxu0 %v870
      %1914 = vmatmul.mubr.bf16.gmra.mrb[0].mxu0 %v869
      %v1915 = vpop.f32.mrb[0].mxu0
      %v1916 = vadd.f32 0.0, %v1915
      %v1917 = vpop.f32.mrb[0].mxu0
      %v1918 = vadd.f32 0.0, %v1917
      %v1919 = vpop.f32.mrb[0].mxu0
      %v1920 = vadd.f32 0.0, %v1919
      %v1921 = vpop.f32.mrb[0].mxu0
      %v1922 = vadd.f32 0.0, %v1921
      %1923 = vmatprep.mubr.bf16.mxu0 %v874
      %1924 = vmatmul.mubr.bf16.gmra.mrb[0].mxu0 %v873
      %v1925 = vpop.f32.mrb[0].mxu0
      %v1926 = vadd.f32 0.0, %v1925
      %v1927 = vpop.f32.mrb[0].mxu0
      %v1928 = vadd.f32 0.0, %v1927
      %v1929 = vpop.f32.mrb[0].mxu0
      %v1930 = vadd.f32 0.0, %v1929
      %v1931 = vpop.f32.mrb[0].mxu0
      %v1932 = vadd.f32 0.0, %v1931
      %1933 = vmatprep.mubr.bf16.mxu0 %v878
      %1934 = vmatmul.mubr.bf16.gmra.mrb[0].mxu0 %v877
      %v1935 = vpop.f32.mrb[0].mxu0
      %v1936 = vadd.f32 0.0, %v1935
      %v1937 = vpop.f32.mrb[0].mxu0
      %v1938 = vadd.f32 0.0, %v1937
      %v1939 = vpop.f32.mrb[0].mxu0
      %v1940 = vpop.f32.mrb[0].mxu0
      %1941 = vdwg.mxu0
      %1942 = vmatprep.subr.bf16.mxu0 %v1574
      %1943 = vmatpush1.bf16.msra.mxu0 %v1573
      %1944 = vmatprep.subr.bf16.mxu0 %v1580
      %1945 = vmatpush1.bf16.msra.mxu0 %v1579
      %1946 = vmatprep.subr.bf16.mxu0 %v1586
      %1947 = vmatpush1.bf16.msra.mxu0 %v1585
      %1948 = vmatprep.subr.bf16.mxu0 %v1592
      %1949 = vmatpush1.bf16.msra.mxu0 %v1591
      %1950 = vmatprep.subr.bf16.mxu0 %v1598
      %1951 = vmatpush1.bf16.msra.mxu0 %v1597
      %1952 = vmatprep.subr.bf16.mxu0 %v1604
      %1953 = vmatpush1.bf16.msra.mxu0 %v1603
      %1954 = vmatprep.subr.bf16.mxu0 %v1610
      %1955 = vmatpush1.bf16.msra.mxu0 %v1609
      %1956 = vmatprep.subr.bf16.mxu0 %v1616
      %1957 = vmatpush1.bf16.msra.mxu0 %v1615
      %1958 = vmatprep.subr.bf16.mxu0 %v1622
      %1959 = vmatpush1.bf16.msra.mxu0 %v1621
      %1960 = vmatprep.subr.bf16.mxu0 %v1628
      %1961 = vmatpush1.bf16.msra.mxu0 %v1627
      %1962 = vmatprep.subr.bf16.mxu0 %v1634
      %1963 = vmatpush1.bf16.msra.mxu0 %v1633
      %1964 = vmatprep.subr.bf16.mxu0 %v1640
      %1965 = vmatpush1.bf16.msra.mxu0 %v1639
      %1966 = vmatprep.subr.bf16.mxu0 %v1646
      %1967 = vmatpush1.bf16.msra.mxu0 %v1645
      %1968 = vmatprep.subr.bf16.mxu0 %v1652
      %1969 = vmatpush1.bf16.msra.mxu0 %v1651
      %1970 = vmatprep.subr.bf16.mxu0 %v1658
      %1971 = vmatpush1.bf16.msra.mxu0 %v1657
      %1972 = vmatprep.subr.bf16.mxu0 %v1664
      %1973 = vmatpush1.bf16.msra.mxu0 %v1663
      %1974 = vmatprep.mubr.bf16.mxu0 %v864
      %1975 = vmatmul.mubr.bf16.gmra.mrb[0].mxu0 %v863
      %v1976 = vpop.f32.mrb[0].mxu0
      %v1977 = vadd.f32 %v1896, %v1976
      %v1978 = vpop.f32.mrb[0].mxu0
      %v1979 = vadd.f32 %v1898, %v1978
      %v1980 = vpop.f32.mrb[0].mxu0
      %v1981 = vadd.f32 %v1900, %v1980
      %v1982 = vpop.f32.mrb[0].mxu0
      %v1983 = vadd.f32 %v1902, %v1982
      %1984 = vmatprep.mubr.bf16.mxu0 %v868
      %1985 = vmatmul.mubr.bf16.gmra.mrb[0].mxu0 %v867
      %v1986 = vpop.f32.mrb[0].mxu0
      %v1987 = vadd.f32 %v1906, %v1986
      %v1988 = vpop.f32.mrb[0].mxu0
      %v1989 = vadd.f32 %v1908, %v1988
      %v1990 = vpop.f32.mrb[0].mxu0
      %v1991 = vadd.f32 %v1910, %v1990
      %v1992 = vpop.f32.mrb[0].mxu0
      %v1993 = vadd.f32 %v1912, %v1992
      %1994 = vmatprep.mubr.bf16.mxu0 %v872
      %1995 = vmatmul.mubr.bf16.gmra.mrb[0].mxu0 %v871
      %v1996 = vpop.f32.mrb[0].mxu0
      %v1997 = vadd.f32 %v1916, %v1996
      %v1998 = vpop.f32.mrb[0].mxu0
      %v1999 = vadd.f32 %v1918, %v1998
      %v2000 = vpop.f32.mrb[0].mxu0
      %v2001 = vadd.f32 %v1920, %v2000
      %v2002 = vpop.f32.mrb[0].mxu0
      %v2003 = vadd.f32 %v1922, %v2002
      %2004 = vmatprep.mubr.bf16.mxu0 %v876
      %2005 = vmatmul.mubr.bf16.gmra.mrb[0].mxu0 %v875
      %v2006 = vpop.f32.mrb[0].mxu0
      %v2007 = vadd.f32 %v1926, %v2006
      %v2008 = vpop.f32.mrb[0].mxu0
      %v2009 = vadd.f32 %v1928, %v2008
      %v2010 = vpop.f32.mrb[0].mxu0
      %v2011 = vadd.f32 %v1930, %v2010
      %v2012 = vpop.f32.mrb[0].mxu0
      %v2013 = vadd.f32 %v1932, %v2012
      %2014 = vmatprep.mubr.bf16.mxu0 %v880
      %2015 = vmatmul.mubr.bf16.gmra.mrb[0].mxu0 %v879
      %v2016 = vpop.f32.mrb[0].mxu0
      %v2017 = vadd.f32 %v1936, %v2016
      %v2018 = vpop.f32.mrb[0].mxu0
      %v2019 = vadd.f32 %v1938, %v2018
      %v2020 = vpop.f32.mrb[0].mxu0
      %v2021 = vpop.f32.mrb[0].mxu0
      %2022 = vdwg.mxu0
      %2023 = vmatprep.subr.bf16.mxu0 %v1480
      %2024 = vmatpush1.bf16.msra.mxu0 %v1479
      %2025 = vmatprep.subr.bf16.mxu0 %v1486
      %2026 = vmatpush1.bf16.msra.mxu0 %v1485
      %2027 = vmatprep.subr.bf16.mxu0 %v1492
      %2028 = vmatpush1.bf16.msra.mxu0 %v1491
      %2029 = vmatprep.subr.bf16.mxu0 %v1498
      %2030 = vmatpush1.bf16.msra.mxu0 %v1497
      %2031 = vmatprep.subr.bf16.mxu0 %v1504
      %2032 = vmatpush1.bf16.msra.mxu0 %v1503
      %2033 = vmatprep.subr.bf16.mxu0 %v1510
      %2034 = vmatpush1.bf16.msra.mxu0 %v1509
      %2035 = vmatprep.subr.bf16.mxu0 %v1516
      %2036 = vmatpush1.bf16.msra.mxu0 %v1515
      %2037 = vmatprep.subr.bf16.mxu0 %v1522
      %2038 = vmatpush1.bf16.msra.mxu0 %v1521
      %2039 = vmatprep.subr.bf16.mxu0 %v1528
      %2040 = vmatpush1.bf16.msra.mxu0 %v1527
      %2041 = vmatprep.subr.bf16.mxu0 %v1534
      %2042 = vmatpush1.bf16.msra.mxu0 %v1533
      %2043 = vmatprep.subr.bf16.mxu0 %v1540
      %2044 = vmatpush1.bf16.msra.mxu0 %v1539
      %2045 = vmatprep.subr.bf16.mxu0 %v1546
      %2046 = vmatpush1.bf16.msra.mxu0 %v1545
      %2047 = vmatprep.subr.bf16.mxu0 %v1552
      %2048 = vmatpush1.bf16.msra.mxu0 %v1551
      %2049 = vmatprep.subr.bf16.mxu0 %v1558
      %2050 = vmatpush1.bf16.msra.mxu0 %v1557
      %2051 = vmatprep.subr.bf16.mxu0 %v1564
      %2052 = vmatpush1.bf16.msra.mxu0 %v1563
      %2053 = vmatprep.subr.bf16.mxu0 %v1570
      %2054 = vmatpush1.bf16.msra.mxu0 %v1569
      %2055 = vmatprep.mubr.bf16.mxu0 %v862
      %2056 = vmatmul.mubr.bf16.gmra.mrb[0].mxu0 %v861
      %v2057 = vpop.f32.mrb[0].mxu0
      %v2058 = vadd.f32 0.0, %v2057
      %v2059 = vpop.f32.mrb[0].mxu0
      %v2060 = vadd.f32 0.0, %v2059
      %v2061 = vpop.f32.mrb[0].mxu0
      %v2062 = vadd.f32 0.0, %v2061
      %v2063 = vpop.f32.mrb[0].mxu0
      %v2064 = vadd.f32 0.0, %v2063
      %2065 = vmatprep.mubr.bf16.mxu0 %v866
      %2066 = vmatmul.mubr.bf16.gmra.mrb[0].mxu0 %v865
      %v2067 = vpop.f32.mrb[0].mxu0
      %v2068 = vadd.f32 0.0, %v2067
      %v2069 = vpop.f32.mrb[0].mxu0
      %v2070 = vadd.f32 0.0, %v2069
      %v2071 = vpop.f32.mrb[0].mxu0
      %v2072 = vadd.f32 0.0, %v2071
      %v2073 = vpop.f32.mrb[0].mxu0
      %v2074 = vadd.f32 0.0, %v2073
      %2075 = vmatprep.mubr.bf16.mxu0 %v870
      %2076 = vmatmul.mubr.bf16.gmra.mrb[0].mxu0 %v869
      %v2077 = vpop.f32.mrb[0].mxu0
      %v2078 = vadd.f32 0.0, %v2077
      %v2079 = vpop.f32.mrb[0].mxu0
      %v2080 = vadd.f32 0.0, %v2079
      %v2081 = vpop.f32.mrb[0].mxu0
      %v2082 = vadd.f32 0.0, %v2081
      %v2083 = vpop.f32.mrb[0].mxu0
      %v2084 = vadd.f32 0.0, %v2083
      %2085 = vmatprep.mubr.bf16.mxu0 %v874
      %2086 = vmatmul.mubr.bf16.gmra.mrb[0].mxu0 %v873
      %v2087 = vpop.f32.mrb[0].mxu0
      %v2088 = vadd.f32 0.0, %v2087
      %v2089 = vpop.f32.mrb[0].mxu0
      %v2090 = vadd.f32 0.0, %v2089
      %v2091 = vpop.f32.mrb[0].mxu0
      %v2092 = vadd.f32 0.0, %v2091
      %v2093 = vpop.f32.mrb[0].mxu0
      %v2094 = vadd.f32 0.0, %v2093
      %2095 = vmatprep.mubr.bf16.mxu0 %v878
      %2096 = vmatmul.mubr.bf16.gmra.mrb[0].mxu0 %v877
      %v2097 = vpop.f32.mrb[0].mxu0
      %v2098 = vadd.f32 0.0, %v2097
      %v2099 = vpop.f32.mrb[0].mxu0
      %v2100 = vadd.f32 0.0, %v2099
      %v2101 = vpop.f32.mrb[0].mxu0
      %v2102 = vpop.f32.mrb[0].mxu0
      %2103 = vdwg.mxu0
      %2104 = vmatprep.subr.bf16.mxu0 %v1576
      %2105 = vmatpush1.bf16.msra.mxu0 %v1575
      %2106 = vmatprep.subr.bf16.mxu0 %v1582
      %2107 = vmatpush1.bf16.msra.mxu0 %v1581
      %2108 = vmatprep.subr.bf16.mxu0 %v1588
      %2109 = vmatpush1.bf16.msra.mxu0 %v1587
      %2110 = vmatprep.subr.bf16.mxu0 %v1594
      %2111 = vmatpush1.bf16.msra.mxu0 %v1593
      %2112 = vmatprep.subr.bf16.mxu0 %v1600
      %2113 = vmatpush1.bf16.msra.mxu0 %v1599
      %2114 = vmatprep.subr.bf16.mxu0 %v1606
      %2115 = vmatpush1.bf16.msra.mxu0 %v1605
      %2116 = vmatprep.subr.bf16.mxu0 %v1612
      %2117 = vmatpush1.bf16.msra.mxu0 %v1611
      %2118 = vmatprep.subr.bf16.mxu0 %v1618
      %2119 = vmatpush1.bf16.msra.mxu0 %v1617
      %2120 = vmatprep.subr.bf16.mxu0 %v1624
      %2121 = vmatpush1.bf16.msra.mxu0 %v1623
      %2122 = vmatprep.subr.bf16.mxu0 %v1630
      %2123 = vmatpush1.bf16.msra.mxu0 %v1629
      %2124 = vmatprep.subr.bf16.mxu0 %v1636
      %2125 = vmatpush1.bf16.msra.mxu0 %v1635
      %2126 = vmatprep.subr.bf16.mxu0 %v1642
      %2127 = vmatpush1.bf16.msra.mxu0 %v1641
      %2128 = vmatprep.subr.bf16.mxu0 %v1648
      %2129 = vmatpush1.bf16.msra.mxu0 %v1647
      %2130 = vmatprep.subr.bf16.mxu0 %v1654
      %2131 = vmatpush1.bf16.msra.mxu0 %v1653
      %2132 = vmatprep.subr.bf16.mxu0 %v1660
      %2133 = vmatpush1.bf16.msra.mxu0 %v1659
      %2134 = vmatprep.subr.bf16.mxu0 %v1666
      %2135 = vmatpush1.bf16.msra.mxu0 %v1665
      %2136 = vmatprep.mubr.bf16.mxu0 %v864
      %2137 = vmatmul.mubr.bf16.gmra.mrb[0].mxu0 %v863
      %v2138 = vpop.f32.mrb[0].mxu0
      %v2139 = vadd.f32 %v2058, %v2138
      %v2140 = vpop.f32.mrb[0].mxu0
      %v2141 = vadd.f32 %v2060, %v2140
      %v2142 = vpop.f32.mrb[0].mxu0
      %v2143 = vadd.f32 %v2062, %v2142
      %v2144 = vpop.f32.mrb[0].mxu0
      %v2145 = vadd.f32 %v2064, %v2144
      %2146 = vmatprep.mubr.bf16.mxu0 %v868
      %2147 = vmatmul.mubr.bf16.gmra.mrb[0].mxu0 %v867
      %v2148 = vpop.f32.mrb[0].mxu0
      %v2149 = vadd.f32 %v2068, %v2148
      %v2150 = vpop.f32.mrb[0].mxu0
      %v2151 = vadd.f32 %v2070, %v2150
      %v2152 = vpop.f32.mrb[0].mxu0
      %v2153 = vadd.f32 %v2072, %v2152
      %v2154 = vpop.f32.mrb[0].mxu0
      %v2155 = vadd.f32 %v2074, %v2154
      %2156 = vmatprep.mubr.bf16.mxu0 %v872
      %2157 = vmatmul.mubr.bf16.gmra.mrb[0].mxu0 %v871
      %v2158 = vpop.f32.mrb[0].mxu0
      %v2159 = vadd.f32 %v2078, %v2158
      %v2160 = vpop.f32.mrb[0].mxu0
      %v2161 = vadd.f32 %v2080, %v2160
      %v2162 = vpop.f32.mrb[0].mxu0
      %v2163 = vadd.f32 %v2082, %v2162
      %v2164 = vpop.f32.mrb[0].mxu0
      %v2165 = vadd.f32 %v2084, %v2164
      %2166 = vmatprep.mubr.bf16.mxu0 %v876
      %2167 = vmatmul.mubr.bf16.gmra.mrb[0].mxu0 %v875
      %v2168 = vpop.f32.mrb[0].mxu0
      %v2169 = vadd.f32 %v2088, %v2168
      %v2170 = vpop.f32.mrb[0].mxu0
      %v2171 = vadd.f32 %v2090, %v2170
      %v2172 = vpop.f32.mrb[0].mxu0
      %v2173 = vadd.f32 %v2092, %v2172
      %v2174 = vpop.f32.mrb[0].mxu0
      %v2175 = vadd.f32 %v2094, %v2174
      %2176 = vmatprep.mubr.bf16.mxu0 %v880
      %2177 = vmatmul.mubr.bf16.gmra.mrb[0].mxu0 %v879
      %v2178 = vpop.f32.mrb[0].mxu0
      %v2179 = vadd.f32 %v2098, %v2178
      %v2180 = vpop.f32.mrb[0].mxu0
      %v2181 = vadd.f32 %v2100, %v2180
      %v2182 = vpop.f32.mrb[0].mxu0
      %v2183 = vpop.f32.mrb[0].mxu0
      %2184 = vdwg.mxu0
      %2185 = vmatprep.subr.bf16.mxu0 %v1482
      %2186 = vmatpush1.bf16.msra.mxu0 %v1481
      %2187 = vmatprep.subr.bf16.mxu0 %v1488
      %2188 = vmatpush1.bf16.msra.mxu0 %v1487
      %2189 = vmatprep.subr.bf16.mxu0 %v1494
      %2190 = vmatpush1.bf16.msra.mxu0 %v1493
      %2191 = vmatprep.subr.bf16.mxu0 %v1500
      %2192 = vmatpush1.bf16.msra.mxu0 %v1499
      %2193 = vmatprep.subr.bf16.mxu0 %v1506
      %2194 = vmatpush1.bf16.msra.mxu0 %v1505
      %2195 = vmatprep.subr.bf16.mxu0 %v1512
      %2196 = vmatpush1.bf16.msra.mxu0 %v1511
      %2197 = vmatprep.subr.bf16.mxu0 %v1518
      %2198 = vmatpush1.bf16.msra.mxu0 %v1517
      %2199 = vmatprep.subr.bf16.mxu0 %v1524
      %2200 = vmatpush1.bf16.msra.mxu0 %v1523
      %2201 = vmatprep.subr.bf16.mxu0 %v1530
      %2202 = vmatpush1.bf16.msra.mxu0 %v1529
      %2203 = vmatprep.subr.bf16.mxu0 %v1536
      %2204 = vmatpush1.bf16.msra.mxu0 %v1535
      %2205 = vmatprep.subr.bf16.mxu0 %v1542
      %2206 = vmatpush1.bf16.msra.mxu0 %v1541
      %2207 = vmatprep.subr.bf16.mxu0 %v1548
      %2208 = vmatpush1.bf16.msra.mxu0 %v1547
      %2209 = vmatprep.subr.bf16.mxu0 %v1554
      %2210 = vmatpush1.bf16.msra.mxu0 %v1553
      %2211 = vmatprep.subr.bf16.mxu0 %v1560
      %2212 = vmatpush1.bf16.msra.mxu0 %v1559
      %2213 = vmatprep.subr.bf16.mxu0 %v1566
      %2214 = vmatpush1.bf16.msra.mxu0 %v1565
      %2215 = vmatprep.subr.bf16.mxu0 %v1572
      %2216 = vmatpush1.bf16.msra.mxu0 %v1571
      %2217 = vmatprep.mubr.bf16.mxu0 %v862
      %2218 = vmatmul.mubr.bf16.gmra.mrb[0].mxu0 %v861
      %v2219 = vpop.f32.mrb[0].mxu0
      %v2220 = vadd.f32 0.0, %v2219
      %v2221 = vpop.f32.mrb[0].mxu0
      %v2222 = vadd.f32 0.0, %v2221
      %v2223 = vpop.f32.mrb[0].mxu0
      %v2224 = vadd.f32 0.0, %v2223
      %v2225 = vpop.f32.mrb[0].mxu0
      %v2226 = vadd.f32 0.0, %v2225
      %2227 = vmatprep.mubr.bf16.mxu0 %v866
      %2228 = vmatmul.mubr.bf16.gmra.mrb[0].mxu0 %v865
      %v2229 = vpop.f32.mrb[0].mxu0
      %v2230 = vadd.f32 0.0, %v2229
      %v2231 = vpop.f32.mrb[0].mxu0
      %v2232 = vadd.f32 0.0, %v2231
      %v2233 = vpop.f32.mrb[0].mxu0
      %v2234 = vadd.f32 0.0, %v2233
      %v2235 = vpop.f32.mrb[0].mxu0
      %v2236 = vadd.f32 0.0, %v2235
      %2237 = vmatprep.mubr.bf16.mxu0 %v870
      %2238 = vmatmul.mubr.bf16.gmra.mrb[0].mxu0 %v869
      %v2239 = vpop.f32.mrb[0].mxu0
      %v2240 = vadd.f32 0.0, %v2239
      %v2241 = vpop.f32.mrb[0].mxu0
      %v2242 = vadd.f32 0.0, %v2241
      %v2243 = vpop.f32.mrb[0].mxu0
      %v2244 = vadd.f32 0.0, %v2243
      %v2245 = vpop.f32.mrb[0].mxu0
      %v2246 = vadd.f32 0.0, %v2245
      %2247 = vmatprep.mubr.bf16.mxu0 %v874
      %2248 = vmatmul.mubr.bf16.gmra.mrb[0].mxu0 %v873
      %v2249 = vpop.f32.mrb[0].mxu0
      %v2250 = vadd.f32 0.0, %v2249
      %v2251 = vpop.f32.mrb[0].mxu0
      %v2252 = vadd.f32 0.0, %v2251
      %v2253 = vpop.f32.mrb[0].mxu0
      %v2254 = vadd.f32 0.0, %v2253
      %v2255 = vpop.f32.mrb[0].mxu0
      %v2256 = vadd.f32 0.0, %v2255
      %2257 = vmatprep.mubr.bf16.mxu0 %v878
      %2258 = vmatmul.mubr.bf16.gmra.mrb[0].mxu0 %v877
      %v2259 = vpop.f32.mrb[0].mxu0
      %v2260 = vadd.f32 0.0, %v2259
      %v2261 = vpop.f32.mrb[0].mxu0
      %v2262 = vadd.f32 0.0, %v2261
      %v2263 = vpop.f32.mrb[0].mxu0
      %v2264 = vpop.f32.mrb[0].mxu0
      %2265 = vdwg.mxu0
      %2266 = vmatprep.subr.bf16.mxu0 %v1578
      %2267 = vmatpush1.bf16.msra.mxu0 %v1577
      %2268 = vmatprep.subr.bf16.mxu0 %v1584
      %2269 = vmatpush1.bf16.msra.mxu0 %v1583
      %2270 = vmatprep.subr.bf16.mxu0 %v1590
      %2271 = vmatpush1.bf16.msra.mxu0 %v1589
      %2272 = vmatprep.subr.bf16.mxu0 %v1596
      %2273 = vmatpush1.bf16.msra.mxu0 %v1595
      %2274 = vmatprep.subr.bf16.mxu0 %v1602
      %2275 = vmatpush1.bf16.msra.mxu0 %v1601
      %2276 = vmatprep.subr.bf16.mxu0 %v1608
      %2277 = vmatpush1.bf16.msra.mxu0 %v1607
      %2278 = vmatprep.subr.bf16.mxu0 %v1614
      %2279 = vmatpush1.bf16.msra.mxu0 %v1613
      %2280 = vmatprep.subr.bf16.mxu0 %v1620
      %2281 = vmatpush1.bf16.msra.mxu0 %v1619
      %2282 = vmatprep.subr.bf16.mxu0 %v1626
      %2283 = vmatpush1.bf16.msra.mxu0 %v1625
      %2284 = vmatprep.subr.bf16.mxu0 %v1632
      %2285 = vmatpush1.bf16.msra.mxu0 %v1631
      %2286 = vmatprep.subr.bf16.mxu0 %v1638
      %2287 = vmatpush1.bf16.msra.mxu0 %v1637
      %2288 = vmatprep.subr.bf16.mxu0 %v1644
      %2289 = vmatpush1.bf16.msra.mxu0 %v1643
      %2290 = vmatprep.subr.bf16.mxu0 %v1650
      %2291 = vmatpush1.bf16.msra.mxu0 %v1649
      %2292 = vmatprep.subr.bf16.mxu0 %v1656
      %2293 = vmatpush1.bf16.msra.mxu0 %v1655
      %2294 = vmatprep.subr.bf16.mxu0 %v1662
      %2295 = vmatpush1.bf16.msra.mxu0 %v1661
      %2296 = vmatprep.subr.bf16.mxu0 %v1668
      %2297 = vmatpush1.bf16.msra.mxu0 %v1667
      %2298 = vmatprep.mubr.bf16.mxu0 %v864
      %2299 = vmatmul.mubr.bf16.gmra.mrb[0].mxu0 %v863
      %v2300 = vpop.f32.mrb[0].mxu0
      %v2301 = vadd.f32 %v2220, %v2300
      %v2302 = vpop.f32.mrb[0].mxu0
      %v2303 = vadd.f32 %v2222, %v2302
      %v2304 = vpop.f32.mrb[0].mxu0
      %v2305 = vadd.f32 %v2224, %v2304
      %v2306 = vpop.f32.mrb[0].mxu0
      %v2307 = vadd.f32 %v2226, %v2306
      %2308 = vmatprep.mubr.bf16.mxu0 %v868
      %2309 = vmatmul.mubr.bf16.gmra.mrb[0].mxu0 %v867
      %v2310 = vpop.f32.mrb[0].mxu0
      %v2311 = vadd.f32 %v2230, %v2310
      %v2312 = vpop.f32.mrb[0].mxu0
      %v2313 = vadd.f32 %v2232, %v2312
      %v2314 = vpop.f32.mrb[0].mxu0
      %v2315 = vadd.f32 %v2234, %v2314
      %v2316 = vpop.f32.mrb[0].mxu0
      %v2317 = vadd.f32 %v2236, %v2316
      %2318 = vmatprep.mubr.bf16.mxu0 %v872
      %2319 = vmatmul.mubr.bf16.gmra.mrb[0].mxu0 %v871
      %v2320 = vpop.f32.mrb[0].mxu0
      %v2321 = vadd.f32 %v2240, %v2320
      %v2322 = vpop.f32.mrb[0].mxu0
      %v2323 = vadd.f32 %v2242, %v2322
      %v2324 = vpop.f32.mrb[0].mxu0
      %v2325 = vadd.f32 %v2244, %v2324
      %v2326 = vpop.f32.mrb[0].mxu0
      %v2327 = vadd.f32 %v2246, %v2326
      %2328 = vmatprep.mubr.bf16.mxu0 %v876
      %2329 = vmatmul.mubr.bf16.gmra.mrb[0].mxu0 %v875
      %v2330 = vpop.f32.mrb[0].mxu0
      %v2331 = vadd.f32 %v2250, %v2330
      %v2332 = vpop.f32.mrb[0].mxu0
      %v2333 = vadd.f32 %v2252, %v2332
      %v2334 = vpop.f32.mrb[0].mxu0
      %v2335 = vadd.f32 %v2254, %v2334
      %v2336 = vpop.f32.mrb[0].mxu0
      %v2337 = vadd.f32 %v2256, %v2336
      %2338 = vmatprep.mubr.bf16.mxu0 %v880
      %2339 = vmatmul.mubr.bf16.gmra.mrb[0].mxu0 %v879
      %v2340 = vpop.f32.mrb[0].mxu0
      %v2341 = vadd.f32 %v2260, %v2340
      %v2342 = vpop.f32.mrb[0].mxu0
      %v2343 = vadd.f32 %v2262, %v2342
      %v2344 = vpop.f32.mrb[0].mxu0
      %v2345 = vpop.f32.mrb[0].mxu0
      %2346 = vdwg.mxu0
      %v2347 = vmul.f32 %v1977, %v1977
      %v2348 = vmul.f32 %v1979, %v1979
      %v2349 = vmul.f32 %v2139, %v2139
      %v2350 = vmul.f32 %v1981, %v1981
      %v2351 = vmul.f32 %v1983, %v1983
      %v2352 = vmul.f32 %v2143, %v2143
      %v2353 = vmul.f32 %v1987, %v1987
      %v2354 = vmul.f32 %v1989, %v1989
      %v2355 = vmul.f32 %v2149, %v2149
      %v2356 = vmul.f32 %v1991, %v1991
      %v2357 = vmul.f32 %v1993, %v1993
      %v2358 = vmul.f32 %v2153, %v2153
      %v2359 = vmul.f32 %v1997, %v1997
      %v2360 = vmul.f32 %v1999, %v1999
      %v2361 = vmul.f32 %v2159, %v2159
      %v2362 = vmul.f32 %v2001, %v2001
      %v2363 = vmul.f32 %v2003, %v2003
      %v2364 = vmul.f32 %v2163, %v2163
      %v2365 = vmul.f32 %v2007, %v2007
      %v2366 = vmul.f32 %v2009, %v2009
      %v2367 = vmul.f32 %v2169, %v2169
      %v2368 = vmul.f32 %v2011, %v2011
      %v2369 = vmul.f32 %v2013, %v2013
      %v2370 = vmul.f32 %v2173, %v2173
      %v2371 = vmul.f32 %v2017, %v2017
      %v2372 = vmul.f32 %v2019, %v2019
      %v2373 = vmul.f32 %v2179, %v2179
      %v2374 = vmul.f32 %v2141, %v2141
      %v2375 = vmul.f32 %v2301, %v2301
      %v2376 = vmul.f32 %v2303, %v2303
      %v2377 = vmul.f32 %v2145, %v2145
      %v2378 = vmul.f32 %v2305, %v2305
      %v2379 = vmul.f32 %v2307, %v2307
      %v2380 = vmul.f32 %v2151, %v2151
      %v2381 = vmul.f32 %v2311, %v2311
      %v2382 = vmul.f32 %v2313, %v2313
      %v2383 = vmul.f32 %v2155, %v2155
      %v2384 = vmul.f32 %v2315, %v2315
      %v2385 = vmul.f32 %v2317, %v2317
      %v2386 = vmul.f32 %v2161, %v2161
      %v2387 = vmul.f32 %v2321, %v2321
      %v2388 = vmul.f32 %v2323, %v2323
      %v2389 = vmul.f32 %v2165, %v2165
      %v2390 = vmul.f32 %v2325, %v2325
      %v2391 = vmul.f32 %v2327, %v2327
      %v2392 = vmul.f32 %v2171, %v2171
      %v2393 = vmul.f32 %v2331, %v2331
      %v2394 = vmul.f32 %v2333, %v2333
      %v2395 = vmul.f32 %v2175, %v2175
      %v2396 = vmul.f32 %v2335, %v2335
      %v2397 = vmul.f32 %v2337, %v2337
      %v2398 = vmul.f32 %v2181, %v2181
      %v2399 = vmul.f32 %v2341, %v2341
      %v2400 = vmul.f32 %v2343, %v2343
      %v2401 = vadd.f32 %v2347, %v2374
      %v2402 = vadd.f32 %v2348, %v2375
      %v2403 = vadd.f32 %v2349, %v2376
      %v2404 = vadd.f32 %v2350, %v2377
      %v2405 = vadd.f32 %v2351, %v2378
      %v2406 = vadd.f32 %v2352, %v2379
      %v2407 = vadd.f32 %v2353, %v2380
      %v2408 = vadd.f32 %v2354, %v2381
      %v2409 = vadd.f32 %v2355, %v2382
      %v2410 = vadd.f32 %v2356, %v2383
      %v2411 = vadd.f32 %v2357, %v2384
      %v2412 = vadd.f32 %v2358, %v2385
      %v2413 = vadd.f32 %v2359, %v2386
      %v2414 = vadd.f32 %v2360, %v2387
      %v2415 = vadd.f32 %v2361, %v2388
      %v2416 = vadd.f32 %v2362, %v2389
      %v2417 = vadd.f32 %v2363, %v2390
      %v2418 = vadd.f32 %v2364, %v2391
      %v2419 = vadd.f32 %v2365, %v2392
      %v2420 = vadd.f32 %v2366, %v2393
      %v2421 = vadd.f32 %v2367, %v2394
      %v2422 = vadd.f32 %v2368, %v2395
      %v2423 = vadd.f32 %v2369, %v2396
      %v2424 = vadd.f32 %v2370, %v2397
      %v2425 = vadd.f32 %v2371, %v2398
      %v2426 = vadd.f32 %v2372, %v2399
      %v2427 = vadd.f32 %v2373, %v2400
      %v2428 = vpack.c.bf16 %v2404, %v2401
      %v2429 = vpack.c.bf16 %v2405, %v2402
      %v2430 = vpack.c.bf16 %v2406, %v2403
      %v2431 = vpack.c.bf16 %v2410, %v2407
      %v2432 = vpack.c.bf16 %v2411, %v2408
      %v2433 = vpack.c.bf16 %v2412, %v2409
      %v2434 = vpack.c.bf16 %v2416, %v2413
      %v2435 = vpack.c.bf16 %v2417, %v2414
      %v2436 = vpack.c.bf16 %v2418, %v2415
      %v2437 = vpack.c.bf16 %v2422, %v2419
      %v2438 = vpack.c.bf16 %v2423, %v2420
      %v2439 = vpack.c.bf16 %v2424, %v2421
      %v2440 = vpack.c.bf16 %v2425, %v2425
      %v2441 = vpack.c.bf16 %v2426, %v2426
      %v2442 = vpack.c.bf16 %v2427, %v2427
      %v2443 = vld [vmem:[%s2] sm:$0xf]
      %v2444 = vld [vmem:[%s2 + $0x4] sm:$0xf]
      %v2445 = vld [vmem:[%s2 + $0x8] sm:$0xf]
      %v2446 = vld [vmem:[%s2 + $0xc] sm:$0xf]
      %v2447 = vld [vmem:[%s2 + $0x10] sm:$0xf]
      %v2448 = vld [vmem:[%s2 + $0x14] sm:$0xf]
      %v2449 = vld [vmem:[%s2 + $0x18] sm:$0xf]
      %v2450 = vld [vmem:[%s2 + $0x1c] sm:$0xf]
      %v2451 = vld [vmem:[%s2 + $0x20] sm:$0xf]
      %v2452 = vld [vmem:[%s2 + $0x24] sm:$0xf]
      %v2453 = vld [vmem:[%s2 + $0x28] sm:$0xf]
      %v2454 = vld [vmem:[%s2 + $0x2c] sm:$0xf]
      %v2455 = vld [vmem:[%s2 + $0x30] sm:$0xf]
      %v2456 = vld [vmem:[%s2 + $0x34] sm:$0xf]
      %v2457 = vld [vmem:[%s2 + $0x38] sm:$0xf]
      %v2458 = vld [vmem:[%s2 + $0x3c] sm:$0xf]
      %v2459 = vld [vmem:[%s2 + $0x40] sm:$0xf]
      %v2460 = vld [vmem:[%s2 + $0x44] sm:$0xf]
      %v2461 = vld [vmem:[%s2 + $0x48] sm:$0xf]
      %v2462 = vld [vmem:[%s2 + $0x4c] sm:$0xf]
      %v2463 = vld [vmem:[%s2 + $0x50] sm:$0xf]
      %v2464 = vld [vmem:[%s2 + $0x54] sm:$0xf]
      %v2465 = vld [vmem:[%s2 + $0x58] sm:$0xf]
      %v2466 = vld [vmem:[%s2 + $0x5c] sm:$0xf]
      %v2467 = vld [vmem:[%s2 + $0x60] sm:$0xf]
      %v2468 = vld [vmem:[%s2 + $0x64] sm:$0xf]
      %v2469 = vld [vmem:[%s2 + $0x68] sm:$0xf]
      %v2470 = vld [vmem:[%s2 + $0x6c] sm:$0xf]
      %v2471 = vld [vmem:[%s2 + $0x70] sm:$0xf]
      %v2472 = vld [vmem:[%s2 + $0x74] sm:$0xf]
      %v2473 = vld [vmem:[%s2 + $0x78] sm:$0xf]
      %v2474 = vld [vmem:[%s2 + $0x7c] sm:$0xf]
      %v2475 = vld [vmem:[%s2 + $0x80] sm:$0xf]
      %v2476 = vld [vmem:[%s2 + $0x84] sm:$0xf]
      %v2477 = vld [vmem:[%s2 + $0x88] sm:$0xf]
      %v2478 = vld [vmem:[%s2 + $0x8c] sm:$0xf]
      %v2479 = vld [vmem:[%s2 + $0x90] sm:$0xf]
      %v2480 = vld [vmem:[%s2 + $0x94] sm:$0xf]
      %v2481 = vld [vmem:[%s2 + $0x98] sm:$0xf]
      %v2482 = vld [vmem:[%s2 + $0x9c] sm:$0xf]
      %v2483 = vld [vmem:[%s2 + $0xa0] sm:$0xf]
      %v2484 = vld [vmem:[%s2 + $0xa4] sm:$0xf]
      %v2485 = vld [vmem:[%s2 + $0xa8] sm:$0xf]
      %v2486 = vld [vmem:[%s2 + $0xac] sm:$0xf]
      %v2487 = vld [vmem:[%s2 + $0xb0] sm:$0xf]
      %v2488 = vld [vmem:[%s2 + $0xb4] sm:$0xf]
      %v2489 = vld [vmem:[%s2 + $0xb8] sm:$0xf]
      %v2490 = vld [vmem:[%s2 + $0xbc] sm:$0xf]
      %v2539 = vunpack.c.l.b16 %v2443
      %v2540 = vunpack.c.l.b16 %v2444
      %v2541 = vunpack.c.l.b16 %v2445
      %v2542 = vunpack.c.l.b16 %v2446
      %v2543 = vunpack.c.l.b16 %v2447
      %v2544 = vunpack.c.l.b16 %v2448
      %v2545 = vunpack.c.l.b16 %v2449
      %v2546 = vunpack.c.l.b16 %v2450
      %v2547 = vunpack.c.l.b16 %v2451
      %v2548 = vunpack.c.l.b16 %v2452
      %v2549 = vunpack.c.l.b16 %v2453
      %v2550 = vunpack.c.l.b16 %v2454
      %v2551 = vunpack.c.l.b16 %v2455
      %v2552 = vunpack.c.l.b16 %v2456
      %v2553 = vunpack.c.l.b16 %v2457
      %v2554 = vunpack.c.l.b16 %v2458
      %v2555 = vunpack.c.l.b16 %v2459
      %v2556 = vunpack.c.l.b16 %v2460
      %v2557 = vunpack.c.l.b16 %v2461
      %v2558 = vunpack.c.l.b16 %v2462
      %v2559 = vunpack.c.l.b16 %v2463
      %v2560 = vunpack.c.l.b16 %v2464
      %v2561 = vunpack.c.l.b16 %v2465
      %v2562 = vunpack.c.l.b16 %v2466
      %v2563 = vunpack.c.l.b16 %v2467
      %v2564 = vunpack.c.l.b16 %v2468
      %v2565 = vunpack.c.l.b16 %v2469
      %v2566 = vunpack.c.l.b16 %v2470
      %v2567 = vunpack.c.l.b16 %v2471
      %v2568 = vunpack.c.l.b16 %v2472
      %v2569 = vunpack.c.l.b16 %v2473
      %v2570 = vunpack.c.l.b16 %v2474
      %v2571 = vunpack.c.l.b16 %v2475
      %v2572 = vunpack.c.l.b16 %v2476
      %v2573 = vunpack.c.l.b16 %v2477
      %v2574 = vunpack.c.l.b16 %v2478
      %v2575 = vunpack.c.l.b16 %v2479
      %v2576 = vunpack.c.l.b16 %v2480
      %v2577 = vunpack.c.l.b16 %v2481
      %v2578 = vunpack.c.l.b16 %v2482
      %v2579 = vunpack.c.l.b16 %v2483
      %v2580 = vunpack.c.l.b16 %v2484
      %v2581 = vunpack.c.l.b16 %v2485
      %v2582 = vunpack.c.l.b16 %v2486
      %v2583 = vunpack.c.l.b16 %v2487
      %v2584 = vunpack.c.l.b16 %v2488
      %v2585 = vunpack.c.l.b16 %v2489
      %v2586 = vunpack.c.l.b16 %v2490
      %v2587 = vpack.c.b16 %v2540, %v2539
      %v2588 = vpack.c.b16 %v2542, %v2541
      %v2589 = vpack.c.b16 %v2544, %v2543
      %v2590 = vpack.c.b16 %v2546, %v2545
      %v2591 = vpack.c.b16 %v2548, %v2547
      %v2592 = vpack.c.b16 %v2550, %v2549
      %v2593 = vpack.c.b16 %v2552, %v2551
      %v2594 = vpack.c.b16 %v2554, %v2553
      %v2595 = vpack.c.b16 %v2556, %v2555
      %v2596 = vpack.c.b16 %v2558, %v2557
      %v2597 = vpack.c.b16 %v2560, %v2559
      %v2598 = vpack.c.b16 %v2562, %v2561
      %v2599 = vpack.c.b16 %v2564, %v2563
      %v2600 = vpack.c.b16 %v2566, %v2565
      %v2601 = vpack.c.b16 %v2568, %v2567
      %v2602 = vpack.c.b16 %v2570, %v2569
      %v2603 = vpack.c.b16 %v2572, %v2571
      %v2604 = vpack.c.b16 %v2574, %v2573
      %v2605 = vpack.c.b16 %v2576, %v2575
      %v2606 = vpack.c.b16 %v2578, %v2577
      %v2607 = vpack.c.b16 %v2580, %v2579
      %v2608 = vpack.c.b16 %v2582, %v2581
      %v2609 = vpack.c.b16 %v2584, %v2583
      %v2610 = vpack.c.b16 %v2586, %v2585
      %2635 = vmatprep.subr.bf16.mxu0 0
      %2636 = vmatpush1.bf16.msra.mxu0 %v2587
      %2637 = vmatprep.subr.bf16.mxu0 0
      %2638 = vmatpush1.bf16.msra.mxu0 %v2588
      %2639 = vmatprep.subr.bf16.mxu0 0
      %2640 = vmatpush1.bf16.msra.mxu0 %v2589
      %2641 = vmatprep.subr.bf16.mxu0 0
      %2642 = vmatpush1.bf16.msra.mxu0 %v2590
      %2643 = vmatprep.subr.bf16.mxu0 0
      %2644 = vmatpush1.bf16.msra.mxu0 %v2591
      %2645 = vmatprep.subr.bf16.mxu0 0
      %2646 = vmatpush1.bf16.msra.mxu0 %v2592
      %2647 = vmatprep.subr.bf16.mxu0 0
      %2648 = vmatpush1.bf16.msra.mxu0 %v2593
      %2649 = vmatprep.subr.bf16.mxu0 0
      %2650 = vmatpush1.bf16.msra.mxu0 %v2594
      %2651 = vmatprep.subr.bf16.mxu0 0
      %2652 = vmatpush1.bf16.msra.mxu0 %v2595
      %2653 = vmatprep.subr.bf16.mxu0 0
      %2654 = vmatpush1.bf16.msra.mxu0 %v2596
      %2655 = vmatprep.subr.bf16.mxu0 0
      %2656 = vmatpush1.bf16.msra.mxu0 %v2597
      %2657 = vmatprep.subr.bf16.mxu0 0
      %2658 = vmatpush1.bf16.msra.mxu0 %v2598
      %2659 = vmatprep.subr.bf16.mxu0 0
      %2660 = vmatpush1.bf16.msra.mxu0 %v2599
      %2661 = vmatprep.subr.bf16.mxu0 0
      %2662 = vmatpush1.bf16.msra.mxu0 %v2600
      %2663 = vmatprep.subr.bf16.mxu0 0
      %2664 = vmatpush1.bf16.msra.mxu0 %v2601
      %2665 = vmatprep.subr.bf16.mxu0 0
      %2666 = vmatpush1.bf16.msra.mxu0 %v2602
      %2667 = vmatprep.mubr.bf16.mxu0 %v2429
      %2668 = vmatmul.mubr.bf16.gmra.mrb[0].mxu0 %v2428
      %v2669 = vpop.f32.mrb[0].mxu0
      %v2670 = vadd.f32 1e-05, %v2669
      %v2671 = vpop.f32.mrb[0].mxu0
      %v2672 = vpop.f32.mrb[0].mxu0
      %v2673 = vadd.f32 1e-05, %v2672
      %v2674 = vpop.f32.mrb[0].mxu0
      %2675 = vmatprep.mubr.bf16.mxu0 %v2432
      %2676 = vmatmul.mubr.bf16.gmra.mrb[0].mxu0 %v2431
      %v2677 = vpop.f32.mrb[0].mxu0
      %v2678 = vadd.f32 1e-05, %v2677
      %v2679 = vpop.f32.mrb[0].mxu0
      %v2680 = vpop.f32.mrb[0].mxu0
      %v2681 = vadd.f32 1e-05, %v2680
      %v2682 = vpop.f32.mrb[0].mxu0
      %2683 = vmatprep.mubr.bf16.mxu0 %v2435
      %2684 = vmatmul.mubr.bf16.gmra.mrb[0].mxu0 %v2434
      %v2685 = vpop.f32.mrb[0].mxu0
      %v2686 = vadd.f32 1e-05, %v2685
      %v2687 = vpop.f32.mrb[0].mxu0
      %v2688 = vpop.f32.mrb[0].mxu0
      %v2689 = vadd.f32 1e-05, %v2688
      %v2690 = vpop.f32.mrb[0].mxu0
      %2691 = vmatprep.mubr.bf16.mxu0 %v2438
      %2692 = vmatmul.mubr.bf16.gmra.mrb[0].mxu0 %v2437
      %v2693 = vpop.f32.mrb[0].mxu0
      %v2694 = vadd.f32 1e-05, %v2693
      %v2695 = vpop.f32.mrb[0].mxu0
      %v2696 = vpop.f32.mrb[0].mxu0
      %v2697 = vadd.f32 1e-05, %v2696
      %v2698 = vpop.f32.mrb[0].mxu0
      %2699 = vmatprep.mubr.bf16.mxu0 %v2441
      %2700 = vmatmul.mubr.bf16.gmra.mrb[0].mxu0 %v2440
      %v2701 = vpop.f32.mrb[0].mxu0
      %v2702 = vadd.f32 1e-05, %v2701
      %v2703 = vpop.f32.mrb[0].mxu0
      %v2704 = vpop.f32.mrb[0].mxu0
      %v2705 = vpop.f32.mrb[0].mxu0
      %2706 = vdwg.mxu0
      %2707 = vmatprep.subr.bf16.mxu0 0
      %2708 = vmatpush1.bf16.msra.mxu0 %v2603
      %2709 = vmatprep.subr.bf16.mxu0 0
      %2710 = vmatpush1.bf16.msra.mxu0 %v2604
      %2711 = vmatprep.subr.bf16.mxu0 0
      %2712 = vmatpush1.bf16.msra.mxu0 %v2605
      %2713 = vmatprep.subr.bf16.mxu0 0
      %2714 = vmatpush1.bf16.msra.mxu0 %v2606
      %2715 = vmatprep.subr.bf16.mxu0 0
      %2716 = vmatpush1.bf16.msra.mxu0 %v2607
      %2717 = vmatprep.subr.bf16.mxu0 0
      %2718 = vmatpush1.bf16.msra.mxu0 %v2608
      %2719 = vmatprep.subr.bf16.mxu0 0
      %2720 = vmatpush1.bf16.msra.mxu0 %v2609
      %2721 = vmatprep.subr.bf16.mxu0 0
      %2722 = vmatpush1.bf16.msra.mxu0 %v2610
      %2723 = vmatprep.subr.bf16.mxu0 0
      %2724 = vmatpush1.bf16.msra.mxu0 0
      %2725 = vmatprep.subr.bf16.mxu0 0
      %2726 = vmatpush1.bf16.msra.mxu0 0
      %2727 = vmatprep.subr.bf16.mxu0 0
      %2728 = vmatpush1.bf16.msra.mxu0 0
      %2729 = vmatprep.subr.bf16.mxu0 0
      %2730 = vmatpush1.bf16.msra.mxu0 0
      %2731 = vmatprep.subr.bf16.mxu0 0
      %2732 = vmatpush1.bf16.msra.mxu0 0
      %2733 = vmatprep.subr.bf16.mxu0 0
      %2734 = vmatpush1.bf16.msra.mxu0 0
      %2735 = vmatprep.subr.bf16.mxu0 0
      %2736 = vmatpush1.bf16.msra.mxu0 0
      %2737 = vmatprep.subr.bf16.mxu0 0
      %2738 = vmatpush1.bf16.msra.mxu0 0
      %2739 = vmatprep.mubr.bf16.mxu0 0
      %2740 = vmatmul.mubr.bf16.gmra.mrb[0].mxu0 %v2430
      %v2741 = vpop.f32.mrb[0].mxu0
      %v2742 = vadd.f32 %v2670, %v2741
      %v2743 = vpop.f32.mrb[0].mxu0
      %v2744 = vpop.f32.mrb[0].mxu0
      %v2745 = vadd.f32 %v2673, %v2744
      %v2746 = vpop.f32.mrb[0].mxu0
      %2747 = vmatprep.mubr.bf16.mxu0 0
      %2748 = vmatmul.mubr.bf16.gmra.mrb[0].mxu0 %v2433
      %v2749 = vpop.f32.mrb[0].mxu0
      %v2750 = vadd.f32 %v2678, %v2749
      %v2751 = vpop.f32.mrb[0].mxu0
      %v2752 = vpop.f32.mrb[0].mxu0
      %v2753 = vadd.f32 %v2681, %v2752
      %v2754 = vpop.f32.mrb[0].mxu0
      %2755 = vmatprep.mubr.bf16.mxu0 0
      %2756 = vmatmul.mubr.bf16.gmra.mrb[0].mxu0 %v2436
      %v2757 = vpop.f32.mrb[0].mxu0
      %v2758 = vadd.f32 %v2686, %v2757
      %v2759 = vpop.f32.mrb[0].mxu0
      %v2760 = vpop.f32.mrb[0].mxu0
      %v2761 = vadd.f32 %v2689, %v2760
      %v2762 = vpop.f32.mrb[0].mxu0
      %2763 = vmatprep.mubr.bf16.mxu0 0
      %2764 = vmatmul.mubr.bf16.gmra.mrb[0].mxu0 %v2439
      %v2765 = vpop.f32.mrb[0].mxu0
      %v2766 = vadd.f32 %v2694, %v2765
      %v2767 = vpop.f32.mrb[0].mxu0
      %v2768 = vpop.f32.mrb[0].mxu0
      %v2769 = vadd.f32 %v2697, %v2768
      %v2770 = vpop.f32.mrb[0].mxu0
      %2771 = vmatprep.mubr.bf16.mxu0 0
      %2772 = vmatmul.mubr.bf16.gmra.mrb[0].mxu0 %v2442
      %v2773 = vpop.f32.mrb[0].mxu0
      %v2774 = vadd.f32 %v2702, %v2773
      %v2775 = vpop.f32.mrb[0].mxu0
      %v2776 = vpop.f32.mrb[0].mxu0
      %v2777 = vpop.f32.mrb[0].mxu0
      %2778 = vdwg.mxu0
      %v2779 = vlog2.pop %v2742
      %v2780 = vmul.f32 %v2779, 0.6931472
      %v2781 = vlog2.pop %v2745
      %v2782 = vmul.f32 %v2781, 0.6931472
      %v2783 = vlog2.pop %v2750
      %v2784 = vmul.f32 %v2783, 0.6931472
      %v2785 = vlog2.pop %v2753
      %v2786 = vmul.f32 %v2785, 0.6931472
      %v2787 = vlog2.pop %v2758
      %v2788 = vmul.f32 %v2787, 0.6931472
      %v2789 = vlog2.pop %v2761
      %v2790 = vmul.f32 %v2789, 0.6931472
      %v2791 = vlog2.pop %v2766
      %v2792 = vmul.f32 %v2791, 0.6931472
      %v2793 = vlog2.pop %v2769
      %v2794 = vmul.f32 %v2793, 0.6931472
      %v2795 = vlog2.pop %v2774
      %v2796 = vmul.f32 %v2795, 0.6931472
      %v2797 = vlaneseq
      %v2798 = vshrl.u32 %v2797, 7
      %v2799 = vadd.s32 %v2798, 8
      %v2800 = vadd.s32 %v2798, 16
      %v2801 = vadd.s32 %v2798, 24
      %v2802 = vadd.s32 %v2798, 32
      %v2803 = vadd.s32 %v2798, 40
      %v2804 = vadd.s32 %v2798, 48
      %v2805 = vadd.s32 %v2798, 56
      %v2806 = vadd.s32 %v2798, 64
      %p2807 = scmp.eq.s32.totalorder %s23, 0
      %s2808 = scalar_select %p2807, 1, 0
      %p2809 = scmp.eq.s32.totalorder %s23, 3
      %s2810 = scalar_select %p2809, 64, 65
      %v2811 = vstv %s2808
      %vm2812 = vcmp.ge.s32.totalorder %v2798, %v2811
      %vm2813 = vcmp.ge.s32.totalorder %v2799, %v2811
      %vm2814 = vcmp.ge.s32.totalorder %v2800, %v2811
      %vm2815 = vcmp.ge.s32.totalorder %v2801, %v2811
      %vm2816 = vcmp.ge.s32.totalorder %v2802, %v2811
      %vm2817 = vcmp.ge.s32.totalorder %v2803, %v2811
      %vm2818 = vcmp.ge.s32.totalorder %v2804, %v2811
      %vm2819 = vcmp.ge.s32.totalorder %v2805, %v2811
      %vm2820 = vcmp.ge.s32.totalorder %v2806, %v2811
      %v2821 = vstv %s2810
      %vm2822 = vcmp.le.s32.totalorder %v2798, %v2821
      %vm2823 = vcmp.le.s32.totalorder %v2799, %v2821
      %vm2824 = vcmp.le.s32.totalorder %v2800, %v2821
      %vm2825 = vcmp.le.s32.totalorder %v2801, %v2821
      %vm2826 = vcmp.le.s32.totalorder %v2802, %v2821
      %vm2827 = vcmp.le.s32.totalorder %v2803, %v2821
      %vm2828 = vcmp.le.s32.totalorder %v2804, %v2821
      %vm2829 = vcmp.le.s32.totalorder %v2805, %v2821
      %vm2830 = vcmp.le.s32.totalorder %v2806, %v2821
      %vm2831 = vmand %vm2812, %vm2822
      %vm2832 = vmand %vm2813, %vm2823
      %vm2833 = vmand %vm2814, %vm2824
      %vm2834 = vmand %vm2815, %vm2825
      %vm2835 = vmand %vm2816, %vm2826
      %vm2836 = vmand %vm2817, %vm2827
      %vm2837 = vmand %vm2818, %vm2828
      %vm2838 = vmand %vm2819, %vm2829
      %vm2839 = vmand %vm2820, %vm2830
      %v2840 = vsel %vm2831, 1, 0
      %v2841 = vsel %vm2832, 1, 0
      %v2842 = vsel %vm2833, 1, 0
      %v2843 = vsel %vm2834, 1, 0
      %v2844 = vsel %vm2835, 1, 0
      %v2845 = vsel %vm2836, 1, 0
      %v2846 = vsel %vm2837, 1, 0
      %v2847 = vsel %vm2838, 1, 0
      %v2848 = vsel %vm2839, 1, 0
      %vm2849 = vcmp.eq.s32.totalorder %v2840, 1
      %vm2850 = vcmp.eq.s32.totalorder %v2841, 1
      %vm2851 = vcmp.eq.s32.totalorder %v2842, 1
      %vm2852 = vcmp.eq.s32.totalorder %v2843, 1
      %vm2853 = vcmp.eq.s32.totalorder %v2844, 1
      %vm2854 = vcmp.eq.s32.totalorder %v2845, 1
      %vm2855 = vcmp.eq.s32.totalorder %v2846, 1
      %vm2856 = vcmp.eq.s32.totalorder %v2847, 1
      %vm2857 = vcmp.eq.s32.totalorder %v2848, 1
      %v2858 = vsel %vm2849, %v2780, 0.0
      %v2859 = vsel %vm2850, %v2782, 0.0
      %v2860 = vsel %vm2851, %v2784, 0.0
      %v2861 = vsel %vm2852, %v2786, 0.0
      %v2862 = vsel %vm2853, %v2788, 0.0
      %v2863 = vsel %vm2854, %v2790, 0.0
      %v2864 = vsel %vm2855, %v2792, 0.0
      %v2865 = vsel %vm2856, %v2794, 0.0
      %v2866 = vsel %vm2857, %v2796, 0.0
      %2867 = vst [vmem:[#allocation3] sm:$0xff] %v2858
      %2868 = vst [vmem:[#allocation3 + $0x8] sm:$0xff] %v2859
      %2869 = vst [vmem:[#allocation3 + $0x10] sm:$0xff] %v2860
      %2870 = vst [vmem:[#allocation3 + $0x18] sm:$0xff] %v2861
      %2871 = vst [vmem:[#allocation3 + $0x20] sm:$0xff] %v2862
      %2872 = vst [vmem:[#allocation3 + $0x28] sm:$0xff] %v2863
      %2873 = vst [vmem:[#allocation3 + $0x30] sm:$0xff] %v2864
      %2874 = vst [vmem:[#allocation3 + $0x38] sm:$0xff] %v2865
      %2875 = vst [vmem:[#allocation3 + $0x40] sm:$0x3] %v2866
      %v2876 = vld [vmem:[%s4] sm:$0x1]
      %v2877 = vld [vmem:[#allocation3] sm:$0xff]
      %v2878 = vld [vmem:[#allocation3 + $0x8] sm:$0xff]
      %v2879 = vld [vmem:[#allocation3 + $0x10] sm:$0xff]
      %v2880 = vld [vmem:[#allocation3 + $0x18] sm:$0xff]
      %v2881 = vld [vmem:[#allocation3 + $0x20] sm:$0xff]
      %v2882 = vld [vmem:[#allocation3 + $0x28] sm:$0xff]
      %v2883 = vld [vmem:[#allocation3 + $0x30] sm:$0xff]
      %v2884 = vld [vmem:[#allocation3 + $0x38] sm:$0xff]
      %v2885 = vld [vmem:[#allocation3 + $0x40] sm:$0x3]
      %v2886 = vpack.c.bf16 %v2878, %v2877
      %v2887 = vpack.c.bf16 %v2880, %v2879
      %v2888 = vpack.c.bf16 %v2882, %v2881
      %v2889 = vpack.c.bf16 %v2884, %v2883
      %v2890 = vld [vmem:[%s3] sm:$0xf]
      %v2891 = vld [vmem:[%s3 + $0x4] sm:$0xf]
      %v2892 = vld [vmem:[%s3 + $0x8] sm:$0xf]
      %v2893 = vld [vmem:[%s3 + $0xc] sm:$0xf]
      %v2894 = vld [vmem:[%s3 + $0x10] sm:$0xf]
      %v2895 = vld [vmem:[%s3 + $0x14] sm:$0xf]
      %v2896 = vld [vmem:[%s3 + $0x18] sm:$0xf]
      %v2897 = vld [vmem:[%s3 + $0x1c] sm:$0xf]
      %v2898 = vld [vmem:[%s3 + $0x20] sm:$0xf]
      %v2899 = vld [vmem:[%s3 + $0x24] sm:$0xf]
      %v2900 = vld [vmem:[%s3 + $0x28] sm:$0xf]
      %v2901 = vld [vmem:[%s3 + $0x2c] sm:$0xf]
      %v2902 = vld [vmem:[%s3 + $0x30] sm:$0xf]
      %v2903 = vld [vmem:[%s3 + $0x34] sm:$0xf]
      %v2904 = vld [vmem:[%s3 + $0x38] sm:$0xf]
      %v2905 = vld [vmem:[%s3 + $0x3c] sm:$0xf]
      %v2906 = vpack.c.bf16 %v2885, %v2885
      %s2907 = scalar_lea.vmem %s3, 64
      %v2908 = vld [vmem:[%s2907] sm:$0xf]
      %v2909 = vld [vmem:[%s2907 + $0x4] sm:$0xf]
      %v2910 = vld [vmem:[%s2907 + $0x8] sm:$0xf]
      %v2911 = vld [vmem:[%s2907 + $0xc] sm:$0xf]
      %v2912 = vld [vmem:[%s2907 + $0x10] sm:$0xf]
      %v2913 = vld [vmem:[%s2907 + $0x14] sm:$0xf]
      %v2914 = vld [vmem:[%s2907 + $0x18] sm:$0xf]
      %v2915 = vld [vmem:[%s2907 + $0x1c] sm:$0xf]
      %v2916 = vld [vmem:[%s2907 + $0x20] sm:$0xf]
      %v2917 = vld [vmem:[%s2907 + $0x24] sm:$0xf]
      %v2918 = vld [vmem:[%s2907 + $0x28] sm:$0xf]
      %v2919 = vld [vmem:[%s2907 + $0x2c] sm:$0xf]
      %v2920 = vld [vmem:[%s2907 + $0x30] sm:$0xf]
      %v2921 = vld [vmem:[%s2907 + $0x34] sm:$0xf]
      %v2922 = vld [vmem:[%s2907 + $0x38] sm:$0xf]
      %v2923 = vld [vmem:[%s2907 + $0x3c] sm:$0xf]
      %vm2924 = vsmask.f32 7424
      %v2926 = vshrl.u32 %v2886, 16
      %v2928 = vshll.u32 %v2886, 16
      %v2930 = vrot.slane %v2928, 1
      %v2931 = vor.u32 %v2926, %v2930
      %v2933 = vshll.u32 %v2887, 16
      %v2935 = vrot.slane %v2933, 1
      %v2936 = vsel %vm2924, %v2931, %v2935
      %v2937 = vshrl.u32 %v2887, 16
      %v2939 = vor.u32 %v2937, %v2935
      %v2941 = vshll.u32 %v2888, 16
      %v2943 = vrot.slane %v2941, 1
      %v2944 = vsel %vm2924, %v2939, %v2943
      %v2945 = vshrl.u32 %v2888, 16
      %v2947 = vor.u32 %v2945, %v2943
      %v2949 = vshll.u32 %v2889, 16
      %v2951 = vrot.slane %v2949, 1
      %v2952 = vsel %vm2924, %v2947, %v2951
      %v2953 = vshrl.u32 %v2889, 16
      %v2955 = vor.u32 %v2953, %v2951
      %v2957 = vshll.u32 %v2906, 16
      %v2959 = vrot.slane %v2957, 1
      %v2960 = vsel %vm2924, %v2955, %v2959
      %v2981 = vunpack.c.l.b16 %v2908
      %v2982 = vunpack.c.l.b16 %v2909
      %v2983 = vunpack.c.l.b16 %v2910
      %v2984 = vunpack.c.l.b16 %v2911
      %v2985 = vunpack.c.l.b16 %v2912
      %v2986 = vunpack.c.l.b16 %v2913
      %v2987 = vunpack.c.l.b16 %v2914
      %v2988 = vunpack.c.l.b16 %v2915
      %v2989 = vunpack.c.l.b16 %v2916
      %v2990 = vunpack.c.l.b16 %v2917
      %v2991 = vunpack.c.l.b16 %v2918
      %v2992 = vunpack.c.l.b16 %v2919
      %v2993 = vunpack.c.l.b16 %v2920
      %v2994 = vunpack.c.l.b16 %v2921
      %v2995 = vunpack.c.l.b16 %v2922
      %v2996 = vunpack.c.l.b16 %v2923
      %v2997 = vpack.c.b16 %v2982, %v2981
      %v2998 = vpack.c.b16 %v2984, %v2983
      %v2999 = vpack.c.b16 %v2986, %v2985
      %v3000 = vpack.c.b16 %v2988, %v2987
      %v3001 = vpack.c.b16 %v2990, %v2989
      %v3002 = vpack.c.b16 %v2992, %v2991
      %v3003 = vpack.c.b16 %v2994, %v2993
      %v3004 = vpack.c.b16 %v2996, %v2995
      %3013 = vmatprep.subr.bf16.mxu0 0
      %3014 = vmatpush1.bf16.msra.mxu0 %v2997
      %3015 = vmatprep.subr.bf16.mxu0 0
      %3016 = vmatpush1.bf16.msra.mxu0 %v2998
      %3017 = vmatprep.subr.bf16.mxu0 0
      %3018 = vmatpush1.bf16.msra.mxu0 %v2999
      %3019 = vmatprep.subr.bf16.mxu0 0
      %3020 = vmatpush1.bf16.msra.mxu0 %v3000
      %3021 = vmatprep.subr.bf16.mxu0 0
      %3022 = vmatpush1.bf16.msra.mxu0 %v3001
      %3023 = vmatprep.subr.bf16.mxu0 0
      %3024 = vmatpush1.bf16.msra.mxu0 %v3002
      %3025 = vmatprep.subr.bf16.mxu0 0
      %3026 = vmatpush1.bf16.msra.mxu0 %v3003
      %3027 = vmatprep.subr.bf16.mxu0 0
      %3028 = vmatpush1.bf16.msra.mxu0 %v3004
      %3029 = vmatprep.subr.bf16.mxu0 0
      %3030 = vmatpush1.bf16.msra.mxu0 0
      %3031 = vmatprep.subr.bf16.mxu0 0
      %3032 = vmatpush1.bf16.msra.mxu0 0
      %3033 = vmatprep.subr.bf16.mxu0 0
      %3034 = vmatpush1.bf16.msra.mxu0 0
      %3035 = vmatprep.subr.bf16.mxu0 0
      %3036 = vmatpush1.bf16.msra.mxu0 0
      %3037 = vmatprep.subr.bf16.mxu0 0
      %3038 = vmatpush1.bf16.msra.mxu0 0
      %3039 = vmatprep.subr.bf16.mxu0 0
      %3040 = vmatpush1.bf16.msra.mxu0 0
      %3041 = vmatprep.subr.bf16.mxu0 0
      %3042 = vmatpush1.bf16.msra.mxu0 0
      %3043 = vmatprep.subr.bf16.mxu0 0
      %3044 = vmatpush1.bf16.msra.mxu0 0
      %3045 = vmatprep.mubr.bf16.mxu0 0
      %3046 = vmatmul.mubr.bf16.gmra.mrb[0].mxu0 %v2936
      %v3047 = vpop.f32.mrb[0].mxu0
      %v3048 = vadd.f32 0.0, %v3047
      %v3049 = vpop.f32.mrb[0].mxu0
      %v3050 = vpop.f32.mrb[0].mxu0
      %v3051 = vadd.f32 0.0, %v3050
      %v3052 = vpop.f32.mrb[0].mxu0
      %3053 = vmatprep.mubr.bf16.mxu0 0
      %3054 = vmatmul.mubr.bf16.gmra.mrb[0].mxu0 %v2944
      %v3055 = vpop.f32.mrb[0].mxu0
      %v3056 = vadd.f32 0.0, %v3055
      %v3057 = vpop.f32.mrb[0].mxu0
      %v3058 = vpop.f32.mrb[0].mxu0
      %v3059 = vadd.f32 0.0, %v3058
      %v3060 = vpop.f32.mrb[0].mxu0
      %3061 = vmatprep.mubr.bf16.mxu0 0
      %3062 = vmatmul.mubr.bf16.gmra.mrb[0].mxu0 %v2952
      %v3063 = vpop.f32.mrb[0].mxu0
      %v3064 = vadd.f32 0.0, %v3063
      %v3065 = vpop.f32.mrb[0].mxu0
      %v3066 = vpop.f32.mrb[0].mxu0
      %v3067 = vadd.f32 0.0, %v3066
      %v3068 = vpop.f32.mrb[0].mxu0
      %3069 = vmatprep.mubr.bf16.mxu0 0
      %3070 = vmatmul.mubr.bf16.gmra.mrb[0].mxu0 %v2960
      %v3071 = vpop.f32.mrb[0].mxu0
      %v3072 = vadd.f32 0.0, %v3071
      %v3073 = vpop.f32.mrb[0].mxu0
      %v3074 = vpop.f32.mrb[0].mxu0
      %v3075 = vadd.f32 0.0, %v3074
      %v3076 = vpop.f32.mrb[0].mxu0
      %3077 = vdwg.mxu0
      %v3094 = vunpack.c.l.b16 %v2890
      %v3095 = vunpack.c.l.b16 %v2891
      %v3096 = vunpack.c.l.b16 %v2892
      %v3097 = vunpack.c.l.b16 %v2893
      %v3098 = vunpack.c.l.b16 %v2894
      %v3099 = vunpack.c.l.b16 %v2895
      %v3100 = vunpack.c.l.b16 %v2896
      %v3101 = vunpack.c.l.b16 %v2897
      %v3102 = vunpack.c.l.b16 %v2898
      %v3103 = vunpack.c.l.b16 %v2899
      %v3104 = vunpack.c.l.b16 %v2900
      %v3105 = vunpack.c.l.b16 %v2901
      %v3106 = vunpack.c.l.b16 %v2902
      %v3107 = vunpack.c.l.b16 %v2903
      %v3108 = vunpack.c.l.b16 %v2904
      %v3109 = vunpack.c.l.b16 %v2905
      %v3110 = vpack.c.b16 %v3095, %v3094
      %v3111 = vpack.c.b16 %v3097, %v3096
      %v3112 = vpack.c.b16 %v3099, %v3098
      %v3113 = vpack.c.b16 %v3101, %v3100
      %v3114 = vpack.c.b16 %v3103, %v3102
      %v3115 = vpack.c.b16 %v3105, %v3104
      %v3116 = vpack.c.b16 %v3107, %v3106
      %v3117 = vpack.c.b16 %v3109, %v3108
      %3126 = vmatprep.subr.bf16.mxu0 0
      %3127 = vmatpush1.bf16.msra.mxu0 %v3110
      %3128 = vmatprep.subr.bf16.mxu0 0
      %3129 = vmatpush1.bf16.msra.mxu0 %v3111
      %3130 = vmatprep.subr.bf16.mxu0 0
      %3131 = vmatpush1.bf16.msra.mxu0 %v3112
      %3132 = vmatprep.subr.bf16.mxu0 0
      %3133 = vmatpush1.bf16.msra.mxu0 %v3113
      %3134 = vmatprep.subr.bf16.mxu0 0
      %3135 = vmatpush1.bf16.msra.mxu0 %v3114
      %3136 = vmatprep.subr.bf16.mxu0 0
      %3137 = vmatpush1.bf16.msra.mxu0 %v3115
      %3138 = vmatprep.subr.bf16.mxu0 0
      %3139 = vmatpush1.bf16.msra.mxu0 %v3116
      %3140 = vmatprep.subr.bf16.mxu0 0
      %3141 = vmatpush1.bf16.msra.mxu0 %v3117
      %3142 = vmatprep.subr.bf16.mxu0 0
      %3143 = vmatpush1.bf16.msra.mxu0 0
      %3144 = vmatprep.subr.bf16.mxu0 0
      %3145 = vmatpush1.bf16.msra.mxu0 0
      %3146 = vmatprep.subr.bf16.mxu0 0
      %3147 = vmatpush1.bf16.msra.mxu0 0
      %3148 = vmatprep.subr.bf16.mxu0 0
      %3149 = vmatpush1.bf16.msra.mxu0 0
      %3150 = vmatprep.subr.bf16.mxu0 0
      %3151 = vmatpush1.bf16.msra.mxu0 0
      %3152 = vmatprep.subr.bf16.mxu0 0
      %3153 = vmatpush1.bf16.msra.mxu0 0
      %3154 = vmatprep.subr.bf16.mxu0 0
      %3155 = vmatpush1.bf16.msra.mxu0 0
      %3156 = vmatprep.subr.bf16.mxu0 0
      %3157 = vmatpush1.bf16.msra.mxu0 0
      %3158 = vmatprep.mubr.bf16.mxu0 0
      %3159 = vmatmul.mubr.bf16.gmra.mrb[0].mxu0 %v2886
      %v3160 = vpop.f32.mrb[0].mxu0
      %v3161 = vadd.f32 %v3048, %v3160
      %v3162 = vpop.f32.mrb[0].mxu0
      %v3163 = vpop.f32.mrb[0].mxu0
      %v3164 = vadd.f32 %v3051, %v3163
      %v3165 = vpop.f32.mrb[0].mxu0
      %3166 = vmatprep.mubr.bf16.mxu0 0
      %3167 = vmatmul.mubr.bf16.gmra.mrb[0].mxu0 %v2887
      %v3168 = vpop.f32.mrb[0].mxu0
      %v3169 = vadd.f32 %v3056, %v3168
      %v3170 = vpop.f32.mrb[0].mxu0
      %v3171 = vpop.f32.mrb[0].mxu0
      %v3172 = vadd.f32 %v3059, %v3171
      %v3173 = vpop.f32.mrb[0].mxu0
      %3174 = vmatprep.mubr.bf16.mxu0 0
      %3175 = vmatmul.mubr.bf16.gmra.mrb[0].mxu0 %v2888
      %v3176 = vpop.f32.mrb[0].mxu0
      %v3177 = vadd.f32 %v3064, %v3176
      %v3178 = vpop.f32.mrb[0].mxu0
      %v3179 = vpop.f32.mrb[0].mxu0
      %v3180 = vadd.f32 %v3067, %v3179
      %v3181 = vpop.f32.mrb[0].mxu0
      %3182 = vmatprep.mubr.bf16.mxu0 0
      %3183 = vmatmul.mubr.bf16.gmra.mrb[0].mxu0 %v2889
      %v3184 = vpop.f32.mrb[0].mxu0
      %v3185 = vadd.f32 %v3072, %v3184
      %v3186 = vpop.f32.mrb[0].mxu0
      %v3187 = vpop.f32.mrb[0].mxu0
      %v3188 = vadd.f32 %v3075, %v3187
      %v3189 = vpop.f32.mrb[0].mxu0
      %3190 = vdwg.mxu0
      %s3191 = scalar_lea.vmem %s3, 128
      %v3192 = vld [vmem:[%s3191] sm:$0xf]
      %v3193 = vld [vmem:[%s3191 + $0x4] sm:$0xf]
      %v3194 = vld [vmem:[%s3191 + $0x8] sm:$0xf]
      %v3195 = vld [vmem:[%s3191 + $0xc] sm:$0xf]
      %v3196 = vld [vmem:[%s3191 + $0x10] sm:$0xf]
      %v3197 = vld [vmem:[%s3191 + $0x14] sm:$0xf]
      %v3198 = vld [vmem:[%s3191 + $0x18] sm:$0xf]
      %v3199 = vld [vmem:[%s3191 + $0x1c] sm:$0xf]
      %v3200 = vld [vmem:[%s3191 + $0x20] sm:$0xf]
      %v3201 = vld [vmem:[%s3191 + $0x24] sm:$0xf]
      %v3202 = vld [vmem:[%s3191 + $0x28] sm:$0xf]
      %v3203 = vld [vmem:[%s3191 + $0x2c] sm:$0xf]
      %v3204 = vld [vmem:[%s3191 + $0x30] sm:$0xf]
      %v3205 = vld [vmem:[%s3191 + $0x34] sm:$0xf]
      %v3206 = vld [vmem:[%s3191 + $0x38] sm:$0xf]
      %v3207 = vld [vmem:[%s3191 + $0x3c] sm:$0xf]
      %vm3213 = vcmask 1046528
      %v3214 = vrot.slane %v2886, 1
      %v3215 = vrot.slane %v2887, 1
      %v3216 = vsel %vm3213, %v3214, %v3215
      %v3217 = vrot.slane %v2888, 1
      %v3218 = vsel %vm3213, %v3215, %v3217
      %v3219 = vrot.slane %v2889, 1
      %v3220 = vsel %vm3213, %v3217, %v3219
      %v3221 = vrot.slane %v2906, 1
      %v3222 = vsel %vm3213, %v3219, %v3221
      %v3243 = vunpack.c.l.b16 %v3192
      %v3244 = vunpack.c.l.b16 %v3193
      %v3245 = vunpack.c.l.b16 %v3194
      %v3246 = vunpack.c.l.b16 %v3195
      %v3247 = vunpack.c.l.b16 %v3196
      %v3248 = vunpack.c.l.b16 %v3197
      %v3249 = vunpack.c.l.b16 %v3198
      %v3250 = vunpack.c.l.b16 %v3199
      %v3251 = vunpack.c.l.b16 %v3200
      %v3252 = vunpack.c.l.b16 %v3201
      %v3253 = vunpack.c.l.b16 %v3202
      %v3254 = vunpack.c.l.b16 %v3203
      %v3255 = vunpack.c.l.b16 %v3204
      %v3256 = vunpack.c.l.b16 %v3205
      %v3257 = vunpack.c.l.b16 %v3206
      %v3258 = vunpack.c.l.b16 %v3207
      %v3259 = vpack.c.b16 %v3244, %v3243
      %v3260 = vpack.c.b16 %v3246, %v3245
      %v3261 = vpack.c.b16 %v3248, %v3247
      %v3262 = vpack.c.b16 %v3250, %v3249
      %v3263 = vpack.c.b16 %v3252, %v3251
      %v3264 = vpack.c.b16 %v3254, %v3253
      %v3265 = vpack.c.b16 %v3256, %v3255
      %v3266 = vpack.c.b16 %v3258, %v3257
      %3275 = vmatprep.subr.bf16.mxu0 0
      %3276 = vmatpush1.bf16.msra.mxu0 %v3259
      %3277 = vmatprep.subr.bf16.mxu0 0
      %3278 = vmatpush1.bf16.msra.mxu0 %v3260
      %3279 = vmatprep.subr.bf16.mxu0 0
      %3280 = vmatpush1.bf16.msra.mxu0 %v3261
      %3281 = vmatprep.subr.bf16.mxu0 0
      %3282 = vmatpush1.bf16.msra.mxu0 %v3262
      %3283 = vmatprep.subr.bf16.mxu0 0
      %3284 = vmatpush1.bf16.msra.mxu0 %v3263
      %3285 = vmatprep.subr.bf16.mxu0 0
      %3286 = vmatpush1.bf16.msra.mxu0 %v3264
      %3287 = vmatprep.subr.bf16.mxu0 0
      %3288 = vmatpush1.bf16.msra.mxu0 %v3265
      %3289 = vmatprep.subr.bf16.mxu0 0
      %3290 = vmatpush1.bf16.msra.mxu0 %v3266
      %3291 = vmatprep.subr.bf16.mxu0 0
      %3292 = vmatpush1.bf16.msra.mxu0 0
      %3293 = vmatprep.subr.bf16.mxu0 0
      %3294 = vmatpush1.bf16.msra.mxu0 0
      %3295 = vmatprep.subr.bf16.mxu0 0
      %3296 = vmatpush1.bf16.msra.mxu0 0
      %3297 = vmatprep.subr.bf16.mxu0 0
      %3298 = vmatpush1.bf16.msra.mxu0 0
      %3299 = vmatprep.subr.bf16.mxu0 0
      %3300 = vmatpush1.bf16.msra.mxu0 0
      %3301 = vmatprep.subr.bf16.mxu0 0
      %3302 = vmatpush1.bf16.msra.mxu0 0
      %3303 = vmatprep.subr.bf16.mxu0 0
      %3304 = vmatpush1.bf16.msra.mxu0 0
      %3305 = vmatprep.subr.bf16.mxu0 0
      %3306 = vmatpush1.bf16.msra.mxu0 0
      %3307 = vmatprep.mubr.bf16.mxu0 0
      %3308 = vmatmul.mubr.bf16.gmra.mrb[0].mxu0 %v3216
      %v3309 = vpop.f32.mrb[0].mxu0
      %v3310 = vadd.f32 0.0, %v3309
      %v3311 = vpop.f32.mrb[0].mxu0
      %v3312 = vpop.f32.mrb[0].mxu0
      %v3313 = vadd.f32 0.0, %v3312
      %v3314 = vpop.f32.mrb[0].mxu0
      %3315 = vmatprep.mubr.bf16.mxu0 0
      %3316 = vmatmul.mubr.bf16.gmra.mrb[0].mxu0 %v3218
      %v3317 = vpop.f32.mrb[0].mxu0
      %v3318 = vadd.f32 0.0, %v3317
      %v3319 = vpop.f32.mrb[0].mxu0
      %v3320 = vpop.f32.mrb[0].mxu0
      %v3321 = vadd.f32 0.0, %v3320
      %v3322 = vpop.f32.mrb[0].mxu0
      %3323 = vmatprep.mubr.bf16.mxu0 0
      %3324 = vmatmul.mubr.bf16.gmra.mrb[0].mxu0 %v3220
      %v3325 = vpop.f32.mrb[0].mxu0
      %v3326 = vadd.f32 0.0, %v3325
      %v3327 = vpop.f32.mrb[0].mxu0
      %v3328 = vpop.f32.mrb[0].mxu0
      %v3329 = vadd.f32 0.0, %v3328
      %v3330 = vpop.f32.mrb[0].mxu0
      %3331 = vmatprep.mubr.bf16.mxu0 0
      %3332 = vmatmul.mubr.bf16.gmra.mrb[0].mxu0 %v3222
      %v3333 = vpop.f32.mrb[0].mxu0
      %v3334 = vadd.f32 0.0, %v3333
      %v3335 = vpop.f32.mrb[0].mxu0
      %v3336 = vpop.f32.mrb[0].mxu0
      %v3337 = vadd.f32 0.0, %v3336
      %v3338 = vpop.f32.mrb[0].mxu0
      %3339 = vdwg.mxu0
      %v3340 = vadd.f32 %v3161, %v3310
      %v3341 = vadd.f32 %v3164, %v3313
      %v3342 = vadd.f32 %v3169, %v3318
      %v3343 = vadd.f32 %v3172, %v3321
      %v3344 = vadd.f32 %v3177, %v3326
      %v3345 = vadd.f32 %v3180, %v3329
      %v3346 = vadd.f32 %v3185, %v3334
      %v3347 = vadd.f32 %v3188, %v3337
      %v3349 = vlaneseq
      %v3350 = vshrl.u32 %v3349, 7
      %v3351 = vsub.s32 0, %v3350
      %v3352 = vrot.slane %v2876, %v3351
      %v3354 = vadd.f32 %v3340, %v3352
      %v3355 = vadd.f32 %v3341, %v3352
      %v3356 = vadd.f32 %v3342, %v3352
      %v3357 = vadd.f32 %v3343, %v3352
      %v3358 = vadd.f32 %v3344, %v3352
      %v3359 = vadd.f32 %v3345, %v3352
      %v3360 = vadd.f32 %v3346, %v3352
      %v3361 = vadd.f32 %v3347, %v3352
      %v3362 = vpack.c.bf16 %v3355, %v3354
      %v3363 = vpack.c.bf16 %v3357, %v3356
      %v3364 = vpack.c.bf16 %v3359, %v3358
      %v3365 = vpack.c.bf16 %v3361, %v3360
      %v3370 = vunpack.c.l.b16 %v3362
      %v3371 = vunpack.c.h.b16 %v3362
      %v3372 = vunpack.c.l.b16 %v3363
      %v3373 = vunpack.c.h.b16 %v3363
      %v3374 = vunpack.c.l.b16 %v3364
      %v3375 = vunpack.c.h.b16 %v3364
      %v3376 = vunpack.c.l.b16 %v3365
      %v3377 = vunpack.c.h.b16 %v3365
      %v3378 = vpack.c.b16 %v3370, %v3370
      %v3379 = vpack.c.b16 %v3371, %v3371
      %v3380 = vpack.c.b16 %v3372, %v3372
      %v3381 = vpack.c.b16 %v3373, %v3373
      %v3382 = vpack.c.b16 %v3374, %v3374
      %v3383 = vpack.c.b16 %v3375, %v3375
      %v3384 = vpack.c.b16 %v3376, %v3376
      %v3385 = vpack.c.b16 %v3377, %v3377
      %3394 = vst [vmem:[%s300] sm:$0xf] %v3378
      %3395 = vst [vmem:[%s300 + $0x4] sm:$0xf] %v3379
      %3396 = vst [vmem:[%s300 + $0x8] sm:$0xf] %v3380
      %3397 = vst [vmem:[%s300 + $0xc] sm:$0xf] %v3381
      %3398 = vst [vmem:[%s300 + $0x10] sm:$0xf] %v3382
      %3399 = vst [vmem:[%s300 + $0x14] sm:$0xf] %v3383
      %3400 = vst [vmem:[%s300 + $0x18] sm:$0xf] %v3384
      %3401 = vst [vmem:[%s300 + $0x1c] sm:$0xf] %v3385
      %v3402 = vadd.f32 %v3354, %v3355
      %v3403 = vadd.f32 %v3402, %v3356
      %v3404 = vadd.f32 %v3403, %v3357
      %v3405 = vadd.f32 %v3404, %v3358
      %v3406 = vadd.f32 %v3405, %v3359
      %v3407 = vadd.f32 %v3406, %v3360
      %v3408 = vadd.f32 %v3407, %v3361
      %v3409 = vrot.slane %v3408, 4
      %v3410 = vadd.f32 %v3408, %v3409
      %v3411 = vrot.slane %v3410, 2
      %v3412 = vadd.f32 %v3410, %v3411
      %v3413 = vrot.slane %v3412, 1
      %v3414 = vadd.f32 %v3412, %v3413
      %v3415 = vrcp.pop 64.0
      %v3416 = vmul.f32 %v3414, %v3415
      %v3417 = vsub.f32 %v3354, %v3416
      %v3418 = vsub.f32 %v3355, %v3416
      %v3419 = vsub.f32 %v3356, %v3416
      %v3420 = vsub.f32 %v3357, %v3416
      %v3421 = vsub.f32 %v3358, %v3416
      %v3422 = vsub.f32 %v3359, %v3416
      %v3423 = vsub.f32 %v3360, %v3416
      %v3424 = vsub.f32 %v3361, %v3416
      %3425 = vst [vmem:[%s309] sm:$0x1] %v3416
      %v3426 = vmul.f32 %v3417, %v3417
      %v3427 = vmul.f32 %v3418, %v3418
      %v3428 = vmul.f32 %v3419, %v3419
      %v3429 = vmul.f32 %v3420, %v3420
      %v3430 = vmul.f32 %v3421, %v3421
      %v3431 = vmul.f32 %v3422, %v3422
      %v3432 = vmul.f32 %v3423, %v3423
      %v3433 = vmul.f32 %v3424, %v3424
      %v3434 = vadd.f32 %v3426, %v3427
      %v3435 = vadd.f32 %v3434, %v3428
      %v3436 = vadd.f32 %v3435, %v3429
      %v3437 = vadd.f32 %v3436, %v3430
      %v3438 = vadd.f32 %v3437, %v3431
      %v3439 = vadd.f32 %v3438, %v3432
      %v3440 = vadd.f32 %v3439, %v3433
      %v3441 = vrot.slane %v3440, 4
      %v3442 = vadd.f32 %v3440, %v3441
      %v3443 = vrot.slane %v3442, 2
      %v3444 = vadd.f32 %v3442, %v3443
      %v3445 = vrot.slane %v3444, 1
      %v3446 = vadd.f32 %v3444, %v3445
      %3447 = vst [vmem:[%s309 + $0x1] sm:$0x1] %v3446
      %s3448 = smul.u32 8, %s23
      %p3449 = scmp.lt.s32.totalorder %s22, 1
      %s3450 = scalar_select %p3449, %s22, 1
      %p3451 = scmp.lt.s32.totalorder %s3448, 31
      %s3452 = scalar_select %p3451, %s3448, 31
      %s3453 = smul.addr %s3450, 32
      %s3454 = sadd.s32 %s3452, %s3453
      %s3455 = smul.addr %s3454, 4
      %s3456 = scalar_lea.vmem %s5, %s3455
      %p3457 = scmp.lt.s32.totalorder %s22, 1
      %s3458 = scalar_select %p3457, %s22, 1
      %p3459 = scmp.lt.s32.totalorder %s23, 3
      %s3460 = scalar_select %p3459, %s23, 3
      %s3461 = smul.addr %s3458, 4
      %s3462 = sadd.s32 %s3460, %s3461
      %s3463 = smul.addr %s3462, 2
      %s3464 = scalar_lea.vmem %s6, %s3463
      // Predicated region
      $region41: #{audio_processing_tokenizer_forward.3} parent=39 // pred_check
        %p3465 = pneg %p162
      $region42: #{audio_processing_tokenizer_forward.3} parent=39 // pred_check_branch
        %3467 = sbr.rel (%p3465) target = $region44
      $region43: #{audio_processing_tokenizer_forward.3} parent=39 // pred_region
        %s3468 = smul.u32 8, %s23
      $region44: #{audio_processing_tokenizer_forward.3} parent=39 // pred_fallthru
        _
      // Predicated region
      $region45: #{audio_processing_tokenizer_forward.3} parent=39 // pred_check
        %p3469 = pneg %p190
      $region46: #{audio_processing_tokenizer_forward.3} parent=39 // pred_check_branch
        %3471 = sbr.rel (%p3469) target = $region48
      $region47: #{audio_processing_tokenizer_forward.3} parent=39 // pred_region
        _
      $region48: #{audio_processing_tokenizer_forward.3} parent=39 // pred_fallthru
        _
    $region40: #{audio_processing_tokenizer_forward.3} parent=5 // pred_fallthru
      _
    %p3472 = scmp.le.s32.totalorder 2, %s13
    // Predicated region
    $region49: #{audio_processing_tokenizer_forward.3} parent=5 // pred_check
      %p3473 = pneg %p3472
    $region50: #{audio_processing_tokenizer_forward.3} parent=5 // pred_check_branch
      %3475 = sbr.rel (%p3473) target = $region52
    $region51: #{audio_processing_tokenizer_forward.3} parent=5 // pred_region
      %s3476 = ssub.s32 %s13, 2
      // Predicated region
      $region53: #{audio_processing_tokenizer_forward.3} parent=51 // pred_check
        %p3477 = pneg %p168
      $region54: #{audio_processing_tokenizer_forward.3} parent=51 // pred_check_branch
        %3479 = sbr.rel (%p3477) target = $region56
      $region55: #{audio_processing_tokenizer_forward.3} parent=51 // pred_region
        %s3480 = smul.u32 8, %s25
        %p3481 = scmp.lt.s32.totalorder %s24, 1
        %s3482 = scalar_select %p3481, %s24, 1
        %p3483 = scmp.lt.s32.totalorder %s3480, 31
        %s3484 = scalar_select %p3483, %s3480, 31
        %s3485 = smul.addr %s3482, 32
        %s3486 = sadd.s32 %s3484, %s3485
        %s3487 = smul.addr %s3486, 4
        %s3488 = scalar_lea.vmem %s5, %s3487
      $region56: #{audio_processing_tokenizer_forward.3} parent=51 // pred_fallthru
        _
      // Predicated region
      $region57: #{audio_processing_tokenizer_forward.3} parent=51 // pred_check
        %p3489 = pneg %p196
      $region58: #{audio_processing_tokenizer_forward.3} parent=51 // pred_check_branch
        %3491 = sbr.rel (%p3489) target = $region60
      $region59: #{audio_processing_tokenizer_forward.3} parent=51 // pred_region
        %p3492 = scmp.lt.s32.totalorder %s24, 1
        %s3493 = scalar_select %p3492, %s24, 1
        %p3494 = scmp.lt.s32.totalorder %s25, 3
        %s3495 = scalar_select %p3494, %s25, 3
        %s3496 = smul.addr %s3493, 4
        %s3497 = sadd.s32 %s3495, %s3496
        %s3498 = smul.addr %s3497, 2
        %s3499 = scalar_lea.vmem %s6, %s3498
      $region60: #{audio_processing_tokenizer_forward.3} parent=51 // pred_fallthru
        _
    $region52: #{audio_processing_tokenizer_forward.3} parent=5 // pred_fallthru
      _
  $region6: #{audio_processing_tokenizer_forward.3} parent=0 // loop_footer
    %s17 = sadd.s32 1, %s13
  $region7: #{audio_processing_tokenizer_forward.3} parent=0 // loop_footer_branch
    %12 = sbr.rel target = $region3
  $region8: #{audio_processing_tokenizer_forward.3} parent=0 // loop_exit
    _

</llo_original>
